<compile_context>
chip_gen: v7x
topology: tpu7x:2x2x1
jax: 0.10.0
libtpu: 0.0.40
codegen_flags: <defaults>
</compile_context>

<pallas_src>
import numpy as np
import jax
import jax.numpy as jnp
from jax import lax
from jax.experimental import pallas as pl
from jax.experimental.pallas import tpu as pltpu


# (kernel_size, stride, padding, in_channels, out_channels, relu) per conv layer,
# in the exact order of Discriminator.forward.
LAYERS = (
    [(1, 1, 0, 3, 32, True),
     (3, 1, 1, 32, 32, True),
     (3, 2, 1, 32, 32, True),
     (3, 1, 1, 32, 32, True),
     (3, 2, 1, 32, 64, True)]
    + [(3, 1, 1, 64, 64, True)] * 8          # 4 res blocks = 8 conv+relu (no skip)
    + [(1, 1, 0, 64, 1, False)]
)
RES_FIRST, RES_COUNT = 5, 8                  # layers 5..12 share the same geometry


def _rup(x, m=8):
    return -(-x // m) * m


def _geometry(H, W, B):
    """Per-layer shapes plus the batch-stacked row counts Mi/Mo (pad to 8)."""
    geo, h, w, mi = [], H, W, B * H
    for (k, s, p, cin, cout, relu) in LAYERS:
        ho = (h + 2 * p - k) // s + 1
        wo = (w + 2 * p - k) // s + 1
        if k == 1:
            assert s == 1 and p == 0          # 1x1 layers pass rows through
            mo = mi
        else:
            mo = _rup(B * ho)                 # tap blocks padded to 8 sublanes
        geo.append(dict(k=k, s=s, p=p, cin=cin, cout=cout, relu=relu,
                        Hin=h, Win=w, Ho=ho, Wo=wo, Mi=mi, Mo=mo))
        h, w, mi = ho, wo, mo
    return geo


# ----------------------------- parameter prep --------------------------------

def _toeplitz(w_np, g):
    """(Cout,Cin,KH,KW) -> (KH, Win*Cin, Wo*Cout): folds the kx taps, horizontal
    zero-padding and horizontal stride into one wide-K weight per row tap."""
    cout, cin, kh, kw = w_np.shape
    win, wo, s, p = g["Win"], g["Wo"], g["s"], g["p"]
    wt = np.zeros((kh, win * cin, wo * cout), np.float32)
    for ky in range(kh):
        for x in range(wo):
            for kx in range(kw):
                wi = x * s + kx - p
                if 0 <= wi < win:
                    wt[ky, wi * cin:(wi + 1) * cin, x * cout:(x + 1) * cout] = \
                        w_np[:, :, ky, kx].T
    return wt


def _row_select(g, B):
    """Batch-stacked 0/1 selection matrix (KH*Mo, Mi).
    Row ky*Mo + b*Ho + y selects input slab row b*Hin + (y*stride+ky-pad);
    all-zero rows implement the vertical zero-padding and the 8-row tap-block
    padding (so every tap slice in the kernel is sublane aligned)."""
    kh, ho, hin, s, p = g["k"], g["Ho"], g["Hin"], g["s"], g["p"]
    mi, mo = g["Mi"], g["Mo"]
    sel = np.zeros((kh * mo, mi), np.float32)
    for ky in range(kh):
        for b in range(B):
            for y in range(ho):
                hi = y * s + ky - p
                if 0 <= hi < hin:
                    sel[ky * mo + b * ho + y, b * hin + hi] = 1.0
    return sel


def prepare_discriminator(params, H, W, B):
    """Re-pack the raw (w, b) conv params into matmul-ready constants.

    Returns (consts, static):
      consts: device arrays in first-use order
              [bias_pack, W1, S2, W2, S3, W3, S4, W4, S5, W5, S_res, W_res_pack, W6]
      static: python-side metadata (per-layer plan, DMA copy units, geometry, B).
    """
    geo = _geometry(H, W, B)
    n_layers = len(LAYERS)

    # packed biases: row l = tile(b_l, Wo_l), padded to (16, 512) f32 (one DMA)
    max_n = max(g["Wo"] * g["cout"] for g in geo)
    bias = np.zeros((_rup(n_layers), max_n), np.float32)
    for l, ((_, b), g) in enumerate(zip(params, geo)):
        n = g["Wo"] * g["cout"]
        bias[l, :n] = np.tile(np.asarray(b, np.float32), g["Wo"])

    consts = [jnp.asarray(bias)]
    copy_units = [(0, None, None)]        # (const_idx, row_start, row_count)
    plan = []
    s_cache = {}
    res_pack = None                       # (const_idx, [copy unit per res conv])

    for l, ((w, _), g) in enumerate(zip(params, geo)):
        L = dict(k=g["k"], relu=g["relu"], n_out=g["Wo"] * g["cout"],
                 Mo=g["Mo"], row=l, s=None, w_off=0)
        waits = [0]                       # everyone needs the bias pack

        if g["k"] == 3:
            skey = (g["Hin"], g["Ho"], g["s"], g["p"], g["Mi"], g["Mo"])
            if skey not in s_cache:       # the 8 res convs share one S matrix
                consts.append(jnp.asarray(_row_select(g, B), jnp.float32))
                copy_units.append((len(consts) - 1, None, None))
                s_cache[skey] = (len(consts) - 1, len(copy_units) - 1)
            L["s"], s_unit = s_cache[skey]
            waits.append(s_unit)

        if RES_FIRST <= l < RES_FIRST + RES_COUNT:
            j = l - RES_FIRST
            if res_pack is None:
                # one packed HBM slab for the 8 identical-shape res-block weights,
                # DMA'd in 8 chunks so each layer only waits for its own slice
                pack = np.concatenate(
                    [_toeplitz(np.asarray(params[RES_FIRST + i][0], np.float32),
                               geo[RES_FIRST + i])
                     for i in range(RES_COUNT)], axis=0)          # (24, K, N)
                consts.append(jnp.asarray(pack, jnp.bfloat16))
                units = []
                for i in range(RES_COUNT):
                    copy_units.append((len(consts) - 1, 3 * i, 3))
                    units.append(len(copy_units) - 1)
                res_pack = (len(consts) - 1, units)
            L["w"] = res_pack[0]
            L["w_off"] = 3 * j
            waits.append(res_pack[1][j])
        else:
            wt = _toeplitz(np.asarray(w, np.float32), g)
            if g["k"] == 1:
                consts.append(jnp.asarray(wt[0], jnp.float32))   # conv1/conv6 in f32
            else:
                consts.append(jnp.asarray(wt, jnp.bfloat16))
            L["w"] = len(consts) - 1
            copy_units.append((len(consts) - 1, None, None))
            waits.append(len(copy_units) - 1)

        L["waits"] = tuple(waits)
        plan.append(L)

    static = dict(plan=plan, copy_units=copy_units, B=B, H=H, W=W, geo=geo)
    return consts, static


# ----------------------------- fused Pallas kernel ---------------------------

def _make_kernel(plan, copy_units, n_const):
    def kernel(*refs):
        x_ref = refs[0]
        hbm = refs[1:1 + n_const]                  # ANY-space constant refs
        o_ref = refs[1 + n_const]
        bufs = refs[2 + n_const:2 + 2 * n_const]   # single-buffered VMEM scratch
        sem = refs[-1]

        # Issue every weight DMA (HBM -> VMEM scratch) up front in first-use
        # order; the per-layer waits below let layer-i MXU work overlap the
        # in-flight copies of later layers' weights.
        copies = []
        for u, (ci, start, size) in enumerate(copy_units):
            src, dst = hbm[ci], bufs[ci]
            if start is not None:
                src = src.at[pl.ds(start, size)]
                dst = dst.at[pl.ds(start, size)]
            copies.append(pltpu.make_async_copy(src, dst, sem.at[u]))
        for cp in copies:
            cp.start()

        waited = [False] * len(copies)

        def ensure(units):
            for u in units:
                if not waited[u]:
                    copies[u].wait()
                    waited[u] = True

        bias_buf = bufs[0]                         # (16, 512) f32 packed biases
        a = x_ref[0]                               # (B*H, W*Cin) f32 row slab
        for L in plan:
            ensure(L["waits"])
            n = L["n_out"]
            b = bias_buf[L["row"]:L["row"] + 1, :n]            # (1, n) f32
            if L["k"] == 1:
                # 1x1 conv: one dot, kept fully in f32 (conv1 / conv6)
                acc = jnp.dot(a, bufs[L["w"]][...],
                              preferred_element_type=jnp.float32) + b
            else:
                # 3x3 conv: one exact f32 0/1 selection dot (vertical taps +
                # pad + stride for the whole batch block), one bf16 cast, then
                # three wide-K bf16 MXU dots against the block-Toeplitz weights.
                ls = jnp.dot(bufs[L["s"]][...], a,
                             preferred_element_type=jnp.float32)  # (3*Mo, Win*Cin)
                lsb = ls.astype(jnp.bfloat16)                     # single cast/layer
                mo = L["Mo"]
                acc = b
                for ky in range(3):
                    wk = bufs[L["w"]][L["w_off"] + ky]            # (Win*Cin, Wo*Cout)
                    acc = acc + jnp.dot(lsb[ky * mo:(ky + 1) * mo, :], wk,
                                        preferred_element_type=jnp.float32)
            if L["relu"]:
                acc = jnp.maximum(acc, 0.0)
            a = acc                                               # carried in f32
        o_ref[0] = a.astype(o_ref.dtype)
    return kernel


def discriminator_forward(prepped, x_nchw):
    consts, st = prepped
    plan, copy_units = st["plan"], st["copy_units"]
    B, H, W, geo = st["B"], st["H"], st["W"], st["geo"]
    N, C, Hx, Wx = x_nchw.shape
    assert (Hx, Wx) == (H, W) and C == LAYERS[0][3]

    G = -(-N // B)                                 # grid steps (batch blocks)
    gl = geo[-1]
    ho_f, wo_f, co_f = gl["Ho"], gl["Wo"], gl["cout"]
    mo_f, n_f = gl["Mo"], gl["Wo"] * gl["cout"]

    # NCHW -> batch-stacked f32 row slab (G, B*H, W*C): rows of image b live at
    # slab rows [b*H, (b+1)*H), so the whole batch block is one MXU M dimension.
    x = jnp.transpose(x_nchw, (0, 2, 3, 1)).astype(jnp.float32)
    if G * B != N:
        x = jnp.concatenate(
            [x, jnp.zeros((G * B - N, H, W, C), jnp.float32)], axis=0)
    x = x.reshape(G, B * H, W * C)

    n_const = len(consts)
    in_specs = [pl.BlockSpec((1, B * H, W * C), lambda g: (g, 0, 0))]
    in_specs += [pl.BlockSpec(memory_space=pl.ANY) for _ in range(n_const)]
    scratch = [pltpu.VMEM(tuple(c.shape), c.dtype) for c in consts]
    scratch.append(pltpu.SemaphoreType.DMA((len(copy_units),)))

    # Advisory cost estimate so XLA schedules neighbouring ops sanely.
    flops = 0
    for g in geo:
        k_in = g["Win"] * g["cin"]
        n_out = g["Wo"] * g["cout"]
        flops += 2 * g["k"] * g["Mo"] * k_in * n_out            # Toeplitz dots
        if g["k"] == 3:
            flops += 2 * (g["k"] * g["Mo"]) * g["Mi"] * k_in    # selection dot
    flops *= G
    w_bytes = sum(int(c.size) * c.dtype.itemsize for c in consts)
    bytes_accessed = int(w_bytes + x.size * 4 + G * mo_f * n_f * 4)

    out = pl.pallas_call(
        _make_kernel(plan, copy_units, n_const),
        out_shape=jax.ShapeDtypeStruct((G, mo_f, n_f), jnp.float32),
        grid=(G,),
        in_specs=in_specs,
        out_specs=pl.BlockSpec((1, mo_f, n_f), lambda g: (g, 0, 0)),
        scratch_shapes=scratch,
        compiler_params=pltpu.CompilerParams(
            dimension_semantics=("parallel",),
            vmem_limit_bytes=32 * 1024 * 1024),   # ~7 MiB resident; portable budget
        cost_estimate=pl.CostEstimate(flops=flops, transcendentals=0,
                                      bytes_accessed=bytes_accessed),
    )(x, *consts)

    # (G, Mo_f, Wo*Co) -> NCHW, dropping tap-block pad rows and batch padding.
    out = out[:, :B * ho_f, :].reshape(G * B, ho_f, wo_f, co_f)[:N]
    return jnp.transpose(out, (0, 3, 1, 2))


# ----------------------------- parameters -----------------------------------

def _init_conv(key, cout, cin, k):
    wk, bk = jax.random.split(key)
    std = 1.0 / np.sqrt(cin * k * k)
    w = jax.random.normal(wk, (cout, cin, k, k), jnp.float32) * std
    b = jax.random.normal(bk, (cout,), jnp.float32) * std
    return w, b


def init_discriminator_params(key):
    keys = jax.random.split(key, len(LAYERS))
    return [_init_conv(kk, cout, cin, k)
            for kk, (k, s, p, cin, cout, relu) in zip(keys, LAYERS)]


# ----------------------------- pure-JAX reference ----------------------------

def discriminator_forward_ref(params, x_nchw):
    x = jnp.transpose(x_nchw, (0, 2, 3, 1)).astype(jnp.float32)
    for (w, b), (k, s, p, cin, cout, relu) in zip(params, LAYERS):
        x = lax.conv_general_dilated(
            x, w, window_strides=(s, s), padding=((p, p), (p, p)),
            dimension_numbers=("NHWC", "OIHW", "NHWC"))
        x = x + b.reshape(1, 1, 1, -1)
        if relu:
            x = jnp.maximum(x, 0.0)
    return jnp.transpose(x, (0, 3, 1, 2))


# ----------------------------------- main -------------------------------------

if __name__ == "__main__":
    key = jax.random.PRNGKey(0)
    pkey, xkey = jax.random.split(key)
    params = init_discriminator_params(pkey)

    # PyTorch input convention: NCHW, 3 input channels (conv1 expects 3)
    N, H, W = 2, 16, 16
    x = jax.random.normal(xkey, (N, 3, H, W), jnp.float32)

    # Batch block: stack up to 8 images into the MXU M dimension per grid step.
    # (At N=2 this gives grid=(1,): one core, one weight fetch, M = 2*Ho rows.)
    B = max(1, min(N, 8))
    consts, static = prepare_discriminator(params, H, W, B)

    fwd = jax.jit(lambda cs, xx: discriminator_forward((cs, static), xx))
    out = jax.block_until_ready(fwd(consts, x))

    assert out.shape == (N, 1, 4, 4), out.shape
    assert bool(jnp.all(jnp.isfinite(out)))

    ref = jax.block_until_ready(jax.jit(discriminator_forward_ref)(params, x))
    max_diff = float(jnp.max(jnp.abs(out - ref)))
    scale = max(float(jnp.max(jnp.abs(ref))), 1e-6)
    # 9 bf16 wide-K layers with f32 accumulation (conv1/conv6 and all row
    # selections exact f32): ~1e-2 relative error expected; gate at 5e-2.
    assert max_diff / scale < 5e-2, f"mismatch vs reference: rel={max_diff / scale:.3e}"

    print("KERNEL_OK")
</pallas_src>

<mosaic_0001>
module attributes {stable_mosaic.version = 11 : i64} {
  func.func @kernel(%arg0: i32, %arg1: memref<1x32x48xf32, #tpu.memory_space<vmem>>, %arg2: memref<16x512xf32, #tpu.memory_space<any>>, %arg3: memref<48x512xf32, #tpu.memory_space<any>>, %arg4: memref<96x32xf32, #tpu.memory_space<any>>, %arg5: memref<3x512x512xbf16, #tpu.memory_space<any>>, %arg6: memref<48x32xf32, #tpu.memory_space<any>>, %arg7: memref<3x512x256xbf16, #tpu.memory_space<any>>, %arg8: memref<48x16xf32, #tpu.memory_space<any>>, %arg9: memref<3x256x256xbf16, #tpu.memory_space<any>>, %arg10: memref<24x16xf32, #tpu.memory_space<any>>, %arg11: memref<3x256x256xbf16, #tpu.memory_space<any>>, %arg12: memref<24x8xf32, #tpu.memory_space<any>>, %arg13: memref<24x256x256xbf16, #tpu.memory_space<any>>, %arg14: memref<256x4xf32, #tpu.memory_space<any>>, %arg15: memref<1x8x4xf32, #tpu.memory_space<vmem>>, %arg16: memref<16x512xf32, #tpu.memory_space<vmem>>, %arg17: memref<48x512xf32, #tpu.memory_space<vmem>>, %arg18: memref<96x32xf32, #tpu.memory_space<vmem>>, %arg19: memref<3x512x512xbf16, #tpu.memory_space<vmem>>, %arg20: memref<48x32xf32, #tpu.memory_space<vmem>>, %arg21: memref<3x512x256xbf16, #tpu.memory_space<vmem>>, %arg22: memref<48x16xf32, #tpu.memory_space<vmem>>, %arg23: memref<3x256x256xbf16, #tpu.memory_space<vmem>>, %arg24: memref<24x16xf32, #tpu.memory_space<vmem>>, %arg25: memref<3x256x256xbf16, #tpu.memory_space<vmem>>, %arg26: memref<24x8xf32, #tpu.memory_space<vmem>>, %arg27: memref<24x256x256xbf16, #tpu.memory_space<vmem>>, %arg28: memref<256x4xf32, #tpu.memory_space<vmem>>, %arg29: memref<20x!tpu.dma_semaphore, #tpu.memory_space<semaphore_mem>>) attributes {dimension_semantics = [#tpu.dimension_semantics<parallel>], iteration_bounds = array<i64: 1>, scalar_prefetch = 0 : i64, scratch_operands = 14 : i64, tpu.core_type = #tpu.core_type<tc>, window_params = [{transform_indices = @transform_0, window_bounds = array<i64: 1, 32, 48>}, {}, {}, {}, {}, {}, {}, {}, {}, {}, {}, {}, {}, {}, {transform_indices = @transform_14, window_bounds = array<i64: 1, 8, 4>}]} {
    %c0_i32 = arith.constant 0 : i32
    %0 = tpu.memref_slice %arg29[%c0_i32] : memref<20x!tpu.dma_semaphore, #tpu.memory_space<semaphore_mem>> -> memref<1x!tpu.dma_semaphore, #tpu.memory_space<semaphore_mem>>
    %1 = tpu.memref_squeeze %0 : memref<1x!tpu.dma_semaphore, #tpu.memory_space<semaphore_mem>> -> memref<!tpu.dma_semaphore, #tpu.memory_space<semaphore_mem>>
    tpu.enqueue_dma source(%arg2 : memref<16x512xf32, #tpu.memory_space<any>>) target(%arg16 : memref<16x512xf32, #tpu.memory_space<vmem>>) target_semaphore(%1 : memref<!tpu.dma_semaphore, #tpu.memory_space<semaphore_mem>>)
    %c1_i32 = arith.constant 1 : i32
    %2 = tpu.memref_slice %arg29[%c1_i32] : memref<20x!tpu.dma_semaphore, #tpu.memory_space<semaphore_mem>> -> memref<1x!tpu.dma_semaphore, #tpu.memory_space<semaphore_mem>>
    %3 = tpu.memref_squeeze %2 : memref<1x!tpu.dma_semaphore, #tpu.memory_space<semaphore_mem>> -> memref<!tpu.dma_semaphore, #tpu.memory_space<semaphore_mem>>
    tpu.enqueue_dma source(%arg3 : memref<48x512xf32, #tpu.memory_space<any>>) target(%arg17 : memref<48x512xf32, #tpu.memory_space<vmem>>) target_semaphore(%3 : memref<!tpu.dma_semaphore, #tpu.memory_space<semaphore_mem>>)
    %c2_i32 = arith.constant 2 : i32
    %4 = tpu.memref_slice %arg29[%c2_i32] : memref<20x!tpu.dma_semaphore, #tpu.memory_space<semaphore_mem>> -> memref<1x!tpu.dma_semaphore, #tpu.memory_space<semaphore_mem>>
    %5 = tpu.memref_squeeze %4 : memref<1x!tpu.dma_semaphore, #tpu.memory_space<semaphore_mem>> -> memref<!tpu.dma_semaphore, #tpu.memory_space<semaphore_mem>>
    tpu.enqueue_dma source(%arg4 : memref<96x32xf32, #tpu.memory_space<any>>) target(%arg18 : memref<96x32xf32, #tpu.memory_space<vmem>>) target_semaphore(%5 : memref<!tpu.dma_semaphore, #tpu.memory_space<semaphore_mem>>)
    %c3_i32 = arith.constant 3 : i32
    %6 = tpu.memref_slice %arg29[%c3_i32] : memref<20x!tpu.dma_semaphore, #tpu.memory_space<semaphore_mem>> -> memref<1x!tpu.dma_semaphore, #tpu.memory_space<semaphore_mem>>
    %7 = tpu.memref_squeeze %6 : memref<1x!tpu.dma_semaphore, #tpu.memory_space<semaphore_mem>> -> memref<!tpu.dma_semaphore, #tpu.memory_space<semaphore_mem>>
    tpu.enqueue_dma source(%arg5 : memref<3x512x512xbf16, #tpu.memory_space<any>>) target(%arg19 : memref<3x512x512xbf16, #tpu.memory_space<vmem>>) target_semaphore(%7 : memref<!tpu.dma_semaphore, #tpu.memory_space<semaphore_mem>>)
    %c4_i32 = arith.constant 4 : i32
    %8 = tpu.memref_slice %arg29[%c4_i32] : memref<20x!tpu.dma_semaphore, #tpu.memory_space<semaphore_mem>> -> memref<1x!tpu.dma_semaphore, #tpu.memory_space<semaphore_mem>>
    %9 = tpu.memref_squeeze %8 : memref<1x!tpu.dma_semaphore, #tpu.memory_space<semaphore_mem>> -> memref<!tpu.dma_semaphore, #tpu.memory_space<semaphore_mem>>
    tpu.enqueue_dma source(%arg6 : memref<48x32xf32, #tpu.memory_space<any>>) target(%arg20 : memref<48x32xf32, #tpu.memory_space<vmem>>) target_semaphore(%9 : memref<!tpu.dma_semaphore, #tpu.memory_space<semaphore_mem>>)
    %c5_i32 = arith.constant 5 : i32
    %10 = tpu.memref_slice %arg29[%c5_i32] : memref<20x!tpu.dma_semaphore, #tpu.memory_space<semaphore_mem>> -> memref<1x!tpu.dma_semaphore, #tpu.memory_space<semaphore_mem>>
    %11 = tpu.memref_squeeze %10 : memref<1x!tpu.dma_semaphore, #tpu.memory_space<semaphore_mem>> -> memref<!tpu.dma_semaphore, #tpu.memory_space<semaphore_mem>>
    tpu.enqueue_dma source(%arg7 : memref<3x512x256xbf16, #tpu.memory_space<any>>) target(%arg21 : memref<3x512x256xbf16, #tpu.memory_space<vmem>>) target_semaphore(%11 : memref<!tpu.dma_semaphore, #tpu.memory_space<semaphore_mem>>)
    %c6_i32 = arith.constant 6 : i32
    %12 = tpu.memref_slice %arg29[%c6_i32] : memref<20x!tpu.dma_semaphore, #tpu.memory_space<semaphore_mem>> -> memref<1x!tpu.dma_semaphore, #tpu.memory_space<semaphore_mem>>
    %13 = tpu.memref_squeeze %12 : memref<1x!tpu.dma_semaphore, #tpu.memory_space<semaphore_mem>> -> memref<!tpu.dma_semaphore, #tpu.memory_space<semaphore_mem>>
    tpu.enqueue_dma source(%arg8 : memref<48x16xf32, #tpu.memory_space<any>>) target(%arg22 : memref<48x16xf32, #tpu.memory_space<vmem>>) target_semaphore(%13 : memref<!tpu.dma_semaphore, #tpu.memory_space<semaphore_mem>>)
    %c7_i32 = arith.constant 7 : i32
    %14 = tpu.memref_slice %arg29[%c7_i32] : memref<20x!tpu.dma_semaphore, #tpu.memory_space<semaphore_mem>> -> memref<1x!tpu.dma_semaphore, #tpu.memory_space<semaphore_mem>>
    %15 = tpu.memref_squeeze %14 : memref<1x!tpu.dma_semaphore, #tpu.memory_space<semaphore_mem>> -> memref<!tpu.dma_semaphore, #tpu.memory_space<semaphore_mem>>
    tpu.enqueue_dma source(%arg9 : memref<3x256x256xbf16, #tpu.memory_space<any>>) target(%arg23 : memref<3x256x256xbf16, #tpu.memory_space<vmem>>) target_semaphore(%15 : memref<!tpu.dma_semaphore, #tpu.memory_space<semaphore_mem>>)
    %c8_i32 = arith.constant 8 : i32
    %16 = tpu.memref_slice %arg29[%c8_i32] : memref<20x!tpu.dma_semaphore, #tpu.memory_space<semaphore_mem>> -> memref<1x!tpu.dma_semaphore, #tpu.memory_space<semaphore_mem>>
    %17 = tpu.memref_squeeze %16 : memref<1x!tpu.dma_semaphore, #tpu.memory_space<semaphore_mem>> -> memref<!tpu.dma_semaphore, #tpu.memory_space<semaphore_mem>>
    tpu.enqueue_dma source(%arg10 : memref<24x16xf32, #tpu.memory_space<any>>) target(%arg24 : memref<24x16xf32, #tpu.memory_space<vmem>>) target_semaphore(%17 : memref<!tpu.dma_semaphore, #tpu.memory_space<semaphore_mem>>)
    %c9_i32 = arith.constant 9 : i32
    %18 = tpu.memref_slice %arg29[%c9_i32] : memref<20x!tpu.dma_semaphore, #tpu.memory_space<semaphore_mem>> -> memref<1x!tpu.dma_semaphore, #tpu.memory_space<semaphore_mem>>
    %19 = tpu.memref_squeeze %18 : memref<1x!tpu.dma_semaphore, #tpu.memory_space<semaphore_mem>> -> memref<!tpu.dma_semaphore, #tpu.memory_space<semaphore_mem>>
    tpu.enqueue_dma source(%arg11 : memref<3x256x256xbf16, #tpu.memory_space<any>>) target(%arg25 : memref<3x256x256xbf16, #tpu.memory_space<vmem>>) target_semaphore(%19 : memref<!tpu.dma_semaphore, #tpu.memory_space<semaphore_mem>>)
    %c10_i32 = arith.constant 10 : i32
    %20 = tpu.memref_slice %arg29[%c10_i32] : memref<20x!tpu.dma_semaphore, #tpu.memory_space<semaphore_mem>> -> memref<1x!tpu.dma_semaphore, #tpu.memory_space<semaphore_mem>>
    %21 = tpu.memref_squeeze %20 : memref<1x!tpu.dma_semaphore, #tpu.memory_space<semaphore_mem>> -> memref<!tpu.dma_semaphore, #tpu.memory_space<semaphore_mem>>
    tpu.enqueue_dma source(%arg12 : memref<24x8xf32, #tpu.memory_space<any>>) target(%arg26 : memref<24x8xf32, #tpu.memory_space<vmem>>) target_semaphore(%21 : memref<!tpu.dma_semaphore, #tpu.memory_space<semaphore_mem>>)
    %c11_i32 = arith.constant 11 : i32
    %c0_i32_0 = arith.constant 0 : i32
    %c0_i32_1 = arith.constant 0 : i32
    %c0_i32_2 = arith.constant 0 : i32
    %22 = tpu.memref_slice %arg13[%c0_i32_0, %c0_i32_1, %c0_i32_2] : memref<24x256x256xbf16, #tpu.memory_space<any>> -> memref<3x256x256xbf16, #tpu.memory_space<any>>
    %c0_i32_3 = arith.constant 0 : i32
    %c0_i32_4 = arith.constant 0 : i32
    %c0_i32_5 = arith.constant 0 : i32
    %23 = tpu.memref_slice %arg27[%c0_i32_3, %c0_i32_4, %c0_i32_5] : memref<24x256x256xbf16, #tpu.memory_space<vmem>> -> memref<3x256x256xbf16, #tpu.memory_space<vmem>>
    %24 = tpu.memref_slice %arg29[%c11_i32] : memref<20x!tpu.dma_semaphore, #tpu.memory_space<semaphore_mem>> -> memref<1x!tpu.dma_semaphore, #tpu.memory_space<semaphore_mem>>
    %25 = tpu.memref_squeeze %24 : memref<1x!tpu.dma_semaphore, #tpu.memory_space<semaphore_mem>> -> memref<!tpu.dma_semaphore, #tpu.memory_space<semaphore_mem>>
    tpu.enqueue_dma source(%22 : memref<3x256x256xbf16, #tpu.memory_space<any>>) target(%23 : memref<3x256x256xbf16, #tpu.memory_space<vmem>>) target_semaphore(%25 : memref<!tpu.dma_semaphore, #tpu.memory_space<semaphore_mem>>)
    %c12_i32 = arith.constant 12 : i32
    %c3_i32_6 = arith.constant 3 : i32
    %c0_i32_7 = arith.constant 0 : i32
    %c0_i32_8 = arith.constant 0 : i32
    %26 = tpu.memref_slice %arg13[%c3_i32_6, %c0_i32_7, %c0_i32_8] : memref<24x256x256xbf16, #tpu.memory_space<any>> -> memref<3x256x256xbf16, #tpu.memory_space<any>>
    %c3_i32_9 = arith.constant 3 : i32
    %c0_i32_10 = arith.constant 0 : i32
    %c0_i32_11 = arith.constant 0 : i32
    %27 = tpu.memref_slice %arg27[%c3_i32_9, %c0_i32_10, %c0_i32_11] : memref<24x256x256xbf16, #tpu.memory_space<vmem>> -> memref<3x256x256xbf16, #tpu.memory_space<vmem>>
    %28 = tpu.memref_slice %arg29[%c12_i32] : memref<20x!tpu.dma_semaphore, #tpu.memory_space<semaphore_mem>> -> memref<1x!tpu.dma_semaphore, #tpu.memory_space<semaphore_mem>>
    %29 = tpu.memref_squeeze %28 : memref<1x!tpu.dma_semaphore, #tpu.memory_space<semaphore_mem>> -> memref<!tpu.dma_semaphore, #tpu.memory_space<semaphore_mem>>
    tpu.enqueue_dma source(%26 : memref<3x256x256xbf16, #tpu.memory_space<any>>) target(%27 : memref<3x256x256xbf16, #tpu.memory_space<vmem>>) target_semaphore(%29 : memref<!tpu.dma_semaphore, #tpu.memory_space<semaphore_mem>>)
    %c13_i32 = arith.constant 13 : i32
    %c6_i32_12 = arith.constant 6 : i32
    %c0_i32_13 = arith.constant 0 : i32
    %c0_i32_14 = arith.constant 0 : i32
    %30 = tpu.memref_slice %arg13[%c6_i32_12, %c0_i32_13, %c0_i32_14] : memref<24x256x256xbf16, #tpu.memory_space<any>> -> memref<3x256x256xbf16, #tpu.memory_space<any>>
    %c6_i32_15 = arith.constant 6 : i32
    %c0_i32_16 = arith.constant 0 : i32
    %c0_i32_17 = arith.constant 0 : i32
    %31 = tpu.memref_slice %arg27[%c6_i32_15, %c0_i32_16, %c0_i32_17] : memref<24x256x256xbf16, #tpu.memory_space<vmem>> -> memref<3x256x256xbf16, #tpu.memory_space<vmem>>
    %32 = tpu.memref_slice %arg29[%c13_i32] : memref<20x!tpu.dma_semaphore, #tpu.memory_space<semaphore_mem>> -> memref<1x!tpu.dma_semaphore, #tpu.memory_space<semaphore_mem>>
    %33 = tpu.memref_squeeze %32 : memref<1x!tpu.dma_semaphore, #tpu.memory_space<semaphore_mem>> -> memref<!tpu.dma_semaphore, #tpu.memory_space<semaphore_mem>>
    tpu.enqueue_dma source(%30 : memref<3x256x256xbf16, #tpu.memory_space<any>>) target(%31 : memref<3x256x256xbf16, #tpu.memory_space<vmem>>) target_semaphore(%33 : memref<!tpu.dma_semaphore, #tpu.memory_space<semaphore_mem>>)
    %c14_i32 = arith.constant 14 : i32
    %c9_i32_18 = arith.constant 9 : i32
    %c0_i32_19 = arith.constant 0 : i32
    %c0_i32_20 = arith.constant 0 : i32
    %34 = tpu.memref_slice %arg13[%c9_i32_18, %c0_i32_19, %c0_i32_20] : memref<24x256x256xbf16, #tpu.memory_space<any>> -> memref<3x256x256xbf16, #tpu.memory_space<any>>
    %c9_i32_21 = arith.constant 9 : i32
    %c0_i32_22 = arith.constant 0 : i32
    %c0_i32_23 = arith.constant 0 : i32
    %35 = tpu.memref_slice %arg27[%c9_i32_21, %c0_i32_22, %c0_i32_23] : memref<24x256x256xbf16, #tpu.memory_space<vmem>> -> memref<3x256x256xbf16, #tpu.memory_space<vmem>>
    %36 = tpu.memref_slice %arg29[%c14_i32] : memref<20x!tpu.dma_semaphore, #tpu.memory_space<semaphore_mem>> -> memref<1x!tpu.dma_semaphore, #tpu.memory_space<semaphore_mem>>
    %37 = tpu.memref_squeeze %36 : memref<1x!tpu.dma_semaphore, #tpu.memory_space<semaphore_mem>> -> memref<!tpu.dma_semaphore, #tpu.memory_space<semaphore_mem>>
    tpu.enqueue_dma source(%34 : memref<3x256x256xbf16, #tpu.memory_space<any>>) target(%35 : memref<3x256x256xbf16, #tpu.memory_space<vmem>>) target_semaphore(%37 : memref<!tpu.dma_semaphore, #tpu.memory_space<semaphore_mem>>)
    %c15_i32 = arith.constant 15 : i32
    %c12_i32_24 = arith.constant 12 : i32
    %c0_i32_25 = arith.constant 0 : i32
    %c0_i32_26 = arith.constant 0 : i32
    %38 = tpu.memref_slice %arg13[%c12_i32_24, %c0_i32_25, %c0_i32_26] : memref<24x256x256xbf16, #tpu.memory_space<any>> -> memref<3x256x256xbf16, #tpu.memory_space<any>>
    %c12_i32_27 = arith.constant 12 : i32
    %c0_i32_28 = arith.constant 0 : i32
    %c0_i32_29 = arith.constant 0 : i32
    %39 = tpu.memref_slice %arg27[%c12_i32_27, %c0_i32_28, %c0_i32_29] : memref<24x256x256xbf16, #tpu.memory_space<vmem>> -> memref<3x256x256xbf16, #tpu.memory_space<vmem>>
    %40 = tpu.memref_slice %arg29[%c15_i32] : memref<20x!tpu.dma_semaphore, #tpu.memory_space<semaphore_mem>> -> memref<1x!tpu.dma_semaphore, #tpu.memory_space<semaphore_mem>>
    %41 = tpu.memref_squeeze %40 : memref<1x!tpu.dma_semaphore, #tpu.memory_space<semaphore_mem>> -> memref<!tpu.dma_semaphore, #tpu.memory_space<semaphore_mem>>
    tpu.enqueue_dma source(%38 : memref<3x256x256xbf16, #tpu.memory_space<any>>) target(%39 : memref<3x256x256xbf16, #tpu.memory_space<vmem>>) target_semaphore(%41 : memref<!tpu.dma_semaphore, #tpu.memory_space<semaphore_mem>>)
    %c16_i32 = arith.constant 16 : i32
    %c15_i32_30 = arith.constant 15 : i32
    %c0_i32_31 = arith.constant 0 : i32
    %c0_i32_32 = arith.constant 0 : i32
    %42 = tpu.memref_slice %arg13[%c15_i32_30, %c0_i32_31, %c0_i32_32] : memref<24x256x256xbf16, #tpu.memory_space<any>> -> memref<3x256x256xbf16, #tpu.memory_space<any>>
    %c15_i32_33 = arith.constant 15 : i32
    %c0_i32_34 = arith.constant 0 : i32
    %c0_i32_35 = arith.constant 0 : i32
    %43 = tpu.memref_slice %arg27[%c15_i32_33, %c0_i32_34, %c0_i32_35] : memref<24x256x256xbf16, #tpu.memory_space<vmem>> -> memref<3x256x256xbf16, #tpu.memory_space<vmem>>
    %44 = tpu.memref_slice %arg29[%c16_i32] : memref<20x!tpu.dma_semaphore, #tpu.memory_space<semaphore_mem>> -> memref<1x!tpu.dma_semaphore, #tpu.memory_space<semaphore_mem>>
    %45 = tpu.memref_squeeze %44 : memref<1x!tpu.dma_semaphore, #tpu.memory_space<semaphore_mem>> -> memref<!tpu.dma_semaphore, #tpu.memory_space<semaphore_mem>>
    tpu.enqueue_dma source(%42 : memref<3x256x256xbf16, #tpu.memory_space<any>>) target(%43 : memref<3x256x256xbf16, #tpu.memory_space<vmem>>) target_semaphore(%45 : memref<!tpu.dma_semaphore, #tpu.memory_space<semaphore_mem>>)
    %c17_i32 = arith.constant 17 : i32
    %c18_i32 = arith.constant 18 : i32
    %c0_i32_36 = arith.constant 0 : i32
    %c0_i32_37 = arith.constant 0 : i32
    %46 = tpu.memref_slice %arg13[%c18_i32, %c0_i32_36, %c0_i32_37] : memref<24x256x256xbf16, #tpu.memory_space<any>> -> memref<3x256x256xbf16, #tpu.memory_space<any>>
    %c18_i32_38 = arith.constant 18 : i32
    %c0_i32_39 = arith.constant 0 : i32
    %c0_i32_40 = arith.constant 0 : i32
    %47 = tpu.memref_slice %arg27[%c18_i32_38, %c0_i32_39, %c0_i32_40] : memref<24x256x256xbf16, #tpu.memory_space<vmem>> -> memref<3x256x256xbf16, #tpu.memory_space<vmem>>
    %48 = tpu.memref_slice %arg29[%c17_i32] : memref<20x!tpu.dma_semaphore, #tpu.memory_space<semaphore_mem>> -> memref<1x!tpu.dma_semaphore, #tpu.memory_space<semaphore_mem>>
    %49 = tpu.memref_squeeze %48 : memref<1x!tpu.dma_semaphore, #tpu.memory_space<semaphore_mem>> -> memref<!tpu.dma_semaphore, #tpu.memory_space<semaphore_mem>>
    tpu.enqueue_dma source(%46 : memref<3x256x256xbf16, #tpu.memory_space<any>>) target(%47 : memref<3x256x256xbf16, #tpu.memory_space<vmem>>) target_semaphore(%49 : memref<!tpu.dma_semaphore, #tpu.memory_space<semaphore_mem>>)
    %c18_i32_41 = arith.constant 18 : i32
    %c21_i32 = arith.constant 21 : i32
    %c0_i32_42 = arith.constant 0 : i32
    %c0_i32_43 = arith.constant 0 : i32
    %50 = tpu.memref_slice %arg13[%c21_i32, %c0_i32_42, %c0_i32_43] : memref<24x256x256xbf16, #tpu.memory_space<any>> -> memref<3x256x256xbf16, #tpu.memory_space<any>>
    %c21_i32_44 = arith.constant 21 : i32
    %c0_i32_45 = arith.constant 0 : i32
    %c0_i32_46 = arith.constant 0 : i32
    %51 = tpu.memref_slice %arg27[%c21_i32_44, %c0_i32_45, %c0_i32_46] : memref<24x256x256xbf16, #tpu.memory_space<vmem>> -> memref<3x256x256xbf16, #tpu.memory_space<vmem>>
    %52 = tpu.memref_slice %arg29[%c18_i32_41] : memref<20x!tpu.dma_semaphore, #tpu.memory_space<semaphore_mem>> -> memref<1x!tpu.dma_semaphore, #tpu.memory_space<semaphore_mem>>
    %53 = tpu.memref_squeeze %52 : memref<1x!tpu.dma_semaphore, #tpu.memory_space<semaphore_mem>> -> memref<!tpu.dma_semaphore, #tpu.memory_space<semaphore_mem>>
    tpu.enqueue_dma source(%50 : memref<3x256x256xbf16, #tpu.memory_space<any>>) target(%51 : memref<3x256x256xbf16, #tpu.memory_space<vmem>>) target_semaphore(%53 : memref<!tpu.dma_semaphore, #tpu.memory_space<semaphore_mem>>)
    %c19_i32 = arith.constant 19 : i32
    %54 = tpu.memref_slice %arg29[%c19_i32] : memref<20x!tpu.dma_semaphore, #tpu.memory_space<semaphore_mem>> -> memref<1x!tpu.dma_semaphore, #tpu.memory_space<semaphore_mem>>
    %55 = tpu.memref_squeeze %54 : memref<1x!tpu.dma_semaphore, #tpu.memory_space<semaphore_mem>> -> memref<!tpu.dma_semaphore, #tpu.memory_space<semaphore_mem>>
    tpu.enqueue_dma source(%arg14 : memref<256x4xf32, #tpu.memory_space<any>>) target(%arg28 : memref<256x4xf32, #tpu.memory_space<vmem>>) target_semaphore(%55 : memref<!tpu.dma_semaphore, #tpu.memory_space<semaphore_mem>>)
    %c0 = arith.constant 0 : index
    %c0_47 = arith.constant 0 : index
    %c0_48 = arith.constant 0 : index
    %56 = vector.load %arg1[%c0, %c0_47, %c0_48] : memref<1x32x48xf32, #tpu.memory_space<vmem>>, vector<1x32x48xf32>
    %57 = vector.shape_cast %56 : vector<1x32x48xf32> to vector<32x48xf32>
    %c0_i32_49 = arith.constant 0 : i32
    %58 = tpu.memref_slice %arg29[%c0_i32_49] : memref<20x!tpu.dma_semaphore, #tpu.memory_space<semaphore_mem>> -> memref<1x!tpu.dma_semaphore, #tpu.memory_space<semaphore_mem>>
    %59 = tpu.memref_squeeze %58 : memref<1x!tpu.dma_semaphore, #tpu.memory_space<semaphore_mem>> -> memref<!tpu.dma_semaphore, #tpu.memory_space<semaphore_mem>>
    tpu.wait_dma2 semaphore(%59 : memref<!tpu.dma_semaphore, #tpu.memory_space<semaphore_mem>>) src(%arg2 : memref<16x512xf32, #tpu.memory_space<any>>) dst(%arg16 : memref<16x512xf32, #tpu.memory_space<vmem>>)
    %c1_i32_50 = arith.constant 1 : i32
    %60 = tpu.memref_slice %arg29[%c1_i32_50] : memref<20x!tpu.dma_semaphore, #tpu.memory_space<semaphore_mem>> -> memref<1x!tpu.dma_semaphore, #tpu.memory_space<semaphore_mem>>
    %61 = tpu.memref_squeeze %60 : memref<1x!tpu.dma_semaphore, #tpu.memory_space<semaphore_mem>> -> memref<!tpu.dma_semaphore, #tpu.memory_space<semaphore_mem>>
    tpu.wait_dma2 semaphore(%61 : memref<!tpu.dma_semaphore, #tpu.memory_space<semaphore_mem>>) src(%arg3 : memref<48x512xf32, #tpu.memory_space<any>>) dst(%arg17 : memref<48x512xf32, #tpu.memory_space<vmem>>)
    %c0_51 = arith.constant 0 : index
    %c0_52 = arith.constant 0 : index
    %62 = vector.load %arg16[%c0_51, %c0_52] : memref<16x512xf32, #tpu.memory_space<vmem>>, vector<1x512xf32>
    %c0_53 = arith.constant 0 : index
    %c0_54 = arith.constant 0 : index
    %63 = vector.load %arg17[%c0_53, %c0_54] : memref<48x512xf32, #tpu.memory_space<vmem>>, vector<48x512xf32>
    %cst = arith.constant dense<0.000000e+00> : vector<32x512xf32>
    %64 = tpu.matmul %57, %63, %cst {dimension_numbers = #tpu.dot_dimension_numbers<[1], [0], [0], [1], [0, 0, 1, 1], [], []>} : vector<32x48xf32>, vector<48x512xf32>, vector<32x512xf32> -> vector<32x512xf32>
    %65 = vector.broadcast %62 : vector<1x512xf32> to vector<32x512xf32>
    %66 = arith.addf %64, %65 : vector<32x512xf32>
    %cst_55 = arith.constant 0.000000e+00 : f32
    %67 = vector.broadcast %cst_55 : f32 to vector<32x512xf32>
    %68 = arith.maximumf %66, %67 : vector<32x512xf32>
    %c2_i32_56 = arith.constant 2 : i32
    %69 = tpu.memref_slice %arg29[%c2_i32_56] : memref<20x!tpu.dma_semaphore, #tpu.memory_space<semaphore_mem>> -> memref<1x!tpu.dma_semaphore, #tpu.memory_space<semaphore_mem>>
    %70 = tpu.memref_squeeze %69 : memref<1x!tpu.dma_semaphore, #tpu.memory_space<semaphore_mem>> -> memref<!tpu.dma_semaphore, #tpu.memory_space<semaphore_mem>>
    tpu.wait_dma2 semaphore(%70 : memref<!tpu.dma_semaphore, #tpu.memory_space<semaphore_mem>>) src(%arg4 : memref<96x32xf32, #tpu.memory_space<any>>) dst(%arg18 : memref<96x32xf32, #tpu.memory_space<vmem>>)
    %c3_i32_57 = arith.constant 3 : i32
    %71 = tpu.memref_slice %arg29[%c3_i32_57] : memref<20x!tpu.dma_semaphore, #tpu.memory_space<semaphore_mem>> -> memref<1x!tpu.dma_semaphore, #tpu.memory_space<semaphore_mem>>
    %72 = tpu.memref_squeeze %71 : memref<1x!tpu.dma_semaphore, #tpu.memory_space<semaphore_mem>> -> memref<!tpu.dma_semaphore, #tpu.memory_space<semaphore_mem>>
    tpu.wait_dma2 semaphore(%72 : memref<!tpu.dma_semaphore, #tpu.memory_space<semaphore_mem>>) src(%arg5 : memref<3x512x512xbf16, #tpu.memory_space<any>>) dst(%arg19 : memref<3x512x512xbf16, #tpu.memory_space<vmem>>)
    %c1 = arith.constant 1 : index
    %c0_58 = arith.constant 0 : index
    %73 = vector.load %arg16[%c1, %c0_58] : memref<16x512xf32, #tpu.memory_space<vmem>>, vector<1x512xf32>
    %c0_59 = arith.constant 0 : index
    %c0_60 = arith.constant 0 : index
    %74 = vector.load %arg18[%c0_59, %c0_60] : memref<96x32xf32, #tpu.memory_space<vmem>>, vector<96x32xf32>
    %cst_61 = arith.constant dense<0.000000e+00> : vector<96x512xf32>
    %75 = tpu.matmul %74, %68, %cst_61 {dimension_numbers = #tpu.dot_dimension_numbers<[1], [0], [0], [1], [0, 0, 1, 1], [], []>} : vector<96x32xf32>, vector<32x512xf32>, vector<96x512xf32> -> vector<96x512xf32>
    %76 = arith.truncf %75 : vector<96x512xf32> to vector<96x512xbf16>
    %c0_62 = arith.constant 0 : index
    %c0_63 = arith.constant 0 : index
    %c0_64 = arith.constant 0 : index
    %77 = vector.load %arg19[%c0_62, %c0_63, %c0_64] : memref<3x512x512xbf16, #tpu.memory_space<vmem>>, vector<1x512x512xbf16>
    %78 = vector.shape_cast %77 : vector<1x512x512xbf16> to vector<512x512xbf16>
    %79 = vector.extract_strided_slice %76 {offsets = [0, 0], sizes = [32, 512], strides = [1, 1]} : vector<96x512xbf16> to vector<32x512xbf16>
    %cst_65 = arith.constant dense<0.000000e+00> : vector<32x512xf32>
    %80 = tpu.matmul %79, %78, %cst_65 {dimension_numbers = #tpu.dot_dimension_numbers<[1], [0], [0], [1], [0, 0, 1, 1], [], []>} : vector<32x512xbf16>, vector<512x512xbf16>, vector<32x512xf32> -> vector<32x512xf32>
    %81 = vector.broadcast %73 : vector<1x512xf32> to vector<32x512xf32>
    %82 = arith.addf %81, %80 : vector<32x512xf32>
    %c1_66 = arith.constant 1 : index
    %c0_67 = arith.constant 0 : index
    %c0_68 = arith.constant 0 : index
    %83 = vector.load %arg19[%c1_66, %c0_67, %c0_68] : memref<3x512x512xbf16, #tpu.memory_space<vmem>>, vector<1x512x512xbf16>
    %84 = vector.shape_cast %83 : vector<1x512x512xbf16> to vector<512x512xbf16>
    %85 = vector.extract_strided_slice %76 {offsets = [32, 0], sizes = [32, 512], strides = [1, 1]} : vector<96x512xbf16> to vector<32x512xbf16>
    %cst_69 = arith.constant dense<0.000000e+00> : vector<32x512xf32>
    %86 = tpu.matmul %85, %84, %cst_69 {dimension_numbers = #tpu.dot_dimension_numbers<[1], [0], [0], [1], [0, 0, 1, 1], [], []>} : vector<32x512xbf16>, vector<512x512xbf16>, vector<32x512xf32> -> vector<32x512xf32>
    %87 = arith.addf %82, %86 : vector<32x512xf32>
    %c2 = arith.constant 2 : index
    %c0_70 = arith.constant 0 : index
    %c0_71 = arith.constant 0 : index
    %88 = vector.load %arg19[%c2, %c0_70, %c0_71] : memref<3x512x512xbf16, #tpu.memory_space<vmem>>, vector<1x512x512xbf16>
    %89 = vector.shape_cast %88 : vector<1x512x512xbf16> to vector<512x512xbf16>
    %90 = vector.extract_strided_slice %76 {offsets = [64, 0], sizes = [32, 512], strides = [1, 1]} : vector<96x512xbf16> to vector<32x512xbf16>
    %cst_72 = arith.constant dense<0.000000e+00> : vector<32x512xf32>
    %91 = tpu.matmul %90, %89, %cst_72 {dimension_numbers = #tpu.dot_dimension_numbers<[1], [0], [0], [1], [0, 0, 1, 1], [], []>} : vector<32x512xbf16>, vector<512x512xbf16>, vector<32x512xf32> -> vector<32x512xf32>
    %92 = arith.addf %87, %91 : vector<32x512xf32>
    %cst_73 = arith.constant 0.000000e+00 : f32
    %93 = vector.broadcast %cst_73 : f32 to vector<32x512xf32>
    %94 = arith.maximumf %92, %93 : vector<32x512xf32>
    %c4_i32_74 = arith.constant 4 : i32
    %95 = tpu.memref_slice %arg29[%c4_i32_74] : memref<20x!tpu.dma_semaphore, #tpu.memory_space<semaphore_mem>> -> memref<1x!tpu.dma_semaphore, #tpu.memory_space<semaphore_mem>>
    %96 = tpu.memref_squeeze %95 : memref<1x!tpu.dma_semaphore, #tpu.memory_space<semaphore_mem>> -> memref<!tpu.dma_semaphore, #tpu.memory_space<semaphore_mem>>
    tpu.wait_dma2 semaphore(%96 : memref<!tpu.dma_semaphore, #tpu.memory_space<semaphore_mem>>) src(%arg6 : memref<48x32xf32, #tpu.memory_space<any>>) dst(%arg20 : memref<48x32xf32, #tpu.memory_space<vmem>>)
    %c5_i32_75 = arith.constant 5 : i32
    %97 = tpu.memref_slice %arg29[%c5_i32_75] : memref<20x!tpu.dma_semaphore, #tpu.memory_space<semaphore_mem>> -> memref<1x!tpu.dma_semaphore, #tpu.memory_space<semaphore_mem>>
    %98 = tpu.memref_squeeze %97 : memref<1x!tpu.dma_semaphore, #tpu.memory_space<semaphore_mem>> -> memref<!tpu.dma_semaphore, #tpu.memory_space<semaphore_mem>>
    tpu.wait_dma2 semaphore(%98 : memref<!tpu.dma_semaphore, #tpu.memory_space<semaphore_mem>>) src(%arg7 : memref<3x512x256xbf16, #tpu.memory_space<any>>) dst(%arg21 : memref<3x512x256xbf16, #tpu.memory_space<vmem>>)
    %c2_76 = arith.constant 2 : index
    %c0_77 = arith.constant 0 : index
    %99 = vector.load %arg16[%c2_76, %c0_77] : memref<16x512xf32, #tpu.memory_space<vmem>>, vector<1x256xf32>
    %c0_78 = arith.constant 0 : index
    %c0_79 = arith.constant 0 : index
    %100 = vector.load %arg20[%c0_78, %c0_79] : memref<48x32xf32, #tpu.memory_space<vmem>>, vector<48x32xf32>
    %cst_80 = arith.constant dense<0.000000e+00> : vector<48x512xf32>
    %101 = tpu.matmul %100, %94, %cst_80 {dimension_numbers = #tpu.dot_dimension_numbers<[1], [0], [0], [1], [0, 0, 1, 1], [], []>} : vector<48x32xf32>, vector<32x512xf32>, vector<48x512xf32> -> vector<48x512xf32>
    %102 = arith.truncf %101 : vector<48x512xf32> to vector<48x512xbf16>
    %c0_81 = arith.constant 0 : index
    %c0_82 = arith.constant 0 : index
    %c0_83 = arith.constant 0 : index
    %103 = vector.load %arg21[%c0_81, %c0_82, %c0_83] : memref<3x512x256xbf16, #tpu.memory_space<vmem>>, vector<1x512x256xbf16>
    %104 = vector.shape_cast %103 : vector<1x512x256xbf16> to vector<512x256xbf16>
    %105 = vector.extract_strided_slice %102 {offsets = [0, 0], sizes = [16, 512], strides = [1, 1]} : vector<48x512xbf16> to vector<16x512xbf16>
    %cst_84 = arith.constant dense<0.000000e+00> : vector<16x256xf32>
    %106 = tpu.matmul %105, %104, %cst_84 {dimension_numbers = #tpu.dot_dimension_numbers<[1], [0], [0], [1], [0, 0, 1, 1], [], []>} : vector<16x512xbf16>, vector<512x256xbf16>, vector<16x256xf32> -> vector<16x256xf32>
    %107 = vector.broadcast %99 : vector<1x256xf32> to vector<16x256xf32>
    %108 = arith.addf %107, %106 : vector<16x256xf32>
    %c1_85 = arith.constant 1 : index
    %c0_86 = arith.constant 0 : index
    %c0_87 = arith.constant 0 : index
    %109 = vector.load %arg21[%c1_85, %c0_86, %c0_87] : memref<3x512x256xbf16, #tpu.memory_space<vmem>>, vector<1x512x256xbf16>
    %110 = vector.shape_cast %109 : vector<1x512x256xbf16> to vector<512x256xbf16>
    %111 = vector.extract_strided_slice %102 {offsets = [16, 0], sizes = [16, 512], strides = [1, 1]} : vector<48x512xbf16> to vector<16x512xbf16>
    %cst_88 = arith.constant dense<0.000000e+00> : vector<16x256xf32>
    %112 = tpu.matmul %111, %110, %cst_88 {dimension_numbers = #tpu.dot_dimension_numbers<[1], [0], [0], [1], [0, 0, 1, 1], [], []>} : vector<16x512xbf16>, vector<512x256xbf16>, vector<16x256xf32> -> vector<16x256xf32>
    %113 = arith.addf %108, %112 : vector<16x256xf32>
    %c2_89 = arith.constant 2 : index
    %c0_90 = arith.constant 0 : index
    %c0_91 = arith.constant 0 : index
    %114 = vector.load %arg21[%c2_89, %c0_90, %c0_91] : memref<3x512x256xbf16, #tpu.memory_space<vmem>>, vector<1x512x256xbf16>
    %115 = vector.shape_cast %114 : vector<1x512x256xbf16> to vector<512x256xbf16>
    %116 = vector.extract_strided_slice %102 {offsets = [32, 0], sizes = [16, 512], strides = [1, 1]} : vector<48x512xbf16> to vector<16x512xbf16>
    %cst_92 = arith.constant dense<0.000000e+00> : vector<16x256xf32>
    %117 = tpu.matmul %116, %115, %cst_92 {dimension_numbers = #tpu.dot_dimension_numbers<[1], [0], [0], [1], [0, 0, 1, 1], [], []>} : vector<16x512xbf16>, vector<512x256xbf16>, vector<16x256xf32> -> vector<16x256xf32>
    %118 = arith.addf %113, %117 : vector<16x256xf32>
    %cst_93 = arith.constant 0.000000e+00 : f32
    %119 = vector.broadcast %cst_93 : f32 to vector<16x256xf32>
    %120 = arith.maximumf %118, %119 : vector<16x256xf32>
    %c6_i32_94 = arith.constant 6 : i32
    %121 = tpu.memref_slice %arg29[%c6_i32_94] : memref<20x!tpu.dma_semaphore, #tpu.memory_space<semaphore_mem>> -> memref<1x!tpu.dma_semaphore, #tpu.memory_space<semaphore_mem>>
    %122 = tpu.memref_squeeze %121 : memref<1x!tpu.dma_semaphore, #tpu.memory_space<semaphore_mem>> -> memref<!tpu.dma_semaphore, #tpu.memory_space<semaphore_mem>>
    tpu.wait_dma2 semaphore(%122 : memref<!tpu.dma_semaphore, #tpu.memory_space<semaphore_mem>>) src(%arg8 : memref<48x16xf32, #tpu.memory_space<any>>) dst(%arg22 : memref<48x16xf32, #tpu.memory_space<vmem>>)
    %c7_i32_95 = arith.constant 7 : i32
    %123 = tpu.memref_slice %arg29[%c7_i32_95] : memref<20x!tpu.dma_semaphore, #tpu.memory_space<semaphore_mem>> -> memref<1x!tpu.dma_semaphore, #tpu.memory_space<semaphore_mem>>
    %124 = tpu.memref_squeeze %123 : memref<1x!tpu.dma_semaphore, #tpu.memory_space<semaphore_mem>> -> memref<!tpu.dma_semaphore, #tpu.memory_space<semaphore_mem>>
    tpu.wait_dma2 semaphore(%124 : memref<!tpu.dma_semaphore, #tpu.memory_space<semaphore_mem>>) src(%arg9 : memref<3x256x256xbf16, #tpu.memory_space<any>>) dst(%arg23 : memref<3x256x256xbf16, #tpu.memory_space<vmem>>)
    %c3 = arith.constant 3 : index
    %c0_96 = arith.constant 0 : index
    %125 = vector.load %arg16[%c3, %c0_96] : memref<16x512xf32, #tpu.memory_space<vmem>>, vector<1x256xf32>
    %c0_97 = arith.constant 0 : index
    %c0_98 = arith.constant 0 : index
    %126 = vector.load %arg22[%c0_97, %c0_98] : memref<48x16xf32, #tpu.memory_space<vmem>>, vector<48x16xf32>
    %cst_99 = arith.constant dense<0.000000e+00> : vector<48x256xf32>
    %127 = tpu.matmul %126, %120, %cst_99 {dimension_numbers = #tpu.dot_dimension_numbers<[1], [0], [0], [1], [0, 0, 1, 1], [], []>} : vector<48x16xf32>, vector<16x256xf32>, vector<48x256xf32> -> vector<48x256xf32>
    %128 = arith.truncf %127 : vector<48x256xf32> to vector<48x256xbf16>
    %c0_100 = arith.constant 0 : index
    %c0_101 = arith.constant 0 : index
    %c0_102 = arith.constant 0 : index
    %129 = vector.load %arg23[%c0_100, %c0_101, %c0_102] : memref<3x256x256xbf16, #tpu.memory_space<vmem>>, vector<1x256x256xbf16>
    %130 = vector.shape_cast %129 : vector<1x256x256xbf16> to vector<256x256xbf16>
    %131 = vector.extract_strided_slice %128 {offsets = [0, 0], sizes = [16, 256], strides = [1, 1]} : vector<48x256xbf16> to vector<16x256xbf16>
    %cst_103 = arith.constant dense<0.000000e+00> : vector<16x256xf32>
    %132 = tpu.matmul %131, %130, %cst_103 {dimension_numbers = #tpu.dot_dimension_numbers<[1], [0], [0], [1], [0, 0, 1, 1], [], []>} : vector<16x256xbf16>, vector<256x256xbf16>, vector<16x256xf32> -> vector<16x256xf32>
    %133 = vector.broadcast %125 : vector<1x256xf32> to vector<16x256xf32>
    %134 = arith.addf %133, %132 : vector<16x256xf32>
    %c1_104 = arith.constant 1 : index
    %c0_105 = arith.constant 0 : index
    %c0_106 = arith.constant 0 : index
    %135 = vector.load %arg23[%c1_104, %c0_105, %c0_106] : memref<3x256x256xbf16, #tpu.memory_space<vmem>>, vector<1x256x256xbf16>
    %136 = vector.shape_cast %135 : vector<1x256x256xbf16> to vector<256x256xbf16>
    %137 = vector.extract_strided_slice %128 {offsets = [16, 0], sizes = [16, 256], strides = [1, 1]} : vector<48x256xbf16> to vector<16x256xbf16>
    %cst_107 = arith.constant dense<0.000000e+00> : vector<16x256xf32>
    %138 = tpu.matmul %137, %136, %cst_107 {dimension_numbers = #tpu.dot_dimension_numbers<[1], [0], [0], [1], [0, 0, 1, 1], [], []>} : vector<16x256xbf16>, vector<256x256xbf16>, vector<16x256xf32> -> vector<16x256xf32>
    %139 = arith.addf %134, %138 : vector<16x256xf32>
    %c2_108 = arith.constant 2 : index
    %c0_109 = arith.constant 0 : index
    %c0_110 = arith.constant 0 : index
    %140 = vector.load %arg23[%c2_108, %c0_109, %c0_110] : memref<3x256x256xbf16, #tpu.memory_space<vmem>>, vector<1x256x256xbf16>
    %141 = vector.shape_cast %140 : vector<1x256x256xbf16> to vector<256x256xbf16>
    %142 = vector.extract_strided_slice %128 {offsets = [32, 0], sizes = [16, 256], strides = [1, 1]} : vector<48x256xbf16> to vector<16x256xbf16>
    %cst_111 = arith.constant dense<0.000000e+00> : vector<16x256xf32>
    %143 = tpu.matmul %142, %141, %cst_111 {dimension_numbers = #tpu.dot_dimension_numbers<[1], [0], [0], [1], [0, 0, 1, 1], [], []>} : vector<16x256xbf16>, vector<256x256xbf16>, vector<16x256xf32> -> vector<16x256xf32>
    %144 = arith.addf %139, %143 : vector<16x256xf32>
    %cst_112 = arith.constant 0.000000e+00 : f32
    %145 = vector.broadcast %cst_112 : f32 to vector<16x256xf32>
    %146 = arith.maximumf %144, %145 : vector<16x256xf32>
    %c8_i32_113 = arith.constant 8 : i32
    %147 = tpu.memref_slice %arg29[%c8_i32_113] : memref<20x!tpu.dma_semaphore, #tpu.memory_space<semaphore_mem>> -> memref<1x!tpu.dma_semaphore, #tpu.memory_space<semaphore_mem>>
    %148 = tpu.memref_squeeze %147 : memref<1x!tpu.dma_semaphore, #tpu.memory_space<semaphore_mem>> -> memref<!tpu.dma_semaphore, #tpu.memory_space<semaphore_mem>>
    tpu.wait_dma2 semaphore(%148 : memref<!tpu.dma_semaphore, #tpu.memory_space<semaphore_mem>>) src(%arg10 : memref<24x16xf32, #tpu.memory_space<any>>) dst(%arg24 : memref<24x16xf32, #tpu.memory_space<vmem>>)
    %c9_i32_114 = arith.constant 9 : i32
    %149 = tpu.memref_slice %arg29[%c9_i32_114] : memref<20x!tpu.dma_semaphore, #tpu.memory_space<semaphore_mem>> -> memref<1x!tpu.dma_semaphore, #tpu.memory_space<semaphore_mem>>
    %150 = tpu.memref_squeeze %149 : memref<1x!tpu.dma_semaphore, #tpu.memory_space<semaphore_mem>> -> memref<!tpu.dma_semaphore, #tpu.memory_space<semaphore_mem>>
    tpu.wait_dma2 semaphore(%150 : memref<!tpu.dma_semaphore, #tpu.memory_space<semaphore_mem>>) src(%arg11 : memref<3x256x256xbf16, #tpu.memory_space<any>>) dst(%arg25 : memref<3x256x256xbf16, #tpu.memory_space<vmem>>)
    %c4 = arith.constant 4 : index
    %c0_115 = arith.constant 0 : index
    %151 = vector.load %arg16[%c4, %c0_115] : memref<16x512xf32, #tpu.memory_space<vmem>>, vector<1x256xf32>
    %c0_116 = arith.constant 0 : index
    %c0_117 = arith.constant 0 : index
    %152 = vector.load %arg24[%c0_116, %c0_117] : memref<24x16xf32, #tpu.memory_space<vmem>>, vector<24x16xf32>
    %cst_118 = arith.constant dense<0.000000e+00> : vector<24x256xf32>
    %153 = tpu.matmul %152, %146, %cst_118 {dimension_numbers = #tpu.dot_dimension_numbers<[1], [0], [0], [1], [0, 0, 1, 1], [], []>} : vector<24x16xf32>, vector<16x256xf32>, vector<24x256xf32> -> vector<24x256xf32>
    %154 = arith.truncf %153 : vector<24x256xf32> to vector<24x256xbf16>
    %c0_119 = arith.constant 0 : index
    %c0_120 = arith.constant 0 : index
    %c0_121 = arith.constant 0 : index
    %155 = vector.load %arg25[%c0_119, %c0_120, %c0_121] : memref<3x256x256xbf16, #tpu.memory_space<vmem>>, vector<1x256x256xbf16>
    %156 = vector.shape_cast %155 : vector<1x256x256xbf16> to vector<256x256xbf16>
    %157 = vector.extract_strided_slice %154 {offsets = [0, 0], sizes = [8, 256], strides = [1, 1]} : vector<24x256xbf16> to vector<8x256xbf16>
    %cst_122 = arith.constant dense<0.000000e+00> : vector<8x256xf32>
    %158 = tpu.matmul %157, %156, %cst_122 {dimension_numbers = #tpu.dot_dimension_numbers<[1], [0], [0], [1], [0, 0, 1, 1], [], []>} : vector<8x256xbf16>, vector<256x256xbf16>, vector<8x256xf32> -> vector<8x256xf32>
    %159 = vector.broadcast %151 : vector<1x256xf32> to vector<8x256xf32>
    %160 = arith.addf %159, %158 : vector<8x256xf32>
    %c1_123 = arith.constant 1 : index
    %c0_124 = arith.constant 0 : index
    %c0_125 = arith.constant 0 : index
    %161 = vector.load %arg25[%c1_123, %c0_124, %c0_125] : memref<3x256x256xbf16, #tpu.memory_space<vmem>>, vector<1x256x256xbf16>
    %162 = vector.shape_cast %161 : vector<1x256x256xbf16> to vector<256x256xbf16>
    %163 = vector.extract_strided_slice %154 {offsets = [8, 0], sizes = [8, 256], strides = [1, 1]} : vector<24x256xbf16> to vector<8x256xbf16>
    %cst_126 = arith.constant dense<0.000000e+00> : vector<8x256xf32>
    %164 = tpu.matmul %163, %162, %cst_126 {dimension_numbers = #tpu.dot_dimension_numbers<[1], [0], [0], [1], [0, 0, 1, 1], [], []>} : vector<8x256xbf16>, vector<256x256xbf16>, vector<8x256xf32> -> vector<8x256xf32>
    %165 = arith.addf %160, %164 : vector<8x256xf32>
    %c2_127 = arith.constant 2 : index
    %c0_128 = arith.constant 0 : index
    %c0_129 = arith.constant 0 : index
    %166 = vector.load %arg25[%c2_127, %c0_128, %c0_129] : memref<3x256x256xbf16, #tpu.memory_space<vmem>>, vector<1x256x256xbf16>
    %167 = vector.shape_cast %166 : vector<1x256x256xbf16> to vector<256x256xbf16>
    %168 = vector.extract_strided_slice %154 {offsets = [16, 0], sizes = [8, 256], strides = [1, 1]} : vector<24x256xbf16> to vector<8x256xbf16>
    %cst_130 = arith.constant dense<0.000000e+00> : vector<8x256xf32>
    %169 = tpu.matmul %168, %167, %cst_130 {dimension_numbers = #tpu.dot_dimension_numbers<[1], [0], [0], [1], [0, 0, 1, 1], [], []>} : vector<8x256xbf16>, vector<256x256xbf16>, vector<8x256xf32> -> vector<8x256xf32>
    %170 = arith.addf %165, %169 : vector<8x256xf32>
    %cst_131 = arith.constant 0.000000e+00 : f32
    %171 = vector.broadcast %cst_131 : f32 to vector<8x256xf32>
    %172 = arith.maximumf %170, %171 : vector<8x256xf32>
    %c10_i32_132 = arith.constant 10 : i32
    %173 = tpu.memref_slice %arg29[%c10_i32_132] : memref<20x!tpu.dma_semaphore, #tpu.memory_space<semaphore_mem>> -> memref<1x!tpu.dma_semaphore, #tpu.memory_space<semaphore_mem>>
    %174 = tpu.memref_squeeze %173 : memref<1x!tpu.dma_semaphore, #tpu.memory_space<semaphore_mem>> -> memref<!tpu.dma_semaphore, #tpu.memory_space<semaphore_mem>>
    tpu.wait_dma2 semaphore(%174 : memref<!tpu.dma_semaphore, #tpu.memory_space<semaphore_mem>>) src(%arg12 : memref<24x8xf32, #tpu.memory_space<any>>) dst(%arg26 : memref<24x8xf32, #tpu.memory_space<vmem>>)
    %c11_i32_133 = arith.constant 11 : i32
    %c0_i32_134 = arith.constant 0 : i32
    %c0_i32_135 = arith.constant 0 : i32
    %c0_i32_136 = arith.constant 0 : i32
    %175 = tpu.memref_slice %arg13[%c0_i32_134, %c0_i32_135, %c0_i32_136] : memref<24x256x256xbf16, #tpu.memory_space<any>> -> memref<3x256x256xbf16, #tpu.memory_space<any>>
    %c0_i32_137 = arith.constant 0 : i32
    %c0_i32_138 = arith.constant 0 : i32
    %c0_i32_139 = arith.constant 0 : i32
    %176 = tpu.memref_slice %arg27[%c0_i32_137, %c0_i32_138, %c0_i32_139] : memref<24x256x256xbf16, #tpu.memory_space<vmem>> -> memref<3x256x256xbf16, #tpu.memory_space<vmem>>
    %177 = tpu.memref_slice %arg29[%c11_i32_133] : memref<20x!tpu.dma_semaphore, #tpu.memory_space<semaphore_mem>> -> memref<1x!tpu.dma_semaphore, #tpu.memory_space<semaphore_mem>>
    %178 = tpu.memref_squeeze %177 : memref<1x!tpu.dma_semaphore, #tpu.memory_space<semaphore_mem>> -> memref<!tpu.dma_semaphore, #tpu.memory_space<semaphore_mem>>
    tpu.wait_dma2 semaphore(%178 : memref<!tpu.dma_semaphore, #tpu.memory_space<semaphore_mem>>) src(%175 : memref<3x256x256xbf16, #tpu.memory_space<any>>) dst(%176 : memref<3x256x256xbf16, #tpu.memory_space<vmem>>)
    %c5 = arith.constant 5 : index
    %c0_140 = arith.constant 0 : index
    %179 = vector.load %arg16[%c5, %c0_140] : memref<16x512xf32, #tpu.memory_space<vmem>>, vector<1x256xf32>
    %c0_141 = arith.constant 0 : index
    %c0_142 = arith.constant 0 : index
    %180 = vector.load %arg26[%c0_141, %c0_142] : memref<24x8xf32, #tpu.memory_space<vmem>>, vector<24x8xf32>
    %cst_143 = arith.constant dense<0.000000e+00> : vector<24x256xf32>
    %181 = tpu.matmul %180, %172, %cst_143 {dimension_numbers = #tpu.dot_dimension_numbers<[1], [0], [0], [1], [0, 0, 1, 1], [], []>} : vector<24x8xf32>, vector<8x256xf32>, vector<24x256xf32> -> vector<24x256xf32>
    %182 = arith.truncf %181 : vector<24x256xf32> to vector<24x256xbf16>
    %c0_144 = arith.constant 0 : index
    %c0_145 = arith.constant 0 : index
    %c0_146 = arith.constant 0 : index
    %183 = vector.load %arg27[%c0_144, %c0_145, %c0_146] : memref<24x256x256xbf16, #tpu.memory_space<vmem>>, vector<1x256x256xbf16>
    %184 = vector.shape_cast %183 : vector<1x256x256xbf16> to vector<256x256xbf16>
    %185 = vector.extract_strided_slice %182 {offsets = [0, 0], sizes = [8, 256], strides = [1, 1]} : vector<24x256xbf16> to vector<8x256xbf16>
    %cst_147 = arith.constant dense<0.000000e+00> : vector<8x256xf32>
    %186 = tpu.matmul %185, %184, %cst_147 {dimension_numbers = #tpu.dot_dimension_numbers<[1], [0], [0], [1], [0, 0, 1, 1], [], []>} : vector<8x256xbf16>, vector<256x256xbf16>, vector<8x256xf32> -> vector<8x256xf32>
    %187 = vector.broadcast %179 : vector<1x256xf32> to vector<8x256xf32>
    %188 = arith.addf %187, %186 : vector<8x256xf32>
    %c1_148 = arith.constant 1 : index
    %c0_149 = arith.constant 0 : index
    %c0_150 = arith.constant 0 : index
    %189 = vector.load %arg27[%c1_148, %c0_149, %c0_150] : memref<24x256x256xbf16, #tpu.memory_space<vmem>>, vector<1x256x256xbf16>
    %190 = vector.shape_cast %189 : vector<1x256x256xbf16> to vector<256x256xbf16>
    %191 = vector.extract_strided_slice %182 {offsets = [8, 0], sizes = [8, 256], strides = [1, 1]} : vector<24x256xbf16> to vector<8x256xbf16>
    %cst_151 = arith.constant dense<0.000000e+00> : vector<8x256xf32>
    %192 = tpu.matmul %191, %190, %cst_151 {dimension_numbers = #tpu.dot_dimension_numbers<[1], [0], [0], [1], [0, 0, 1, 1], [], []>} : vector<8x256xbf16>, vector<256x256xbf16>, vector<8x256xf32> -> vector<8x256xf32>
    %193 = arith.addf %188, %192 : vector<8x256xf32>
    %c2_152 = arith.constant 2 : index
    %c0_153 = arith.constant 0 : index
    %c0_154 = arith.constant 0 : index
    %194 = vector.load %arg27[%c2_152, %c0_153, %c0_154] : memref<24x256x256xbf16, #tpu.memory_space<vmem>>, vector<1x256x256xbf16>
    %195 = vector.shape_cast %194 : vector<1x256x256xbf16> to vector<256x256xbf16>
    %196 = vector.extract_strided_slice %182 {offsets = [16, 0], sizes = [8, 256], strides = [1, 1]} : vector<24x256xbf16> to vector<8x256xbf16>
    %cst_155 = arith.constant dense<0.000000e+00> : vector<8x256xf32>
    %197 = tpu.matmul %196, %195, %cst_155 {dimension_numbers = #tpu.dot_dimension_numbers<[1], [0], [0], [1], [0, 0, 1, 1], [], []>} : vector<8x256xbf16>, vector<256x256xbf16>, vector<8x256xf32> -> vector<8x256xf32>
    %198 = arith.addf %193, %197 : vector<8x256xf32>
    %cst_156 = arith.constant 0.000000e+00 : f32
    %199 = vector.broadcast %cst_156 : f32 to vector<8x256xf32>
    %200 = arith.maximumf %198, %199 : vector<8x256xf32>
    %c12_i32_157 = arith.constant 12 : i32
    %c3_i32_158 = arith.constant 3 : i32
    %c0_i32_159 = arith.constant 0 : i32
    %c0_i32_160 = arith.constant 0 : i32
    %201 = tpu.memref_slice %arg13[%c3_i32_158, %c0_i32_159, %c0_i32_160] : memref<24x256x256xbf16, #tpu.memory_space<any>> -> memref<3x256x256xbf16, #tpu.memory_space<any>>
    %c3_i32_161 = arith.constant 3 : i32
    %c0_i32_162 = arith.constant 0 : i32
    %c0_i32_163 = arith.constant 0 : i32
    %202 = tpu.memref_slice %arg27[%c3_i32_161, %c0_i32_162, %c0_i32_163] : memref<24x256x256xbf16, #tpu.memory_space<vmem>> -> memref<3x256x256xbf16, #tpu.memory_space<vmem>>
    %203 = tpu.memref_slice %arg29[%c12_i32_157] : memref<20x!tpu.dma_semaphore, #tpu.memory_space<semaphore_mem>> -> memref<1x!tpu.dma_semaphore, #tpu.memory_space<semaphore_mem>>
    %204 = tpu.memref_squeeze %203 : memref<1x!tpu.dma_semaphore, #tpu.memory_space<semaphore_mem>> -> memref<!tpu.dma_semaphore, #tpu.memory_space<semaphore_mem>>
    tpu.wait_dma2 semaphore(%204 : memref<!tpu.dma_semaphore, #tpu.memory_space<semaphore_mem>>) src(%201 : memref<3x256x256xbf16, #tpu.memory_space<any>>) dst(%202 : memref<3x256x256xbf16, #tpu.memory_space<vmem>>)
    %c6 = arith.constant 6 : index
    %c0_164 = arith.constant 0 : index
    %205 = vector.load %arg16[%c6, %c0_164] : memref<16x512xf32, #tpu.memory_space<vmem>>, vector<1x256xf32>
    %c0_165 = arith.constant 0 : index
    %c0_166 = arith.constant 0 : index
    %206 = vector.load %arg26[%c0_165, %c0_166] : memref<24x8xf32, #tpu.memory_space<vmem>>, vector<24x8xf32>
    %cst_167 = arith.constant dense<0.000000e+00> : vector<24x256xf32>
    %207 = tpu.matmul %206, %200, %cst_167 {dimension_numbers = #tpu.dot_dimension_numbers<[1], [0], [0], [1], [0, 0, 1, 1], [], []>} : vector<24x8xf32>, vector<8x256xf32>, vector<24x256xf32> -> vector<24x256xf32>
    %208 = arith.truncf %207 : vector<24x256xf32> to vector<24x256xbf16>
    %c3_168 = arith.constant 3 : index
    %c0_169 = arith.constant 0 : index
    %c0_170 = arith.constant 0 : index
    %209 = vector.load %arg27[%c3_168, %c0_169, %c0_170] : memref<24x256x256xbf16, #tpu.memory_space<vmem>>, vector<1x256x256xbf16>
    %210 = vector.shape_cast %209 : vector<1x256x256xbf16> to vector<256x256xbf16>
    %211 = vector.extract_strided_slice %208 {offsets = [0, 0], sizes = [8, 256], strides = [1, 1]} : vector<24x256xbf16> to vector<8x256xbf16>
    %cst_171 = arith.constant dense<0.000000e+00> : vector<8x256xf32>
    %212 = tpu.matmul %211, %210, %cst_171 {dimension_numbers = #tpu.dot_dimension_numbers<[1], [0], [0], [1], [0, 0, 1, 1], [], []>} : vector<8x256xbf16>, vector<256x256xbf16>, vector<8x256xf32> -> vector<8x256xf32>
    %213 = vector.broadcast %205 : vector<1x256xf32> to vector<8x256xf32>
    %214 = arith.addf %213, %212 : vector<8x256xf32>
    %c4_172 = arith.constant 4 : index
    %c0_173 = arith.constant 0 : index
    %c0_174 = arith.constant 0 : index
    %215 = vector.load %arg27[%c4_172, %c0_173, %c0_174] : memref<24x256x256xbf16, #tpu.memory_space<vmem>>, vector<1x256x256xbf16>
    %216 = vector.shape_cast %215 : vector<1x256x256xbf16> to vector<256x256xbf16>
    %217 = vector.extract_strided_slice %208 {offsets = [8, 0], sizes = [8, 256], strides = [1, 1]} : vector<24x256xbf16> to vector<8x256xbf16>
    %cst_175 = arith.constant dense<0.000000e+00> : vector<8x256xf32>
    %218 = tpu.matmul %217, %216, %cst_175 {dimension_numbers = #tpu.dot_dimension_numbers<[1], [0], [0], [1], [0, 0, 1, 1], [], []>} : vector<8x256xbf16>, vector<256x256xbf16>, vector<8x256xf32> -> vector<8x256xf32>
    %219 = arith.addf %214, %218 : vector<8x256xf32>
    %c5_176 = arith.constant 5 : index
    %c0_177 = arith.constant 0 : index
    %c0_178 = arith.constant 0 : index
    %220 = vector.load %arg27[%c5_176, %c0_177, %c0_178] : memref<24x256x256xbf16, #tpu.memory_space<vmem>>, vector<1x256x256xbf16>
    %221 = vector.shape_cast %220 : vector<1x256x256xbf16> to vector<256x256xbf16>
    %222 = vector.extract_strided_slice %208 {offsets = [16, 0], sizes = [8, 256], strides = [1, 1]} : vector<24x256xbf16> to vector<8x256xbf16>
    %cst_179 = arith.constant dense<0.000000e+00> : vector<8x256xf32>
    %223 = tpu.matmul %222, %221, %cst_179 {dimension_numbers = #tpu.dot_dimension_numbers<[1], [0], [0], [1], [0, 0, 1, 1], [], []>} : vector<8x256xbf16>, vector<256x256xbf16>, vector<8x256xf32> -> vector<8x256xf32>
    %224 = arith.addf %219, %223 : vector<8x256xf32>
    %cst_180 = arith.constant 0.000000e+00 : f32
    %225 = vector.broadcast %cst_180 : f32 to vector<8x256xf32>
    %226 = arith.maximumf %224, %225 : vector<8x256xf32>
    %c13_i32_181 = arith.constant 13 : i32
    %c6_i32_182 = arith.constant 6 : i32
    %c0_i32_183 = arith.constant 0 : i32
    %c0_i32_184 = arith.constant 0 : i32
    %227 = tpu.memref_slice %arg13[%c6_i32_182, %c0_i32_183, %c0_i32_184] : memref<24x256x256xbf16, #tpu.memory_space<any>> -> memref<3x256x256xbf16, #tpu.memory_space<any>>
    %c6_i32_185 = arith.constant 6 : i32
    %c0_i32_186 = arith.constant 0 : i32
    %c0_i32_187 = arith.constant 0 : i32
    %228 = tpu.memref_slice %arg27[%c6_i32_185, %c0_i32_186, %c0_i32_187] : memref<24x256x256xbf16, #tpu.memory_space<vmem>> -> memref<3x256x256xbf16, #tpu.memory_space<vmem>>
    %229 = tpu.memref_slice %arg29[%c13_i32_181] : memref<20x!tpu.dma_semaphore, #tpu.memory_space<semaphore_mem>> -> memref<1x!tpu.dma_semaphore, #tpu.memory_space<semaphore_mem>>
    %230 = tpu.memref_squeeze %229 : memref<1x!tpu.dma_semaphore, #tpu.memory_space<semaphore_mem>> -> memref<!tpu.dma_semaphore, #tpu.memory_space<semaphore_mem>>
    tpu.wait_dma2 semaphore(%230 : memref<!tpu.dma_semaphore, #tpu.memory_space<semaphore_mem>>) src(%227 : memref<3x256x256xbf16, #tpu.memory_space<any>>) dst(%228 : memref<3x256x256xbf16, #tpu.memory_space<vmem>>)
    %c7 = arith.constant 7 : index
    %c0_188 = arith.constant 0 : index
    %231 = vector.load %arg16[%c7, %c0_188] : memref<16x512xf32, #tpu.memory_space<vmem>>, vector<1x256xf32>
    %c0_189 = arith.constant 0 : index
    %c0_190 = arith.constant 0 : index
    %232 = vector.load %arg26[%c0_189, %c0_190] : memref<24x8xf32, #tpu.memory_space<vmem>>, vector<24x8xf32>
    %cst_191 = arith.constant dense<0.000000e+00> : vector<24x256xf32>
    %233 = tpu.matmul %232, %226, %cst_191 {dimension_numbers = #tpu.dot_dimension_numbers<[1], [0], [0], [1], [0, 0, 1, 1], [], []>} : vector<24x8xf32>, vector<8x256xf32>, vector<24x256xf32> -> vector<24x256xf32>
    %234 = arith.truncf %233 : vector<24x256xf32> to vector<24x256xbf16>
    %c6_192 = arith.constant 6 : index
    %c0_193 = arith.constant 0 : index
    %c0_194 = arith.constant 0 : index
    %235 = vector.load %arg27[%c6_192, %c0_193, %c0_194] : memref<24x256x256xbf16, #tpu.memory_space<vmem>>, vector<1x256x256xbf16>
    %236 = vector.shape_cast %235 : vector<1x256x256xbf16> to vector<256x256xbf16>
    %237 = vector.extract_strided_slice %234 {offsets = [0, 0], sizes = [8, 256], strides = [1, 1]} : vector<24x256xbf16> to vector<8x256xbf16>
    %cst_195 = arith.constant dense<0.000000e+00> : vector<8x256xf32>
    %238 = tpu.matmul %237, %236, %cst_195 {dimension_numbers = #tpu.dot_dimension_numbers<[1], [0], [0], [1], [0, 0, 1, 1], [], []>} : vector<8x256xbf16>, vector<256x256xbf16>, vector<8x256xf32> -> vector<8x256xf32>
    %239 = vector.broadcast %231 : vector<1x256xf32> to vector<8x256xf32>
    %240 = arith.addf %239, %238 : vector<8x256xf32>
    %c7_196 = arith.constant 7 : index
    %c0_197 = arith.constant 0 : index
    %c0_198 = arith.constant 0 : index
    %241 = vector.load %arg27[%c7_196, %c0_197, %c0_198] : memref<24x256x256xbf16, #tpu.memory_space<vmem>>, vector<1x256x256xbf16>
    %242 = vector.shape_cast %241 : vector<1x256x256xbf16> to vector<256x256xbf16>
    %243 = vector.extract_strided_slice %234 {offsets = [8, 0], sizes = [8, 256], strides = [1, 1]} : vector<24x256xbf16> to vector<8x256xbf16>
    %cst_199 = arith.constant dense<0.000000e+00> : vector<8x256xf32>
    %244 = tpu.matmul %243, %242, %cst_199 {dimension_numbers = #tpu.dot_dimension_numbers<[1], [0], [0], [1], [0, 0, 1, 1], [], []>} : vector<8x256xbf16>, vector<256x256xbf16>, vector<8x256xf32> -> vector<8x256xf32>
    %245 = arith.addf %240, %244 : vector<8x256xf32>
    %c8 = arith.constant 8 : index
    %c0_200 = arith.constant 0 : index
    %c0_201 = arith.constant 0 : index
    %246 = vector.load %arg27[%c8, %c0_200, %c0_201] : memref<24x256x256xbf16, #tpu.memory_space<vmem>>, vector<1x256x256xbf16>
    %247 = vector.shape_cast %246 : vector<1x256x256xbf16> to vector<256x256xbf16>
    %248 = vector.extract_strided_slice %234 {offsets = [16, 0], sizes = [8, 256], strides = [1, 1]} : vector<24x256xbf16> to vector<8x256xbf16>
    %cst_202 = arith.constant dense<0.000000e+00> : vector<8x256xf32>
    %249 = tpu.matmul %248, %247, %cst_202 {dimension_numbers = #tpu.dot_dimension_numbers<[1], [0], [0], [1], [0, 0, 1, 1], [], []>} : vector<8x256xbf16>, vector<256x256xbf16>, vector<8x256xf32> -> vector<8x256xf32>
    %250 = arith.addf %245, %249 : vector<8x256xf32>
    %cst_203 = arith.constant 0.000000e+00 : f32
    %251 = vector.broadcast %cst_203 : f32 to vector<8x256xf32>
    %252 = arith.maximumf %250, %251 : vector<8x256xf32>
    %c14_i32_204 = arith.constant 14 : i32
    %c9_i32_205 = arith.constant 9 : i32
    %c0_i32_206 = arith.constant 0 : i32
    %c0_i32_207 = arith.constant 0 : i32
    %253 = tpu.memref_slice %arg13[%c9_i32_205, %c0_i32_206, %c0_i32_207] : memref<24x256x256xbf16, #tpu.memory_space<any>> -> memref<3x256x256xbf16, #tpu.memory_space<any>>
    %c9_i32_208 = arith.constant 9 : i32
    %c0_i32_209 = arith.constant 0 : i32
    %c0_i32_210 = arith.constant 0 : i32
    %254 = tpu.memref_slice %arg27[%c9_i32_208, %c0_i32_209, %c0_i32_210] : memref<24x256x256xbf16, #tpu.memory_space<vmem>> -> memref<3x256x256xbf16, #tpu.memory_space<vmem>>
    %255 = tpu.memref_slice %arg29[%c14_i32_204] : memref<20x!tpu.dma_semaphore, #tpu.memory_space<semaphore_mem>> -> memref<1x!tpu.dma_semaphore, #tpu.memory_space<semaphore_mem>>
    %256 = tpu.memref_squeeze %255 : memref<1x!tpu.dma_semaphore, #tpu.memory_space<semaphore_mem>> -> memref<!tpu.dma_semaphore, #tpu.memory_space<semaphore_mem>>
    tpu.wait_dma2 semaphore(%256 : memref<!tpu.dma_semaphore, #tpu.memory_space<semaphore_mem>>) src(%253 : memref<3x256x256xbf16, #tpu.memory_space<any>>) dst(%254 : memref<3x256x256xbf16, #tpu.memory_space<vmem>>)
    %c8_211 = arith.constant 8 : index
    %c0_212 = arith.constant 0 : index
    %257 = vector.load %arg16[%c8_211, %c0_212] : memref<16x512xf32, #tpu.memory_space<vmem>>, vector<1x256xf32>
    %c0_213 = arith.constant 0 : index
    %c0_214 = arith.constant 0 : index
    %258 = vector.load %arg26[%c0_213, %c0_214] : memref<24x8xf32, #tpu.memory_space<vmem>>, vector<24x8xf32>
    %cst_215 = arith.constant dense<0.000000e+00> : vector<24x256xf32>
    %259 = tpu.matmul %258, %252, %cst_215 {dimension_numbers = #tpu.dot_dimension_numbers<[1], [0], [0], [1], [0, 0, 1, 1], [], []>} : vector<24x8xf32>, vector<8x256xf32>, vector<24x256xf32> -> vector<24x256xf32>
    %260 = arith.truncf %259 : vector<24x256xf32> to vector<24x256xbf16>
    %c9 = arith.constant 9 : index
    %c0_216 = arith.constant 0 : index
    %c0_217 = arith.constant 0 : index
    %261 = vector.load %arg27[%c9, %c0_216, %c0_217] : memref<24x256x256xbf16, #tpu.memory_space<vmem>>, vector<1x256x256xbf16>
    %262 = vector.shape_cast %261 : vector<1x256x256xbf16> to vector<256x256xbf16>
    %263 = vector.extract_strided_slice %260 {offsets = [0, 0], sizes = [8, 256], strides = [1, 1]} : vector<24x256xbf16> to vector<8x256xbf16>
    %cst_218 = arith.constant dense<0.000000e+00> : vector<8x256xf32>
    %264 = tpu.matmul %263, %262, %cst_218 {dimension_numbers = #tpu.dot_dimension_numbers<[1], [0], [0], [1], [0, 0, 1, 1], [], []>} : vector<8x256xbf16>, vector<256x256xbf16>, vector<8x256xf32> -> vector<8x256xf32>
    %265 = vector.broadcast %257 : vector<1x256xf32> to vector<8x256xf32>
    %266 = arith.addf %265, %264 : vector<8x256xf32>
    %c10 = arith.constant 10 : index
    %c0_219 = arith.constant 0 : index
    %c0_220 = arith.constant 0 : index
    %267 = vector.load %arg27[%c10, %c0_219, %c0_220] : memref<24x256x256xbf16, #tpu.memory_space<vmem>>, vector<1x256x256xbf16>
    %268 = vector.shape_cast %267 : vector<1x256x256xbf16> to vector<256x256xbf16>
    %269 = vector.extract_strided_slice %260 {offsets = [8, 0], sizes = [8, 256], strides = [1, 1]} : vector<24x256xbf16> to vector<8x256xbf16>
    %cst_221 = arith.constant dense<0.000000e+00> : vector<8x256xf32>
    %270 = tpu.matmul %269, %268, %cst_221 {dimension_numbers = #tpu.dot_dimension_numbers<[1], [0], [0], [1], [0, 0, 1, 1], [], []>} : vector<8x256xbf16>, vector<256x256xbf16>, vector<8x256xf32> -> vector<8x256xf32>
    %271 = arith.addf %266, %270 : vector<8x256xf32>
    %c11 = arith.constant 11 : index
    %c0_222 = arith.constant 0 : index
    %c0_223 = arith.constant 0 : index
    %272 = vector.load %arg27[%c11, %c0_222, %c0_223] : memref<24x256x256xbf16, #tpu.memory_space<vmem>>, vector<1x256x256xbf16>
    %273 = vector.shape_cast %272 : vector<1x256x256xbf16> to vector<256x256xbf16>
    %274 = vector.extract_strided_slice %260 {offsets = [16, 0], sizes = [8, 256], strides = [1, 1]} : vector<24x256xbf16> to vector<8x256xbf16>
    %cst_224 = arith.constant dense<0.000000e+00> : vector<8x256xf32>
    %275 = tpu.matmul %274, %273, %cst_224 {dimension_numbers = #tpu.dot_dimension_numbers<[1], [0], [0], [1], [0, 0, 1, 1], [], []>} : vector<8x256xbf16>, vector<256x256xbf16>, vector<8x256xf32> -> vector<8x256xf32>
    %276 = arith.addf %271, %275 : vector<8x256xf32>
    %cst_225 = arith.constant 0.000000e+00 : f32
    %277 = vector.broadcast %cst_225 : f32 to vector<8x256xf32>
    %278 = arith.maximumf %276, %277 : vector<8x256xf32>
    %c15_i32_226 = arith.constant 15 : i32
    %c12_i32_227 = arith.constant 12 : i32
    %c0_i32_228 = arith.constant 0 : i32
    %c0_i32_229 = arith.constant 0 : i32
    %279 = tpu.memref_slice %arg13[%c12_i32_227, %c0_i32_228, %c0_i32_229] : memref<24x256x256xbf16, #tpu.memory_space<any>> -> memref<3x256x256xbf16, #tpu.memory_space<any>>
    %c12_i32_230 = arith.constant 12 : i32
    %c0_i32_231 = arith.constant 0 : i32
    %c0_i32_232 = arith.constant 0 : i32
    %280 = tpu.memref_slice %arg27[%c12_i32_230, %c0_i32_231, %c0_i32_232] : memref<24x256x256xbf16, #tpu.memory_space<vmem>> -> memref<3x256x256xbf16, #tpu.memory_space<vmem>>
    %281 = tpu.memref_slice %arg29[%c15_i32_226] : memref<20x!tpu.dma_semaphore, #tpu.memory_space<semaphore_mem>> -> memref<1x!tpu.dma_semaphore, #tpu.memory_space<semaphore_mem>>
    %282 = tpu.memref_squeeze %281 : memref<1x!tpu.dma_semaphore, #tpu.memory_space<semaphore_mem>> -> memref<!tpu.dma_semaphore, #tpu.memory_space<semaphore_mem>>
    tpu.wait_dma2 semaphore(%282 : memref<!tpu.dma_semaphore, #tpu.memory_space<semaphore_mem>>) src(%279 : memref<3x256x256xbf16, #tpu.memory_space<any>>) dst(%280 : memref<3x256x256xbf16, #tpu.memory_space<vmem>>)
    %c9_233 = arith.constant 9 : index
    %c0_234 = arith.constant 0 : index
    %283 = vector.load %arg16[%c9_233, %c0_234] : memref<16x512xf32, #tpu.memory_space<vmem>>, vector<1x256xf32>
    %c0_235 = arith.constant 0 : index
    %c0_236 = arith.constant 0 : index
    %284 = vector.load %arg26[%c0_235, %c0_236] : memref<24x8xf32, #tpu.memory_space<vmem>>, vector<24x8xf32>
    %cst_237 = arith.constant dense<0.000000e+00> : vector<24x256xf32>
    %285 = tpu.matmul %284, %278, %cst_237 {dimension_numbers = #tpu.dot_dimension_numbers<[1], [0], [0], [1], [0, 0, 1, 1], [], []>} : vector<24x8xf32>, vector<8x256xf32>, vector<24x256xf32> -> vector<24x256xf32>
    %286 = arith.truncf %285 : vector<24x256xf32> to vector<24x256xbf16>
    %c12 = arith.constant 12 : index
    %c0_238 = arith.constant 0 : index
    %c0_239 = arith.constant 0 : index
    %287 = vector.load %arg27[%c12, %c0_238, %c0_239] : memref<24x256x256xbf16, #tpu.memory_space<vmem>>, vector<1x256x256xbf16>
    %288 = vector.shape_cast %287 : vector<1x256x256xbf16> to vector<256x256xbf16>
    %289 = vector.extract_strided_slice %286 {offsets = [0, 0], sizes = [8, 256], strides = [1, 1]} : vector<24x256xbf16> to vector<8x256xbf16>
    %cst_240 = arith.constant dense<0.000000e+00> : vector<8x256xf32>
    %290 = tpu.matmul %289, %288, %cst_240 {dimension_numbers = #tpu.dot_dimension_numbers<[1], [0], [0], [1], [0, 0, 1, 1], [], []>} : vector<8x256xbf16>, vector<256x256xbf16>, vector<8x256xf32> -> vector<8x256xf32>
    %291 = vector.broadcast %283 : vector<1x256xf32> to vector<8x256xf32>
    %292 = arith.addf %291, %290 : vector<8x256xf32>
    %c13 = arith.constant 13 : index
    %c0_241 = arith.constant 0 : index
    %c0_242 = arith.constant 0 : index
    %293 = vector.load %arg27[%c13, %c0_241, %c0_242] : memref<24x256x256xbf16, #tpu.memory_space<vmem>>, vector<1x256x256xbf16>
    %294 = vector.shape_cast %293 : vector<1x256x256xbf16> to vector<256x256xbf16>
    %295 = vector.extract_strided_slice %286 {offsets = [8, 0], sizes = [8, 256], strides = [1, 1]} : vector<24x256xbf16> to vector<8x256xbf16>
    %cst_243 = arith.constant dense<0.000000e+00> : vector<8x256xf32>
    %296 = tpu.matmul %295, %294, %cst_243 {dimension_numbers = #tpu.dot_dimension_numbers<[1], [0], [0], [1], [0, 0, 1, 1], [], []>} : vector<8x256xbf16>, vector<256x256xbf16>, vector<8x256xf32> -> vector<8x256xf32>
    %297 = arith.addf %292, %296 : vector<8x256xf32>
    %c14 = arith.constant 14 : index
    %c0_244 = arith.constant 0 : index
    %c0_245 = arith.constant 0 : index
    %298 = vector.load %arg27[%c14, %c0_244, %c0_245] : memref<24x256x256xbf16, #tpu.memory_space<vmem>>, vector<1x256x256xbf16>
    %299 = vector.shape_cast %298 : vector<1x256x256xbf16> to vector<256x256xbf16>
    %300 = vector.extract_strided_slice %286 {offsets = [16, 0], sizes = [8, 256], strides = [1, 1]} : vector<24x256xbf16> to vector<8x256xbf16>
    %cst_246 = arith.constant dense<0.000000e+00> : vector<8x256xf32>
    %301 = tpu.matmul %300, %299, %cst_246 {dimension_numbers = #tpu.dot_dimension_numbers<[1], [0], [0], [1], [0, 0, 1, 1], [], []>} : vector<8x256xbf16>, vector<256x256xbf16>, vector<8x256xf32> -> vector<8x256xf32>
    %302 = arith.addf %297, %301 : vector<8x256xf32>
    %cst_247 = arith.constant 0.000000e+00 : f32
    %303 = vector.broadcast %cst_247 : f32 to vector<8x256xf32>
    %304 = arith.maximumf %302, %303 : vector<8x256xf32>
    %c16_i32_248 = arith.constant 16 : i32
    %c15_i32_249 = arith.constant 15 : i32
    %c0_i32_250 = arith.constant 0 : i32
    %c0_i32_251 = arith.constant 0 : i32
    %305 = tpu.memref_slice %arg13[%c15_i32_249, %c0_i32_250, %c0_i32_251] : memref<24x256x256xbf16, #tpu.memory_space<any>> -> memref<3x256x256xbf16, #tpu.memory_space<any>>
    %c15_i32_252 = arith.constant 15 : i32
    %c0_i32_253 = arith.constant 0 : i32
    %c0_i32_254 = arith.constant 0 : i32
    %306 = tpu.memref_slice %arg27[%c15_i32_252, %c0_i32_253, %c0_i32_254] : memref<24x256x256xbf16, #tpu.memory_space<vmem>> -> memref<3x256x256xbf16, #tpu.memory_space<vmem>>
    %307 = tpu.memref_slice %arg29[%c16_i32_248] : memref<20x!tpu.dma_semaphore, #tpu.memory_space<semaphore_mem>> -> memref<1x!tpu.dma_semaphore, #tpu.memory_space<semaphore_mem>>
    %308 = tpu.memref_squeeze %307 : memref<1x!tpu.dma_semaphore, #tpu.memory_space<semaphore_mem>> -> memref<!tpu.dma_semaphore, #tpu.memory_space<semaphore_mem>>
    tpu.wait_dma2 semaphore(%308 : memref<!tpu.dma_semaphore, #tpu.memory_space<semaphore_mem>>) src(%305 : memref<3x256x256xbf16, #tpu.memory_space<any>>) dst(%306 : memref<3x256x256xbf16, #tpu.memory_space<vmem>>)
    %c10_255 = arith.constant 10 : index
    %c0_256 = arith.constant 0 : index
    %309 = vector.load %arg16[%c10_255, %c0_256] : memref<16x512xf32, #tpu.memory_space<vmem>>, vector<1x256xf32>
    %c0_257 = arith.constant 0 : index
    %c0_258 = arith.constant 0 : index
    %310 = vector.load %arg26[%c0_257, %c0_258] : memref<24x8xf32, #tpu.memory_space<vmem>>, vector<24x8xf32>
    %cst_259 = arith.constant dense<0.000000e+00> : vector<24x256xf32>
    %311 = tpu.matmul %310, %304, %cst_259 {dimension_numbers = #tpu.dot_dimension_numbers<[1], [0], [0], [1], [0, 0, 1, 1], [], []>} : vector<24x8xf32>, vector<8x256xf32>, vector<24x256xf32> -> vector<24x256xf32>
    %312 = arith.truncf %311 : vector<24x256xf32> to vector<24x256xbf16>
    %c15 = arith.constant 15 : index
    %c0_260 = arith.constant 0 : index
    %c0_261 = arith.constant 0 : index
    %313 = vector.load %arg27[%c15, %c0_260, %c0_261] : memref<24x256x256xbf16, #tpu.memory_space<vmem>>, vector<1x256x256xbf16>
    %314 = vector.shape_cast %313 : vector<1x256x256xbf16> to vector<256x256xbf16>
    %315 = vector.extract_strided_slice %312 {offsets = [0, 0], sizes = [8, 256], strides = [1, 1]} : vector<24x256xbf16> to vector<8x256xbf16>
    %cst_262 = arith.constant dense<0.000000e+00> : vector<8x256xf32>
    %316 = tpu.matmul %315, %314, %cst_262 {dimension_numbers = #tpu.dot_dimension_numbers<[1], [0], [0], [1], [0, 0, 1, 1], [], []>} : vector<8x256xbf16>, vector<256x256xbf16>, vector<8x256xf32> -> vector<8x256xf32>
    %317 = vector.broadcast %309 : vector<1x256xf32> to vector<8x256xf32>
    %318 = arith.addf %317, %316 : vector<8x256xf32>
    %c16 = arith.constant 16 : index
    %c0_263 = arith.constant 0 : index
    %c0_264 = arith.constant 0 : index
    %319 = vector.load %arg27[%c16, %c0_263, %c0_264] : memref<24x256x256xbf16, #tpu.memory_space<vmem>>, vector<1x256x256xbf16>
    %320 = vector.shape_cast %319 : vector<1x256x256xbf16> to vector<256x256xbf16>
    %321 = vector.extract_strided_slice %312 {offsets = [8, 0], sizes = [8, 256], strides = [1, 1]} : vector<24x256xbf16> to vector<8x256xbf16>
    %cst_265 = arith.constant dense<0.000000e+00> : vector<8x256xf32>
    %322 = tpu.matmul %321, %320, %cst_265 {dimension_numbers = #tpu.dot_dimension_numbers<[1], [0], [0], [1], [0, 0, 1, 1], [], []>} : vector<8x256xbf16>, vector<256x256xbf16>, vector<8x256xf32> -> vector<8x256xf32>
    %323 = arith.addf %318, %322 : vector<8x256xf32>
    %c17 = arith.constant 17 : index
    %c0_266 = arith.constant 0 : index
    %c0_267 = arith.constant 0 : index
    %324 = vector.load %arg27[%c17, %c0_266, %c0_267] : memref<24x256x256xbf16, #tpu.memory_space<vmem>>, vector<1x256x256xbf16>
    %325 = vector.shape_cast %324 : vector<1x256x256xbf16> to vector<256x256xbf16>
    %326 = vector.extract_strided_slice %312 {offsets = [16, 0], sizes = [8, 256], strides = [1, 1]} : vector<24x256xbf16> to vector<8x256xbf16>
    %cst_268 = arith.constant dense<0.000000e+00> : vector<8x256xf32>
    %327 = tpu.matmul %326, %325, %cst_268 {dimension_numbers = #tpu.dot_dimension_numbers<[1], [0], [0], [1], [0, 0, 1, 1], [], []>} : vector<8x256xbf16>, vector<256x256xbf16>, vector<8x256xf32> -> vector<8x256xf32>
    %328 = arith.addf %323, %327 : vector<8x256xf32>
    %cst_269 = arith.constant 0.000000e+00 : f32
    %329 = vector.broadcast %cst_269 : f32 to vector<8x256xf32>
    %330 = arith.maximumf %328, %329 : vector<8x256xf32>
    %c17_i32_270 = arith.constant 17 : i32
    %c18_i32_271 = arith.constant 18 : i32
    %c0_i32_272 = arith.constant 0 : i32
    %c0_i32_273 = arith.constant 0 : i32
    %331 = tpu.memref_slice %arg13[%c18_i32_271, %c0_i32_272, %c0_i32_273] : memref<24x256x256xbf16, #tpu.memory_space<any>> -> memref<3x256x256xbf16, #tpu.memory_space<any>>
    %c18_i32_274 = arith.constant 18 : i32
    %c0_i32_275 = arith.constant 0 : i32
    %c0_i32_276 = arith.constant 0 : i32
    %332 = tpu.memref_slice %arg27[%c18_i32_274, %c0_i32_275, %c0_i32_276] : memref<24x256x256xbf16, #tpu.memory_space<vmem>> -> memref<3x256x256xbf16, #tpu.memory_space<vmem>>
    %333 = tpu.memref_slice %arg29[%c17_i32_270] : memref<20x!tpu.dma_semaphore, #tpu.memory_space<semaphore_mem>> -> memref<1x!tpu.dma_semaphore, #tpu.memory_space<semaphore_mem>>
    %334 = tpu.memref_squeeze %333 : memref<1x!tpu.dma_semaphore, #tpu.memory_space<semaphore_mem>> -> memref<!tpu.dma_semaphore, #tpu.memory_space<semaphore_mem>>
    tpu.wait_dma2 semaphore(%334 : memref<!tpu.dma_semaphore, #tpu.memory_space<semaphore_mem>>) src(%331 : memref<3x256x256xbf16, #tpu.memory_space<any>>) dst(%332 : memref<3x256x256xbf16, #tpu.memory_space<vmem>>)
    %c11_277 = arith.constant 11 : index
    %c0_278 = arith.constant 0 : index
    %335 = vector.load %arg16[%c11_277, %c0_278] : memref<16x512xf32, #tpu.memory_space<vmem>>, vector<1x256xf32>
    %c0_279 = arith.constant 0 : index
    %c0_280 = arith.constant 0 : index
    %336 = vector.load %arg26[%c0_279, %c0_280] : memref<24x8xf32, #tpu.memory_space<vmem>>, vector<24x8xf32>
    %cst_281 = arith.constant dense<0.000000e+00> : vector<24x256xf32>
    %337 = tpu.matmul %336, %330, %cst_281 {dimension_numbers = #tpu.dot_dimension_numbers<[1], [0], [0], [1], [0, 0, 1, 1], [], []>} : vector<24x8xf32>, vector<8x256xf32>, vector<24x256xf32> -> vector<24x256xf32>
    %338 = arith.truncf %337 : vector<24x256xf32> to vector<24x256xbf16>
    %c18 = arith.constant 18 : index
    %c0_282 = arith.constant 0 : index
    %c0_283 = arith.constant 0 : index
    %339 = vector.load %arg27[%c18, %c0_282, %c0_283] : memref<24x256x256xbf16, #tpu.memory_space<vmem>>, vector<1x256x256xbf16>
    %340 = vector.shape_cast %339 : vector<1x256x256xbf16> to vector<256x256xbf16>
    %341 = vector.extract_strided_slice %338 {offsets = [0, 0], sizes = [8, 256], strides = [1, 1]} : vector<24x256xbf16> to vector<8x256xbf16>
    %cst_284 = arith.constant dense<0.000000e+00> : vector<8x256xf32>
    %342 = tpu.matmul %341, %340, %cst_284 {dimension_numbers = #tpu.dot_dimension_numbers<[1], [0], [0], [1], [0, 0, 1, 1], [], []>} : vector<8x256xbf16>, vector<256x256xbf16>, vector<8x256xf32> -> vector<8x256xf32>
    %343 = vector.broadcast %335 : vector<1x256xf32> to vector<8x256xf32>
    %344 = arith.addf %343, %342 : vector<8x256xf32>
    %c19 = arith.constant 19 : index
    %c0_285 = arith.constant 0 : index
    %c0_286 = arith.constant 0 : index
    %345 = vector.load %arg27[%c19, %c0_285, %c0_286] : memref<24x256x256xbf16, #tpu.memory_space<vmem>>, vector<1x256x256xbf16>
    %346 = vector.shape_cast %345 : vector<1x256x256xbf16> to vector<256x256xbf16>
    %347 = vector.extract_strided_slice %338 {offsets = [8, 0], sizes = [8, 256], strides = [1, 1]} : vector<24x256xbf16> to vector<8x256xbf16>
    %cst_287 = arith.constant dense<0.000000e+00> : vector<8x256xf32>
    %348 = tpu.matmul %347, %346, %cst_287 {dimension_numbers = #tpu.dot_dimension_numbers<[1], [0], [0], [1], [0, 0, 1, 1], [], []>} : vector<8x256xbf16>, vector<256x256xbf16>, vector<8x256xf32> -> vector<8x256xf32>
    %349 = arith.addf %344, %348 : vector<8x256xf32>
    %c20 = arith.constant 20 : index
    %c0_288 = arith.constant 0 : index
    %c0_289 = arith.constant 0 : index
    %350 = vector.load %arg27[%c20, %c0_288, %c0_289] : memref<24x256x256xbf16, #tpu.memory_space<vmem>>, vector<1x256x256xbf16>
    %351 = vector.shape_cast %350 : vector<1x256x256xbf16> to vector<256x256xbf16>
    %352 = vector.extract_strided_slice %338 {offsets = [16, 0], sizes = [8, 256], strides = [1, 1]} : vector<24x256xbf16> to vector<8x256xbf16>
    %cst_290 = arith.constant dense<0.000000e+00> : vector<8x256xf32>
    %353 = tpu.matmul %352, %351, %cst_290 {dimension_numbers = #tpu.dot_dimension_numbers<[1], [0], [0], [1], [0, 0, 1, 1], [], []>} : vector<8x256xbf16>, vector<256x256xbf16>, vector<8x256xf32> -> vector<8x256xf32>
    %354 = arith.addf %349, %353 : vector<8x256xf32>
    %cst_291 = arith.constant 0.000000e+00 : f32
    %355 = vector.broadcast %cst_291 : f32 to vector<8x256xf32>
    %356 = arith.maximumf %354, %355 : vector<8x256xf32>
    %c18_i32_292 = arith.constant 18 : i32
    %c21_i32_293 = arith.constant 21 : i32
    %c0_i32_294 = arith.constant 0 : i32
    %c0_i32_295 = arith.constant 0 : i32
    %357 = tpu.memref_slice %arg13[%c21_i32_293, %c0_i32_294, %c0_i32_295] : memref<24x256x256xbf16, #tpu.memory_space<any>> -> memref<3x256x256xbf16, #tpu.memory_space<any>>
    %c21_i32_296 = arith.constant 21 : i32
    %c0_i32_297 = arith.constant 0 : i32
    %c0_i32_298 = arith.constant 0 : i32
    %358 = tpu.memref_slice %arg27[%c21_i32_296, %c0_i32_297, %c0_i32_298] : memref<24x256x256xbf16, #tpu.memory_space<vmem>> -> memref<3x256x256xbf16, #tpu.memory_space<vmem>>
    %359 = tpu.memref_slice %arg29[%c18_i32_292] : memref<20x!tpu.dma_semaphore, #tpu.memory_space<semaphore_mem>> -> memref<1x!tpu.dma_semaphore, #tpu.memory_space<semaphore_mem>>
    %360 = tpu.memref_squeeze %359 : memref<1x!tpu.dma_semaphore, #tpu.memory_space<semaphore_mem>> -> memref<!tpu.dma_semaphore, #tpu.memory_space<semaphore_mem>>
    tpu.wait_dma2 semaphore(%360 : memref<!tpu.dma_semaphore, #tpu.memory_space<semaphore_mem>>) src(%357 : memref<3x256x256xbf16, #tpu.memory_space<any>>) dst(%358 : memref<3x256x256xbf16, #tpu.memory_space<vmem>>)
    %c12_299 = arith.constant 12 : index
    %c0_300 = arith.constant 0 : index
    %361 = vector.load %arg16[%c12_299, %c0_300] : memref<16x512xf32, #tpu.memory_space<vmem>>, vector<1x256xf32>
    %c0_301 = arith.constant 0 : index
    %c0_302 = arith.constant 0 : index
    %362 = vector.load %arg26[%c0_301, %c0_302] : memref<24x8xf32, #tpu.memory_space<vmem>>, vector<24x8xf32>
    %cst_303 = arith.constant dense<0.000000e+00> : vector<24x256xf32>
    %363 = tpu.matmul %362, %356, %cst_303 {dimension_numbers = #tpu.dot_dimension_numbers<[1], [0], [0], [1], [0, 0, 1, 1], [], []>} : vector<24x8xf32>, vector<8x256xf32>, vector<24x256xf32> -> vector<24x256xf32>
    %364 = arith.truncf %363 : vector<24x256xf32> to vector<24x256xbf16>
    %c21 = arith.constant 21 : index
    %c0_304 = arith.constant 0 : index
    %c0_305 = arith.constant 0 : index
    %365 = vector.load %arg27[%c21, %c0_304, %c0_305] : memref<24x256x256xbf16, #tpu.memory_space<vmem>>, vector<1x256x256xbf16>
    %366 = vector.shape_cast %365 : vector<1x256x256xbf16> to vector<256x256xbf16>
    %367 = vector.extract_strided_slice %364 {offsets = [0, 0], sizes = [8, 256], strides = [1, 1]} : vector<24x256xbf16> to vector<8x256xbf16>
    %cst_306 = arith.constant dense<0.000000e+00> : vector<8x256xf32>
    %368 = tpu.matmul %367, %366, %cst_306 {dimension_numbers = #tpu.dot_dimension_numbers<[1], [0], [0], [1], [0, 0, 1, 1], [], []>} : vector<8x256xbf16>, vector<256x256xbf16>, vector<8x256xf32> -> vector<8x256xf32>
    %369 = vector.broadcast %361 : vector<1x256xf32> to vector<8x256xf32>
    %370 = arith.addf %369, %368 : vector<8x256xf32>
    %c22 = arith.constant 22 : index
    %c0_307 = arith.constant 0 : index
    %c0_308 = arith.constant 0 : index
    %371 = vector.load %arg27[%c22, %c0_307, %c0_308] : memref<24x256x256xbf16, #tpu.memory_space<vmem>>, vector<1x256x256xbf16>
    %372 = vector.shape_cast %371 : vector<1x256x256xbf16> to vector<256x256xbf16>
    %373 = vector.extract_strided_slice %364 {offsets = [8, 0], sizes = [8, 256], strides = [1, 1]} : vector<24x256xbf16> to vector<8x256xbf16>
    %cst_309 = arith.constant dense<0.000000e+00> : vector<8x256xf32>
    %374 = tpu.matmul %373, %372, %cst_309 {dimension_numbers = #tpu.dot_dimension_numbers<[1], [0], [0], [1], [0, 0, 1, 1], [], []>} : vector<8x256xbf16>, vector<256x256xbf16>, vector<8x256xf32> -> vector<8x256xf32>
    %375 = arith.addf %370, %374 : vector<8x256xf32>
    %c23 = arith.constant 23 : index
    %c0_310 = arith.constant 0 : index
    %c0_311 = arith.constant 0 : index
    %376 = vector.load %arg27[%c23, %c0_310, %c0_311] : memref<24x256x256xbf16, #tpu.memory_space<vmem>>, vector<1x256x256xbf16>
    %377 = vector.shape_cast %376 : vector<1x256x256xbf16> to vector<256x256xbf16>
    %378 = vector.extract_strided_slice %364 {offsets = [16, 0], sizes = [8, 256], strides = [1, 1]} : vector<24x256xbf16> to vector<8x256xbf16>
    %cst_312 = arith.constant dense<0.000000e+00> : vector<8x256xf32>
    %379 = tpu.matmul %378, %377, %cst_312 {dimension_numbers = #tpu.dot_dimension_numbers<[1], [0], [0], [1], [0, 0, 1, 1], [], []>} : vector<8x256xbf16>, vector<256x256xbf16>, vector<8x256xf32> -> vector<8x256xf32>
    %380 = arith.addf %375, %379 : vector<8x256xf32>
    %cst_313 = arith.constant 0.000000e+00 : f32
    %381 = vector.broadcast %cst_313 : f32 to vector<8x256xf32>
    %382 = arith.maximumf %380, %381 : vector<8x256xf32>
    %c19_i32_314 = arith.constant 19 : i32
    %383 = tpu.memref_slice %arg29[%c19_i32_314] : memref<20x!tpu.dma_semaphore, #tpu.memory_space<semaphore_mem>> -> memref<1x!tpu.dma_semaphore, #tpu.memory_space<semaphore_mem>>
    %384 = tpu.memref_squeeze %383 : memref<1x!tpu.dma_semaphore, #tpu.memory_space<semaphore_mem>> -> memref<!tpu.dma_semaphore, #tpu.memory_space<semaphore_mem>>
    tpu.wait_dma2 semaphore(%384 : memref<!tpu.dma_semaphore, #tpu.memory_space<semaphore_mem>>) src(%arg14 : memref<256x4xf32, #tpu.memory_space<any>>) dst(%arg28 : memref<256x4xf32, #tpu.memory_space<vmem>>)
    %c13_315 = arith.constant 13 : index
    %c0_316 = arith.constant 0 : index
    %385 = vector.load %arg16[%c13_315, %c0_316] : memref<16x512xf32, #tpu.memory_space<vmem>>, vector<1x4xf32>
    %c0_317 = arith.constant 0 : index
    %c0_318 = arith.constant 0 : index
    %386 = vector.load %arg28[%c0_317, %c0_318] : memref<256x4xf32, #tpu.memory_space<vmem>>, vector<256x4xf32>
    %cst_319 = arith.constant dense<0.000000e+00> : vector<8x4xf32>
    %387 = tpu.matmul %382, %386, %cst_319 {dimension_numbers = #tpu.dot_dimension_numbers<[1], [0], [0], [1], [0, 0, 1, 1], [], []>} : vector<8x256xf32>, vector<256x4xf32>, vector<8x4xf32> -> vector<8x4xf32>
    %388 = vector.broadcast %385 : vector<1x4xf32> to vector<8x4xf32>
    %389 = arith.addf %387, %388 : vector<8x4xf32>
    %c0_320 = arith.constant 0 : index
    %c0_321 = arith.constant 0 : index
    %c0_322 = arith.constant 0 : index
    %390 = vector.load %arg15[%c0_320, %c0_321, %c0_322] : memref<1x8x4xf32, #tpu.memory_space<vmem>>, vector<1x8x4xf32>
    %391 = vector.shape_cast %390 : vector<1x8x4xf32> to vector<8x4xf32>
    %392 = vector.shape_cast %389 : vector<8x4xf32> to vector<1x8x4xf32>
    tpu.vector_store %arg15[%c0_320, %c0_321, %c0_322], %392 {strides = array<i32>} : memref<1x8x4xf32, #tpu.memory_space<vmem>>, vector<1x8x4xf32>,
    return
  }
  func.func @transform_0(%arg0: i32) -> (i32, i32, i32) {
    %c0_i32 = arith.constant 0 : i32
    %c0_i32_0 = arith.constant 0 : i32
    %c0_i32_1 = arith.constant 0 : i32
    return %arg0, %c0_i32, %c0_i32_0 : i32, i32, i32
  }
  func.func @transform_14(%arg0: i32) -> (i32, i32, i32) {
    %c0_i32 = arith.constant 0 : i32
    %c0_i32_0 = arith.constant 0 : i32
    %c0_i32_1 = arith.constant 0 : i32
    return %arg0, %c0_i32, %c0_i32_0 : i32, i32, i32
  }
}

</mosaic_0001>

<llo_original>
// kernel: _lambda_.1
$region0: #{_lambda_.1}
  #allocation0 [shape = 'u32[]', space=smem, size = 0x4, offset = 0x4, fixed_abs, tag = 'smem constant byte address 0x4 - core index']
  #allocation1 [shape = 'u32[144,128]{1,0:T(1,128)}', space=vmem, size = 0x12000, scoped, tag = 'internal scratch']
  #allocation2 [shape = 'f32[16,512]{1,0:T(8,128)}', space=vmem, size = 0x8000, scoped, tag = 'scratch operand']
  #allocation3 [shape = 'f32[48,512]{1,0:T(8,128)}', space=vmem, size = 0x18000, scoped, tag = 'scratch operand']
  #allocation4 [shape = 'f32[96,32]{1,0:T(8,128)}', space=vmem, size = 0xc000, scoped, tag = 'scratch operand']
  #allocation5 [shape = 'bf16[3,512,512]{2,1,0:T(16,128)(2,1)}', space=vmem, size = 0x180000, scoped, tag = 'scratch operand']
  #allocation6 [shape = 'f32[48,32]{1,0:T(8,128)}', space=vmem, size = 0x6000, scoped, tag = 'scratch operand']
  #allocation7 [shape = 'bf16[3,512,256]{2,1,0:T(16,128)(2,1)}', space=vmem, size = 0xc0000, scoped, tag = 'scratch operand']
  #allocation8 [shape = 'f32[48,16]{1,0:T(8,128)}', space=vmem, size = 0x6000, scoped, tag = 'scratch operand']
  #allocation9 [shape = 'bf16[3,256,256]{2,1,0:T(16,128)(2,1)}', space=vmem, size = 0x60000, scoped, tag = 'scratch operand']
  #allocation10 [shape = 'f32[24,16]{1,0:T(8,128)}', space=vmem, size = 0x3000, scoped, tag = 'scratch operand']
  #allocation11 [shape = 'bf16[3,256,256]{2,1,0:T(16,128)(2,1)}', space=vmem, size = 0x60000, scoped, tag = 'scratch operand']
  #allocation12 [shape = 'f32[24,8]{1,0:T(8,128)}', space=vmem, size = 0x3000, scoped, tag = 'scratch operand']
  #allocation13 [shape = 'bf16[24,256,256]{2,1,0:T(16,128)(2,1)}', space=vmem, size = 0x300000, scoped, tag = 'scratch operand']
  #allocation14 [shape = 'f32[256,4]{1,0:T(8,128)}', space=vmem, size = 0x20000, scoped, tag = 'scratch operand']
  #allocation15 [shape = 's32[20]{0}', space=sflag, size = 0x50, scoped, tag = 'scratch operand']
  #allocation18 [shape = 's32[]', space=sflag, size = 0x4, offset = 0, fixed_abs, tag = 'sflag constant byte address 0x0 - dummy sync flag']
  #allocation19 [shape = 's32[]', space=sflag, size = 0x4, offset = 0, fixed_abs, tag = 'sflag constant byte address 0x0 - dummy sync flag']
  #allocation20 [shape = 'u32[]', space=smem, size = 0x4, offset = 0x44, fixed_abs, tag = 'smem constant byte address 0x44 - assertion arg 0']
  #allocation21 [shape = 'u32[]', space=smem, size = 0x4, offset = 0x48, fixed_abs, tag = 'smem constant byte address 0x48 - assertion arg 1']
  #allocation22 [shape = 's32[]', space=sflag, size = 0x4, offset = 0, fixed_abs, tag = 'sflag constant byte address 0x0 - dummy sync flag']
  #allocation23 [shape = 's32[]', space=sflag, size = 0x4, offset = 0, fixed_abs, tag = 'sflag constant byte address 0x0 - dummy sync flag']
  #allocation24 [shape = 's32[]', space=sflag, size = 0x4, offset = 0, fixed_abs, tag = 'sflag constant byte address 0x0 - dummy sync flag']
  #allocation25 [shape = 's32[]', space=sflag, size = 0x4, offset = 0, fixed_abs, tag = 'sflag constant byte address 0x0 - dummy sync flag']
  #allocation27 [shape = 's32[]', space=sflag, size = 0x4, offset = 0, fixed_abs, tag = 'sflag constant byte address 0x0 - dummy sync flag']
  #allocation28 [shape = 's32[]', space=sflag, size = 0x4, offset = 0, fixed_abs, tag = 'sflag constant byte address 0x0 - dummy sync flag']
  #allocation30 [shape = 's32[]', space=sflag, size = 0x4, offset = 0, fixed_abs, tag = 'sflag constant byte address 0x0 - dummy sync flag']
  #allocation31 [shape = 's32[]', space=sflag, size = 0x4, offset = 0, fixed_abs, tag = 'sflag constant byte address 0x0 - dummy sync flag']
  #allocation33 [shape = 's32[]', space=sflag, size = 0x4, offset = 0, fixed_abs, tag = 'sflag constant byte address 0x0 - dummy sync flag']
  #allocation34 [shape = 's32[]', space=sflag, size = 0x4, offset = 0, fixed_abs, tag = 'sflag constant byte address 0x0 - dummy sync flag']
  #allocation36 [shape = 's32[]', space=sflag, size = 0x4, offset = 0, fixed_abs, tag = 'sflag constant byte address 0x0 - dummy sync flag']
  #allocation37 [shape = 's32[]', space=sflag, size = 0x4, offset = 0, fixed_abs, tag = 'sflag constant byte address 0x0 - dummy sync flag']
  #allocation39 [shape = 's32[]', space=sflag, size = 0x4, offset = 0, fixed_abs, tag = 'sflag constant byte address 0x0 - dummy sync flag']
  #allocation41 [shape = 's32[]', space=sflag, size = 0x4, offset = 0, fixed_abs, tag = 'sflag constant byte address 0x0 - dummy sync flag']
  #allocation43 [shape = 's32[]', space=sflag, size = 0x4, offset = 0, fixed_abs, tag = 'sflag constant byte address 0x0 - dummy sync flag']
  #allocation45 [shape = 's32[]', space=sflag, size = 0x4, offset = 0, fixed_abs, tag = 'sflag constant byte address 0x0 - dummy sync flag']
  #allocation47 [shape = 's32[]', space=sflag, size = 0x4, offset = 0, fixed_abs, tag = 'sflag constant byte address 0x0 - dummy sync flag']
  #allocation49 [shape = 's32[]', space=sflag, size = 0x4, offset = 0, fixed_abs, tag = 'sflag constant byte address 0x0 - dummy sync flag']
  #allocation51 [shape = 's32[]', space=sflag, size = 0x4, offset = 0, fixed_abs, tag = 'sflag constant byte address 0x0 - dummy sync flag']
  #allocation53 [shape = 's32[]', space=sflag, size = 0x4, offset = 0, fixed_abs, tag = 'sflag constant byte address 0x0 - dummy sync flag']
  %s0 = inlined_call_operand.vmem [shape: f32[1,32,48], index: 0, kind: input, shape index: {}]
  %s1 = inlined_call_operand.hbm [shape: f32[16,512], index: 1, kind: input, shape index: {}]
  %s2 = inlined_call_operand.hbm [shape: f32[48,512], index: 2, kind: input, shape index: {}]
  %s3 = inlined_call_operand.vmem [shape: f32[96,32], index: 3, kind: input, shape index: {}]
  %s4 = inlined_call_operand.hbm [shape: bf16[3,512,512], index: 4, kind: input, shape index: {}]
  %s5 = inlined_call_operand.vmem [shape: f32[48,32], index: 5, kind: input, shape index: {}]
  %s6 = inlined_call_operand.hbm [shape: bf16[3,512,256], index: 6, kind: input, shape index: {}]
  %s7 = inlined_call_operand.vmem [shape: f32[48,16], index: 7, kind: input, shape index: {}]
  %s8 = inlined_call_operand.hbm [shape: bf16[3,256,256], index: 8, kind: input, shape index: {}]
  %s9 = inlined_call_operand.vmem [shape: f32[24,16], index: 9, kind: input, shape index: {}]
  %s10 = inlined_call_operand.hbm [shape: bf16[3,256,256], index: 10, kind: input, shape index: {}]
  %s11 = inlined_call_operand.vmem [shape: f32[24,8], index: 11, kind: input, shape index: {}]
  %s12 = inlined_call_operand.hbm [shape: bf16[24,256,256], index: 12, kind: input, shape index: {}]
  %s13 = inlined_call_operand.vmem [shape: f32[256,4], index: 13, kind: input, shape index: {}]
  %s14 = inlined_call_operand.hbm [shape: f32[1,8,4], index: 14, kind: output, shape index: {}]
  %s15 = sld [smem:[#allocation0]]
  $region226: #{_lambda_.1} parent=0
    _
  %s17 = ssub.s32 1, %s15
  %s18 = scalar_select 0, %s17, %s15
  $region1: #{_lambda_.1} parent=0
    #allocation16 [shape = 'u8[4096]{0}', space=vmem, size = 0x1000, scoped, tag = 'output window, operand 0, single buffered']
    #allocation17 [shape = 's32[1]{0}', space=sflag, size = 0x4, scoped, tag = 'scoped memory for _lambda_.1']
    #allocation26 [shape = 'u32[9]{0}', space=smem, size = 0x24, scoped, tag = 'DMA stride descriptor']
    #allocation29 [shape = 'u32[9]{0}', space=smem, size = 0x24, scoped, tag = 'DMA stride descriptor']
    #allocation32 [shape = 'u32[9]{0}', space=smem, size = 0x24, scoped, tag = 'DMA stride descriptor']
    #allocation35 [shape = 'u32[9]{0}', space=smem, size = 0x24, scoped, tag = 'DMA stride descriptor']
    #allocation38 [shape = 'u32[9]{0}', space=smem, size = 0x24, scoped, tag = 'DMA stride descriptor']
    #allocation40 [shape = 'u32[9]{0}', space=smem, size = 0x24, scoped, tag = 'DMA stride descriptor']
    #allocation42 [shape = 'u32[9]{0}', space=smem, size = 0x24, scoped, tag = 'DMA stride descriptor']
    #allocation44 [shape = 'u32[9]{0}', space=smem, size = 0x24, scoped, tag = 'DMA stride descriptor']
    #allocation46 [shape = 'u32[9]{0}', space=smem, size = 0x24, scoped, tag = 'DMA stride descriptor']
    #allocation48 [shape = 'u32[9]{0}', space=smem, size = 0x24, scoped, tag = 'DMA stride descriptor']
    #allocation50 [shape = 'u32[9]{0}', space=smem, size = 0x24, scoped, tag = 'DMA stride descriptor']
    #allocation52 [shape = 'u32[9]{0}', space=smem, size = 0x24, scoped, tag = 'DMA stride descriptor']
    %19 = vsyncpa [#allocation17], 0
    // Predicated region
    $region2: #{_lambda_.1} parent=1 // pred_check
      _
    $region3: #{_lambda_.1} parent=1 // pred_check_branch
      %21 = sbr.rel (0) target = $region5
    $region4: #{_lambda_.1} parent=1 // pred_region
      _
    $region5: #{_lambda_.1} parent=1 // pred_fallthru
      _
    // Predicated region
    $region6: #{_lambda_.1} parent=1 // pred_check
      _
    $region7: #{_lambda_.1} parent=1 // pred_check_branch
      %23 = sbr.rel target = $region9
    $region8: #{_lambda_.1} parent=1 // pred_region
      %24 = sst [smem:[#allocation20]] [#allocation19]
      %25 = sst [smem:[#allocation21]] [#allocation18]
    $region9: #{_lambda_.1} parent=1 // pred_fallthru
      _
    %27 = shalt.err (0)
    %s29 = sshll.u32 [#allocation2], 4
    %s30 = int_to_ptr.vmem [resolvable:$true] %s29
    %32 = dma.hbm_to_vmem [thread:$0]  %s1, 1024, %s30, [#allocation15]
    %s33 = scalar_lea.sflag [#allocation15], 1
    // Predicated region
    $region10: #{_lambda_.1} parent=1 // pred_check
      _
    $region11: #{_lambda_.1} parent=1 // pred_check_branch
      %35 = sbr.rel target = $region13
    $region12: #{_lambda_.1} parent=1 // pred_region
      %36 = sst [smem:[#allocation20]] [#allocation23]
      %37 = sst [smem:[#allocation21]] [#allocation22]
    $region13: #{_lambda_.1} parent=1 // pred_fallthru
      _
    %39 = shalt.err (0)
    %s41 = sshll.u32 [#allocation3], 4
    %s42 = int_to_ptr.vmem [resolvable:$true] %s41
    %44 = dma.hbm_to_vmem [thread:$0]  %s2, 3072, %s42, %s33
    %s45 = scalar_lea.sflag [#allocation15], 2
    %p47 = scmp.lt.u32.totalorder 96, 8
    %p48 = pneg %p47
    // Predicated region
    $region14: #{_lambda_.1} parent=1 // pred_check
      _
    $region15: #{_lambda_.1} parent=1 // pred_check_branch
      %50 = sbr.rel (%p47) target = $region17
    $region16: #{_lambda_.1} parent=1 // pred_region
      %s65 = sand.u32 96, 7
      %p66 = scmp.eq.s32.totalorder %s65, 0
      // Predicated region
      $region29: #{_lambda_.1} parent=16 // pred_check
        %p67 = pneg %p66
      $region30: #{_lambda_.1} parent=16 // pred_check_branch
        %69 = sbr.rel (%p67) target = $region32
      $region31: #{_lambda_.1} parent=16 // pred_region
        loop: start=0, step=1, limit=1
        $region33: #{_lambda_.1} parent=31 // loop_pre_header
          _
        $region34: #{_lambda_.1} parent=31 // loop_header
          %s71 = sphi 0, %s75
          %p72 = scmp.ge.s32.totalorder %s71, 1
          %s76 = sphi %s3, %s3
          %s77 = sphi [#allocation4], [#allocation4]
        $region35: #{_lambda_.1} parent=31 // loop_header_branch
          %74 = sbr.rel (%p72) target = $region39
        $region36: #{_lambda_.1} parent=31 // loop_body
          %v78 = vld [vmem:[%s76] sm:$0xff]
          %79 = vst [vmem:[%s77] sm:$0xff] %v78
          %v80 = vld [vmem:[%s76 + $0x8] sm:$0xff]
          %81 = vst [vmem:[%s77 + $0x8] sm:$0xff] %v80
          %v82 = vld [vmem:[%s76 + $0x10] sm:$0xff]
          %83 = vst [vmem:[%s77 + $0x10] sm:$0xff] %v82
          %v84 = vld [vmem:[%s76 + $0x18] sm:$0xff]
          %85 = vst [vmem:[%s77 + $0x18] sm:$0xff] %v84
          %v86 = vld [vmem:[%s76 + $0x20] sm:$0xff]
          %87 = vst [vmem:[%s77 + $0x20] sm:$0xff] %v86
          %v88 = vld [vmem:[%s76 + $0x28] sm:$0xff]
          %89 = vst [vmem:[%s77 + $0x28] sm:$0xff] %v88
          %v90 = vld [vmem:[%s76 + $0x30] sm:$0xff]
          %91 = vst [vmem:[%s77 + $0x30] sm:$0xff] %v90
          %v92 = vld [vmem:[%s76 + $0x38] sm:$0xff]
          %93 = vst [vmem:[%s77 + $0x38] sm:$0xff] %v92
          %v94 = vld [vmem:[%s76 + $0x40] sm:$0xff]
          %95 = vst [vmem:[%s77 + $0x40] sm:$0xff] %v94
          %v96 = vld [vmem:[%s76 + $0x48] sm:$0xff]
          %97 = vst [vmem:[%s77 + $0x48] sm:$0xff] %v96
          %v98 = vld [vmem:[%s76 + $0x50] sm:$0xff]
          %99 = vst [vmem:[%s77 + $0x50] sm:$0xff] %v98
          %v100 = vld [vmem:[%s76 + $0x58] sm:$0xff]
          %101 = vst [vmem:[%s77 + $0x58] sm:$0xff] %v100
        $region37: #{_lambda_.1} parent=31 // loop_footer
          %s75 = sadd.s32 1, %s71
        $region38: #{_lambda_.1} parent=31 // loop_footer_branch
          %70 = sbr.rel target = $region34
        $region39: #{_lambda_.1} parent=31 // loop_exit
          _
      $region32: #{_lambda_.1} parent=16 // pred_fallthru
        _
      %p102 = pneg %p66
      // Predicated region
      $region40: #{_lambda_.1} parent=16 // pred_check
        _
      $region41: #{_lambda_.1} parent=16 // pred_check_branch
        %104 = sbr.rel (%p66) target = $region43
      $region42: #{_lambda_.1} parent=16 // pred_region
        %s105 = sand.u32 96, 7
      $region43: #{_lambda_.1} parent=16 // pred_fallthru
        _
    $region17: #{_lambda_.1} parent=1 // pred_fallthru
      _
    // Predicated region
    $region18: #{_lambda_.1} parent=1 // pred_check
      %p51 = pneg %p47
    $region19: #{_lambda_.1} parent=1 // pred_check_branch
      %53 = sbr.rel (%p51) target = $region21
    $region20: #{_lambda_.1} parent=1 // pred_region
      %s54 = sshllo.u32 0, 96
      loop: start=0, step=1, limit=1
      $region22: #{_lambda_.1} parent=20 // loop_pre_header
        _
      $region23: #{_lambda_.1} parent=20 // loop_header
        %s56 = sphi 0, %s60
        %p57 = scmp.ge.s32.totalorder %s56, 1
        %s61 = sphi %s3, %s3
        %s62 = sphi [#allocation4], [#allocation4]
      $region24: #{_lambda_.1} parent=20 // loop_header_branch
        %59 = sbr.rel (%p57) target = $region28
      $region25: #{_lambda_.1} parent=20 // loop_body
        %v63 = vld [vmem:[%s61] sm:%s54]
        %64 = vst [vmem:[%s62] sm:%s54] %v63
      $region26: #{_lambda_.1} parent=20 // loop_footer
        %s60 = sadd.s32 1, %s56
      $region27: #{_lambda_.1} parent=20 // loop_footer_branch
        %55 = sbr.rel target = $region23
      $region28: #{_lambda_.1} parent=20 // loop_exit
        _
    $region21: #{_lambda_.1} parent=1 // pred_fallthru
      _
    // Predicated region
    $region44: #{_lambda_.1} parent=1 // pred_check
      _
    $region45: #{_lambda_.1} parent=1 // pred_check_branch
      %108 = sbr.rel (0) target = $region47
    $region46: #{_lambda_.1} parent=1 // pred_region
      %109 = vsyncadd %s45, 1536
    $region47: #{_lambda_.1} parent=1 // pred_fallthru
      _
    %s110 = scalar_lea.sflag [#allocation15], 3
    %s112 = sshll.u32 1, 14
    %s113 = sxor.u32 4294967295, %s112
    %s115 = sld [smem:[#allocation0]]
    %s116 = sadd.s32 2, %s115
    %s118 = sshll.u32 7, 26
    %s119 = sxor.u32 4294967295, %s118
    %s120 = sand.u32 0, %s119
    %s121 = sshll.u32 %s116, 26
    %s122 = sor.u32 %s120, %s121
    %s123 = sshll.u32 [#allocation5], 4
    %s124 = int_to_ptr.vmem [resolvable:$true] %s123
    %127 = sst [smem:[#allocation26]] 512
    %s128 = scalar_lea.smem [#allocation26], 1
    %129 = sst [smem:[%s128]] 512
    %s130 = scalar_lea.smem [#allocation26], 2
    %131 = sst [smem:[%s130]] 4
    %s132 = scalar_lea.smem [#allocation26], 3
    %133 = sst [smem:[%s132]] 64
    %s134 = scalar_lea.smem [#allocation26], 4
    %135 = sst [smem:[%s134]] 128
    %s136 = scalar_lea.smem [#allocation26], 5
    %137 = sst [smem:[%s136]] 2
    %s138 = scalar_lea.smem [#allocation26], 6
    %139 = sst [smem:[%s138]] 256
    %s140 = scalar_lea.smem [#allocation26], 7
    %141 = sst [smem:[%s140]] 64
    %s142 = scalar_lea.smem [#allocation26], 8
    %143 = sst [smem:[%s142]] 4
    %145 = dma.general %s4, 49152, %s124, %s110, [#allocation25], [#allocation26], %s122, 0
    %s146 = scalar_lea.sflag [#allocation15], 4
    %p148 = scmp.lt.u32.totalorder 48, 8
    %p149 = pneg %p148
    // Predicated region
    $region48: #{_lambda_.1} parent=1 // pred_check
      _
    $region49: #{_lambda_.1} parent=1 // pred_check_branch
      %151 = sbr.rel (%p148) target = $region51
    $region50: #{_lambda_.1} parent=1 // pred_region
      %s166 = sand.u32 48, 7
      %p167 = scmp.eq.s32.totalorder %s166, 0
      // Predicated region
      $region63: #{_lambda_.1} parent=50 // pred_check
        %p168 = pneg %p167
      $region64: #{_lambda_.1} parent=50 // pred_check_branch
        %170 = sbr.rel (%p168) target = $region66
      $region65: #{_lambda_.1} parent=50 // pred_region
        loop: start=0, step=1, limit=1
        $region67: #{_lambda_.1} parent=65 // loop_pre_header
          _
        $region68: #{_lambda_.1} parent=65 // loop_header
          %s172 = sphi 0, %s176
          %p173 = scmp.ge.s32.totalorder %s172, 1
          %s177 = sphi %s5, %s5
          %s178 = sphi [#allocation6], [#allocation6]
        $region69: #{_lambda_.1} parent=65 // loop_header_branch
          %175 = sbr.rel (%p173) target = $region73
        $region70: #{_lambda_.1} parent=65 // loop_body
          %v179 = vld [vmem:[%s177] sm:$0xff]
          %180 = vst [vmem:[%s178] sm:$0xff] %v179
          %v181 = vld [vmem:[%s177 + $0x8] sm:$0xff]
          %182 = vst [vmem:[%s178 + $0x8] sm:$0xff] %v181
          %v183 = vld [vmem:[%s177 + $0x10] sm:$0xff]
          %184 = vst [vmem:[%s178 + $0x10] sm:$0xff] %v183
          %v185 = vld [vmem:[%s177 + $0x18] sm:$0xff]
          %186 = vst [vmem:[%s178 + $0x18] sm:$0xff] %v185
          %v187 = vld [vmem:[%s177 + $0x20] sm:$0xff]
          %188 = vst [vmem:[%s178 + $0x20] sm:$0xff] %v187
          %v189 = vld [vmem:[%s177 + $0x28] sm:$0xff]
          %190 = vst [vmem:[%s178 + $0x28] sm:$0xff] %v189
        $region71: #{_lambda_.1} parent=65 // loop_footer
          %s176 = sadd.s32 1, %s172
        $region72: #{_lambda_.1} parent=65 // loop_footer_branch
          %171 = sbr.rel target = $region68
        $region73: #{_lambda_.1} parent=65 // loop_exit
          _
      $region66: #{_lambda_.1} parent=50 // pred_fallthru
        _
      %p191 = pneg %p167
      // Predicated region
      $region74: #{_lambda_.1} parent=50 // pred_check
        _
      $region75: #{_lambda_.1} parent=50 // pred_check_branch
        %193 = sbr.rel (%p167) target = $region77
      $region76: #{_lambda_.1} parent=50 // pred_region
        %s194 = sand.u32 48, 7
      $region77: #{_lambda_.1} parent=50 // pred_fallthru
        _
    $region51: #{_lambda_.1} parent=1 // pred_fallthru
      _
    // Predicated region
    $region52: #{_lambda_.1} parent=1 // pred_check
      %p152 = pneg %p148
    $region53: #{_lambda_.1} parent=1 // pred_check_branch
      %154 = sbr.rel (%p152) target = $region55
    $region54: #{_lambda_.1} parent=1 // pred_region
      %s155 = sshllo.u32 0, 48
      loop: start=0, step=1, limit=1
      $region56: #{_lambda_.1} parent=54 // loop_pre_header
        _
      $region57: #{_lambda_.1} parent=54 // loop_header
        %s157 = sphi 0, %s161
        %p158 = scmp.ge.s32.totalorder %s157, 1
        %s162 = sphi %s5, %s5
        %s163 = sphi [#allocation6], [#allocation6]
      $region58: #{_lambda_.1} parent=54 // loop_header_branch
        %160 = sbr.rel (%p158) target = $region62
      $region59: #{_lambda_.1} parent=54 // loop_body
        %v164 = vld [vmem:[%s162] sm:%s155]
        %165 = vst [vmem:[%s163] sm:%s155] %v164
      $region60: #{_lambda_.1} parent=54 // loop_footer
        %s161 = sadd.s32 1, %s157
      $region61: #{_lambda_.1} parent=54 // loop_footer_branch
        %156 = sbr.rel target = $region57
      $region62: #{_lambda_.1} parent=54 // loop_exit
        _
    $region55: #{_lambda_.1} parent=1 // pred_fallthru
      _
    // Predicated region
    $region78: #{_lambda_.1} parent=1 // pred_check
      _
    $region79: #{_lambda_.1} parent=1 // pred_check_branch
      %197 = sbr.rel (0) target = $region81
    $region80: #{_lambda_.1} parent=1 // pred_region
      %198 = vsyncadd %s146, 768
    $region81: #{_lambda_.1} parent=1 // pred_fallthru
      _
    %s199 = scalar_lea.sflag [#allocation15], 5
    %s201 = sshll.u32 1, 14
    %s202 = sxor.u32 4294967295, %s201
    %s204 = sadd.s32 2, %s115
    %s206 = sshll.u32 7, 26
    %s207 = sxor.u32 4294967295, %s206
    %s208 = sand.u32 0, %s207
    %s209 = sshll.u32 %s204, 26
    %s210 = sor.u32 %s208, %s209
    %s211 = sshll.u32 [#allocation7], 4
    %s212 = int_to_ptr.vmem [resolvable:$true] %s211
    %215 = sst [smem:[#allocation29]] 256
    %s216 = scalar_lea.smem [#allocation29], 1
    %217 = sst [smem:[%s216]] 256
    %s218 = scalar_lea.smem [#allocation29], 2
    %219 = sst [smem:[%s218]] 2
    %s220 = scalar_lea.smem [#allocation29], 3
    %221 = sst [smem:[%s220]] 64
    %s222 = scalar_lea.smem [#allocation29], 4
    %223 = sst [smem:[%s222]] 128
    %s224 = scalar_lea.smem [#allocation29], 5
    %225 = sst [smem:[%s224]] 2
    %s226 = scalar_lea.smem [#allocation29], 6
    %227 = sst [smem:[%s226]] 128
    %s228 = scalar_lea.smem [#allocation29], 7
    %229 = sst [smem:[%s228]] 64
    %s230 = scalar_lea.smem [#allocation29], 8
    %231 = sst [smem:[%s230]] 4
    %233 = dma.general %s6, 24576, %s212, %s199, [#allocation28], [#allocation29], %s210, 0
    %s234 = scalar_lea.sflag [#allocation15], 6
    %p236 = scmp.lt.u32.totalorder 48, 8
    %p237 = pneg %p236
    // Predicated region
    $region82: #{_lambda_.1} parent=1 // pred_check
      _
    $region83: #{_lambda_.1} parent=1 // pred_check_branch
      %239 = sbr.rel (%p236) target = $region85
    $region84: #{_lambda_.1} parent=1 // pred_region
      %s254 = sand.u32 48, 7
      %p255 = scmp.eq.s32.totalorder %s254, 0
      // Predicated region
      $region97: #{_lambda_.1} parent=84 // pred_check
        %p256 = pneg %p255
      $region98: #{_lambda_.1} parent=84 // pred_check_branch
        %258 = sbr.rel (%p256) target = $region100
      $region99: #{_lambda_.1} parent=84 // pred_region
        loop: start=0, step=1, limit=1
        $region101: #{_lambda_.1} parent=99 // loop_pre_header
          _
        $region102: #{_lambda_.1} parent=99 // loop_header
          %s260 = sphi 0, %s264
          %p261 = scmp.ge.s32.totalorder %s260, 1
          %s265 = sphi %s7, %s7
          %s266 = sphi [#allocation8], [#allocation8]
        $region103: #{_lambda_.1} parent=99 // loop_header_branch
          %263 = sbr.rel (%p261) target = $region107
        $region104: #{_lambda_.1} parent=99 // loop_body
          %v267 = vld [vmem:[%s265] sm:$0xff]
          %268 = vst [vmem:[%s266] sm:$0xff] %v267
          %v269 = vld [vmem:[%s265 + $0x8] sm:$0xff]
          %270 = vst [vmem:[%s266 + $0x8] sm:$0xff] %v269
          %v271 = vld [vmem:[%s265 + $0x10] sm:$0xff]
          %272 = vst [vmem:[%s266 + $0x10] sm:$0xff] %v271
          %v273 = vld [vmem:[%s265 + $0x18] sm:$0xff]
          %274 = vst [vmem:[%s266 + $0x18] sm:$0xff] %v273
          %v275 = vld [vmem:[%s265 + $0x20] sm:$0xff]
          %276 = vst [vmem:[%s266 + $0x20] sm:$0xff] %v275
          %v277 = vld [vmem:[%s265 + $0x28] sm:$0xff]
          %278 = vst [vmem:[%s266 + $0x28] sm:$0xff] %v277
        $region105: #{_lambda_.1} parent=99 // loop_footer
          %s264 = sadd.s32 1, %s260
        $region106: #{_lambda_.1} parent=99 // loop_footer_branch
          %259 = sbr.rel target = $region102
        $region107: #{_lambda_.1} parent=99 // loop_exit
          _
      $region100: #{_lambda_.1} parent=84 // pred_fallthru
        _
      %p279 = pneg %p255
      // Predicated region
      $region108: #{_lambda_.1} parent=84 // pred_check
        _
      $region109: #{_lambda_.1} parent=84 // pred_check_branch
        %281 = sbr.rel (%p255) target = $region111
      $region110: #{_lambda_.1} parent=84 // pred_region
        %s282 = sand.u32 48, 7
      $region111: #{_lambda_.1} parent=84 // pred_fallthru
        _
    $region85: #{_lambda_.1} parent=1 // pred_fallthru
      _
    // Predicated region
    $region86: #{_lambda_.1} parent=1 // pred_check
      %p240 = pneg %p236
    $region87: #{_lambda_.1} parent=1 // pred_check_branch
      %242 = sbr.rel (%p240) target = $region89
    $region88: #{_lambda_.1} parent=1 // pred_region
      %s243 = sshllo.u32 0, 48
      loop: start=0, step=1, limit=1
      $region90: #{_lambda_.1} parent=88 // loop_pre_header
        _
      $region91: #{_lambda_.1} parent=88 // loop_header
        %s245 = sphi 0, %s249
        %p246 = scmp.ge.s32.totalorder %s245, 1
        %s250 = sphi %s7, %s7
        %s251 = sphi [#allocation8], [#allocation8]
      $region92: #{_lambda_.1} parent=88 // loop_header_branch
        %248 = sbr.rel (%p246) target = $region96
      $region93: #{_lambda_.1} parent=88 // loop_body
        %v252 = vld [vmem:[%s250] sm:%s243]
        %253 = vst [vmem:[%s251] sm:%s243] %v252
      $region94: #{_lambda_.1} parent=88 // loop_footer
        %s249 = sadd.s32 1, %s245
      $region95: #{_lambda_.1} parent=88 // loop_footer_branch
        %244 = sbr.rel target = $region91
      $region96: #{_lambda_.1} parent=88 // loop_exit
        _
    $region89: #{_lambda_.1} parent=1 // pred_fallthru
      _
    // Predicated region
    $region112: #{_lambda_.1} parent=1 // pred_check
      _
    $region113: #{_lambda_.1} parent=1 // pred_check_branch
      %285 = sbr.rel (0) target = $region115
    $region114: #{_lambda_.1} parent=1 // pred_region
      %286 = vsyncadd %s234, 768
    $region115: #{_lambda_.1} parent=1 // pred_fallthru
      _
    %s287 = scalar_lea.sflag [#allocation15], 7
    %s289 = sshll.u32 1, 14
    %s290 = sxor.u32 4294967295, %s289
    %s292 = sadd.s32 2, %s115
    %s294 = sshll.u32 7, 26
    %s295 = sxor.u32 4294967295, %s294
    %s296 = sand.u32 0, %s295
    %s297 = sshll.u32 %s292, 26
    %s298 = sor.u32 %s296, %s297
    %s299 = sshll.u32 [#allocation9], 4
    %s300 = int_to_ptr.vmem [resolvable:$true] %s299
    %303 = sst [smem:[#allocation32]] 256
    %s304 = scalar_lea.smem [#allocation32], 1
    %305 = sst [smem:[%s304]] 256
    %s306 = scalar_lea.smem [#allocation32], 2
    %307 = sst [smem:[%s306]] 2
    %s308 = scalar_lea.smem [#allocation32], 3
    %309 = sst [smem:[%s308]] 64
    %s310 = scalar_lea.smem [#allocation32], 4
    %311 = sst [smem:[%s310]] 128
    %s312 = scalar_lea.smem [#allocation32], 5
    %313 = sst [smem:[%s312]] 2
    %s314 = scalar_lea.smem [#allocation32], 6
    %315 = sst [smem:[%s314]] 128
    %s316 = scalar_lea.smem [#allocation32], 7
    %317 = sst [smem:[%s316]] 64
    %s318 = scalar_lea.smem [#allocation32], 8
    %319 = sst [smem:[%s318]] 4
    %321 = dma.general %s8, 12288, %s300, %s287, [#allocation31], [#allocation32], %s298, 0
    %s322 = scalar_lea.sflag [#allocation15], 8
    %p324 = scmp.lt.u32.totalorder 24, 8
    %p325 = pneg %p324
    // Predicated region
    $region116: #{_lambda_.1} parent=1 // pred_check
      _
    $region117: #{_lambda_.1} parent=1 // pred_check_branch
      %327 = sbr.rel (%p324) target = $region119
    $region118: #{_lambda_.1} parent=1 // pred_region
      %s342 = sand.u32 24, 7
      %p343 = scmp.eq.s32.totalorder %s342, 0
      // Predicated region
      $region131: #{_lambda_.1} parent=118 // pred_check
        %p344 = pneg %p343
      $region132: #{_lambda_.1} parent=118 // pred_check_branch
        %346 = sbr.rel (%p344) target = $region134
      $region133: #{_lambda_.1} parent=118 // pred_region
        loop: start=0, step=1, limit=1
        $region135: #{_lambda_.1} parent=133 // loop_pre_header
          _
        $region136: #{_lambda_.1} parent=133 // loop_header
          %s348 = sphi 0, %s352
          %p349 = scmp.ge.s32.totalorder %s348, 1
          %s353 = sphi %s9, %s9
          %s354 = sphi [#allocation10], [#allocation10]
        $region137: #{_lambda_.1} parent=133 // loop_header_branch
          %351 = sbr.rel (%p349) target = $region141
        $region138: #{_lambda_.1} parent=133 // loop_body
          %v355 = vld [vmem:[%s353] sm:$0xff]
          %356 = vst [vmem:[%s354] sm:$0xff] %v355
          %v357 = vld [vmem:[%s353 + $0x8] sm:$0xff]
          %358 = vst [vmem:[%s354 + $0x8] sm:$0xff] %v357
          %v359 = vld [vmem:[%s353 + $0x10] sm:$0xff]
          %360 = vst [vmem:[%s354 + $0x10] sm:$0xff] %v359
        $region139: #{_lambda_.1} parent=133 // loop_footer
          %s352 = sadd.s32 1, %s348
        $region140: #{_lambda_.1} parent=133 // loop_footer_branch
          %347 = sbr.rel target = $region136
        $region141: #{_lambda_.1} parent=133 // loop_exit
          _
      $region134: #{_lambda_.1} parent=118 // pred_fallthru
        _
      %p361 = pneg %p343
      // Predicated region
      $region142: #{_lambda_.1} parent=118 // pred_check
        _
      $region143: #{_lambda_.1} parent=118 // pred_check_branch
        %363 = sbr.rel (%p343) target = $region145
      $region144: #{_lambda_.1} parent=118 // pred_region
        %s364 = sand.u32 24, 7
      $region145: #{_lambda_.1} parent=118 // pred_fallthru
        _
    $region119: #{_lambda_.1} parent=1 // pred_fallthru
      _
    // Predicated region
    $region120: #{_lambda_.1} parent=1 // pred_check
      %p328 = pneg %p324
    $region121: #{_lambda_.1} parent=1 // pred_check_branch
      %330 = sbr.rel (%p328) target = $region123
    $region122: #{_lambda_.1} parent=1 // pred_region
      %s331 = sshllo.u32 0, 24
      loop: start=0, step=1, limit=1
      $region124: #{_lambda_.1} parent=122 // loop_pre_header
        _
      $region125: #{_lambda_.1} parent=122 // loop_header
        %s333 = sphi 0, %s337
        %p334 = scmp.ge.s32.totalorder %s333, 1
        %s338 = sphi %s9, %s9
        %s339 = sphi [#allocation10], [#allocation10]
      $region126: #{_lambda_.1} parent=122 // loop_header_branch
        %336 = sbr.rel (%p334) target = $region130
      $region127: #{_lambda_.1} parent=122 // loop_body
        %v340 = vld [vmem:[%s338] sm:%s331]
        %341 = vst [vmem:[%s339] sm:%s331] %v340
      $region128: #{_lambda_.1} parent=122 // loop_footer
        %s337 = sadd.s32 1, %s333
      $region129: #{_lambda_.1} parent=122 // loop_footer_branch
        %332 = sbr.rel target = $region125
      $region130: #{_lambda_.1} parent=122 // loop_exit
        _
    $region123: #{_lambda_.1} parent=1 // pred_fallthru
      _
    // Predicated region
    $region146: #{_lambda_.1} parent=1 // pred_check
      _
    $region147: #{_lambda_.1} parent=1 // pred_check_branch
      %367 = sbr.rel (0) target = $region149
    $region148: #{_lambda_.1} parent=1 // pred_region
      %368 = vsyncadd %s322, 384
    $region149: #{_lambda_.1} parent=1 // pred_fallthru
      _
    %s369 = scalar_lea.sflag [#allocation15], 9
    %s371 = sshll.u32 1, 14
    %s372 = sxor.u32 4294967295, %s371
    %s374 = sadd.s32 2, %s115
    %s376 = sshll.u32 7, 26
    %s377 = sxor.u32 4294967295, %s376
    %s378 = sand.u32 0, %s377
    %s379 = sshll.u32 %s374, 26
    %s380 = sor.u32 %s378, %s379
    %s381 = sshll.u32 [#allocation11], 4
    %s382 = int_to_ptr.vmem [resolvable:$true] %s381
    %385 = sst [smem:[#allocation35]] 256
    %s386 = scalar_lea.smem [#allocation35], 1
    %387 = sst [smem:[%s386]] 256
    %s388 = scalar_lea.smem [#allocation35], 2
    %389 = sst [smem:[%s388]] 2
    %s390 = scalar_lea.smem [#allocation35], 3
    %391 = sst [smem:[%s390]] 64
    %s392 = scalar_lea.smem [#allocation35], 4
    %393 = sst [smem:[%s392]] 128
    %s394 = scalar_lea.smem [#allocation35], 5
    %395 = sst [smem:[%s394]] 2
    %s396 = scalar_lea.smem [#allocation35], 6
    %397 = sst [smem:[%s396]] 128
    %s398 = scalar_lea.smem [#allocation35], 7
    %399 = sst [smem:[%s398]] 64
    %s400 = scalar_lea.smem [#allocation35], 8
    %401 = sst [smem:[%s400]] 4
    %403 = dma.general %s10, 12288, %s382, %s369, [#allocation34], [#allocation35], %s380, 0
    %s404 = scalar_lea.sflag [#allocation15], 10
    %p406 = scmp.lt.u32.totalorder 24, 8
    %p407 = pneg %p406
    // Predicated region
    $region150: #{_lambda_.1} parent=1 // pred_check
      _
    $region151: #{_lambda_.1} parent=1 // pred_check_branch
      %409 = sbr.rel (%p406) target = $region153
    $region152: #{_lambda_.1} parent=1 // pred_region
      %s424 = sand.u32 24, 7
      %p425 = scmp.eq.s32.totalorder %s424, 0
      // Predicated region
      $region165: #{_lambda_.1} parent=152 // pred_check
        %p426 = pneg %p425
      $region166: #{_lambda_.1} parent=152 // pred_check_branch
        %428 = sbr.rel (%p426) target = $region168
      $region167: #{_lambda_.1} parent=152 // pred_region
        loop: start=0, step=1, limit=1
        $region169: #{_lambda_.1} parent=167 // loop_pre_header
          _
        $region170: #{_lambda_.1} parent=167 // loop_header
          %s430 = sphi 0, %s434
          %p431 = scmp.ge.s32.totalorder %s430, 1
          %s435 = sphi %s11, %s11
          %s436 = sphi [#allocation12], [#allocation12]
        $region171: #{_lambda_.1} parent=167 // loop_header_branch
          %433 = sbr.rel (%p431) target = $region175
        $region172: #{_lambda_.1} parent=167 // loop_body
          %v437 = vld [vmem:[%s435] sm:$0xff]
          %438 = vst [vmem:[%s436] sm:$0xff] %v437
          %v439 = vld [vmem:[%s435 + $0x8] sm:$0xff]
          %440 = vst [vmem:[%s436 + $0x8] sm:$0xff] %v439
          %v441 = vld [vmem:[%s435 + $0x10] sm:$0xff]
          %442 = vst [vmem:[%s436 + $0x10] sm:$0xff] %v441
        $region173: #{_lambda_.1} parent=167 // loop_footer
          %s434 = sadd.s32 1, %s430
        $region174: #{_lambda_.1} parent=167 // loop_footer_branch
          %429 = sbr.rel target = $region170
        $region175: #{_lambda_.1} parent=167 // loop_exit
          _
      $region168: #{_lambda_.1} parent=152 // pred_fallthru
        _
      %p443 = pneg %p425
      // Predicated region
      $region176: #{_lambda_.1} parent=152 // pred_check
        _
      $region177: #{_lambda_.1} parent=152 // pred_check_branch
        %445 = sbr.rel (%p425) target = $region179
      $region178: #{_lambda_.1} parent=152 // pred_region
        %s446 = sand.u32 24, 7
      $region179: #{_lambda_.1} parent=152 // pred_fallthru
        _
    $region153: #{_lambda_.1} parent=1 // pred_fallthru
      _
    // Predicated region
    $region154: #{_lambda_.1} parent=1 // pred_check
      %p410 = pneg %p406
    $region155: #{_lambda_.1} parent=1 // pred_check_branch
      %412 = sbr.rel (%p410) target = $region157
    $region156: #{_lambda_.1} parent=1 // pred_region
      %s413 = sshllo.u32 0, 24
      loop: start=0, step=1, limit=1
      $region158: #{_lambda_.1} parent=156 // loop_pre_header
        _
      $region159: #{_lambda_.1} parent=156 // loop_header
        %s415 = sphi 0, %s419
        %p416 = scmp.ge.s32.totalorder %s415, 1
        %s420 = sphi %s11, %s11
        %s421 = sphi [#allocation12], [#allocation12]
      $region160: #{_lambda_.1} parent=156 // loop_header_branch
        %418 = sbr.rel (%p416) target = $region164
      $region161: #{_lambda_.1} parent=156 // loop_body
        %v422 = vld [vmem:[%s420] sm:%s413]
        %423 = vst [vmem:[%s421] sm:%s413] %v422
      $region162: #{_lambda_.1} parent=156 // loop_footer
        %s419 = sadd.s32 1, %s415
      $region163: #{_lambda_.1} parent=156 // loop_footer_branch
        %414 = sbr.rel target = $region159
      $region164: #{_lambda_.1} parent=156 // loop_exit
        _
    $region157: #{_lambda_.1} parent=1 // pred_fallthru
      _
    // Predicated region
    $region180: #{_lambda_.1} parent=1 // pred_check
      _
    $region181: #{_lambda_.1} parent=1 // pred_check_branch
      %449 = sbr.rel (0) target = $region183
    $region182: #{_lambda_.1} parent=1 // pred_region
      %450 = vsyncadd %s404, 384
    $region183: #{_lambda_.1} parent=1 // pred_fallthru
      _
    %s451 = scalar_lea.sflag [#allocation15], 11
    %s453 = sshll.u32 1, 14
    %s454 = sxor.u32 4294967295, %s453
    %s456 = sadd.s32 2, %s115
    %s458 = sshll.u32 7, 26
    %s459 = sxor.u32 4294967295, %s458
    %s460 = sand.u32 0, %s459
    %s461 = sshll.u32 %s456, 26
    %s462 = sor.u32 %s460, %s461
    %s463 = sshll.u32 [#allocation13], 4
    %s464 = int_to_ptr.vmem [resolvable:$true] %s463
    %467 = sst [smem:[#allocation38]] 256
    %s468 = scalar_lea.smem [#allocation38], 1
    %469 = sst [smem:[%s468]] 256
    %s470 = scalar_lea.smem [#allocation38], 2
    %471 = sst [smem:[%s470]] 2
    %s472 = scalar_lea.smem [#allocation38], 3
    %473 = sst [smem:[%s472]] 64
    %s474 = scalar_lea.smem [#allocation38], 4
    %475 = sst [smem:[%s474]] 128
    %s476 = scalar_lea.smem [#allocation38], 5
    %477 = sst [smem:[%s476]] 2
    %s478 = scalar_lea.smem [#allocation38], 6
    %479 = sst [smem:[%s478]] 128
    %s480 = scalar_lea.smem [#allocation38], 7
    %481 = sst [smem:[%s480]] 64
    %s482 = scalar_lea.smem [#allocation38], 8
    %483 = sst [smem:[%s482]] 4
    %485 = dma.general %s12, 12288, %s464, %s451, [#allocation37], [#allocation38], %s462, 0
    %s486 = scalar_lea.hbm %s12, 12288
    %s487 = scalar_lea.vmem [#allocation13], 768
    %s488 = scalar_lea.sflag [#allocation15], 12
    %s490 = sshll.u32 1, 14
    %s491 = sxor.u32 4294967295, %s490
    %s493 = sadd.s32 2, %s115
    %s495 = sshll.u32 7, 26
    %s496 = sxor.u32 4294967295, %s495
    %s497 = sand.u32 0, %s496
    %s498 = sshll.u32 %s493, 26
    %s499 = sor.u32 %s497, %s498
    %s500 = sshll.u32 %s487, 4
    %s501 = int_to_ptr.vmem [resolvable:$true] %s500
    %504 = sst [smem:[#allocation40]] 256
    %s505 = scalar_lea.smem [#allocation40], 1
    %506 = sst [smem:[%s505]] 256
    %s507 = scalar_lea.smem [#allocation40], 2
    %508 = sst [smem:[%s507]] 2
    %s509 = scalar_lea.smem [#allocation40], 3
    %510 = sst [smem:[%s509]] 64
    %s511 = scalar_lea.smem [#allocation40], 4
    %512 = sst [smem:[%s511]] 128
    %s513 = scalar_lea.smem [#allocation40], 5
    %514 = sst [smem:[%s513]] 2
    %s515 = scalar_lea.smem [#allocation40], 6
    %516 = sst [smem:[%s515]] 128
    %s517 = scalar_lea.smem [#allocation40], 7
    %518 = sst [smem:[%s517]] 64
    %s519 = scalar_lea.smem [#allocation40], 8
    %520 = sst [smem:[%s519]] 4
    %522 = dma.general %s486, 12288, %s501, %s488, [#allocation39], [#allocation40], %s499, 0
    %s523 = scalar_lea.hbm %s12, 24576
    %s524 = scalar_lea.vmem [#allocation13], 1536
    %s525 = scalar_lea.sflag [#allocation15], 13
    %s527 = sshll.u32 1, 14
    %s528 = sxor.u32 4294967295, %s527
    %s530 = sadd.s32 2, %s115
    %s532 = sshll.u32 7, 26
    %s533 = sxor.u32 4294967295, %s532
    %s534 = sand.u32 0, %s533
    %s535 = sshll.u32 %s530, 26
    %s536 = sor.u32 %s534, %s535
    %s537 = sshll.u32 %s524, 4
    %s538 = int_to_ptr.vmem [resolvable:$true] %s537
    %541 = sst [smem:[#allocation42]] 256
    %s542 = scalar_lea.smem [#allocation42], 1
    %543 = sst [smem:[%s542]] 256
    %s544 = scalar_lea.smem [#allocation42], 2
    %545 = sst [smem:[%s544]] 2
    %s546 = scalar_lea.smem [#allocation42], 3
    %547 = sst [smem:[%s546]] 64
    %s548 = scalar_lea.smem [#allocation42], 4
    %549 = sst [smem:[%s548]] 128
    %s550 = scalar_lea.smem [#allocation42], 5
    %551 = sst [smem:[%s550]] 2
    %s552 = scalar_lea.smem [#allocation42], 6
    %553 = sst [smem:[%s552]] 128
    %s554 = scalar_lea.smem [#allocation42], 7
    %555 = sst [smem:[%s554]] 64
    %s556 = scalar_lea.smem [#allocation42], 8
    %557 = sst [smem:[%s556]] 4
    %559 = dma.general %s523, 12288, %s538, %s525, [#allocation41], [#allocation42], %s536, 0
    %s560 = scalar_lea.hbm %s12, 36864
    %s561 = scalar_lea.vmem [#allocation13], 2304
    %s562 = scalar_lea.sflag [#allocation15], 14
    %s564 = sshll.u32 1, 14
    %s565 = sxor.u32 4294967295, %s564
    %s567 = sadd.s32 2, %s115
    %s569 = sshll.u32 7, 26
    %s570 = sxor.u32 4294967295, %s569
    %s571 = sand.u32 0, %s570
    %s572 = sshll.u32 %s567, 26
    %s573 = sor.u32 %s571, %s572
    %s574 = sshll.u32 %s561, 4
    %s575 = int_to_ptr.vmem [resolvable:$true] %s574
    %578 = sst [smem:[#allocation44]] 256
    %s579 = scalar_lea.smem [#allocation44], 1
    %580 = sst [smem:[%s579]] 256
    %s581 = scalar_lea.smem [#allocation44], 2
    %582 = sst [smem:[%s581]] 2
    %s583 = scalar_lea.smem [#allocation44], 3
    %584 = sst [smem:[%s583]] 64
    %s585 = scalar_lea.smem [#allocation44], 4
    %586 = sst [smem:[%s585]] 128
    %s587 = scalar_lea.smem [#allocation44], 5
    %588 = sst [smem:[%s587]] 2
    %s589 = scalar_lea.smem [#allocation44], 6
    %590 = sst [smem:[%s589]] 128
    %s591 = scalar_lea.smem [#allocation44], 7
    %592 = sst [smem:[%s591]] 64
    %s593 = scalar_lea.smem [#allocation44], 8
    %594 = sst [smem:[%s593]] 4
    %596 = dma.general %s560, 12288, %s575, %s562, [#allocation43], [#allocation44], %s573, 0
    %s597 = scalar_lea.hbm %s12, 49152
    %s598 = scalar_lea.vmem [#allocation13], 3072
    %s599 = scalar_lea.sflag [#allocation15], 15
    %s601 = sshll.u32 1, 14
    %s602 = sxor.u32 4294967295, %s601
    %s604 = sadd.s32 2, %s115
    %s606 = sshll.u32 7, 26
    %s607 = sxor.u32 4294967295, %s606
    %s608 = sand.u32 0, %s607
    %s609 = sshll.u32 %s604, 26
    %s610 = sor.u32 %s608, %s609
    %s611 = sshll.u32 %s598, 4
    %s612 = int_to_ptr.vmem [resolvable:$true] %s611
    %615 = sst [smem:[#allocation46]] 256
    %s616 = scalar_lea.smem [#allocation46], 1
    %617 = sst [smem:[%s616]] 256
    %s618 = scalar_lea.smem [#allocation46], 2
    %619 = sst [smem:[%s618]] 2
    %s620 = scalar_lea.smem [#allocation46], 3
    %621 = sst [smem:[%s620]] 64
    %s622 = scalar_lea.smem [#allocation46], 4
    %623 = sst [smem:[%s622]] 128
    %s624 = scalar_lea.smem [#allocation46], 5
    %625 = sst [smem:[%s624]] 2
    %s626 = scalar_lea.smem [#allocation46], 6
    %627 = sst [smem:[%s626]] 128
    %s628 = scalar_lea.smem [#allocation46], 7
    %629 = sst [smem:[%s628]] 64
    %s630 = scalar_lea.smem [#allocation46], 8
    %631 = sst [smem:[%s630]] 4
    %633 = dma.general %s597, 12288, %s612, %s599, [#allocation45], [#allocation46], %s610, 0
    %s634 = scalar_lea.hbm %s12, 61440
    %s635 = scalar_lea.vmem [#allocation13], 3840
    %s636 = scalar_lea.sflag [#allocation15], 16
    %s638 = sshll.u32 1, 14
    %s639 = sxor.u32 4294967295, %s638
    %s641 = sadd.s32 2, %s115
    %s643 = sshll.u32 7, 26
    %s644 = sxor.u32 4294967295, %s643
    %s645 = sand.u32 0, %s644
    %s646 = sshll.u32 %s641, 26
    %s647 = sor.u32 %s645, %s646
    %s648 = sshll.u32 %s635, 4
    %s649 = int_to_ptr.vmem [resolvable:$true] %s648
    %652 = sst [smem:[#allocation48]] 256
    %s653 = scalar_lea.smem [#allocation48], 1
    %654 = sst [smem:[%s653]] 256
    %s655 = scalar_lea.smem [#allocation48], 2
    %656 = sst [smem:[%s655]] 2
    %s657 = scalar_lea.smem [#allocation48], 3
    %658 = sst [smem:[%s657]] 64
    %s659 = scalar_lea.smem [#allocation48], 4
    %660 = sst [smem:[%s659]] 128
    %s661 = scalar_lea.smem [#allocation48], 5
    %662 = sst [smem:[%s661]] 2
    %s663 = scalar_lea.smem [#allocation48], 6
    %664 = sst [smem:[%s663]] 128
    %s665 = scalar_lea.smem [#allocation48], 7
    %666 = sst [smem:[%s665]] 64
    %s667 = scalar_lea.smem [#allocation48], 8
    %668 = sst [smem:[%s667]] 4
    %670 = dma.general %s634, 12288, %s649, %s636, [#allocation47], [#allocation48], %s647, 0
    %s671 = scalar_lea.hbm %s12, 73728
    %s672 = scalar_lea.vmem [#allocation13], 4608
    %s673 = scalar_lea.sflag [#allocation15], 17
    %s675 = sshll.u32 1, 14
    %s676 = sxor.u32 4294967295, %s675
    %s678 = sadd.s32 2, %s115
    %s680 = sshll.u32 7, 26
    %s681 = sxor.u32 4294967295, %s680
    %s682 = sand.u32 0, %s681
    %s683 = sshll.u32 %s678, 26
    %s684 = sor.u32 %s682, %s683
    %s685 = sshll.u32 %s672, 4
    %s686 = int_to_ptr.vmem [resolvable:$true] %s685
    %689 = sst [smem:[#allocation50]] 256
    %s690 = scalar_lea.smem [#allocation50], 1
    %691 = sst [smem:[%s690]] 256
    %s692 = scalar_lea.smem [#allocation50], 2
    %693 = sst [smem:[%s692]] 2
    %s694 = scalar_lea.smem [#allocation50], 3
    %695 = sst [smem:[%s694]] 64
    %s696 = scalar_lea.smem [#allocation50], 4
    %697 = sst [smem:[%s696]] 128
    %s698 = scalar_lea.smem [#allocation50], 5
    %699 = sst [smem:[%s698]] 2
    %s700 = scalar_lea.smem [#allocation50], 6
    %701 = sst [smem:[%s700]] 128
    %s702 = scalar_lea.smem [#allocation50], 7
    %703 = sst [smem:[%s702]] 64
    %s704 = scalar_lea.smem [#allocation50], 8
    %705 = sst [smem:[%s704]] 4
    %707 = dma.general %s671, 12288, %s686, %s673, [#allocation49], [#allocation50], %s684, 0
    %s708 = scalar_lea.hbm %s12, 86016
    %s709 = scalar_lea.vmem [#allocation13], 5376
    %s710 = scalar_lea.sflag [#allocation15], 18
    %s712 = sshll.u32 1, 14
    %s713 = sxor.u32 4294967295, %s712
    %s715 = sadd.s32 2, %s115
    %s717 = sshll.u32 7, 26
    %s718 = sxor.u32 4294967295, %s717
    %s719 = sand.u32 0, %s718
    %s720 = sshll.u32 %s715, 26
    %s721 = sor.u32 %s719, %s720
    %s722 = sshll.u32 %s709, 4
    %s723 = int_to_ptr.vmem [resolvable:$true] %s722
    %726 = sst [smem:[#allocation52]] 256
    %s727 = scalar_lea.smem [#allocation52], 1
    %728 = sst [smem:[%s727]] 256
    %s729 = scalar_lea.smem [#allocation52], 2
    %730 = sst [smem:[%s729]] 2
    %s731 = scalar_lea.smem [#allocation52], 3
    %732 = sst [smem:[%s731]] 64
    %s733 = scalar_lea.smem [#allocation52], 4
    %734 = sst [smem:[%s733]] 128
    %s735 = scalar_lea.smem [#allocation52], 5
    %736 = sst [smem:[%s735]] 2
    %s737 = scalar_lea.smem [#allocation52], 6
    %738 = sst [smem:[%s737]] 128
    %s739 = scalar_lea.smem [#allocation52], 7
    %740 = sst [smem:[%s739]] 64
    %s741 = scalar_lea.smem [#allocation52], 8
    %742 = sst [smem:[%s741]] 4
    %744 = dma.general %s708, 12288, %s723, %s710, [#allocation51], [#allocation52], %s721, 0
    %s745 = scalar_lea.sflag [#allocation15], 19
    %p747 = scmp.lt.u32.totalorder 256, 8
    %p748 = pneg %p747
    // Predicated region
    $region184: #{_lambda_.1} parent=1 // pred_check
      _
    $region185: #{_lambda_.1} parent=1 // pred_check_branch
      %750 = sbr.rel (%p747) target = $region187
    $region186: #{_lambda_.1} parent=1 // pred_region
      %s765 = sand.u32 256, 7
      %p766 = scmp.eq.s32.totalorder %s765, 0
      // Predicated region
      $region199: #{_lambda_.1} parent=186 // pred_check
        %p767 = pneg %p766
      $region200: #{_lambda_.1} parent=186 // pred_check_branch
        %769 = sbr.rel (%p767) target = $region202
      $region201: #{_lambda_.1} parent=186 // pred_region
        loop: start=0, step=1, limit=1
        $region203: #{_lambda_.1} parent=201 // loop_pre_header
          _
        $region204: #{_lambda_.1} parent=201 // loop_header
          %s771 = sphi 0, %s775
          %p772 = scmp.ge.s32.totalorder %s771, 1
          %s776 = sphi %s13, %s13
          %s777 = sphi [#allocation14], [#allocation14]
        $region205: #{_lambda_.1} parent=201 // loop_header_branch
          %774 = sbr.rel (%p772) target = $region209
        $region206: #{_lambda_.1} parent=201 // loop_body
          %v778 = vld [vmem:[%s776] sm:$0xff]
          %779 = vst [vmem:[%s777] sm:$0xff] %v778
          %v780 = vld [vmem:[%s776 + $0x8] sm:$0xff]
          %781 = vst [vmem:[%s777 + $0x8] sm:$0xff] %v780
          %v782 = vld [vmem:[%s776 + $0x10] sm:$0xff]
          %783 = vst [vmem:[%s777 + $0x10] sm:$0xff] %v782
          %v784 = vld [vmem:[%s776 + $0x18] sm:$0xff]
          %785 = vst [vmem:[%s777 + $0x18] sm:$0xff] %v784
          %v786 = vld [vmem:[%s776 + $0x20] sm:$0xff]
          %787 = vst [vmem:[%s777 + $0x20] sm:$0xff] %v786
          %v788 = vld [vmem:[%s776 + $0x28] sm:$0xff]
          %789 = vst [vmem:[%s777 + $0x28] sm:$0xff] %v788
          %v790 = vld [vmem:[%s776 + $0x30] sm:$0xff]
          %791 = vst [vmem:[%s777 + $0x30] sm:$0xff] %v790
          %v792 = vld [vmem:[%s776 + $0x38] sm:$0xff]
          %793 = vst [vmem:[%s777 + $0x38] sm:$0xff] %v792
          %v794 = vld [vmem:[%s776 + $0x40] sm:$0xff]
          %795 = vst [vmem:[%s777 + $0x40] sm:$0xff] %v794
          %v796 = vld [vmem:[%s776 + $0x48] sm:$0xff]
          %797 = vst [vmem:[%s777 + $0x48] sm:$0xff] %v796
          %v798 = vld [vmem:[%s776 + $0x50] sm:$0xff]
          %799 = vst [vmem:[%s777 + $0x50] sm:$0xff] %v798
          %v800 = vld [vmem:[%s776 + $0x58] sm:$0xff]
          %801 = vst [vmem:[%s777 + $0x58] sm:$0xff] %v800
          %v802 = vld [vmem:[%s776 + $0x60] sm:$0xff]
          %803 = vst [vmem:[%s777 + $0x60] sm:$0xff] %v802
          %v804 = vld [vmem:[%s776 + $0x68] sm:$0xff]
          %805 = vst [vmem:[%s777 + $0x68] sm:$0xff] %v804
          %v806 = vld [vmem:[%s776 + $0x70] sm:$0xff]
          %807 = vst [vmem:[%s777 + $0x70] sm:$0xff] %v806
          %v808 = vld [vmem:[%s776 + $0x78] sm:$0xff]
          %809 = vst [vmem:[%s777 + $0x78] sm:$0xff] %v808
          %v810 = vld [vmem:[%s776 + $0x80] sm:$0xff]
          %811 = vst [vmem:[%s777 + $0x80] sm:$0xff] %v810
          %v812 = vld [vmem:[%s776 + $0x88] sm:$0xff]
          %813 = vst [vmem:[%s777 + $0x88] sm:$0xff] %v812
          %v814 = vld [vmem:[%s776 + $0x90] sm:$0xff]
          %815 = vst [vmem:[%s777 + $0x90] sm:$0xff] %v814
          %v816 = vld [vmem:[%s776 + $0x98] sm:$0xff]
          %817 = vst [vmem:[%s777 + $0x98] sm:$0xff] %v816
          %v818 = vld [vmem:[%s776 + $0xa0] sm:$0xff]
          %819 = vst [vmem:[%s777 + $0xa0] sm:$0xff] %v818
          %v820 = vld [vmem:[%s776 + $0xa8] sm:$0xff]
          %821 = vst [vmem:[%s777 + $0xa8] sm:$0xff] %v820
          %v822 = vld [vmem:[%s776 + $0xb0] sm:$0xff]
          %823 = vst [vmem:[%s777 + $0xb0] sm:$0xff] %v822
          %v824 = vld [vmem:[%s776 + $0xb8] sm:$0xff]
          %825 = vst [vmem:[%s777 + $0xb8] sm:$0xff] %v824
          %v826 = vld [vmem:[%s776 + $0xc0] sm:$0xff]
          %827 = vst [vmem:[%s777 + $0xc0] sm:$0xff] %v826
          %v828 = vld [vmem:[%s776 + $0xc8] sm:$0xff]
          %829 = vst [vmem:[%s777 + $0xc8] sm:$0xff] %v828
          %v830 = vld [vmem:[%s776 + $0xd0] sm:$0xff]
          %831 = vst [vmem:[%s777 + $0xd0] sm:$0xff] %v830
          %v832 = vld [vmem:[%s776 + $0xd8] sm:$0xff]
          %833 = vst [vmem:[%s777 + $0xd8] sm:$0xff] %v832
          %v834 = vld [vmem:[%s776 + $0xe0] sm:$0xff]
          %835 = vst [vmem:[%s777 + $0xe0] sm:$0xff] %v834
          %v836 = vld [vmem:[%s776 + $0xe8] sm:$0xff]
          %837 = vst [vmem:[%s777 + $0xe8] sm:$0xff] %v836
          %v838 = vld [vmem:[%s776 + $0xf0] sm:$0xff]
          %839 = vst [vmem:[%s777 + $0xf0] sm:$0xff] %v838
          %v840 = vld [vmem:[%s776 + $0xf8] sm:$0xff]
          %841 = vst [vmem:[%s777 + $0xf8] sm:$0xff] %v840
        $region207: #{_lambda_.1} parent=201 // loop_footer
          %s775 = sadd.s32 1, %s771
        $region208: #{_lambda_.1} parent=201 // loop_footer_branch
          %770 = sbr.rel target = $region204
        $region209: #{_lambda_.1} parent=201 // loop_exit
          _
      $region202: #{_lambda_.1} parent=186 // pred_fallthru
        _
      %p842 = pneg %p766
      // Predicated region
      $region210: #{_lambda_.1} parent=186 // pred_check
        _
      $region211: #{_lambda_.1} parent=186 // pred_check_branch
        %844 = sbr.rel (%p766) target = $region213
      $region212: #{_lambda_.1} parent=186 // pred_region
        %s845 = sand.u32 256, 7
      $region213: #{_lambda_.1} parent=186 // pred_fallthru
        _
    $region187: #{_lambda_.1} parent=1 // pred_fallthru
      _
    // Predicated region
    $region188: #{_lambda_.1} parent=1 // pred_check
      %p751 = pneg %p747
    $region189: #{_lambda_.1} parent=1 // pred_check_branch
      %753 = sbr.rel (%p751) target = $region191
    $region190: #{_lambda_.1} parent=1 // pred_region
      %s754 = sshllo.u32 0, 256
      loop: start=0, step=1, limit=1
      $region192: #{_lambda_.1} parent=190 // loop_pre_header
        _
      $region193: #{_lambda_.1} parent=190 // loop_header
        %s756 = sphi 0, %s760
        %p757 = scmp.ge.s32.totalorder %s756, 1
        %s761 = sphi %s13, %s13
        %s762 = sphi [#allocation14], [#allocation14]
      $region194: #{_lambda_.1} parent=190 // loop_header_branch
        %759 = sbr.rel (%p757) target = $region198
      $region195: #{_lambda_.1} parent=190 // loop_body
        %v763 = vld [vmem:[%s761] sm:%s754]
        %764 = vst [vmem:[%s762] sm:%s754] %v763
      $region196: #{_lambda_.1} parent=190 // loop_footer
        %s760 = sadd.s32 1, %s756
      $region197: #{_lambda_.1} parent=190 // loop_footer_branch
        %755 = sbr.rel target = $region193
      $region198: #{_lambda_.1} parent=190 // loop_exit
        _
    $region191: #{_lambda_.1} parent=1 // pred_fallthru
      _
    // Predicated region
    $region214: #{_lambda_.1} parent=1 // pred_check
      _
    $region215: #{_lambda_.1} parent=1 // pred_check_branch
      %848 = sbr.rel (0) target = $region217
    $region216: #{_lambda_.1} parent=1 // pred_region
      %849 = vsyncadd %s745, 4096
    $region217: #{_lambda_.1} parent=1 // pred_fallthru
      _
    %v850 = vld [vmem:[%s0] sm:$0xff]
    %v851 = vld [vmem:[%s0 + $0x8] sm:$0xff]
    %v852 = vld [vmem:[%s0 + $0x10] sm:$0xff]
    %v853 = vld [vmem:[%s0 + $0x18] sm:$0xff]
    %s854 = smul.u32 8, 2
    %s855 = smul.u32 %s854, 4
    %s856 = sshll.u32 %s855, 4
    %857 = dma.done [#allocation15], %s856
    %s858 = smul.u32 8, 6
    %s859 = smul.u32 %s858, 4
    %s860 = sshll.u32 %s859, 4
    %861 = dma.done %s33, %s860
    %v862 = vld [vmem:[#allocation2] ss:$8 sm:$0xf]
    %v863 = vld [vmem:[#allocation3] sm:$0xff]
    %v864 = vld [vmem:[#allocation3 + $0x8] sm:$0xff]
    %v865 = vld [vmem:[#allocation3 + $0x10] sm:$0xff]
    %v866 = vld [vmem:[#allocation3 + $0x18] sm:$0xff]
    %v867 = vld [vmem:[#allocation3 + $0x20] sm:$0xff]
    %v868 = vld [vmem:[#allocation3 + $0x28] sm:$0xff]
    %v869 = vld [vmem:[#allocation3 + $0x30] sm:$0xff]
    %v870 = vld [vmem:[#allocation3 + $0x38] sm:$0xff]
    %v871 = vld [vmem:[#allocation3 + $0x40] sm:$0xff]
    %v872 = vld [vmem:[#allocation3 + $0x48] sm:$0xff]
    %v873 = vld [vmem:[#allocation3 + $0x50] sm:$0xff]
    %v874 = vld [vmem:[#allocation3 + $0x58] sm:$0xff]
    %v875 = vld [vmem:[#allocation3 + $0x60] sm:$0xff]
    %v876 = vld [vmem:[#allocation3 + $0x68] sm:$0xff]
    %v877 = vld [vmem:[#allocation3 + $0x70] sm:$0xff]
    %v878 = vld [vmem:[#allocation3 + $0x78] sm:$0xff]
    %v879 = vld [vmem:[#allocation3 + $0x80] sm:$0xff]
    %v880 = vld [vmem:[#allocation3 + $0x88] sm:$0xff]
    %v881 = vld [vmem:[#allocation3 + $0x90] sm:$0xff]
    %v882 = vld [vmem:[#allocation3 + $0x98] sm:$0xff]
    %v883 = vld [vmem:[#allocation3 + $0xa0] sm:$0xff]
    %v884 = vld [vmem:[#allocation3 + $0xa8] sm:$0xff]
    %v885 = vld [vmem:[#allocation3 + $0xb0] sm:$0xff]
    %v886 = vld [vmem:[#allocation3 + $0xb8] sm:$0xff]
    %v888 = vlaneseq
    %v889 = vshrl.u32 %v888, 7
    %v890 = vsub.s32 0, %v889
    %v891 = vrot.slane %v862, %v890
    %v892 = vlaneseq
    %v893 = vshrl.u32 %v892, 7
    %v894 = vsub.s32 1, %v893
    %v895 = vrot.slane %v862, %v894
    %v896 = vlaneseq
    %v897 = vshrl.u32 %v896, 7
    %v898 = vsub.s32 2, %v897
    %v899 = vrot.slane %v862, %v898
    %v900 = vlaneseq
    %v901 = vshrl.u32 %v900, 7
    %v902 = vsub.s32 3, %v901
    %v903 = vrot.slane %v862, %v902
    %vm908 = vcmask 392192
    %v910 = vsel %vm908, %v850, 0
    %v913 = vsel %vm908, %v851, 0
    %v916 = vsel %vm908, %v852, 0
    %v919 = vsel %vm908, %v853, 0
    %921 = vmatprep.subr.mxu0 %v864
    %922 = vmatpush1.msra.mxu0 %v863
    %923 = vmatprep.subr.mxu0 %v868
    %924 = vmatpush1.msra.mxu0 %v867
    %925 = vmatprep.subr.mxu0 %v872
    %926 = vmatpush1.msra.mxu0 %v871
    %927 = vmatprep.subr.mxu0 %v876
    %928 = vmatpush1.msra.mxu0 %v875
    %929 = vmatprep.subr.mxu0 %v880
    %930 = vmatpush1.msra.mxu0 %v879
    %931 = vmatprep.subr.mxu0 %v884
    %932 = vmatpush1.msra.mxu0 %v883
    %933 = vmatprep.subr.mxu0 0.0
    %934 = vmatpush1.msra.mxu0 0.0
    %935 = vmatprep.subr.mxu0 0.0
    %936 = vmatpush1.msra.mxu0 0.0
    %937 = vmatprep.subr.mxu0 0.0
    %938 = vmatpush1.msra.mxu0 0.0
    %939 = vmatprep.subr.mxu0 0.0
    %940 = vmatpush1.msra.mxu0 0.0
    %941 = vmatprep.subr.mxu0 0.0
    %942 = vmatpush1.msra.mxu0 0.0
    %943 = vmatprep.subr.mxu0 0.0
    %944 = vmatpush1.msra.mxu0 0.0
    %945 = vmatprep.subr.mxu0 0.0
    %946 = vmatpush1.msra.mxu0 0.0
    %947 = vmatprep.subr.mxu0 0.0
    %948 = vmatpush1.msra.mxu0 0.0
    %949 = vmatprep.subr.mxu0 0.0
    %950 = vmatpush1.msra.mxu0 0.0
    %951 = vmatprep.subr.mxu0 0.0
    %952 = vmatpush1.msra.mxu0 0.0
    %953 = vmatprep.subr.mxu0 0.0
    %954 = vmatpush1.msra.mxu0 0.0
    %955 = vmatprep.subr.mxu0 0.0
    %956 = vmatpush1.msra.mxu0 0.0
    %957 = vmatprep.subr.mxu0 0.0
    %958 = vmatpush1.msra.mxu0 0.0
    %959 = vmatprep.subr.mxu0 0.0
    %960 = vmatpush1.msra.mxu0 0.0
    %961 = vmatprep.subr.mxu0 0.0
    %962 = vmatpush1.msra.mxu0 0.0
    %963 = vmatprep.subr.mxu0 0.0
    %964 = vmatpush1.msra.mxu0 0.0
    %965 = vmatprep.subr.mxu0 0.0
    %966 = vmatpush1.msra.mxu0 0.0
    %967 = vmatprep.subr.mxu0 0.0
    %968 = vmatpush1.msra.mxu0 0.0
    %969 = vmatprep.subr.mxu0 0.0
    %970 = vmatpush1.msra.mxu0 0.0
    %971 = vmatprep.subr.mxu0 0.0
    %972 = vmatpush1.msra.mxu0 0.0
    %973 = vmatprep.subr.mxu0 0.0
    %974 = vmatpush1.msra.mxu0 0.0
    %975 = vmatprep.subr.mxu0 0.0
    %976 = vmatpush1.msra.mxu0 0.0
    %977 = vmatprep.subr.mxu0 0.0
    %978 = vmatpush1.msra.mxu0 0.0
    %979 = vmatprep.subr.mxu0 0.0
    %980 = vmatpush1.msra.mxu0 0.0
    %981 = vmatprep.subr.mxu0 0.0
    %982 = vmatpush1.msra.mxu0 0.0
    %983 = vmatprep.subr.mxu0 0.0
    %984 = vmatpush1.msra.mxu0 0.0
    %985 = vmatprep.mubr.f32.mxu0 0.0
    %986 = vmatmul.mubr.f32.gmra.mrb[0].mxu0 %v910
    %v987 = vpop.f32.mrb[0].mxu0
    %v988 = vadd.f32 %v891, %v987
    %v989 = vpop.f32.mrb[0].mxu0
    %v990 = vadd.f32 %v895, %v989
    %991 = vmatprep.mubr.f32.mxu0 0.0
    %992 = vmatmul.mubr.f32.gmra.mrb[0].mxu0 %v913
    %v993 = vpop.f32.mrb[0].mxu0
    %v994 = vadd.f32 %v891, %v993
    %v995 = vpop.f32.mrb[0].mxu0
    %v996 = vadd.f32 %v895, %v995
    %997 = vmatprep.mubr.f32.mxu0 0.0
    %998 = vmatmul.mubr.f32.gmra.mrb[0].mxu0 %v916
    %v999 = vpop.f32.mrb[0].mxu0
    %v1000 = vadd.f32 %v891, %v999
    %v1001 = vpop.f32.mrb[0].mxu0
    %v1002 = vadd.f32 %v895, %v1001
    %1003 = vmatprep.mubr.f32.mxu0 0.0
    %1004 = vmatmul.mubr.f32.gmra.mrb[0].mxu0 %v919
    %v1005 = vpop.f32.mrb[0].mxu0
    %v1006 = vadd.f32 %v891, %v1005
    %v1007 = vpop.f32.mrb[0].mxu0
    %v1008 = vadd.f32 %v895, %v1007
    %1009 = vdwg.mxu0
    %1010 = vmatprep.subr.mxu0 %v866
    %1011 = vmatpush1.msra.mxu0 %v865
    %1012 = vmatprep.subr.mxu0 %v870
    %1013 = vmatpush1.msra.mxu0 %v869
    %1014 = vmatprep.subr.mxu0 %v874
    %1015 = vmatpush1.msra.mxu0 %v873
    %1016 = vmatprep.subr.mxu0 %v878
    %1017 = vmatpush1.msra.mxu0 %v877
    %1018 = vmatprep.subr.mxu0 %v882
    %1019 = vmatpush1.msra.mxu0 %v881
    %1020 = vmatprep.subr.mxu0 %v886
    %1021 = vmatpush1.msra.mxu0 %v885
    %1022 = vmatprep.subr.mxu0 0.0
    %1023 = vmatpush1.msra.mxu0 0.0
    %1024 = vmatprep.subr.mxu0 0.0
    %1025 = vmatpush1.msra.mxu0 0.0
    %1026 = vmatprep.subr.mxu0 0.0
    %1027 = vmatpush1.msra.mxu0 0.0
    %1028 = vmatprep.subr.mxu0 0.0
    %1029 = vmatpush1.msra.mxu0 0.0
    %1030 = vmatprep.subr.mxu0 0.0
    %1031 = vmatpush1.msra.mxu0 0.0
    %1032 = vmatprep.subr.mxu0 0.0
    %1033 = vmatpush1.msra.mxu0 0.0
    %1034 = vmatprep.subr.mxu0 0.0
    %1035 = vmatpush1.msra.mxu0 0.0
    %1036 = vmatprep.subr.mxu0 0.0
    %1037 = vmatpush1.msra.mxu0 0.0
    %1038 = vmatprep.subr.mxu0 0.0
    %1039 = vmatpush1.msra.mxu0 0.0
    %1040 = vmatprep.subr.mxu0 0.0
    %1041 = vmatpush1.msra.mxu0 0.0
    %1042 = vmatprep.subr.mxu0 0.0
    %1043 = vmatpush1.msra.mxu0 0.0
    %1044 = vmatprep.subr.mxu0 0.0
    %1045 = vmatpush1.msra.mxu0 0.0
    %1046 = vmatprep.subr.mxu0 0.0
    %1047 = vmatpush1.msra.mxu0 0.0
    %1048 = vmatprep.subr.mxu0 0.0
    %1049 = vmatpush1.msra.mxu0 0.0
    %1050 = vmatprep.subr.mxu0 0.0
    %1051 = vmatpush1.msra.mxu0 0.0
    %1052 = vmatprep.subr.mxu0 0.0
    %1053 = vmatpush1.msra.mxu0 0.0
    %1054 = vmatprep.subr.mxu0 0.0
    %1055 = vmatpush1.msra.mxu0 0.0
    %1056 = vmatprep.subr.mxu0 0.0
    %1057 = vmatpush1.msra.mxu0 0.0
    %1058 = vmatprep.subr.mxu0 0.0
    %1059 = vmatpush1.msra.mxu0 0.0
    %1060 = vmatprep.subr.mxu0 0.0
    %1061 = vmatpush1.msra.mxu0 0.0
    %1062 = vmatprep.subr.mxu0 0.0
    %1063 = vmatpush1.msra.mxu0 0.0
    %1064 = vmatprep.subr.mxu0 0.0
    %1065 = vmatpush1.msra.mxu0 0.0
    %1066 = vmatprep.subr.mxu0 0.0
    %1067 = vmatpush1.msra.mxu0 0.0
    %1068 = vmatprep.subr.mxu0 0.0
    %1069 = vmatpush1.msra.mxu0 0.0
    %1070 = vmatprep.subr.mxu0 0.0
    %1071 = vmatpush1.msra.mxu0 0.0
    %1072 = vmatprep.subr.mxu0 0.0
    %1073 = vmatpush1.msra.mxu0 0.0
    %1074 = vmatprep.mubr.f32.mxu0 0.0
    %1075 = vmatmul.mubr.f32.gmra.mrb[0].mxu0 %v910
    %v1076 = vpop.f32.mrb[0].mxu0
    %v1077 = vadd.f32 %v899, %v1076
    %v1078 = vpop.f32.mrb[0].mxu0
    %v1079 = vadd.f32 %v903, %v1078
    %1080 = vmatprep.mubr.f32.mxu0 0.0
    %1081 = vmatmul.mubr.f32.gmra.mrb[0].mxu0 %v913
    %v1082 = vpop.f32.mrb[0].mxu0
    %v1083 = vadd.f32 %v899, %v1082
    %v1084 = vpop.f32.mrb[0].mxu0
    %v1085 = vadd.f32 %v903, %v1084
    %1086 = vmatprep.mubr.f32.mxu0 0.0
    %1087 = vmatmul.mubr.f32.gmra.mrb[0].mxu0 %v916
    %v1088 = vpop.f32.mrb[0].mxu0
    %v1089 = vadd.f32 %v899, %v1088
    %v1090 = vpop.f32.mrb[0].mxu0
    %v1091 = vadd.f32 %v903, %v1090
    %1092 = vmatprep.mubr.f32.mxu0 0.0
    %1093 = vmatmul.mubr.f32.gmra.mrb[0].mxu0 %v919
    %v1094 = vpop.f32.mrb[0].mxu0
    %v1095 = vadd.f32 %v899, %v1094
    %v1096 = vpop.f32.mrb[0].mxu0
    %v1097 = vadd.f32 %v903, %v1096
    %1098 = vdwg.mxu0
    %v1099 = vmax.f32 %v988, 0.0
    %v1100 = vmax.f32 %v990, 0.0
    %v1101 = vmax.f32 %v1077, 0.0
    %v1102 = vmax.f32 %v1079, 0.0
    %v1103 = vmax.f32 %v994, 0.0
    %v1104 = vmax.f32 %v996, 0.0
    %v1105 = vmax.f32 %v1083, 0.0
    %v1106 = vmax.f32 %v1085, 0.0
    %v1107 = vmax.f32 %v1000, 0.0
    %v1108 = vmax.f32 %v1002, 0.0
    %v1109 = vmax.f32 %v1089, 0.0
    %v1110 = vmax.f32 %v1091, 0.0
    %v1111 = vmax.f32 %v1006, 0.0
    %v1112 = vmax.f32 %v1008, 0.0
    %v1113 = vmax.f32 %v1095, 0.0
    %v1114 = vmax.f32 %v1097, 0.0
    %s1115 = smul.u32 96, 1
    %s1116 = sshll.u32 %s1115, 4
    %1117 = dma.done %s45, %s1116
    %s1118 = smul.u32 4, 3
    %s1119 = smul.u32 %s1118, 64
    %s1120 = smul.u32 %s1119, 4
    %s1121 = sshll.u32 %s1120, 4
    %1122 = dma.done %s110, %s1121
    %s1123 = scalar_lea.vmem [#allocation2], 1
    %v1124 = vld [vmem:[%s1123] ss:$8 sm:$0xf]
    %v1125 = vld [vmem:[#allocation4] sm:$0xff]
    %v1126 = vld [vmem:[#allocation4 + $0x8] sm:$0xff]
    %v1127 = vld [vmem:[#allocation4 + $0x10] sm:$0xff]
    %v1128 = vld [vmem:[#allocation4 + $0x18] sm:$0xff]
    %v1129 = vld [vmem:[#allocation4 + $0x20] sm:$0xff]
    %v1130 = vld [vmem:[#allocation4 + $0x28] sm:$0xff]
    %v1131 = vld [vmem:[#allocation4 + $0x30] sm:$0xff]
    %v1132 = vld [vmem:[#allocation4 + $0x38] sm:$0xff]
    %v1133 = vld [vmem:[#allocation4 + $0x40] sm:$0xff]
    %v1134 = vld [vmem:[#allocation4 + $0x48] sm:$0xff]
    %v1135 = vld [vmem:[#allocation4 + $0x50] sm:$0xff]
    %v1136 = vld [vmem:[#allocation4 + $0x58] sm:$0xff]
    %vm1137 = vcmask 261120
    %v1139 = vsel %vm1137, %v1125, 0
    %v1142 = vsel %vm1137, %v1126, 0
    %v1145 = vsel %vm1137, %v1127, 0
    %v1148 = vsel %vm1137, %v1128, 0
    %v1151 = vsel %vm1137, %v1129, 0
    %v1154 = vsel %vm1137, %v1130, 0
    %v1157 = vsel %vm1137, %v1131, 0
    %v1160 = vsel %vm1137, %v1132, 0
    %v1163 = vsel %vm1137, %v1133, 0
    %v1166 = vsel %vm1137, %v1134, 0
    %v1169 = vsel %vm1137, %v1135, 0
    %v1172 = vsel %vm1137, %v1136, 0
    %1174 = vmatprep.subr.mxu0 %v1100
    %1175 = vmatpush1.msra.mxu0 %v1099
    %1176 = vmatprep.subr.mxu0 %v1104
    %1177 = vmatpush1.msra.mxu0 %v1103
    %1178 = vmatprep.subr.mxu0 %v1108
    %1179 = vmatpush1.msra.mxu0 %v1107
    %1180 = vmatprep.subr.mxu0 %v1112
    %1181 = vmatpush1.msra.mxu0 %v1111
    %1182 = vmatprep.subr.mxu0 0.0
    %1183 = vmatpush1.msra.mxu0 0.0
    %1184 = vmatprep.subr.mxu0 0.0
    %1185 = vmatpush1.msra.mxu0 0.0
    %1186 = vmatprep.subr.mxu0 0.0
    %1187 = vmatpush1.msra.mxu0 0.0
    %1188 = vmatprep.subr.mxu0 0.0
    %1189 = vmatpush1.msra.mxu0 0.0
    %1190 = vmatprep.subr.mxu0 0.0
    %1191 = vmatpush1.msra.mxu0 0.0
    %1192 = vmatprep.subr.mxu0 0.0
    %1193 = vmatpush1.msra.mxu0 0.0
    %1194 = vmatprep.subr.mxu0 0.0
    %1195 = vmatpush1.msra.mxu0 0.0
    %1196 = vmatprep.subr.mxu0 0.0
    %1197 = vmatpush1.msra.mxu0 0.0
    %1198 = vmatprep.subr.mxu0 0.0
    %1199 = vmatpush1.msra.mxu0 0.0
    %1200 = vmatprep.subr.mxu0 0.0
    %1201 = vmatpush1.msra.mxu0 0.0
    %1202 = vmatprep.subr.mxu0 0.0
    %1203 = vmatpush1.msra.mxu0 0.0
    %1204 = vmatprep.subr.mxu0 0.0
    %1205 = vmatpush1.msra.mxu0 0.0
    %1206 = vmatprep.subr.mxu0 0.0
    %1207 = vmatpush1.msra.mxu0 0.0
    %1208 = vmatprep.subr.mxu0 0.0
    %1209 = vmatpush1.msra.mxu0 0.0
    %1210 = vmatprep.subr.mxu0 0.0
    %1211 = vmatpush1.msra.mxu0 0.0
    %1212 = vmatprep.subr.mxu0 0.0
    %1213 = vmatpush1.msra.mxu0 0.0
    %1214 = vmatprep.subr.mxu0 0.0
    %1215 = vmatpush1.msra.mxu0 0.0
    %1216 = vmatprep.subr.mxu0 0.0
    %1217 = vmatpush1.msra.mxu0 0.0
    %1218 = vmatprep.subr.mxu0 0.0
    %1219 = vmatpush1.msra.mxu0 0.0
    %1220 = vmatprep.subr.mxu0 0.0
    %1221 = vmatpush1.msra.mxu0 0.0
    %1222 = vmatprep.subr.mxu0 0.0
    %1223 = vmatpush1.msra.mxu0 0.0
    %1224 = vmatprep.subr.mxu0 0.0
    %1225 = vmatpush1.msra.mxu0 0.0
    %1226 = vmatprep.subr.mxu0 0.0
    %1227 = vmatpush1.msra.mxu0 0.0
    %1228 = vmatprep.subr.mxu0 0.0
    %1229 = vmatpush1.msra.mxu0 0.0
    %1230 = vmatprep.subr.mxu0 0.0
    %1231 = vmatpush1.msra.mxu0 0.0
    %1232 = vmatprep.subr.mxu0 0.0
    %1233 = vmatpush1.msra.mxu0 0.0
    %1234 = vmatprep.subr.mxu0 0.0
    %1235 = vmatpush1.msra.mxu0 0.0
    %1236 = vmatprep.subr.mxu0 0.0
    %1237 = vmatpush1.msra.mxu0 0.0
    %1238 = vmatprep.mubr.f32.mxu0 0.0
    %1239 = vmatmul.mubr.f32.gmra.mrb[0].mxu0 %v1139
    %v1240 = vpop.f32.mrb[0].mxu0
    %v1241 = vadd.f32 0.0, %v1240
    %v1242 = vpop.f32.mrb[0].mxu0
    %v1243 = vadd.f32 0.0, %v1242
    %1244 = vmatprep.mubr.f32.mxu0 0.0
    %1245 = vmatmul.mubr.f32.gmra.mrb[0].mxu0 %v1142
    %v1246 = vpop.f32.mrb[0].mxu0
    %v1247 = vadd.f32 0.0, %v1246
    %v1248 = vpop.f32.mrb[0].mxu0
    %v1249 = vadd.f32 0.0, %v1248
    %1250 = vmatprep.mubr.f32.mxu0 0.0
    %1251 = vmatmul.mubr.f32.gmra.mrb[0].mxu0 %v1145
    %v1252 = vpop.f32.mrb[0].mxu0
    %v1253 = vadd.f32 0.0, %v1252
    %v1254 = vpop.f32.mrb[0].mxu0
    %v1255 = vadd.f32 0.0, %v1254
    %1256 = vmatprep.mubr.f32.mxu0 0.0
    %1257 = vmatmul.mubr.f32.gmra.mrb[0].mxu0 %v1148
    %v1258 = vpop.f32.mrb[0].mxu0
    %v1259 = vadd.f32 0.0, %v1258
    %v1260 = vpop.f32.mrb[0].mxu0
    %v1261 = vadd.f32 0.0, %v1260
    %1262 = vmatprep.mubr.f32.mxu0 0.0
    %1263 = vmatmul.mubr.f32.gmra.mrb[0].mxu0 %v1151
    %v1264 = vpop.f32.mrb[0].mxu0
    %v1265 = vadd.f32 0.0, %v1264
    %v1266 = vpop.f32.mrb[0].mxu0
    %v1267 = vadd.f32 0.0, %v1266
    %1268 = vmatprep.mubr.f32.mxu0 0.0
    %1269 = vmatmul.mubr.f32.gmra.mrb[0].mxu0 %v1154
    %v1270 = vpop.f32.mrb[0].mxu0
    %v1271 = vadd.f32 0.0, %v1270
    %v1272 = vpop.f32.mrb[0].mxu0
    %v1273 = vadd.f32 0.0, %v1272
    %1274 = vmatprep.mubr.f32.mxu0 0.0
    %1275 = vmatmul.mubr.f32.gmra.mrb[0].mxu0 %v1157
    %v1276 = vpop.f32.mrb[0].mxu0
    %v1277 = vadd.f32 0.0, %v1276
    %v1278 = vpop.f32.mrb[0].mxu0
    %v1279 = vadd.f32 0.0, %v1278
    %1280 = vmatprep.mubr.f32.mxu0 0.0
    %1281 = vmatmul.mubr.f32.gmra.mrb[0].mxu0 %v1160
    %v1282 = vpop.f32.mrb[0].mxu0
    %v1283 = vadd.f32 0.0, %v1282
    %v1284 = vpop.f32.mrb[0].mxu0
    %v1285 = vadd.f32 0.0, %v1284
    %1286 = vmatprep.mubr.f32.mxu0 0.0
    %1287 = vmatmul.mubr.f32.gmra.mrb[0].mxu0 %v1163
    %v1288 = vpop.f32.mrb[0].mxu0
    %v1289 = vadd.f32 0.0, %v1288
    %v1290 = vpop.f32.mrb[0].mxu0
    %v1291 = vadd.f32 0.0, %v1290
    %1292 = vmatprep.mubr.f32.mxu0 0.0
    %1293 = vmatmul.mubr.f32.gmra.mrb[0].mxu0 %v1166
    %v1294 = vpop.f32.mrb[0].mxu0
    %v1295 = vadd.f32 0.0, %v1294
    %v1296 = vpop.f32.mrb[0].mxu0
    %v1297 = vadd.f32 0.0, %v1296
    %1298 = vmatprep.mubr.f32.mxu0 0.0
    %1299 = vmatmul.mubr.f32.gmra.mrb[0].mxu0 %v1169
    %v1300 = vpop.f32.mrb[0].mxu0
    %v1301 = vadd.f32 0.0, %v1300
    %v1302 = vpop.f32.mrb[0].mxu0
    %v1303 = vadd.f32 0.0, %v1302
    %1304 = vmatprep.mubr.f32.mxu0 0.0
    %1305 = vmatmul.mubr.f32.gmra.mrb[0].mxu0 %v1172
    %v1306 = vpop.f32.mrb[0].mxu0
    %v1307 = vadd.f32 0.0, %v1306
    %v1308 = vpop.f32.mrb[0].mxu0
    %v1309 = vadd.f32 0.0, %v1308
    %1310 = vdwg.mxu0
    %1311 = vmatprep.subr.mxu0 %v1102
    %1312 = vmatpush1.msra.mxu0 %v1101
    %1313 = vmatprep.subr.mxu0 %v1106
    %1314 = vmatpush1.msra.mxu0 %v1105
    %1315 = vmatprep.subr.mxu0 %v1110
    %1316 = vmatpush1.msra.mxu0 %v1109
    %1317 = vmatprep.subr.mxu0 %v1114
    %1318 = vmatpush1.msra.mxu0 %v1113
    %1319 = vmatprep.subr.mxu0 0.0
    %1320 = vmatpush1.msra.mxu0 0.0
    %1321 = vmatprep.subr.mxu0 0.0
    %1322 = vmatpush1.msra.mxu0 0.0
    %1323 = vmatprep.subr.mxu0 0.0
    %1324 = vmatpush1.msra.mxu0 0.0
    %1325 = vmatprep.subr.mxu0 0.0
    %1326 = vmatpush1.msra.mxu0 0.0
    %1327 = vmatprep.subr.mxu0 0.0
    %1328 = vmatpush1.msra.mxu0 0.0
    %1329 = vmatprep.subr.mxu0 0.0
    %1330 = vmatpush1.msra.mxu0 0.0
    %1331 = vmatprep.subr.mxu0 0.0
    %1332 = vmatpush1.msra.mxu0 0.0
    %1333 = vmatprep.subr.mxu0 0.0
    %1334 = vmatpush1.msra.mxu0 0.0
    %1335 = vmatprep.subr.mxu0 0.0
    %1336 = vmatpush1.msra.mxu0 0.0
    %1337 = vmatprep.subr.mxu0 0.0
    %1338 = vmatpush1.msra.mxu0 0.0
    %1339 = vmatprep.subr.mxu0 0.0
    %1340 = vmatpush1.msra.mxu0 0.0
    %1341 = vmatprep.subr.mxu0 0.0
    %1342 = vmatpush1.msra.mxu0 0.0
    %1343 = vmatprep.subr.mxu0 0.0
    %1344 = vmatpush1.msra.mxu0 0.0
    %1345 = vmatprep.subr.mxu0 0.0
    %1346 = vmatpush1.msra.mxu0 0.0
    %1347 = vmatprep.subr.mxu0 0.0
    %1348 = vmatpush1.msra.mxu0 0.0
    %1349 = vmatprep.subr.mxu0 0.0
    %1350 = vmatpush1.msra.mxu0 0.0
    %1351 = vmatprep.subr.mxu0 0.0
    %1352 = vmatpush1.msra.mxu0 0.0
    %1353 = vmatprep.subr.mxu0 0.0
    %1354 = vmatpush1.msra.mxu0 0.0
    %1355 = vmatprep.subr.mxu0 0.0
    %1356 = vmatpush1.msra.mxu0 0.0
    %1357 = vmatprep.subr.mxu0 0.0
    %1358 = vmatpush1.msra.mxu0 0.0
    %1359 = vmatprep.subr.mxu0 0.0
    %1360 = vmatpush1.msra.mxu0 0.0
    %1361 = vmatprep.subr.mxu0 0.0
    %1362 = vmatpush1.msra.mxu0 0.0
    %1363 = vmatprep.subr.mxu0 0.0
    %1364 = vmatpush1.msra.mxu0 0.0
    %1365 = vmatprep.subr.mxu0 0.0
    %1366 = vmatpush1.msra.mxu0 0.0
    %1367 = vmatprep.subr.mxu0 0.0
    %1368 = vmatpush1.msra.mxu0 0.0
    %1369 = vmatprep.subr.mxu0 0.0
    %1370 = vmatpush1.msra.mxu0 0.0
    %1371 = vmatprep.subr.mxu0 0.0
    %1372 = vmatpush1.msra.mxu0 0.0
    %1373 = vmatprep.subr.mxu0 0.0
    %1374 = vmatpush1.msra.mxu0 0.0
    %1375 = vmatprep.mubr.f32.mxu0 0.0
    %1376 = vmatmul.mubr.f32.gmra.mrb[0].mxu0 %v1139
    %v1377 = vpop.f32.mrb[0].mxu0
    %v1378 = vadd.f32 0.0, %v1377
    %v1379 = vpop.f32.mrb[0].mxu0
    %v1380 = vadd.f32 0.0, %v1379
    %1381 = vmatprep.mubr.f32.mxu0 0.0
    %1382 = vmatmul.mubr.f32.gmra.mrb[0].mxu0 %v1142
    %v1383 = vpop.f32.mrb[0].mxu0
    %v1384 = vadd.f32 0.0, %v1383
    %v1385 = vpop.f32.mrb[0].mxu0
    %v1386 = vadd.f32 0.0, %v1385
    %1387 = vmatprep.mubr.f32.mxu0 0.0
    %1388 = vmatmul.mubr.f32.gmra.mrb[0].mxu0 %v1145
    %v1389 = vpop.f32.mrb[0].mxu0
    %v1390 = vadd.f32 0.0, %v1389
    %v1391 = vpop.f32.mrb[0].mxu0
    %v1392 = vadd.f32 0.0, %v1391
    %1393 = vmatprep.mubr.f32.mxu0 0.0
    %1394 = vmatmul.mubr.f32.gmra.mrb[0].mxu0 %v1148
    %v1395 = vpop.f32.mrb[0].mxu0
    %v1396 = vadd.f32 0.0, %v1395
    %v1397 = vpop.f32.mrb[0].mxu0
    %v1398 = vadd.f32 0.0, %v1397
    %1399 = vmatprep.mubr.f32.mxu0 0.0
    %1400 = vmatmul.mubr.f32.gmra.mrb[0].mxu0 %v1151
    %v1401 = vpop.f32.mrb[0].mxu0
    %v1402 = vadd.f32 0.0, %v1401
    %v1403 = vpop.f32.mrb[0].mxu0
    %v1404 = vadd.f32 0.0, %v1403
    %1405 = vmatprep.mubr.f32.mxu0 0.0
    %1406 = vmatmul.mubr.f32.gmra.mrb[0].mxu0 %v1154
    %v1407 = vpop.f32.mrb[0].mxu0
    %v1408 = vadd.f32 0.0, %v1407
    %v1409 = vpop.f32.mrb[0].mxu0
    %v1410 = vadd.f32 0.0, %v1409
    %1411 = vmatprep.mubr.f32.mxu0 0.0
    %1412 = vmatmul.mubr.f32.gmra.mrb[0].mxu0 %v1157
    %v1413 = vpop.f32.mrb[0].mxu0
    %v1414 = vadd.f32 0.0, %v1413
    %v1415 = vpop.f32.mrb[0].mxu0
    %v1416 = vadd.f32 0.0, %v1415
    %1417 = vmatprep.mubr.f32.mxu0 0.0
    %1418 = vmatmul.mubr.f32.gmra.mrb[0].mxu0 %v1160
    %v1419 = vpop.f32.mrb[0].mxu0
    %v1420 = vadd.f32 0.0, %v1419
    %v1421 = vpop.f32.mrb[0].mxu0
    %v1422 = vadd.f32 0.0, %v1421
    %1423 = vmatprep.mubr.f32.mxu0 0.0
    %1424 = vmatmul.mubr.f32.gmra.mrb[0].mxu0 %v1163
    %v1425 = vpop.f32.mrb[0].mxu0
    %v1426 = vadd.f32 0.0, %v1425
    %v1427 = vpop.f32.mrb[0].mxu0
    %v1428 = vadd.f32 0.0, %v1427
    %1429 = vmatprep.mubr.f32.mxu0 0.0
    %1430 = vmatmul.mubr.f32.gmra.mrb[0].mxu0 %v1166
    %v1431 = vpop.f32.mrb[0].mxu0
    %v1432 = vadd.f32 0.0, %v1431
    %v1433 = vpop.f32.mrb[0].mxu0
    %v1434 = vadd.f32 0.0, %v1433
    %1435 = vmatprep.mubr.f32.mxu0 0.0
    %1436 = vmatmul.mubr.f32.gmra.mrb[0].mxu0 %v1169
    %v1437 = vpop.f32.mrb[0].mxu0
    %v1438 = vadd.f32 0.0, %v1437
    %v1439 = vpop.f32.mrb[0].mxu0
    %v1440 = vadd.f32 0.0, %v1439
    %1441 = vmatprep.mubr.f32.mxu0 0.0
    %1442 = vmatmul.mubr.f32.gmra.mrb[0].mxu0 %v1172
    %v1443 = vpop.f32.mrb[0].mxu0
    %v1444 = vadd.f32 0.0, %v1443
    %v1445 = vpop.f32.mrb[0].mxu0
    %v1446 = vadd.f32 0.0, %v1445
    %1447 = vdwg.mxu0
    %v1448 = vpack.c.bf16 %v1247, %v1241
    %v1449 = vpack.c.bf16 %v1249, %v1243
    %v1450 = vpack.c.bf16 %v1384, %v1378
    %v1451 = vpack.c.bf16 %v1386, %v1380
    %v1452 = vpack.c.bf16 %v1259, %v1253
    %v1453 = vpack.c.bf16 %v1261, %v1255
    %v1454 = vpack.c.bf16 %v1396, %v1390
    %v1455 = vpack.c.bf16 %v1398, %v1392
    %v1456 = vpack.c.bf16 %v1271, %v1265
    %v1457 = vpack.c.bf16 %v1273, %v1267
    %v1458 = vpack.c.bf16 %v1408, %v1402
    %v1459 = vpack.c.bf16 %v1410, %v1404
    %v1460 = vpack.c.bf16 %v1283, %v1277
    %v1461 = vpack.c.bf16 %v1285, %v1279
    %v1462 = vpack.c.bf16 %v1420, %v1414
    %v1463 = vpack.c.bf16 %v1422, %v1416
    %v1464 = vpack.c.bf16 %v1295, %v1289
    %v1465 = vpack.c.bf16 %v1297, %v1291
    %v1466 = vpack.c.bf16 %v1432, %v1426
    %v1467 = vpack.c.bf16 %v1434, %v1428
    %v1468 = vpack.c.bf16 %v1307, %v1301
    %v1469 = vpack.c.bf16 %v1309, %v1303
    %v1470 = vpack.c.bf16 %v1444, %v1438
    %v1471 = vpack.c.bf16 %v1446, %v1440
    %v1472 = vld [vmem:[#allocation5] sm:$0xff]
    %v1473 = vld [vmem:[#allocation5 + $0x8] sm:$0xff]
    %v1474 = vld [vmem:[#allocation5 + $0x10] sm:$0xff]
    %v1475 = vld [vmem:[#allocation5 + $0x18] sm:$0xff]
    %v1476 = vld [vmem:[#allocation5 + $0x20] sm:$0xff]
    %v1477 = vld [vmem:[#allocation5 + $0x28] sm:$0xff]
    %v1478 = vld [vmem:[#allocation5 + $0x30] sm:$0xff]
    %v1479 = vld [vmem:[#allocation5 + $0x38] sm:$0xff]
    %v1480 = vld [vmem:[#allocation5 + $0x40] sm:$0xff]
    %v1481 = vld [vmem:[#allocation5 + $0x48] sm:$0xff]
    %v1482 = vld [vmem:[#allocation5 + $0x50] sm:$0xff]
    %v1483 = vld [vmem:[#allocation5 + $0x58] sm:$0xff]
    %v1484 = vld [vmem:[#allocation5 + $0x60] sm:$0xff]
    %v1485 = vld [vmem:[#allocation5 + $0x68] sm:$0xff]
    %v1486 = vld [vmem:[#allocation5 + $0x70] sm:$0xff]
    %v1487 = vld [vmem:[#allocation5 + $0x78] sm:$0xff]
    %v1488 = vld [vmem:[#allocation5 + $0x80] sm:$0xff]
    %v1489 = vld [vmem:[#allocation5 + $0x88] sm:$0xff]
    %v1490 = vld [vmem:[#allocation5 + $0x90] sm:$0xff]
    %v1491 = vld [vmem:[#allocation5 + $0x98] sm:$0xff]
    %v1492 = vld [vmem:[#allocation5 + $0xa0] sm:$0xff]
    %v1493 = vld [vmem:[#allocation5 + $0xa8] sm:$0xff]
    %v1494 = vld [vmem:[#allocation5 + $0xb0] sm:$0xff]
    %v1495 = vld [vmem:[#allocation5 + $0xb8] sm:$0xff]
    %v1496 = vld [vmem:[#allocation5 + $0xc0] sm:$0xff]
    %v1497 = vld [vmem:[#allocation5 + $0xc8] sm:$0xff]
    %v1498 = vld [vmem:[#allocation5 + $0xd0] sm:$0xff]
    %v1499 = vld [vmem:[#allocation5 + $0xd8] sm:$0xff]
    %v1500 = vld [vmem:[#allocation5 + $0xe0] sm:$0xff]
    %v1501 = vld [vmem:[#allocation5 + $0xe8] sm:$0xff]
    %v1502 = vld [vmem:[#allocation5 + $0xf0] sm:$0xff]
    %v1503 = vld [vmem:[#allocation5 + $0xf8] sm:$0xff]
    %v1504 = vld [vmem:[#allocation5 + $0x100] sm:$0xff]
    %v1505 = vld [vmem:[#allocation5 + $0x108] sm:$0xff]
    %v1506 = vld [vmem:[#allocation5 + $0x110] sm:$0xff]
    %v1507 = vld [vmem:[#allocation5 + $0x118] sm:$0xff]
    %v1508 = vld [vmem:[#allocation5 + $0x120] sm:$0xff]
    %v1509 = vld [vmem:[#allocation5 + $0x128] sm:$0xff]
    %v1510 = vld [vmem:[#allocation5 + $0x130] sm:$0xff]
    %v1511 = vld [vmem:[#allocation5 + $0x138] sm:$0xff]
    %v1512 = vld [vmem:[#allocation5 + $0x140] sm:$0xff]
    %v1513 = vld [vmem:[#allocation5 + $0x148] sm:$0xff]
    %v1514 = vld [vmem:[#allocation5 + $0x150] sm:$0xff]
    %v1515 = vld [vmem:[#allocation5 + $0x158] sm:$0xff]
    %v1516 = vld [vmem:[#allocation5 + $0x160] sm:$0xff]
    %v1517 = vld [vmem:[#allocation5 + $0x168] sm:$0xff]
    %v1518 = vld [vmem:[#allocation5 + $0x170] sm:$0xff]
    %v1519 = vld [vmem:[#allocation5 + $0x178] sm:$0xff]
    %v1520 = vld [vmem:[#allocation5 + $0x180] sm:$0xff]
    %v1521 = vld [vmem:[#allocation5 + $0x188] sm:$0xff]
    %v1522 = vld [vmem:[#allocation5 + $0x190] sm:$0xff]
    %v1523 = vld [vmem:[#allocation5 + $0x198] sm:$0xff]
    %v1524 = vld [vmem:[#allocation5 + $0x1a0] sm:$0xff]
    %v1525 = vld [vmem:[#allocation5 + $0x1a8] sm:$0xff]
    %v1526 = vld [vmem:[#allocation5 + $0x1b0] sm:$0xff]
    %v1527 = vld [vmem:[#allocation5 + $0x1b8] sm:$0xff]
    %v1528 = vld [vmem:[#allocation5 + $0x1c0] sm:$0xff]
    %v1529 = vld [vmem:[#allocation5 + $0x1c8] sm:$0xff]
    %v1530 = vld [vmem:[#allocation5 + $0x1d0] sm:$0xff]
    %v1531 = vld [vmem:[#allocation5 + $0x1d8] sm:$0xff]
    %v1532 = vld [vmem:[#allocation5 + $0x1e0] sm:$0xff]
    %v1533 = vld [vmem:[#allocation5 + $0x1e8] sm:$0xff]
    %v1534 = vld [vmem:[#allocation5 + $0x1f0] sm:$0xff]
    %v1535 = vld [vmem:[#allocation5 + $0x1f8] sm:$0xff]
    %v1536 = vld [vmem:[#allocation5 + $0x200] sm:$0xff]
    %v1537 = vld [vmem:[#allocation5 + $0x208] sm:$0xff]
    %v1538 = vld [vmem:[#allocation5 + $0x210] sm:$0xff]
    %v1539 = vld [vmem:[#allocation5 + $0x218] sm:$0xff]
    %v1540 = vld [vmem:[#allocation5 + $0x220] sm:$0xff]
    %v1541 = vld [vmem:[#allocation5 + $0x228] sm:$0xff]
    %v1542 = vld [vmem:[#allocation5 + $0x230] sm:$0xff]
    %v1543 = vld [vmem:[#allocation5 + $0x238] sm:$0xff]
    %v1544 = vld [vmem:[#allocation5 + $0x240] sm:$0xff]
    %v1545 = vld [vmem:[#allocation5 + $0x248] sm:$0xff]
    %v1546 = vld [vmem:[#allocation5 + $0x250] sm:$0xff]
    %v1547 = vld [vmem:[#allocation5 + $0x258] sm:$0xff]
    %v1548 = vld [vmem:[#allocation5 + $0x260] sm:$0xff]
    %v1549 = vld [vmem:[#allocation5 + $0x268] sm:$0xff]
    %v1550 = vld [vmem:[#allocation5 + $0x270] sm:$0xff]
    %v1551 = vld [vmem:[#allocation5 + $0x278] sm:$0xff]
    %v1552 = vld [vmem:[#allocation5 + $0x280] sm:$0xff]
    %v1553 = vld [vmem:[#allocation5 + $0x288] sm:$0xff]
    %v1554 = vld [vmem:[#allocation5 + $0x290] sm:$0xff]
    %v1555 = vld [vmem:[#allocation5 + $0x298] sm:$0xff]
    %v1556 = vld [vmem:[#allocation5 + $0x2a0] sm:$0xff]
    %v1557 = vld [vmem:[#allocation5 + $0x2a8] sm:$0xff]
    %v1558 = vld [vmem:[#allocation5 + $0x2b0] sm:$0xff]
    %v1559 = vld [vmem:[#allocation5 + $0x2b8] sm:$0xff]
    %v1560 = vld [vmem:[#allocation5 + $0x2c0] sm:$0xff]
    %v1561 = vld [vmem:[#allocation5 + $0x2c8] sm:$0xff]
    %v1562 = vld [vmem:[#allocation5 + $0x2d0] sm:$0xff]
    %v1563 = vld [vmem:[#allocation5 + $0x2d8] sm:$0xff]
    %v1564 = vld [vmem:[#allocation5 + $0x2e0] sm:$0xff]
    %v1565 = vld [vmem:[#allocation5 + $0x2e8] sm:$0xff]
    %v1566 = vld [vmem:[#allocation5 + $0x2f0] sm:$0xff]
    %v1567 = vld [vmem:[#allocation5 + $0x2f8] sm:$0xff]
    %v1568 = vld [vmem:[#allocation5 + $0x300] sm:$0xff]
    %v1569 = vld [vmem:[#allocation5 + $0x308] sm:$0xff]
    %v1570 = vld [vmem:[#allocation5 + $0x310] sm:$0xff]
    %v1571 = vld [vmem:[#allocation5 + $0x318] sm:$0xff]
    %v1572 = vld [vmem:[#allocation5 + $0x320] sm:$0xff]
    %v1573 = vld [vmem:[#allocation5 + $0x328] sm:$0xff]
    %v1574 = vld [vmem:[#allocation5 + $0x330] sm:$0xff]
    %v1575 = vld [vmem:[#allocation5 + $0x338] sm:$0xff]
    %v1576 = vld [vmem:[#allocation5 + $0x340] sm:$0xff]
    %v1577 = vld [vmem:[#allocation5 + $0x348] sm:$0xff]
    %v1578 = vld [vmem:[#allocation5 + $0x350] sm:$0xff]
    %v1579 = vld [vmem:[#allocation5 + $0x358] sm:$0xff]
    %v1580 = vld [vmem:[#allocation5 + $0x360] sm:$0xff]
    %v1581 = vld [vmem:[#allocation5 + $0x368] sm:$0xff]
    %v1582 = vld [vmem:[#allocation5 + $0x370] sm:$0xff]
    %v1583 = vld [vmem:[#allocation5 + $0x378] sm:$0xff]
    %v1584 = vld [vmem:[#allocation5 + $0x380] sm:$0xff]
    %v1585 = vld [vmem:[#allocation5 + $0x388] sm:$0xff]
    %v1586 = vld [vmem:[#allocation5 + $0x390] sm:$0xff]
    %v1587 = vld [vmem:[#allocation5 + $0x398] sm:$0xff]
    %v1588 = vld [vmem:[#allocation5 + $0x3a0] sm:$0xff]
    %v1589 = vld [vmem:[#allocation5 + $0x3a8] sm:$0xff]
    %v1590 = vld [vmem:[#allocation5 + $0x3b0] sm:$0xff]
    %v1591 = vld [vmem:[#allocation5 + $0x3b8] sm:$0xff]
    %v1592 = vld [vmem:[#allocation5 + $0x3c0] sm:$0xff]
    %v1593 = vld [vmem:[#allocation5 + $0x3c8] sm:$0xff]
    %v1594 = vld [vmem:[#allocation5 + $0x3d0] sm:$0xff]
    %v1595 = vld [vmem:[#allocation5 + $0x3d8] sm:$0xff]
    %v1596 = vld [vmem:[#allocation5 + $0x3e0] sm:$0xff]
    %v1597 = vld [vmem:[#allocation5 + $0x3e8] sm:$0xff]
    %v1598 = vld [vmem:[#allocation5 + $0x3f0] sm:$0xff]
    %v1599 = vld [vmem:[#allocation5 + $0x3f8] sm:$0xff]
    %1600 = vmatprep.subr.bf16.mxu0 %v1473
    %1601 = vmatpush1.bf16.msra.mxu0 %v1472
    %1602 = vmatprep.subr.bf16.mxu0 %v1477
    %1603 = vmatpush1.bf16.msra.mxu0 %v1476
    %1604 = vmatprep.subr.bf16.mxu0 %v1481
    %1605 = vmatpush1.bf16.msra.mxu0 %v1480
    %1606 = vmatprep.subr.bf16.mxu0 %v1485
    %1607 = vmatpush1.bf16.msra.mxu0 %v1484
    %1608 = vmatprep.subr.bf16.mxu0 %v1489
    %1609 = vmatpush1.bf16.msra.mxu0 %v1488
    %1610 = vmatprep.subr.bf16.mxu0 %v1493
    %1611 = vmatpush1.bf16.msra.mxu0 %v1492
    %1612 = vmatprep.subr.bf16.mxu0 %v1497
    %1613 = vmatpush1.bf16.msra.mxu0 %v1496
    %1614 = vmatprep.subr.bf16.mxu0 %v1501
    %1615 = vmatpush1.bf16.msra.mxu0 %v1500
    %1616 = vmatprep.subr.bf16.mxu0 %v1505
    %1617 = vmatpush1.bf16.msra.mxu0 %v1504
    %1618 = vmatprep.subr.bf16.mxu0 %v1509
    %1619 = vmatpush1.bf16.msra.mxu0 %v1508
    %1620 = vmatprep.subr.bf16.mxu0 %v1513
    %1621 = vmatpush1.bf16.msra.mxu0 %v1512
    %1622 = vmatprep.subr.bf16.mxu0 %v1517
    %1623 = vmatpush1.bf16.msra.mxu0 %v1516
    %1624 = vmatprep.subr.bf16.mxu0 %v1521
    %1625 = vmatpush1.bf16.msra.mxu0 %v1520
    %1626 = vmatprep.subr.bf16.mxu0 %v1525
    %1627 = vmatpush1.bf16.msra.mxu0 %v1524
    %1628 = vmatprep.subr.bf16.mxu0 %v1529
    %1629 = vmatpush1.bf16.msra.mxu0 %v1528
    %1630 = vmatprep.subr.bf16.mxu0 %v1533
    %1631 = vmatpush1.bf16.msra.mxu0 %v1532
    %1632 = vmatprep.mubr.bf16.mxu0 %v1449
    %1633 = vmatmul.mubr.bf16.gmra.mrb[0].mxu0 %v1448
    %v1634 = vpop.f32.mrb[0].mxu0
    %v1635 = vadd.f32 0.0, %v1634
    %v1636 = vpop.f32.mrb[0].mxu0
    %v1637 = vadd.f32 0.0, %v1636
    %v1638 = vpop.f32.mrb[0].mxu0
    %v1639 = vadd.f32 0.0, %v1638
    %v1640 = vpop.f32.mrb[0].mxu0
    %v1641 = vadd.f32 0.0, %v1640
    %1642 = vmatprep.mubr.bf16.mxu0 %v1453
    %1643 = vmatmul.mubr.bf16.gmra.mrb[0].mxu0 %v1452
    %v1644 = vpop.f32.mrb[0].mxu0
    %v1645 = vadd.f32 0.0, %v1644
    %v1646 = vpop.f32.mrb[0].mxu0
    %v1647 = vadd.f32 0.0, %v1646
    %v1648 = vpop.f32.mrb[0].mxu0
    %v1649 = vadd.f32 0.0, %v1648
    %v1650 = vpop.f32.mrb[0].mxu0
    %v1651 = vadd.f32 0.0, %v1650
    %1652 = vdwg.mxu0
    %1653 = vmatprep.subr.bf16.mxu0 %v1537
    %1654 = vmatpush1.bf16.msra.mxu0 %v1536
    %1655 = vmatprep.subr.bf16.mxu0 %v1541
    %1656 = vmatpush1.bf16.msra.mxu0 %v1540
    %1657 = vmatprep.subr.bf16.mxu0 %v1545
    %1658 = vmatpush1.bf16.msra.mxu0 %v1544
    %1659 = vmatprep.subr.bf16.mxu0 %v1549
    %1660 = vmatpush1.bf16.msra.mxu0 %v1548
    %1661 = vmatprep.subr.bf16.mxu0 %v1553
    %1662 = vmatpush1.bf16.msra.mxu0 %v1552
    %1663 = vmatprep.subr.bf16.mxu0 %v1557
    %1664 = vmatpush1.bf16.msra.mxu0 %v1556
    %1665 = vmatprep.subr.bf16.mxu0 %v1561
    %1666 = vmatpush1.bf16.msra.mxu0 %v1560
    %1667 = vmatprep.subr.bf16.mxu0 %v1565
    %1668 = vmatpush1.bf16.msra.mxu0 %v1564
    %1669 = vmatprep.subr.bf16.mxu0 %v1569
    %1670 = vmatpush1.bf16.msra.mxu0 %v1568
    %1671 = vmatprep.subr.bf16.mxu0 %v1573
    %1672 = vmatpush1.bf16.msra.mxu0 %v1572
    %1673 = vmatprep.subr.bf16.mxu0 %v1577
    %1674 = vmatpush1.bf16.msra.mxu0 %v1576
    %1675 = vmatprep.subr.bf16.mxu0 %v1581
    %1676 = vmatpush1.bf16.msra.mxu0 %v1580
    %1677 = vmatprep.subr.bf16.mxu0 %v1585
    %1678 = vmatpush1.bf16.msra.mxu0 %v1584
    %1679 = vmatprep.subr.bf16.mxu0 %v1589
    %1680 = vmatpush1.bf16.msra.mxu0 %v1588
    %1681 = vmatprep.subr.bf16.mxu0 %v1593
    %1682 = vmatpush1.bf16.msra.mxu0 %v1592
    %1683 = vmatprep.subr.bf16.mxu0 %v1597
    %1684 = vmatpush1.bf16.msra.mxu0 %v1596
    %1685 = vmatprep.mubr.bf16.mxu0 %v1451
    %1686 = vmatmul.mubr.bf16.gmra.mrb[0].mxu0 %v1450
    %v1687 = vpop.f32.mrb[0].mxu0
    %v1688 = vadd.f32 %v1635, %v1687
    %v1689 = vpop.f32.mrb[0].mxu0
    %v1690 = vadd.f32 %v1637, %v1689
    %v1691 = vpop.f32.mrb[0].mxu0
    %v1692 = vadd.f32 %v1639, %v1691
    %v1693 = vpop.f32.mrb[0].mxu0
    %v1694 = vadd.f32 %v1641, %v1693
    %1695 = vmatprep.mubr.bf16.mxu0 %v1455
    %1696 = vmatmul.mubr.bf16.gmra.mrb[0].mxu0 %v1454
    %v1697 = vpop.f32.mrb[0].mxu0
    %v1698 = vadd.f32 %v1645, %v1697
    %v1699 = vpop.f32.mrb[0].mxu0
    %v1700 = vadd.f32 %v1647, %v1699
    %v1701 = vpop.f32.mrb[0].mxu0
    %v1702 = vadd.f32 %v1649, %v1701
    %v1703 = vpop.f32.mrb[0].mxu0
    %v1704 = vadd.f32 %v1651, %v1703
    %1705 = vdwg.mxu0
    %1706 = vmatprep.subr.bf16.mxu0 %v1475
    %1707 = vmatpush1.bf16.msra.mxu0 %v1474
    %1708 = vmatprep.subr.bf16.mxu0 %v1479
    %1709 = vmatpush1.bf16.msra.mxu0 %v1478
    %1710 = vmatprep.subr.bf16.mxu0 %v1483
    %1711 = vmatpush1.bf16.msra.mxu0 %v1482
    %1712 = vmatprep.subr.bf16.mxu0 %v1487
    %1713 = vmatpush1.bf16.msra.mxu0 %v1486
    %1714 = vmatprep.subr.bf16.mxu0 %v1491
    %1715 = vmatpush1.bf16.msra.mxu0 %v1490
    %1716 = vmatprep.subr.bf16.mxu0 %v1495
    %1717 = vmatpush1.bf16.msra.mxu0 %v1494
    %1718 = vmatprep.subr.bf16.mxu0 %v1499
    %1719 = vmatpush1.bf16.msra.mxu0 %v1498
    %1720 = vmatprep.subr.bf16.mxu0 %v1503
    %1721 = vmatpush1.bf16.msra.mxu0 %v1502
    %1722 = vmatprep.subr.bf16.mxu0 %v1507
    %1723 = vmatpush1.bf16.msra.mxu0 %v1506
    %1724 = vmatprep.subr.bf16.mxu0 %v1511
    %1725 = vmatpush1.bf16.msra.mxu0 %v1510
    %1726 = vmatprep.subr.bf16.mxu0 %v1515
    %1727 = vmatpush1.bf16.msra.mxu0 %v1514
    %1728 = vmatprep.subr.bf16.mxu0 %v1519
    %1729 = vmatpush1.bf16.msra.mxu0 %v1518
    %1730 = vmatprep.subr.bf16.mxu0 %v1523
    %1731 = vmatpush1.bf16.msra.mxu0 %v1522
    %1732 = vmatprep.subr.bf16.mxu0 %v1527
    %1733 = vmatpush1.bf16.msra.mxu0 %v1526
    %1734 = vmatprep.subr.bf16.mxu0 %v1531
    %1735 = vmatpush1.bf16.msra.mxu0 %v1530
    %1736 = vmatprep.subr.bf16.mxu0 %v1535
    %1737 = vmatpush1.bf16.msra.mxu0 %v1534
    %1738 = vmatprep.mubr.bf16.mxu0 %v1449
    %1739 = vmatmul.mubr.bf16.gmra.mrb[0].mxu0 %v1448
    %v1740 = vpop.f32.mrb[0].mxu0
    %v1741 = vadd.f32 0.0, %v1740
    %v1742 = vpop.f32.mrb[0].mxu0
    %v1743 = vadd.f32 0.0, %v1742
    %v1744 = vpop.f32.mrb[0].mxu0
    %v1745 = vadd.f32 0.0, %v1744
    %v1746 = vpop.f32.mrb[0].mxu0
    %v1747 = vadd.f32 0.0, %v1746
    %1748 = vmatprep.mubr.bf16.mxu0 %v1453
    %1749 = vmatmul.mubr.bf16.gmra.mrb[0].mxu0 %v1452
    %v1750 = vpop.f32.mrb[0].mxu0
    %v1751 = vadd.f32 0.0, %v1750
    %v1752 = vpop.f32.mrb[0].mxu0
    %v1753 = vadd.f32 0.0, %v1752
    %v1754 = vpop.f32.mrb[0].mxu0
    %v1755 = vadd.f32 0.0, %v1754
    %v1756 = vpop.f32.mrb[0].mxu0
    %v1757 = vadd.f32 0.0, %v1756
    %1758 = vdwg.mxu0
    %1759 = vmatprep.subr.bf16.mxu0 %v1539
    %1760 = vmatpush1.bf16.msra.mxu0 %v1538
    %1761 = vmatprep.subr.bf16.mxu0 %v1543
    %1762 = vmatpush1.bf16.msra.mxu0 %v1542
    %1763 = vmatprep.subr.bf16.mxu0 %v1547
    %1764 = vmatpush1.bf16.msra.mxu0 %v1546
    %1765 = vmatprep.subr.bf16.mxu0 %v1551
    %1766 = vmatpush1.bf16.msra.mxu0 %v1550
    %1767 = vmatprep.subr.bf16.mxu0 %v1555
    %1768 = vmatpush1.bf16.msra.mxu0 %v1554
    %1769 = vmatprep.subr.bf16.mxu0 %v1559
    %1770 = vmatpush1.bf16.msra.mxu0 %v1558
    %1771 = vmatprep.subr.bf16.mxu0 %v1563
    %1772 = vmatpush1.bf16.msra.mxu0 %v1562
    %1773 = vmatprep.subr.bf16.mxu0 %v1567
    %1774 = vmatpush1.bf16.msra.mxu0 %v1566
    %1775 = vmatprep.subr.bf16.mxu0 %v1571
    %1776 = vmatpush1.bf16.msra.mxu0 %v1570
    %1777 = vmatprep.subr.bf16.mxu0 %v1575
    %1778 = vmatpush1.bf16.msra.mxu0 %v1574
    %1779 = vmatprep.subr.bf16.mxu0 %v1579
    %1780 = vmatpush1.bf16.msra.mxu0 %v1578
    %1781 = vmatprep.subr.bf16.mxu0 %v1583
    %1782 = vmatpush1.bf16.msra.mxu0 %v1582
    %1783 = vmatprep.subr.bf16.mxu0 %v1587
    %1784 = vmatpush1.bf16.msra.mxu0 %v1586
    %1785 = vmatprep.subr.bf16.mxu0 %v1591
    %1786 = vmatpush1.bf16.msra.mxu0 %v1590
    %1787 = vmatprep.subr.bf16.mxu0 %v1595
    %1788 = vmatpush1.bf16.msra.mxu0 %v1594
    %1789 = vmatprep.subr.bf16.mxu0 %v1599
    %1790 = vmatpush1.bf16.msra.mxu0 %v1598
    %1791 = vmatprep.mubr.bf16.mxu0 %v1451
    %1792 = vmatmul.mubr.bf16.gmra.mrb[0].mxu0 %v1450
    %v1793 = vpop.f32.mrb[0].mxu0
    %v1794 = vadd.f32 %v1741, %v1793
    %v1795 = vpop.f32.mrb[0].mxu0
    %v1796 = vadd.f32 %v1743, %v1795
    %v1797 = vpop.f32.mrb[0].mxu0
    %v1798 = vadd.f32 %v1745, %v1797
    %v1799 = vpop.f32.mrb[0].mxu0
    %v1800 = vadd.f32 %v1747, %v1799
    %1801 = vmatprep.mubr.bf16.mxu0 %v1455
    %1802 = vmatmul.mubr.bf16.gmra.mrb[0].mxu0 %v1454
    %v1803 = vpop.f32.mrb[0].mxu0
    %v1804 = vadd.f32 %v1751, %v1803
    %v1805 = vpop.f32.mrb[0].mxu0
    %v1806 = vadd.f32 %v1753, %v1805
    %v1807 = vpop.f32.mrb[0].mxu0
    %v1808 = vadd.f32 %v1755, %v1807
    %v1809 = vpop.f32.mrb[0].mxu0
    %v1810 = vadd.f32 %v1757, %v1809
    %1811 = vdwg.mxu0
    %v1813 = vlaneseq
    %v1814 = vshrl.u32 %v1813, 7
    %v1815 = vsub.s32 0, %v1814
    %v1816 = vrot.slane %v1124, %v1815
    %v1817 = vlaneseq
    %v1818 = vshrl.u32 %v1817, 7
    %v1819 = vsub.s32 1, %v1818
    %v1820 = vrot.slane %v1124, %v1819
    %v1821 = vlaneseq
    %v1822 = vshrl.u32 %v1821, 7
    %v1823 = vsub.s32 2, %v1822
    %v1824 = vrot.slane %v1124, %v1823
    %v1825 = vlaneseq
    %v1826 = vshrl.u32 %v1825, 7
    %v1827 = vsub.s32 3, %v1826
    %v1828 = vrot.slane %v1124, %v1827
    %v1833 = vadd.f32 %v1816, %v1688
    %v1834 = vadd.f32 %v1820, %v1690
    %v1835 = vadd.f32 %v1824, %v1794
    %v1836 = vadd.f32 %v1828, %v1796
    %v1837 = vadd.f32 %v1816, %v1692
    %v1838 = vadd.f32 %v1820, %v1694
    %v1839 = vadd.f32 %v1824, %v1798
    %v1840 = vadd.f32 %v1828, %v1800
    %v1841 = vadd.f32 %v1816, %v1698
    %v1842 = vadd.f32 %v1820, %v1700
    %v1843 = vadd.f32 %v1824, %v1804
    %v1844 = vadd.f32 %v1828, %v1806
    %v1845 = vadd.f32 %v1816, %v1702
    %v1846 = vadd.f32 %v1820, %v1704
    %v1847 = vadd.f32 %v1824, %v1808
    %v1848 = vadd.f32 %v1828, %v1810
    %s1849 = scalar_lea.vmem [#allocation5], 1024
    %v1850 = vld [vmem:[%s1849] sm:$0xff]
    %v1851 = vld [vmem:[%s1849 + $0x8] sm:$0xff]
    %v1852 = vld [vmem:[%s1849 + $0x10] sm:$0xff]
    %v1853 = vld [vmem:[%s1849 + $0x18] sm:$0xff]
    %v1854 = vld [vmem:[%s1849 + $0x20] sm:$0xff]
    %v1855 = vld [vmem:[%s1849 + $0x28] sm:$0xff]
    %v1856 = vld [vmem:[%s1849 + $0x30] sm:$0xff]
    %v1857 = vld [vmem:[%s1849 + $0x38] sm:$0xff]
    %v1858 = vld [vmem:[%s1849 + $0x40] sm:$0xff]
    %v1859 = vld [vmem:[%s1849 + $0x48] sm:$0xff]
    %v1860 = vld [vmem:[%s1849 + $0x50] sm:$0xff]
    %v1861 = vld [vmem:[%s1849 + $0x58] sm:$0xff]
    %v1862 = vld [vmem:[%s1849 + $0x60] sm:$0xff]
    %v1863 = vld [vmem:[%s1849 + $0x68] sm:$0xff]
    %v1864 = vld [vmem:[%s1849 + $0x70] sm:$0xff]
    %v1865 = vld [vmem:[%s1849 + $0x78] sm:$0xff]
    %v1866 = vld [vmem:[%s1849 + $0x80] sm:$0xff]
    %v1867 = vld [vmem:[%s1849 + $0x88] sm:$0xff]
    %v1868 = vld [vmem:[%s1849 + $0x90] sm:$0xff]
    %v1869 = vld [vmem:[%s1849 + $0x98] sm:$0xff]
    %v1870 = vld [vmem:[%s1849 + $0xa0] sm:$0xff]
    %v1871 = vld [vmem:[%s1849 + $0xa8] sm:$0xff]
    %v1872 = vld [vmem:[%s1849 + $0xb0] sm:$0xff]
    %v1873 = vld [vmem:[%s1849 + $0xb8] sm:$0xff]
    %v1874 = vld [vmem:[%s1849 + $0xc0] sm:$0xff]
    %v1875 = vld [vmem:[%s1849 + $0xc8] sm:$0xff]
    %v1876 = vld [vmem:[%s1849 + $0xd0] sm:$0xff]
    %v1877 = vld [vmem:[%s1849 + $0xd8] sm:$0xff]
    %v1878 = vld [vmem:[%s1849 + $0xe0] sm:$0xff]
    %v1879 = vld [vmem:[%s1849 + $0xe8] sm:$0xff]
    %v1880 = vld [vmem:[%s1849 + $0xf0] sm:$0xff]
    %v1881 = vld [vmem:[%s1849 + $0xf8] sm:$0xff]
    %v1882 = vld [vmem:[%s1849 + $0x100] sm:$0xff]
    %v1883 = vld [vmem:[%s1849 + $0x108] sm:$0xff]
    %v1884 = vld [vmem:[%s1849 + $0x110] sm:$0xff]
    %v1885 = vld [vmem:[%s1849 + $0x118] sm:$0xff]
    %v1886 = vld [vmem:[%s1849 + $0x120] sm:$0xff]
    %v1887 = vld [vmem:[%s1849 + $0x128] sm:$0xff]
    %v1888 = vld [vmem:[%s1849 + $0x130] sm:$0xff]
    %v1889 = vld [vmem:[%s1849 + $0x138] sm:$0xff]
    %v1890 = vld [vmem:[%s1849 + $0x140] sm:$0xff]
    %v1891 = vld [vmem:[%s1849 + $0x148] sm:$0xff]
    %v1892 = vld [vmem:[%s1849 + $0x150] sm:$0xff]
    %v1893 = vld [vmem:[%s1849 + $0x158] sm:$0xff]
    %v1894 = vld [vmem:[%s1849 + $0x160] sm:$0xff]
    %v1895 = vld [vmem:[%s1849 + $0x168] sm:$0xff]
    %v1896 = vld [vmem:[%s1849 + $0x170] sm:$0xff]
    %v1897 = vld [vmem:[%s1849 + $0x178] sm:$0xff]
    %v1898 = vld [vmem:[%s1849 + $0x180] sm:$0xff]
    %v1899 = vld [vmem:[%s1849 + $0x188] sm:$0xff]
    %v1900 = vld [vmem:[%s1849 + $0x190] sm:$0xff]
    %v1901 = vld [vmem:[%s1849 + $0x198] sm:$0xff]
    %v1902 = vld [vmem:[%s1849 + $0x1a0] sm:$0xff]
    %v1903 = vld [vmem:[%s1849 + $0x1a8] sm:$0xff]
    %v1904 = vld [vmem:[%s1849 + $0x1b0] sm:$0xff]
    %v1905 = vld [vmem:[%s1849 + $0x1b8] sm:$0xff]
    %v1906 = vld [vmem:[%s1849 + $0x1c0] sm:$0xff]
    %v1907 = vld [vmem:[%s1849 + $0x1c8] sm:$0xff]
    %v1908 = vld [vmem:[%s1849 + $0x1d0] sm:$0xff]
    %v1909 = vld [vmem:[%s1849 + $0x1d8] sm:$0xff]
    %v1910 = vld [vmem:[%s1849 + $0x1e0] sm:$0xff]
    %v1911 = vld [vmem:[%s1849 + $0x1e8] sm:$0xff]
    %v1912 = vld [vmem:[%s1849 + $0x1f0] sm:$0xff]
    %v1913 = vld [vmem:[%s1849 + $0x1f8] sm:$0xff]
    %v1914 = vld [vmem:[%s1849 + $0x200] sm:$0xff]
    %v1915 = vld [vmem:[%s1849 + $0x208] sm:$0xff]
    %v1916 = vld [vmem:[%s1849 + $0x210] sm:$0xff]
    %v1917 = vld [vmem:[%s1849 + $0x218] sm:$0xff]
    %v1918 = vld [vmem:[%s1849 + $0x220] sm:$0xff]
    %v1919 = vld [vmem:[%s1849 + $0x228] sm:$0xff]
    %v1920 = vld [vmem:[%s1849 + $0x230] sm:$0xff]
    %v1921 = vld [vmem:[%s1849 + $0x238] sm:$0xff]
    %v1922 = vld [vmem:[%s1849 + $0x240] sm:$0xff]
    %v1923 = vld [vmem:[%s1849 + $0x248] sm:$0xff]
    %v1924 = vld [vmem:[%s1849 + $0x250] sm:$0xff]
    %v1925 = vld [vmem:[%s1849 + $0x258] sm:$0xff]
    %v1926 = vld [vmem:[%s1849 + $0x260] sm:$0xff]
    %v1927 = vld [vmem:[%s1849 + $0x268] sm:$0xff]
    %v1928 = vld [vmem:[%s1849 + $0x270] sm:$0xff]
    %v1929 = vld [vmem:[%s1849 + $0x278] sm:$0xff]
    %v1930 = vld [vmem:[%s1849 + $0x280] sm:$0xff]
    %v1931 = vld [vmem:[%s1849 + $0x288] sm:$0xff]
    %v1932 = vld [vmem:[%s1849 + $0x290] sm:$0xff]
    %v1933 = vld [vmem:[%s1849 + $0x298] sm:$0xff]
    %v1934 = vld [vmem:[%s1849 + $0x2a0] sm:$0xff]
    %v1935 = vld [vmem:[%s1849 + $0x2a8] sm:$0xff]
    %v1936 = vld [vmem:[%s1849 + $0x2b0] sm:$0xff]
    %v1937 = vld [vmem:[%s1849 + $0x2b8] sm:$0xff]
    %v1938 = vld [vmem:[%s1849 + $0x2c0] sm:$0xff]
    %v1939 = vld [vmem:[%s1849 + $0x2c8] sm:$0xff]
    %v1940 = vld [vmem:[%s1849 + $0x2d0] sm:$0xff]
    %v1941 = vld [vmem:[%s1849 + $0x2d8] sm:$0xff]
    %v1942 = vld [vmem:[%s1849 + $0x2e0] sm:$0xff]
    %v1943 = vld [vmem:[%s1849 + $0x2e8] sm:$0xff]
    %v1944 = vld [vmem:[%s1849 + $0x2f0] sm:$0xff]
    %v1945 = vld [vmem:[%s1849 + $0x2f8] sm:$0xff]
    %v1946 = vld [vmem:[%s1849 + $0x300] sm:$0xff]
    %v1947 = vld [vmem:[%s1849 + $0x308] sm:$0xff]
    %v1948 = vld [vmem:[%s1849 + $0x310] sm:$0xff]
    %v1949 = vld [vmem:[%s1849 + $0x318] sm:$0xff]
    %v1950 = vld [vmem:[%s1849 + $0x320] sm:$0xff]
    %v1951 = vld [vmem:[%s1849 + $0x328] sm:$0xff]
    %v1952 = vld [vmem:[%s1849 + $0x330] sm:$0xff]
    %v1953 = vld [vmem:[%s1849 + $0x338] sm:$0xff]
    %v1954 = vld [vmem:[%s1849 + $0x340] sm:$0xff]
    %v1955 = vld [vmem:[%s1849 + $0x348] sm:$0xff]
    %v1956 = vld [vmem:[%s1849 + $0x350] sm:$0xff]
    %v1957 = vld [vmem:[%s1849 + $0x358] sm:$0xff]
    %v1958 = vld [vmem:[%s1849 + $0x360] sm:$0xff]
    %v1959 = vld [vmem:[%s1849 + $0x368] sm:$0xff]
    %v1960 = vld [vmem:[%s1849 + $0x370] sm:$0xff]
    %v1961 = vld [vmem:[%s1849 + $0x378] sm:$0xff]
    %v1962 = vld [vmem:[%s1849 + $0x380] sm:$0xff]
    %v1963 = vld [vmem:[%s1849 + $0x388] sm:$0xff]
    %v1964 = vld [vmem:[%s1849 + $0x390] sm:$0xff]
    %v1965 = vld [vmem:[%s1849 + $0x398] sm:$0xff]
    %v1966 = vld [vmem:[%s1849 + $0x3a0] sm:$0xff]
    %v1967 = vld [vmem:[%s1849 + $0x3a8] sm:$0xff]
    %v1968 = vld [vmem:[%s1849 + $0x3b0] sm:$0xff]
    %v1969 = vld [vmem:[%s1849 + $0x3b8] sm:$0xff]
    %v1970 = vld [vmem:[%s1849 + $0x3c0] sm:$0xff]
    %v1971 = vld [vmem:[%s1849 + $0x3c8] sm:$0xff]
    %v1972 = vld [vmem:[%s1849 + $0x3d0] sm:$0xff]
    %v1973 = vld [vmem:[%s1849 + $0x3d8] sm:$0xff]
    %v1974 = vld [vmem:[%s1849 + $0x3e0] sm:$0xff]
    %v1975 = vld [vmem:[%s1849 + $0x3e8] sm:$0xff]
    %v1976 = vld [vmem:[%s1849 + $0x3f0] sm:$0xff]
    %v1977 = vld [vmem:[%s1849 + $0x3f8] sm:$0xff]
    %1978 = vmatprep.subr.bf16.mxu0 %v1851
    %1979 = vmatpush1.bf16.msra.mxu0 %v1850
    %1980 = vmatprep.subr.bf16.mxu0 %v1855
    %1981 = vmatpush1.bf16.msra.mxu0 %v1854
    %1982 = vmatprep.subr.bf16.mxu0 %v1859
    %1983 = vmatpush1.bf16.msra.mxu0 %v1858
    %1984 = vmatprep.subr.bf16.mxu0 %v1863
    %1985 = vmatpush1.bf16.msra.mxu0 %v1862
    %1986 = vmatprep.subr.bf16.mxu0 %v1867
    %1987 = vmatpush1.bf16.msra.mxu0 %v1866
    %1988 = vmatprep.subr.bf16.mxu0 %v1871
    %1989 = vmatpush1.bf16.msra.mxu0 %v1870
    %1990 = vmatprep.subr.bf16.mxu0 %v1875
    %1991 = vmatpush1.bf16.msra.mxu0 %v1874
    %1992 = vmatprep.subr.bf16.mxu0 %v1879
    %1993 = vmatpush1.bf16.msra.mxu0 %v1878
    %1994 = vmatprep.subr.bf16.mxu0 %v1883
    %1995 = vmatpush1.bf16.msra.mxu0 %v1882
    %1996 = vmatprep.subr.bf16.mxu0 %v1887
    %1997 = vmatpush1.bf16.msra.mxu0 %v1886
    %1998 = vmatprep.subr.bf16.mxu0 %v1891
    %1999 = vmatpush1.bf16.msra.mxu0 %v1890
    %2000 = vmatprep.subr.bf16.mxu0 %v1895
    %2001 = vmatpush1.bf16.msra.mxu0 %v1894
    %2002 = vmatprep.subr.bf16.mxu0 %v1899
    %2003 = vmatpush1.bf16.msra.mxu0 %v1898
    %2004 = vmatprep.subr.bf16.mxu0 %v1903
    %2005 = vmatpush1.bf16.msra.mxu0 %v1902
    %2006 = vmatprep.subr.bf16.mxu0 %v1907
    %2007 = vmatpush1.bf16.msra.mxu0 %v1906
    %2008 = vmatprep.subr.bf16.mxu0 %v1911
    %2009 = vmatpush1.bf16.msra.mxu0 %v1910
    %2010 = vmatprep.mubr.bf16.mxu0 %v1457
    %2011 = vmatmul.mubr.bf16.gmra.mrb[0].mxu0 %v1456
    %v2012 = vpop.f32.mrb[0].mxu0
    %v2013 = vadd.f32 0.0, %v2012
    %v2014 = vpop.f32.mrb[0].mxu0
    %v2015 = vadd.f32 0.0, %v2014
    %v2016 = vpop.f32.mrb[0].mxu0
    %v2017 = vadd.f32 0.0, %v2016
    %v2018 = vpop.f32.mrb[0].mxu0
    %v2019 = vadd.f32 0.0, %v2018
    %2020 = vmatprep.mubr.bf16.mxu0 %v1461
    %2021 = vmatmul.mubr.bf16.gmra.mrb[0].mxu0 %v1460
    %v2022 = vpop.f32.mrb[0].mxu0
    %v2023 = vadd.f32 0.0, %v2022
    %v2024 = vpop.f32.mrb[0].mxu0
    %v2025 = vadd.f32 0.0, %v2024
    %v2026 = vpop.f32.mrb[0].mxu0
    %v2027 = vadd.f32 0.0, %v2026
    %v2028 = vpop.f32.mrb[0].mxu0
    %v2029 = vadd.f32 0.0, %v2028
    %2030 = vdwg.mxu0
    %2031 = vmatprep.subr.bf16.mxu0 %v1915
    %2032 = vmatpush1.bf16.msra.mxu0 %v1914
    %2033 = vmatprep.subr.bf16.mxu0 %v1919
    %2034 = vmatpush1.bf16.msra.mxu0 %v1918
    %2035 = vmatprep.subr.bf16.mxu0 %v1923
    %2036 = vmatpush1.bf16.msra.mxu0 %v1922
    %2037 = vmatprep.subr.bf16.mxu0 %v1927
    %2038 = vmatpush1.bf16.msra.mxu0 %v1926
    %2039 = vmatprep.subr.bf16.mxu0 %v1931
    %2040 = vmatpush1.bf16.msra.mxu0 %v1930
    %2041 = vmatprep.subr.bf16.mxu0 %v1935
    %2042 = vmatpush1.bf16.msra.mxu0 %v1934
    %2043 = vmatprep.subr.bf16.mxu0 %v1939
    %2044 = vmatpush1.bf16.msra.mxu0 %v1938
    %2045 = vmatprep.subr.bf16.mxu0 %v1943
    %2046 = vmatpush1.bf16.msra.mxu0 %v1942
    %2047 = vmatprep.subr.bf16.mxu0 %v1947
    %2048 = vmatpush1.bf16.msra.mxu0 %v1946
    %2049 = vmatprep.subr.bf16.mxu0 %v1951
    %2050 = vmatpush1.bf16.msra.mxu0 %v1950
    %2051 = vmatprep.subr.bf16.mxu0 %v1955
    %2052 = vmatpush1.bf16.msra.mxu0 %v1954
    %2053 = vmatprep.subr.bf16.mxu0 %v1959
    %2054 = vmatpush1.bf16.msra.mxu0 %v1958
    %2055 = vmatprep.subr.bf16.mxu0 %v1963
    %2056 = vmatpush1.bf16.msra.mxu0 %v1962
    %2057 = vmatprep.subr.bf16.mxu0 %v1967
    %2058 = vmatpush1.bf16.msra.mxu0 %v1966
    %2059 = vmatprep.subr.bf16.mxu0 %v1971
    %2060 = vmatpush1.bf16.msra.mxu0 %v1970
    %2061 = vmatprep.subr.bf16.mxu0 %v1975
    %2062 = vmatpush1.bf16.msra.mxu0 %v1974
    %2063 = vmatprep.mubr.bf16.mxu0 %v1459
    %2064 = vmatmul.mubr.bf16.gmra.mrb[0].mxu0 %v1458
    %v2065 = vpop.f32.mrb[0].mxu0
    %v2066 = vadd.f32 %v2013, %v2065
    %v2067 = vpop.f32.mrb[0].mxu0
    %v2068 = vadd.f32 %v2015, %v2067
    %v2069 = vpop.f32.mrb[0].mxu0
    %v2070 = vadd.f32 %v2017, %v2069
    %v2071 = vpop.f32.mrb[0].mxu0
    %v2072 = vadd.f32 %v2019, %v2071
    %2073 = vmatprep.mubr.bf16.mxu0 %v1463
    %2074 = vmatmul.mubr.bf16.gmra.mrb[0].mxu0 %v1462
    %v2075 = vpop.f32.mrb[0].mxu0
    %v2076 = vadd.f32 %v2023, %v2075
    %v2077 = vpop.f32.mrb[0].mxu0
    %v2078 = vadd.f32 %v2025, %v2077
    %v2079 = vpop.f32.mrb[0].mxu0
    %v2080 = vadd.f32 %v2027, %v2079
    %v2081 = vpop.f32.mrb[0].mxu0
    %v2082 = vadd.f32 %v2029, %v2081
    %2083 = vdwg.mxu0
    %2084 = vmatprep.subr.bf16.mxu0 %v1853
    %2085 = vmatpush1.bf16.msra.mxu0 %v1852
    %2086 = vmatprep.subr.bf16.mxu0 %v1857
    %2087 = vmatpush1.bf16.msra.mxu0 %v1856
    %2088 = vmatprep.subr.bf16.mxu0 %v1861
    %2089 = vmatpush1.bf16.msra.mxu0 %v1860
    %2090 = vmatprep.subr.bf16.mxu0 %v1865
    %2091 = vmatpush1.bf16.msra.mxu0 %v1864
    %2092 = vmatprep.subr.bf16.mxu0 %v1869
    %2093 = vmatpush1.bf16.msra.mxu0 %v1868
    %2094 = vmatprep.subr.bf16.mxu0 %v1873
    %2095 = vmatpush1.bf16.msra.mxu0 %v1872
    %2096 = vmatprep.subr.bf16.mxu0 %v1877
    %2097 = vmatpush1.bf16.msra.mxu0 %v1876
    %2098 = vmatprep.subr.bf16.mxu0 %v1881
    %2099 = vmatpush1.bf16.msra.mxu0 %v1880
    %2100 = vmatprep.subr.bf16.mxu0 %v1885
    %2101 = vmatpush1.bf16.msra.mxu0 %v1884
    %2102 = vmatprep.subr.bf16.mxu0 %v1889
    %2103 = vmatpush1.bf16.msra.mxu0 %v1888
    %2104 = vmatprep.subr.bf16.mxu0 %v1893
    %2105 = vmatpush1.bf16.msra.mxu0 %v1892
    %2106 = vmatprep.subr.bf16.mxu0 %v1897
    %2107 = vmatpush1.bf16.msra.mxu0 %v1896
    %2108 = vmatprep.subr.bf16.mxu0 %v1901
    %2109 = vmatpush1.bf16.msra.mxu0 %v1900
    %2110 = vmatprep.subr.bf16.mxu0 %v1905
    %2111 = vmatpush1.bf16.msra.mxu0 %v1904
    %2112 = vmatprep.subr.bf16.mxu0 %v1909
    %2113 = vmatpush1.bf16.msra.mxu0 %v1908
    %2114 = vmatprep.subr.bf16.mxu0 %v1913
    %2115 = vmatpush1.bf16.msra.mxu0 %v1912
    %2116 = vmatprep.mubr.bf16.mxu0 %v1457
    %2117 = vmatmul.mubr.bf16.gmra.mrb[0].mxu0 %v1456
    %v2118 = vpop.f32.mrb[0].mxu0
    %v2119 = vadd.f32 0.0, %v2118
    %v2120 = vpop.f32.mrb[0].mxu0
    %v2121 = vadd.f32 0.0, %v2120
    %v2122 = vpop.f32.mrb[0].mxu0
    %v2123 = vadd.f32 0.0, %v2122
    %v2124 = vpop.f32.mrb[0].mxu0
    %v2125 = vadd.f32 0.0, %v2124
    %2126 = vmatprep.mubr.bf16.mxu0 %v1461
    %2127 = vmatmul.mubr.bf16.gmra.mrb[0].mxu0 %v1460
    %v2128 = vpop.f32.mrb[0].mxu0
    %v2129 = vadd.f32 0.0, %v2128
    %v2130 = vpop.f32.mrb[0].mxu0
    %v2131 = vadd.f32 0.0, %v2130
    %v2132 = vpop.f32.mrb[0].mxu0
    %v2133 = vadd.f32 0.0, %v2132
    %v2134 = vpop.f32.mrb[0].mxu0
    %v2135 = vadd.f32 0.0, %v2134
    %2136 = vdwg.mxu0
    %2137 = vmatprep.subr.bf16.mxu0 %v1917
    %2138 = vmatpush1.bf16.msra.mxu0 %v1916
    %2139 = vmatprep.subr.bf16.mxu0 %v1921
    %2140 = vmatpush1.bf16.msra.mxu0 %v1920
    %2141 = vmatprep.subr.bf16.mxu0 %v1925
    %2142 = vmatpush1.bf16.msra.mxu0 %v1924
    %2143 = vmatprep.subr.bf16.mxu0 %v1929
    %2144 = vmatpush1.bf16.msra.mxu0 %v1928
    %2145 = vmatprep.subr.bf16.mxu0 %v1933
    %2146 = vmatpush1.bf16.msra.mxu0 %v1932
    %2147 = vmatprep.subr.bf16.mxu0 %v1937
    %2148 = vmatpush1.bf16.msra.mxu0 %v1936
    %2149 = vmatprep.subr.bf16.mxu0 %v1941
    %2150 = vmatpush1.bf16.msra.mxu0 %v1940
    %2151 = vmatprep.subr.bf16.mxu0 %v1945
    %2152 = vmatpush1.bf16.msra.mxu0 %v1944
    %2153 = vmatprep.subr.bf16.mxu0 %v1949
    %2154 = vmatpush1.bf16.msra.mxu0 %v1948
    %2155 = vmatprep.subr.bf16.mxu0 %v1953
    %2156 = vmatpush1.bf16.msra.mxu0 %v1952
    %2157 = vmatprep.subr.bf16.mxu0 %v1957
    %2158 = vmatpush1.bf16.msra.mxu0 %v1956
    %2159 = vmatprep.subr.bf16.mxu0 %v1961
    %2160 = vmatpush1.bf16.msra.mxu0 %v1960
    %2161 = vmatprep.subr.bf16.mxu0 %v1965
    %2162 = vmatpush1.bf16.msra.mxu0 %v1964
    %2163 = vmatprep.subr.bf16.mxu0 %v1969
    %2164 = vmatpush1.bf16.msra.mxu0 %v1968
    %2165 = vmatprep.subr.bf16.mxu0 %v1973
    %2166 = vmatpush1.bf16.msra.mxu0 %v1972
    %2167 = vmatprep.subr.bf16.mxu0 %v1977
    %2168 = vmatpush1.bf16.msra.mxu0 %v1976
    %2169 = vmatprep.mubr.bf16.mxu0 %v1459
    %2170 = vmatmul.mubr.bf16.gmra.mrb[0].mxu0 %v1458
    %v2171 = vpop.f32.mrb[0].mxu0
    %v2172 = vadd.f32 %v2119, %v2171
    %v2173 = vpop.f32.mrb[0].mxu0
    %v2174 = vadd.f32 %v2121, %v2173
    %v2175 = vpop.f32.mrb[0].mxu0
    %v2176 = vadd.f32 %v2123, %v2175
    %v2177 = vpop.f32.mrb[0].mxu0
    %v2178 = vadd.f32 %v2125, %v2177
    %2179 = vmatprep.mubr.bf16.mxu0 %v1463
    %2180 = vmatmul.mubr.bf16.gmra.mrb[0].mxu0 %v1462
    %v2181 = vpop.f32.mrb[0].mxu0
    %v2182 = vadd.f32 %v2129, %v2181
    %v2183 = vpop.f32.mrb[0].mxu0
    %v2184 = vadd.f32 %v2131, %v2183
    %v2185 = vpop.f32.mrb[0].mxu0
    %v2186 = vadd.f32 %v2133, %v2185
    %v2187 = vpop.f32.mrb[0].mxu0
    %v2188 = vadd.f32 %v2135, %v2187
    %2189 = vdwg.mxu0
    %v2190 = vadd.f32 %v1833, %v2066
    %v2191 = vadd.f32 %v1834, %v2068
    %v2192 = vadd.f32 %v1835, %v2172
    %v2193 = vadd.f32 %v1836, %v2174
    %v2194 = vadd.f32 %v1837, %v2070
    %v2195 = vadd.f32 %v1838, %v2072
    %v2196 = vadd.f32 %v1839, %v2176
    %v2197 = vadd.f32 %v1840, %v2178
    %v2198 = vadd.f32 %v1841, %v2076
    %v2199 = vadd.f32 %v1842, %v2078
    %v2200 = vadd.f32 %v1843, %v2182
    %v2201 = vadd.f32 %v1844, %v2184
    %v2202 = vadd.f32 %v1845, %v2080
    %v2203 = vadd.f32 %v1846, %v2082
    %v2204 = vadd.f32 %v1847, %v2186
    %v2205 = vadd.f32 %v1848, %v2188
    %s2206 = scalar_lea.vmem [#allocation5], 2048
    %v2207 = vld [vmem:[%s2206] sm:$0xff]
    %v2208 = vld [vmem:[%s2206 + $0x8] sm:$0xff]
    %v2209 = vld [vmem:[%s2206 + $0x10] sm:$0xff]
    %v2210 = vld [vmem:[%s2206 + $0x18] sm:$0xff]
    %v2211 = vld [vmem:[%s2206 + $0x20] sm:$0xff]
    %v2212 = vld [vmem:[%s2206 + $0x28] sm:$0xff]
    %v2213 = vld [vmem:[%s2206 + $0x30] sm:$0xff]
    %v2214 = vld [vmem:[%s2206 + $0x38] sm:$0xff]
    %v2215 = vld [vmem:[%s2206 + $0x40] sm:$0xff]
    %v2216 = vld [vmem:[%s2206 + $0x48] sm:$0xff]
    %v2217 = vld [vmem:[%s2206 + $0x50] sm:$0xff]
    %v2218 = vld [vmem:[%s2206 + $0x58] sm:$0xff]
    %v2219 = vld [vmem:[%s2206 + $0x60] sm:$0xff]
    %v2220 = vld [vmem:[%s2206 + $0x68] sm:$0xff]
    %v2221 = vld [vmem:[%s2206 + $0x70] sm:$0xff]
    %v2222 = vld [vmem:[%s2206 + $0x78] sm:$0xff]
    %v2223 = vld [vmem:[%s2206 + $0x80] sm:$0xff]
    %v2224 = vld [vmem:[%s2206 + $0x88] sm:$0xff]
    %v2225 = vld [vmem:[%s2206 + $0x90] sm:$0xff]
    %v2226 = vld [vmem:[%s2206 + $0x98] sm:$0xff]
    %v2227 = vld [vmem:[%s2206 + $0xa0] sm:$0xff]
    %v2228 = vld [vmem:[%s2206 + $0xa8] sm:$0xff]
    %v2229 = vld [vmem:[%s2206 + $0xb0] sm:$0xff]
    %v2230 = vld [vmem:[%s2206 + $0xb8] sm:$0xff]
    %v2231 = vld [vmem:[%s2206 + $0xc0] sm:$0xff]
    %v2232 = vld [vmem:[%s2206 + $0xc8] sm:$0xff]
    %v2233 = vld [vmem:[%s2206 + $0xd0] sm:$0xff]
    %v2234 = vld [vmem:[%s2206 + $0xd8] sm:$0xff]
    %v2235 = vld [vmem:[%s2206 + $0xe0] sm:$0xff]
    %v2236 = vld [vmem:[%s2206 + $0xe8] sm:$0xff]
    %v2237 = vld [vmem:[%s2206 + $0xf0] sm:$0xff]
    %v2238 = vld [vmem:[%s2206 + $0xf8] sm:$0xff]
    %v2239 = vld [vmem:[%s2206 + $0x100] sm:$0xff]
    %v2240 = vld [vmem:[%s2206 + $0x108] sm:$0xff]
    %v2241 = vld [vmem:[%s2206 + $0x110] sm:$0xff]
    %v2242 = vld [vmem:[%s2206 + $0x118] sm:$0xff]
    %v2243 = vld [vmem:[%s2206 + $0x120] sm:$0xff]
    %v2244 = vld [vmem:[%s2206 + $0x128] sm:$0xff]
    %v2245 = vld [vmem:[%s2206 + $0x130] sm:$0xff]
    %v2246 = vld [vmem:[%s2206 + $0x138] sm:$0xff]
    %v2247 = vld [vmem:[%s2206 + $0x140] sm:$0xff]
    %v2248 = vld [vmem:[%s2206 + $0x148] sm:$0xff]
    %v2249 = vld [vmem:[%s2206 + $0x150] sm:$0xff]
    %v2250 = vld [vmem:[%s2206 + $0x158] sm:$0xff]
    %v2251 = vld [vmem:[%s2206 + $0x160] sm:$0xff]
    %v2252 = vld [vmem:[%s2206 + $0x168] sm:$0xff]
    %v2253 = vld [vmem:[%s2206 + $0x170] sm:$0xff]
    %v2254 = vld [vmem:[%s2206 + $0x178] sm:$0xff]
    %v2255 = vld [vmem:[%s2206 + $0x180] sm:$0xff]
    %v2256 = vld [vmem:[%s2206 + $0x188] sm:$0xff]
    %v2257 = vld [vmem:[%s2206 + $0x190] sm:$0xff]
    %v2258 = vld [vmem:[%s2206 + $0x198] sm:$0xff]
    %v2259 = vld [vmem:[%s2206 + $0x1a0] sm:$0xff]
    %v2260 = vld [vmem:[%s2206 + $0x1a8] sm:$0xff]
    %v2261 = vld [vmem:[%s2206 + $0x1b0] sm:$0xff]
    %v2262 = vld [vmem:[%s2206 + $0x1b8] sm:$0xff]
    %v2263 = vld [vmem:[%s2206 + $0x1c0] sm:$0xff]
    %v2264 = vld [vmem:[%s2206 + $0x1c8] sm:$0xff]
    %v2265 = vld [vmem:[%s2206 + $0x1d0] sm:$0xff]
    %v2266 = vld [vmem:[%s2206 + $0x1d8] sm:$0xff]
    %v2267 = vld [vmem:[%s2206 + $0x1e0] sm:$0xff]
    %v2268 = vld [vmem:[%s2206 + $0x1e8] sm:$0xff]
    %v2269 = vld [vmem:[%s2206 + $0x1f0] sm:$0xff]
    %v2270 = vld [vmem:[%s2206 + $0x1f8] sm:$0xff]
    %v2271 = vld [vmem:[%s2206 + $0x200] sm:$0xff]
    %v2272 = vld [vmem:[%s2206 + $0x208] sm:$0xff]
    %v2273 = vld [vmem:[%s2206 + $0x210] sm:$0xff]
    %v2274 = vld [vmem:[%s2206 + $0x218] sm:$0xff]
    %v2275 = vld [vmem:[%s2206 + $0x220] sm:$0xff]
    %v2276 = vld [vmem:[%s2206 + $0x228] sm:$0xff]
    %v2277 = vld [vmem:[%s2206 + $0x230] sm:$0xff]
    %v2278 = vld [vmem:[%s2206 + $0x238] sm:$0xff]
    %v2279 = vld [vmem:[%s2206 + $0x240] sm:$0xff]
    %v2280 = vld [vmem:[%s2206 + $0x248] sm:$0xff]
    %v2281 = vld [vmem:[%s2206 + $0x250] sm:$0xff]
    %v2282 = vld [vmem:[%s2206 + $0x258] sm:$0xff]
    %v2283 = vld [vmem:[%s2206 + $0x260] sm:$0xff]
    %v2284 = vld [vmem:[%s2206 + $0x268] sm:$0xff]
    %v2285 = vld [vmem:[%s2206 + $0x270] sm:$0xff]
    %v2286 = vld [vmem:[%s2206 + $0x278] sm:$0xff]
    %v2287 = vld [vmem:[%s2206 + $0x280] sm:$0xff]
    %v2288 = vld [vmem:[%s2206 + $0x288] sm:$0xff]
    %v2289 = vld [vmem:[%s2206 + $0x290] sm:$0xff]
    %v2290 = vld [vmem:[%s2206 + $0x298] sm:$0xff]
    %v2291 = vld [vmem:[%s2206 + $0x2a0] sm:$0xff]
    %v2292 = vld [vmem:[%s2206 + $0x2a8] sm:$0xff]
    %v2293 = vld [vmem:[%s2206 + $0x2b0] sm:$0xff]
    %v2294 = vld [vmem:[%s2206 + $0x2b8] sm:$0xff]
    %v2295 = vld [vmem:[%s2206 + $0x2c0] sm:$0xff]
    %v2296 = vld [vmem:[%s2206 + $0x2c8] sm:$0xff]
    %v2297 = vld [vmem:[%s2206 + $0x2d0] sm:$0xff]
    %v2298 = vld [vmem:[%s2206 + $0x2d8] sm:$0xff]
    %v2299 = vld [vmem:[%s2206 + $0x2e0] sm:$0xff]
    %v2300 = vld [vmem:[%s2206 + $0x2e8] sm:$0xff]
    %v2301 = vld [vmem:[%s2206 + $0x2f0] sm:$0xff]
    %v2302 = vld [vmem:[%s2206 + $0x2f8] sm:$0xff]
    %v2303 = vld [vmem:[%s2206 + $0x300] sm:$0xff]
    %v2304 = vld [vmem:[%s2206 + $0x308] sm:$0xff]
    %v2305 = vld [vmem:[%s2206 + $0x310] sm:$0xff]
    %v2306 = vld [vmem:[%s2206 + $0x318] sm:$0xff]
    %v2307 = vld [vmem:[%s2206 + $0x320] sm:$0xff]
    %v2308 = vld [vmem:[%s2206 + $0x328] sm:$0xff]
    %v2309 = vld [vmem:[%s2206 + $0x330] sm:$0xff]
    %v2310 = vld [vmem:[%s2206 + $0x338] sm:$0xff]
    %v2311 = vld [vmem:[%s2206 + $0x340] sm:$0xff]
    %v2312 = vld [vmem:[%s2206 + $0x348] sm:$0xff]
    %v2313 = vld [vmem:[%s2206 + $0x350] sm:$0xff]
    %v2314 = vld [vmem:[%s2206 + $0x358] sm:$0xff]
    %v2315 = vld [vmem:[%s2206 + $0x360] sm:$0xff]
    %v2316 = vld [vmem:[%s2206 + $0x368] sm:$0xff]
    %v2317 = vld [vmem:[%s2206 + $0x370] sm:$0xff]
    %v2318 = vld [vmem:[%s2206 + $0x378] sm:$0xff]
    %v2319 = vld [vmem:[%s2206 + $0x380] sm:$0xff]
    %v2320 = vld [vmem:[%s2206 + $0x388] sm:$0xff]
    %v2321 = vld [vmem:[%s2206 + $0x390] sm:$0xff]
    %v2322 = vld [vmem:[%s2206 + $0x398] sm:$0xff]
    %v2323 = vld [vmem:[%s2206 + $0x3a0] sm:$0xff]
    %v2324 = vld [vmem:[%s2206 + $0x3a8] sm:$0xff]
    %v2325 = vld [vmem:[%s2206 + $0x3b0] sm:$0xff]
    %v2326 = vld [vmem:[%s2206 + $0x3b8] sm:$0xff]
    %v2327 = vld [vmem:[%s2206 + $0x3c0] sm:$0xff]
    %v2328 = vld [vmem:[%s2206 + $0x3c8] sm:$0xff]
    %v2329 = vld [vmem:[%s2206 + $0x3d0] sm:$0xff]
    %v2330 = vld [vmem:[%s2206 + $0x3d8] sm:$0xff]
    %v2331 = vld [vmem:[%s2206 + $0x3e0] sm:$0xff]
    %v2332 = vld [vmem:[%s2206 + $0x3e8] sm:$0xff]
    %v2333 = vld [vmem:[%s2206 + $0x3f0] sm:$0xff]
    %v2334 = vld [vmem:[%s2206 + $0x3f8] sm:$0xff]
    %2335 = vmatprep.subr.bf16.mxu0 %v2208
    %2336 = vmatpush1.bf16.msra.mxu0 %v2207
    %2337 = vmatprep.subr.bf16.mxu0 %v2212
    %2338 = vmatpush1.bf16.msra.mxu0 %v2211
    %2339 = vmatprep.subr.bf16.mxu0 %v2216
    %2340 = vmatpush1.bf16.msra.mxu0 %v2215
    %2341 = vmatprep.subr.bf16.mxu0 %v2220
    %2342 = vmatpush1.bf16.msra.mxu0 %v2219
    %2343 = vmatprep.subr.bf16.mxu0 %v2224
    %2344 = vmatpush1.bf16.msra.mxu0 %v2223
    %2345 = vmatprep.subr.bf16.mxu0 %v2228
    %2346 = vmatpush1.bf16.msra.mxu0 %v2227
    %2347 = vmatprep.subr.bf16.mxu0 %v2232
    %2348 = vmatpush1.bf16.msra.mxu0 %v2231
    %2349 = vmatprep.subr.bf16.mxu0 %v2236
    %2350 = vmatpush1.bf16.msra.mxu0 %v2235
    %2351 = vmatprep.subr.bf16.mxu0 %v2240
    %2352 = vmatpush1.bf16.msra.mxu0 %v2239
    %2353 = vmatprep.subr.bf16.mxu0 %v2244
    %2354 = vmatpush1.bf16.msra.mxu0 %v2243
    %2355 = vmatprep.subr.bf16.mxu0 %v2248
    %2356 = vmatpush1.bf16.msra.mxu0 %v2247
    %2357 = vmatprep.subr.bf16.mxu0 %v2252
    %2358 = vmatpush1.bf16.msra.mxu0 %v2251
    %2359 = vmatprep.subr.bf16.mxu0 %v2256
    %2360 = vmatpush1.bf16.msra.mxu0 %v2255
    %2361 = vmatprep.subr.bf16.mxu0 %v2260
    %2362 = vmatpush1.bf16.msra.mxu0 %v2259
    %2363 = vmatprep.subr.bf16.mxu0 %v2264
    %2364 = vmatpush1.bf16.msra.mxu0 %v2263
    %2365 = vmatprep.subr.bf16.mxu0 %v2268
    %2366 = vmatpush1.bf16.msra.mxu0 %v2267
    %2367 = vmatprep.mubr.bf16.mxu0 %v1465
    %2368 = vmatmul.mubr.bf16.gmra.mrb[0].mxu0 %v1464
    %v2369 = vpop.f32.mrb[0].mxu0
    %v2370 = vadd.f32 0.0, %v2369
    %v2371 = vpop.f32.mrb[0].mxu0
    %v2372 = vadd.f32 0.0, %v2371
    %v2373 = vpop.f32.mrb[0].mxu0
    %v2374 = vadd.f32 0.0, %v2373
    %v2375 = vpop.f32.mrb[0].mxu0
    %v2376 = vadd.f32 0.0, %v2375
    %2377 = vmatprep.mubr.bf16.mxu0 %v1469
    %2378 = vmatmul.mubr.bf16.gmra.mrb[0].mxu0 %v1468
    %v2379 = vpop.f32.mrb[0].mxu0
    %v2380 = vadd.f32 0.0, %v2379
    %v2381 = vpop.f32.mrb[0].mxu0
    %v2382 = vadd.f32 0.0, %v2381
    %v2383 = vpop.f32.mrb[0].mxu0
    %v2384 = vadd.f32 0.0, %v2383
    %v2385 = vpop.f32.mrb[0].mxu0
    %v2386 = vadd.f32 0.0, %v2385
    %2387 = vdwg.mxu0
    %2388 = vmatprep.subr.bf16.mxu0 %v2272
    %2389 = vmatpush1.bf16.msra.mxu0 %v2271
    %2390 = vmatprep.subr.bf16.mxu0 %v2276
    %2391 = vmatpush1.bf16.msra.mxu0 %v2275
    %2392 = vmatprep.subr.bf16.mxu0 %v2280
    %2393 = vmatpush1.bf16.msra.mxu0 %v2279
    %2394 = vmatprep.subr.bf16.mxu0 %v2284
    %2395 = vmatpush1.bf16.msra.mxu0 %v2283
    %2396 = vmatprep.subr.bf16.mxu0 %v2288
    %2397 = vmatpush1.bf16.msra.mxu0 %v2287
    %2398 = vmatprep.subr.bf16.mxu0 %v2292
    %2399 = vmatpush1.bf16.msra.mxu0 %v2291
    %2400 = vmatprep.subr.bf16.mxu0 %v2296
    %2401 = vmatpush1.bf16.msra.mxu0 %v2295
    %2402 = vmatprep.subr.bf16.mxu0 %v2300
    %2403 = vmatpush1.bf16.msra.mxu0 %v2299
    %2404 = vmatprep.subr.bf16.mxu0 %v2304
    %2405 = vmatpush1.bf16.msra.mxu0 %v2303
    %2406 = vmatprep.subr.bf16.mxu0 %v2308
    %2407 = vmatpush1.bf16.msra.mxu0 %v2307
    %2408 = vmatprep.subr.bf16.mxu0 %v2312
    %2409 = vmatpush1.bf16.msra.mxu0 %v2311
    %2410 = vmatprep.subr.bf16.mxu0 %v2316
    %2411 = vmatpush1.bf16.msra.mxu0 %v2315
    %2412 = vmatprep.subr.bf16.mxu0 %v2320
    %2413 = vmatpush1.bf16.msra.mxu0 %v2319
    %2414 = vmatprep.subr.bf16.mxu0 %v2324
    %2415 = vmatpush1.bf16.msra.mxu0 %v2323
    %2416 = vmatprep.subr.bf16.mxu0 %v2328
    %2417 = vmatpush1.bf16.msra.mxu0 %v2327
    %2418 = vmatprep.subr.bf16.mxu0 %v2332
    %2419 = vmatpush1.bf16.msra.mxu0 %v2331
    %2420 = vmatprep.mubr.bf16.mxu0 %v1467
    %2421 = vmatmul.mubr.bf16.gmra.mrb[0].mxu0 %v1466
    %v2422 = vpop.f32.mrb[0].mxu0
    %v2423 = vadd.f32 %v2370, %v2422
    %v2424 = vpop.f32.mrb[0].mxu0
    %v2425 = vadd.f32 %v2372, %v2424
    %v2426 = vpop.f32.mrb[0].mxu0
    %v2427 = vadd.f32 %v2374, %v2426
    %v2428 = vpop.f32.mrb[0].mxu0
    %v2429 = vadd.f32 %v2376, %v2428
    %2430 = vmatprep.mubr.bf16.mxu0 %v1471
    %2431 = vmatmul.mubr.bf16.gmra.mrb[0].mxu0 %v1470
    %v2432 = vpop.f32.mrb[0].mxu0
    %v2433 = vadd.f32 %v2380, %v2432
    %v2434 = vpop.f32.mrb[0].mxu0
    %v2435 = vadd.f32 %v2382, %v2434
    %v2436 = vpop.f32.mrb[0].mxu0
    %v2437 = vadd.f32 %v2384, %v2436
    %v2438 = vpop.f32.mrb[0].mxu0
    %v2439 = vadd.f32 %v2386, %v2438
    %2440 = vdwg.mxu0
    %2441 = vmatprep.subr.bf16.mxu0 %v2210
    %2442 = vmatpush1.bf16.msra.mxu0 %v2209
    %2443 = vmatprep.subr.bf16.mxu0 %v2214
    %2444 = vmatpush1.bf16.msra.mxu0 %v2213
    %2445 = vmatprep.subr.bf16.mxu0 %v2218
    %2446 = vmatpush1.bf16.msra.mxu0 %v2217
    %2447 = vmatprep.subr.bf16.mxu0 %v2222
    %2448 = vmatpush1.bf16.msra.mxu0 %v2221
    %2449 = vmatprep.subr.bf16.mxu0 %v2226
    %2450 = vmatpush1.bf16.msra.mxu0 %v2225
    %2451 = vmatprep.subr.bf16.mxu0 %v2230
    %2452 = vmatpush1.bf16.msra.mxu0 %v2229
    %2453 = vmatprep.subr.bf16.mxu0 %v2234
    %2454 = vmatpush1.bf16.msra.mxu0 %v2233
    %2455 = vmatprep.subr.bf16.mxu0 %v2238
    %2456 = vmatpush1.bf16.msra.mxu0 %v2237
    %2457 = vmatprep.subr.bf16.mxu0 %v2242
    %2458 = vmatpush1.bf16.msra.mxu0 %v2241
    %2459 = vmatprep.subr.bf16.mxu0 %v2246
    %2460 = vmatpush1.bf16.msra.mxu0 %v2245
    %2461 = vmatprep.subr.bf16.mxu0 %v2250
    %2462 = vmatpush1.bf16.msra.mxu0 %v2249
    %2463 = vmatprep.subr.bf16.mxu0 %v2254
    %2464 = vmatpush1.bf16.msra.mxu0 %v2253
    %2465 = vmatprep.subr.bf16.mxu0 %v2258
    %2466 = vmatpush1.bf16.msra.mxu0 %v2257
    %2467 = vmatprep.subr.bf16.mxu0 %v2262
    %2468 = vmatpush1.bf16.msra.mxu0 %v2261
    %2469 = vmatprep.subr.bf16.mxu0 %v2266
    %2470 = vmatpush1.bf16.msra.mxu0 %v2265
    %2471 = vmatprep.subr.bf16.mxu0 %v2270
    %2472 = vmatpush1.bf16.msra.mxu0 %v2269
    %2473 = vmatprep.mubr.bf16.mxu0 %v1465
    %2474 = vmatmul.mubr.bf16.gmra.mrb[0].mxu0 %v1464
    %v2475 = vpop.f32.mrb[0].mxu0
    %v2476 = vadd.f32 0.0, %v2475
    %v2477 = vpop.f32.mrb[0].mxu0
    %v2478 = vadd.f32 0.0, %v2477
    %v2479 = vpop.f32.mrb[0].mxu0
    %v2480 = vadd.f32 0.0, %v2479
    %v2481 = vpop.f32.mrb[0].mxu0
    %v2482 = vadd.f32 0.0, %v2481
    %2483 = vmatprep.mubr.bf16.mxu0 %v1469
    %2484 = vmatmul.mubr.bf16.gmra.mrb[0].mxu0 %v1468
    %v2485 = vpop.f32.mrb[0].mxu0
    %v2486 = vadd.f32 0.0, %v2485
    %v2487 = vpop.f32.mrb[0].mxu0
    %v2488 = vadd.f32 0.0, %v2487
    %v2489 = vpop.f32.mrb[0].mxu0
    %v2490 = vadd.f32 0.0, %v2489
    %v2491 = vpop.f32.mrb[0].mxu0
    %v2492 = vadd.f32 0.0, %v2491
    %2493 = vdwg.mxu0
    %2494 = vmatprep.subr.bf16.mxu0 %v2274
    %2495 = vmatpush1.bf16.msra.mxu0 %v2273
    %2496 = vmatprep.subr.bf16.mxu0 %v2278
    %2497 = vmatpush1.bf16.msra.mxu0 %v2277
    %2498 = vmatprep.subr.bf16.mxu0 %v2282
    %2499 = vmatpush1.bf16.msra.mxu0 %v2281
    %2500 = vmatprep.subr.bf16.mxu0 %v2286
    %2501 = vmatpush1.bf16.msra.mxu0 %v2285
    %2502 = vmatprep.subr.bf16.mxu0 %v2290
    %2503 = vmatpush1.bf16.msra.mxu0 %v2289
    %2504 = vmatprep.subr.bf16.mxu0 %v2294
    %2505 = vmatpush1.bf16.msra.mxu0 %v2293
    %2506 = vmatprep.subr.bf16.mxu0 %v2298
    %2507 = vmatpush1.bf16.msra.mxu0 %v2297
    %2508 = vmatprep.subr.bf16.mxu0 %v2302
    %2509 = vmatpush1.bf16.msra.mxu0 %v2301
    %2510 = vmatprep.subr.bf16.mxu0 %v2306
    %2511 = vmatpush1.bf16.msra.mxu0 %v2305
    %2512 = vmatprep.subr.bf16.mxu0 %v2310
    %2513 = vmatpush1.bf16.msra.mxu0 %v2309
    %2514 = vmatprep.subr.bf16.mxu0 %v2314
    %2515 = vmatpush1.bf16.msra.mxu0 %v2313
    %2516 = vmatprep.subr.bf16.mxu0 %v2318
    %2517 = vmatpush1.bf16.msra.mxu0 %v2317
    %2518 = vmatprep.subr.bf16.mxu0 %v2322
    %2519 = vmatpush1.bf16.msra.mxu0 %v2321
    %2520 = vmatprep.subr.bf16.mxu0 %v2326
    %2521 = vmatpush1.bf16.msra.mxu0 %v2325
    %2522 = vmatprep.subr.bf16.mxu0 %v2330
    %2523 = vmatpush1.bf16.msra.mxu0 %v2329
    %2524 = vmatprep.subr.bf16.mxu0 %v2334
    %2525 = vmatpush1.bf16.msra.mxu0 %v2333
    %2526 = vmatprep.mubr.bf16.mxu0 %v1467
    %2527 = vmatmul.mubr.bf16.gmra.mrb[0].mxu0 %v1466
    %v2528 = vpop.f32.mrb[0].mxu0
    %v2529 = vadd.f32 %v2476, %v2528
    %v2530 = vpop.f32.mrb[0].mxu0
    %v2531 = vadd.f32 %v2478, %v2530
    %v2532 = vpop.f32.mrb[0].mxu0
    %v2533 = vadd.f32 %v2480, %v2532
    %v2534 = vpop.f32.mrb[0].mxu0
    %v2535 = vadd.f32 %v2482, %v2534
    %2536 = vmatprep.mubr.bf16.mxu0 %v1471
    %2537 = vmatmul.mubr.bf16.gmra.mrb[0].mxu0 %v1470
    %v2538 = vpop.f32.mrb[0].mxu0
    %v2539 = vadd.f32 %v2486, %v2538
    %v2540 = vpop.f32.mrb[0].mxu0
    %v2541 = vadd.f32 %v2488, %v2540
    %v2542 = vpop.f32.mrb[0].mxu0
    %v2543 = vadd.f32 %v2490, %v2542
    %v2544 = vpop.f32.mrb[0].mxu0
    %v2545 = vadd.f32 %v2492, %v2544
    %2546 = vdwg.mxu0
    %v2547 = vadd.f32 %v2190, %v2423
    %v2548 = vadd.f32 %v2191, %v2425
    %v2549 = vadd.f32 %v2192, %v2529
    %v2550 = vadd.f32 %v2193, %v2531
    %v2551 = vadd.f32 %v2194, %v2427
    %v2552 = vadd.f32 %v2195, %v2429
    %v2553 = vadd.f32 %v2196, %v2533
    %v2554 = vadd.f32 %v2197, %v2535
    %v2555 = vadd.f32 %v2198, %v2433
    %v2556 = vadd.f32 %v2199, %v2435
    %v2557 = vadd.f32 %v2200, %v2539
    %v2558 = vadd.f32 %v2201, %v2541
    %v2559 = vadd.f32 %v2202, %v2437
    %v2560 = vadd.f32 %v2203, %v2439
    %v2561 = vadd.f32 %v2204, %v2543
    %v2562 = vadd.f32 %v2205, %v2545
    %v2563 = vmax.f32 %v2547, 0.0
    %v2564 = vmax.f32 %v2548, 0.0
    %v2565 = vmax.f32 %v2549, 0.0
    %v2566 = vmax.f32 %v2550, 0.0
    %v2567 = vmax.f32 %v2551, 0.0
    %v2568 = vmax.f32 %v2552, 0.0
    %v2569 = vmax.f32 %v2553, 0.0
    %v2570 = vmax.f32 %v2554, 0.0
    %v2571 = vmax.f32 %v2555, 0.0
    %v2572 = vmax.f32 %v2556, 0.0
    %v2573 = vmax.f32 %v2557, 0.0
    %v2574 = vmax.f32 %v2558, 0.0
    %v2575 = vmax.f32 %v2559, 0.0
    %v2576 = vmax.f32 %v2560, 0.0
    %v2577 = vmax.f32 %v2561, 0.0
    %v2578 = vmax.f32 %v2562, 0.0
    %s2579 = smul.u32 48, 1
    %s2580 = sshll.u32 %s2579, 4
    %2581 = dma.done %s146, %s2580
    %s2582 = smul.u32 %s1119, 2
    %s2583 = sshll.u32 %s2582, 4
    %2584 = dma.done %s199, %s2583
    %s2585 = scalar_lea.vmem [#allocation2], 2
    %v2586 = vld [vmem:[%s2585] ss:$8 sm:$0x3]
    %v2587 = vld [vmem:[#allocation6] sm:$0xff]
    %v2588 = vld [vmem:[#allocation6 + $0x8] sm:$0xff]
    %v2589 = vld [vmem:[#allocation6 + $0x10] sm:$0xff]
    %v2590 = vld [vmem:[#allocation6 + $0x18] sm:$0xff]
    %v2591 = vld [vmem:[#allocation6 + $0x20] sm:$0xff]
    %v2592 = vld [vmem:[#allocation6 + $0x28] sm:$0xff]
    %v2594 = vsel %vm1137, %v2587, 0
    %v2597 = vsel %vm1137, %v2588, 0
    %v2600 = vsel %vm1137, %v2589, 0
    %v2603 = vsel %vm1137, %v2590, 0
    %v2606 = vsel %vm1137, %v2591, 0
    %v2609 = vsel %vm1137, %v2592, 0
    %2611 = vmatprep.subr.mxu0 %v2564
    %2612 = vmatpush1.msra.mxu0 %v2563
    %2613 = vmatprep.subr.mxu0 %v2568
    %2614 = vmatpush1.msra.mxu0 %v2567
    %2615 = vmatprep.subr.mxu0 %v2572
    %2616 = vmatpush1.msra.mxu0 %v2571
    %2617 = vmatprep.subr.mxu0 %v2576
    %2618 = vmatpush1.msra.mxu0 %v2575
    %2619 = vmatprep.subr.mxu0 0.0
    %2620 = vmatpush1.msra.mxu0 0.0
    %2621 = vmatprep.subr.mxu0 0.0
    %2622 = vmatpush1.msra.mxu0 0.0
    %2623 = vmatprep.subr.mxu0 0.0
    %2624 = vmatpush1.msra.mxu0 0.0
    %2625 = vmatprep.subr.mxu0 0.0
    %2626 = vmatpush1.msra.mxu0 0.0
    %2627 = vmatprep.subr.mxu0 0.0
    %2628 = vmatpush1.msra.mxu0 0.0
    %2629 = vmatprep.subr.mxu0 0.0
    %2630 = vmatpush1.msra.mxu0 0.0
    %2631 = vmatprep.subr.mxu0 0.0
    %2632 = vmatpush1.msra.mxu0 0.0
    %2633 = vmatprep.subr.mxu0 0.0
    %2634 = vmatpush1.msra.mxu0 0.0
    %2635 = vmatprep.subr.mxu0 0.0
    %2636 = vmatpush1.msra.mxu0 0.0
    %2637 = vmatprep.subr.mxu0 0.0
    %2638 = vmatpush1.msra.mxu0 0.0
    %2639 = vmatprep.subr.mxu0 0.0
    %2640 = vmatpush1.msra.mxu0 0.0
    %2641 = vmatprep.subr.mxu0 0.0
    %2642 = vmatpush1.msra.mxu0 0.0
    %2643 = vmatprep.subr.mxu0 0.0
    %2644 = vmatpush1.msra.mxu0 0.0
    %2645 = vmatprep.subr.mxu0 0.0
    %2646 = vmatpush1.msra.mxu0 0.0
    %2647 = vmatprep.subr.mxu0 0.0
    %2648 = vmatpush1.msra.mxu0 0.0
    %2649 = vmatprep.subr.mxu0 0.0
    %2650 = vmatpush1.msra.mxu0 0.0
    %2651 = vmatprep.subr.mxu0 0.0
    %2652 = vmatpush1.msra.mxu0 0.0
    %2653 = vmatprep.subr.mxu0 0.0
    %2654 = vmatpush1.msra.mxu0 0.0
    %2655 = vmatprep.subr.mxu0 0.0
    %2656 = vmatpush1.msra.mxu0 0.0
    %2657 = vmatprep.subr.mxu0 0.0
    %2658 = vmatpush1.msra.mxu0 0.0
    %2659 = vmatprep.subr.mxu0 0.0
    %2660 = vmatpush1.msra.mxu0 0.0
    %2661 = vmatprep.subr.mxu0 0.0
    %2662 = vmatpush1.msra.mxu0 0.0
    %2663 = vmatprep.subr.mxu0 0.0
    %2664 = vmatpush1.msra.mxu0 0.0
    %2665 = vmatprep.subr.mxu0 0.0
    %2666 = vmatpush1.msra.mxu0 0.0
    %2667 = vmatprep.subr.mxu0 0.0
    %2668 = vmatpush1.msra.mxu0 0.0
    %2669 = vmatprep.subr.mxu0 0.0
    %2670 = vmatpush1.msra.mxu0 0.0
    %2671 = vmatprep.subr.mxu0 0.0
    %2672 = vmatpush1.msra.mxu0 0.0
    %2673 = vmatprep.subr.mxu0 0.0
    %2674 = vmatpush1.msra.mxu0 0.0
    %2675 = vmatprep.mubr.f32.mxu0 0.0
    %2676 = vmatmul.mubr.f32.gmra.mrb[0].mxu0 %v2594
    %v2677 = vpop.f32.mrb[0].mxu0
    %v2678 = vadd.f32 0.0, %v2677
    %v2679 = vpop.f32.mrb[0].mxu0
    %v2680 = vadd.f32 0.0, %v2679
    %2681 = vmatprep.mubr.f32.mxu0 0.0
    %2682 = vmatmul.mubr.f32.gmra.mrb[0].mxu0 %v2597
    %v2683 = vpop.f32.mrb[0].mxu0
    %v2684 = vadd.f32 0.0, %v2683
    %v2685 = vpop.f32.mrb[0].mxu0
    %v2686 = vadd.f32 0.0, %v2685
    %2687 = vmatprep.mubr.f32.mxu0 0.0
    %2688 = vmatmul.mubr.f32.gmra.mrb[0].mxu0 %v2600
    %v2689 = vpop.f32.mrb[0].mxu0
    %v2690 = vadd.f32 0.0, %v2689
    %v2691 = vpop.f32.mrb[0].mxu0
    %v2692 = vadd.f32 0.0, %v2691
    %2693 = vmatprep.mubr.f32.mxu0 0.0
    %2694 = vmatmul.mubr.f32.gmra.mrb[0].mxu0 %v2603
    %v2695 = vpop.f32.mrb[0].mxu0
    %v2696 = vadd.f32 0.0, %v2695
    %v2697 = vpop.f32.mrb[0].mxu0
    %v2698 = vadd.f32 0.0, %v2697
    %2699 = vmatprep.mubr.f32.mxu0 0.0
    %2700 = vmatmul.mubr.f32.gmra.mrb[0].mxu0 %v2606
    %v2701 = vpop.f32.mrb[0].mxu0
    %v2702 = vadd.f32 0.0, %v2701
    %v2703 = vpop.f32.mrb[0].mxu0
    %v2704 = vadd.f32 0.0, %v2703
    %2705 = vmatprep.mubr.f32.mxu0 0.0
    %2706 = vmatmul.mubr.f32.gmra.mrb[0].mxu0 %v2609
    %v2707 = vpop.f32.mrb[0].mxu0
    %v2708 = vadd.f32 0.0, %v2707
    %v2709 = vpop.f32.mrb[0].mxu0
    %v2710 = vadd.f32 0.0, %v2709
    %2711 = vdwg.mxu0
    %2712 = vmatprep.subr.mxu0 %v2566
    %2713 = vmatpush1.msra.mxu0 %v2565
    %2714 = vmatprep.subr.mxu0 %v2570
    %2715 = vmatpush1.msra.mxu0 %v2569
    %2716 = vmatprep.subr.mxu0 %v2574
    %2717 = vmatpush1.msra.mxu0 %v2573
    %2718 = vmatprep.subr.mxu0 %v2578
    %2719 = vmatpush1.msra.mxu0 %v2577
    %2720 = vmatprep.subr.mxu0 0.0
    %2721 = vmatpush1.msra.mxu0 0.0
    %2722 = vmatprep.subr.mxu0 0.0
    %2723 = vmatpush1.msra.mxu0 0.0
    %2724 = vmatprep.subr.mxu0 0.0
    %2725 = vmatpush1.msra.mxu0 0.0
    %2726 = vmatprep.subr.mxu0 0.0
    %2727 = vmatpush1.msra.mxu0 0.0
    %2728 = vmatprep.subr.mxu0 0.0
    %2729 = vmatpush1.msra.mxu0 0.0
    %2730 = vmatprep.subr.mxu0 0.0
    %2731 = vmatpush1.msra.mxu0 0.0
    %2732 = vmatprep.subr.mxu0 0.0
    %2733 = vmatpush1.msra.mxu0 0.0
    %2734 = vmatprep.subr.mxu0 0.0
    %2735 = vmatpush1.msra.mxu0 0.0
    %2736 = vmatprep.subr.mxu0 0.0
    %2737 = vmatpush1.msra.mxu0 0.0
    %2738 = vmatprep.subr.mxu0 0.0
    %2739 = vmatpush1.msra.mxu0 0.0
    %2740 = vmatprep.subr.mxu0 0.0
    %2741 = vmatpush1.msra.mxu0 0.0
    %2742 = vmatprep.subr.mxu0 0.0
    %2743 = vmatpush1.msra.mxu0 0.0
    %2744 = vmatprep.subr.mxu0 0.0
    %2745 = vmatpush1.msra.mxu0 0.0
    %2746 = vmatprep.subr.mxu0 0.0
    %2747 = vmatpush1.msra.mxu0 0.0
    %2748 = vmatprep.subr.mxu0 0.0
    %2749 = vmatpush1.msra.mxu0 0.0
    %2750 = vmatprep.subr.mxu0 0.0
    %2751 = vmatpush1.msra.mxu0 0.0
    %2752 = vmatprep.subr.mxu0 0.0
    %2753 = vmatpush1.msra.mxu0 0.0
    %2754 = vmatprep.subr.mxu0 0.0
    %2755 = vmatpush1.msra.mxu0 0.0
    %2756 = vmatprep.subr.mxu0 0.0
    %2757 = vmatpush1.msra.mxu0 0.0
    %2758 = vmatprep.subr.mxu0 0.0
    %2759 = vmatpush1.msra.mxu0 0.0
    %2760 = vmatprep.subr.mxu0 0.0
    %2761 = vmatpush1.msra.mxu0 0.0
    %2762 = vmatprep.subr.mxu0 0.0
    %2763 = vmatpush1.msra.mxu0 0.0
    %2764 = vmatprep.subr.mxu0 0.0
    %2765 = vmatpush1.msra.mxu0 0.0
    %2766 = vmatprep.subr.mxu0 0.0
    %2767 = vmatpush1.msra.mxu0 0.0
    %2768 = vmatprep.subr.mxu0 0.0
    %2769 = vmatpush1.msra.mxu0 0.0
    %2770 = vmatprep.subr.mxu0 0.0
    %2771 = vmatpush1.msra.mxu0 0.0
    %2772 = vmatprep.subr.mxu0 0.0
    %2773 = vmatpush1.msra.mxu0 0.0
    %2774 = vmatprep.subr.mxu0 0.0
    %2775 = vmatpush1.msra.mxu0 0.0
    %2776 = vmatprep.mubr.f32.mxu0 0.0
    %2777 = vmatmul.mubr.f32.gmra.mrb[0].mxu0 %v2594
    %v2778 = vpop.f32.mrb[0].mxu0
    %v2779 = vadd.f32 0.0, %v2778
    %v2780 = vpop.f32.mrb[0].mxu0
    %v2781 = vadd.f32 0.0, %v2780
    %2782 = vmatprep.mubr.f32.mxu0 0.0
    %2783 = vmatmul.mubr.f32.gmra.mrb[0].mxu0 %v2597
    %v2784 = vpop.f32.mrb[0].mxu0
    %v2785 = vadd.f32 0.0, %v2784
    %v2786 = vpop.f32.mrb[0].mxu0
    %v2787 = vadd.f32 0.0, %v2786
    %2788 = vmatprep.mubr.f32.mxu0 0.0
    %2789 = vmatmul.mubr.f32.gmra.mrb[0].mxu0 %v2600
    %v2790 = vpop.f32.mrb[0].mxu0
    %v2791 = vadd.f32 0.0, %v2790
    %v2792 = vpop.f32.mrb[0].mxu0
    %v2793 = vadd.f32 0.0, %v2792
    %2794 = vmatprep.mubr.f32.mxu0 0.0
    %2795 = vmatmul.mubr.f32.gmra.mrb[0].mxu0 %v2603
    %v2796 = vpop.f32.mrb[0].mxu0
    %v2797 = vadd.f32 0.0, %v2796
    %v2798 = vpop.f32.mrb[0].mxu0
    %v2799 = vadd.f32 0.0, %v2798
    %2800 = vmatprep.mubr.f32.mxu0 0.0
    %2801 = vmatmul.mubr.f32.gmra.mrb[0].mxu0 %v2606
    %v2802 = vpop.f32.mrb[0].mxu0
    %v2803 = vadd.f32 0.0, %v2802
    %v2804 = vpop.f32.mrb[0].mxu0
    %v2805 = vadd.f32 0.0, %v2804
    %2806 = vmatprep.mubr.f32.mxu0 0.0
    %2807 = vmatmul.mubr.f32.gmra.mrb[0].mxu0 %v2609
    %v2808 = vpop.f32.mrb[0].mxu0
    %v2809 = vadd.f32 0.0, %v2808
    %v2810 = vpop.f32.mrb[0].mxu0
    %v2811 = vadd.f32 0.0, %v2810
    %2812 = vdwg.mxu0
    %v2813 = vpack.c.bf16 %v2684, %v2678
    %v2814 = vpack.c.bf16 %v2686, %v2680
    %v2815 = vpack.c.bf16 %v2785, %v2779
    %v2816 = vpack.c.bf16 %v2787, %v2781
    %v2817 = vpack.c.bf16 %v2696, %v2690
    %v2818 = vpack.c.bf16 %v2698, %v2692
    %v2819 = vpack.c.bf16 %v2797, %v2791
    %v2820 = vpack.c.bf16 %v2799, %v2793
    %v2821 = vpack.c.bf16 %v2708, %v2702
    %v2822 = vpack.c.bf16 %v2710, %v2704
    %v2823 = vpack.c.bf16 %v2809, %v2803
    %v2824 = vpack.c.bf16 %v2811, %v2805
    %v2825 = vld [vmem:[#allocation7] sm:$0xff]
    %v2826 = vld [vmem:[#allocation7 + $0x8] sm:$0xff]
    %v2827 = vld [vmem:[#allocation7 + $0x10] sm:$0xff]
    %v2828 = vld [vmem:[#allocation7 + $0x18] sm:$0xff]
    %v2829 = vld [vmem:[#allocation7 + $0x20] sm:$0xff]
    %v2830 = vld [vmem:[#allocation7 + $0x28] sm:$0xff]
    %v2831 = vld [vmem:[#allocation7 + $0x30] sm:$0xff]
    %v2832 = vld [vmem:[#allocation7 + $0x38] sm:$0xff]
    %v2833 = vld [vmem:[#allocation7 + $0x40] sm:$0xff]
    %v2834 = vld [vmem:[#allocation7 + $0x48] sm:$0xff]
    %v2835 = vld [vmem:[#allocation7 + $0x50] sm:$0xff]
    %v2836 = vld [vmem:[#allocation7 + $0x58] sm:$0xff]
    %v2837 = vld [vmem:[#allocation7 + $0x60] sm:$0xff]
    %v2838 = vld [vmem:[#allocation7 + $0x68] sm:$0xff]
    %v2839 = vld [vmem:[#allocation7 + $0x70] sm:$0xff]
    %v2840 = vld [vmem:[#allocation7 + $0x78] sm:$0xff]
    %v2841 = vld [vmem:[#allocation7 + $0x80] sm:$0xff]
    %v2842 = vld [vmem:[#allocation7 + $0x88] sm:$0xff]
    %v2843 = vld [vmem:[#allocation7 + $0x90] sm:$0xff]
    %v2844 = vld [vmem:[#allocation7 + $0x98] sm:$0xff]
    %v2845 = vld [vmem:[#allocation7 + $0xa0] sm:$0xff]
    %v2846 = vld [vmem:[#allocation7 + $0xa8] sm:$0xff]
    %v2847 = vld [vmem:[#allocation7 + $0xb0] sm:$0xff]
    %v2848 = vld [vmem:[#allocation7 + $0xb8] sm:$0xff]
    %v2849 = vld [vmem:[#allocation7 + $0xc0] sm:$0xff]
    %v2850 = vld [vmem:[#allocation7 + $0xc8] sm:$0xff]
    %v2851 = vld [vmem:[#allocation7 + $0xd0] sm:$0xff]
    %v2852 = vld [vmem:[#allocation7 + $0xd8] sm:$0xff]
    %v2853 = vld [vmem:[#allocation7 + $0xe0] sm:$0xff]
    %v2854 = vld [vmem:[#allocation7 + $0xe8] sm:$0xff]
    %v2855 = vld [vmem:[#allocation7 + $0xf0] sm:$0xff]
    %v2856 = vld [vmem:[#allocation7 + $0xf8] sm:$0xff]
    %v2857 = vld [vmem:[#allocation7 + $0x100] sm:$0xff]
    %v2858 = vld [vmem:[#allocation7 + $0x108] sm:$0xff]
    %v2859 = vld [vmem:[#allocation7 + $0x110] sm:$0xff]
    %v2860 = vld [vmem:[#allocation7 + $0x118] sm:$0xff]
    %v2861 = vld [vmem:[#allocation7 + $0x120] sm:$0xff]
    %v2862 = vld [vmem:[#allocation7 + $0x128] sm:$0xff]
    %v2863 = vld [vmem:[#allocation7 + $0x130] sm:$0xff]
    %v2864 = vld [vmem:[#allocation7 + $0x138] sm:$0xff]
    %v2865 = vld [vmem:[#allocation7 + $0x140] sm:$0xff]
    %v2866 = vld [vmem:[#allocation7 + $0x148] sm:$0xff]
    %v2867 = vld [vmem:[#allocation7 + $0x150] sm:$0xff]
    %v2868 = vld [vmem:[#allocation7 + $0x158] sm:$0xff]
    %v2869 = vld [vmem:[#allocation7 + $0x160] sm:$0xff]
    %v2870 = vld [vmem:[#allocation7 + $0x168] sm:$0xff]
    %v2871 = vld [vmem:[#allocation7 + $0x170] sm:$0xff]
    %v2872 = vld [vmem:[#allocation7 + $0x178] sm:$0xff]
    %v2873 = vld [vmem:[#allocation7 + $0x180] sm:$0xff]
    %v2874 = vld [vmem:[#allocation7 + $0x188] sm:$0xff]
    %v2875 = vld [vmem:[#allocation7 + $0x190] sm:$0xff]
    %v2876 = vld [vmem:[#allocation7 + $0x198] sm:$0xff]
    %v2877 = vld [vmem:[#allocation7 + $0x1a0] sm:$0xff]
    %v2878 = vld [vmem:[#allocation7 + $0x1a8] sm:$0xff]
    %v2879 = vld [vmem:[#allocation7 + $0x1b0] sm:$0xff]
    %v2880 = vld [vmem:[#allocation7 + $0x1b8] sm:$0xff]
    %v2881 = vld [vmem:[#allocation7 + $0x1c0] sm:$0xff]
    %v2882 = vld [vmem:[#allocation7 + $0x1c8] sm:$0xff]
    %v2883 = vld [vmem:[#allocation7 + $0x1d0] sm:$0xff]
    %v2884 = vld [vmem:[#allocation7 + $0x1d8] sm:$0xff]
    %v2885 = vld [vmem:[#allocation7 + $0x1e0] sm:$0xff]
    %v2886 = vld [vmem:[#allocation7 + $0x1e8] sm:$0xff]
    %v2887 = vld [vmem:[#allocation7 + $0x1f0] sm:$0xff]
    %v2888 = vld [vmem:[#allocation7 + $0x1f8] sm:$0xff]
    %2889 = vmatprep.subr.bf16.mxu0 %v2826
    %2890 = vmatpush1.bf16.msra.mxu0 %v2825
    %2891 = vmatprep.subr.bf16.mxu0 %v2828
    %2892 = vmatpush1.bf16.msra.mxu0 %v2827
    %2893 = vmatprep.subr.bf16.mxu0 %v2830
    %2894 = vmatpush1.bf16.msra.mxu0 %v2829
    %2895 = vmatprep.subr.bf16.mxu0 %v2832
    %2896 = vmatpush1.bf16.msra.mxu0 %v2831
    %2897 = vmatprep.subr.bf16.mxu0 %v2834
    %2898 = vmatpush1.bf16.msra.mxu0 %v2833
    %2899 = vmatprep.subr.bf16.mxu0 %v2836
    %2900 = vmatpush1.bf16.msra.mxu0 %v2835
    %2901 = vmatprep.subr.bf16.mxu0 %v2838
    %2902 = vmatpush1.bf16.msra.mxu0 %v2837
    %2903 = vmatprep.subr.bf16.mxu0 %v2840
    %2904 = vmatpush1.bf16.msra.mxu0 %v2839
    %2905 = vmatprep.subr.bf16.mxu0 %v2842
    %2906 = vmatpush1.bf16.msra.mxu0 %v2841
    %2907 = vmatprep.subr.bf16.mxu0 %v2844
    %2908 = vmatpush1.bf16.msra.mxu0 %v2843
    %2909 = vmatprep.subr.bf16.mxu0 %v2846
    %2910 = vmatpush1.bf16.msra.mxu0 %v2845
    %2911 = vmatprep.subr.bf16.mxu0 %v2848
    %2912 = vmatpush1.bf16.msra.mxu0 %v2847
    %2913 = vmatprep.subr.bf16.mxu0 %v2850
    %2914 = vmatpush1.bf16.msra.mxu0 %v2849
    %2915 = vmatprep.subr.bf16.mxu0 %v2852
    %2916 = vmatpush1.bf16.msra.mxu0 %v2851
    %2917 = vmatprep.subr.bf16.mxu0 %v2854
    %2918 = vmatpush1.bf16.msra.mxu0 %v2853
    %2919 = vmatprep.subr.bf16.mxu0 %v2856
    %2920 = vmatpush1.bf16.msra.mxu0 %v2855
    %2921 = vmatprep.mubr.bf16.mxu0 %v2814
    %2922 = vmatmul.mubr.bf16.gmra.mrb[0].mxu0 %v2813
    %v2923 = vpop.f32.mrb[0].mxu0
    %v2924 = vadd.f32 0.0, %v2923
    %v2925 = vpop.f32.mrb[0].mxu0
    %v2926 = vadd.f32 0.0, %v2925
    %v2927 = vpop.f32.mrb[0].mxu0
    %v2928 = vadd.f32 0.0, %v2927
    %v2929 = vpop.f32.mrb[0].mxu0
    %v2930 = vadd.f32 0.0, %v2929
    %2931 = vdwg.mxu0
    %2932 = vmatprep.subr.bf16.mxu0 %v2858
    %2933 = vmatpush1.bf16.msra.mxu0 %v2857
    %2934 = vmatprep.subr.bf16.mxu0 %v2860
    %2935 = vmatpush1.bf16.msra.mxu0 %v2859
    %2936 = vmatprep.subr.bf16.mxu0 %v2862
    %2937 = vmatpush1.bf16.msra.mxu0 %v2861
    %2938 = vmatprep.subr.bf16.mxu0 %v2864
    %2939 = vmatpush1.bf16.msra.mxu0 %v2863
    %2940 = vmatprep.subr.bf16.mxu0 %v2866
    %2941 = vmatpush1.bf16.msra.mxu0 %v2865
    %2942 = vmatprep.subr.bf16.mxu0 %v2868
    %2943 = vmatpush1.bf16.msra.mxu0 %v2867
    %2944 = vmatprep.subr.bf16.mxu0 %v2870
    %2945 = vmatpush1.bf16.msra.mxu0 %v2869
    %2946 = vmatprep.subr.bf16.mxu0 %v2872
    %2947 = vmatpush1.bf16.msra.mxu0 %v2871
    %2948 = vmatprep.subr.bf16.mxu0 %v2874
    %2949 = vmatpush1.bf16.msra.mxu0 %v2873
    %2950 = vmatprep.subr.bf16.mxu0 %v2876
    %2951 = vmatpush1.bf16.msra.mxu0 %v2875
    %2952 = vmatprep.subr.bf16.mxu0 %v2878
    %2953 = vmatpush1.bf16.msra.mxu0 %v2877
    %2954 = vmatprep.subr.bf16.mxu0 %v2880
    %2955 = vmatpush1.bf16.msra.mxu0 %v2879
    %2956 = vmatprep.subr.bf16.mxu0 %v2882
    %2957 = vmatpush1.bf16.msra.mxu0 %v2881
    %2958 = vmatprep.subr.bf16.mxu0 %v2884
    %2959 = vmatpush1.bf16.msra.mxu0 %v2883
    %2960 = vmatprep.subr.bf16.mxu0 %v2886
    %2961 = vmatpush1.bf16.msra.mxu0 %v2885
    %2962 = vmatprep.subr.bf16.mxu0 %v2888
    %2963 = vmatpush1.bf16.msra.mxu0 %v2887
    %2964 = vmatprep.mubr.bf16.mxu0 %v2816
    %2965 = vmatmul.mubr.bf16.gmra.mrb[0].mxu0 %v2815
    %v2966 = vpop.f32.mrb[0].mxu0
    %v2967 = vadd.f32 %v2924, %v2966
    %v2968 = vpop.f32.mrb[0].mxu0
    %v2969 = vadd.f32 %v2926, %v2968
    %v2970 = vpop.f32.mrb[0].mxu0
    %v2971 = vadd.f32 %v2928, %v2970
    %v2972 = vpop.f32.mrb[0].mxu0
    %v2973 = vadd.f32 %v2930, %v2972
    %2974 = vdwg.mxu0
    %v2976 = vlaneseq
    %v2977 = vshrl.u32 %v2976, 7
    %v2978 = vsub.s32 0, %v2977
    %v2979 = vrot.slane %v2586, %v2978
    %v2980 = vlaneseq
    %v2981 = vshrl.u32 %v2980, 7
    %v2982 = vsub.s32 1, %v2981
    %v2983 = vrot.slane %v2586, %v2982
    %v2986 = vadd.f32 %v2979, %v2967
    %v2987 = vadd.f32 %v2983, %v2969
    %v2988 = vadd.f32 %v2979, %v2971
    %v2989 = vadd.f32 %v2983, %v2973
    %s2990 = scalar_lea.vmem [#allocation7], 512
    %v2991 = vld [vmem:[%s2990] sm:$0xff]
    %v2992 = vld [vmem:[%s2990 + $0x8] sm:$0xff]
    %v2993 = vld [vmem:[%s2990 + $0x10] sm:$0xff]
    %v2994 = vld [vmem:[%s2990 + $0x18] sm:$0xff]
    %v2995 = vld [vmem:[%s2990 + $0x20] sm:$0xff]
    %v2996 = vld [vmem:[%s2990 + $0x28] sm:$0xff]
    %v2997 = vld [vmem:[%s2990 + $0x30] sm:$0xff]
    %v2998 = vld [vmem:[%s2990 + $0x38] sm:$0xff]
    %v2999 = vld [vmem:[%s2990 + $0x40] sm:$0xff]
    %v3000 = vld [vmem:[%s2990 + $0x48] sm:$0xff]
    %v3001 = vld [vmem:[%s2990 + $0x50] sm:$0xff]
    %v3002 = vld [vmem:[%s2990 + $0x58] sm:$0xff]
    %v3003 = vld [vmem:[%s2990 + $0x60] sm:$0xff]
    %v3004 = vld [vmem:[%s2990 + $0x68] sm:$0xff]
    %v3005 = vld [vmem:[%s2990 + $0x70] sm:$0xff]
    %v3006 = vld [vmem:[%s2990 + $0x78] sm:$0xff]
    %v3007 = vld [vmem:[%s2990 + $0x80] sm:$0xff]
    %v3008 = vld [vmem:[%s2990 + $0x88] sm:$0xff]
    %v3009 = vld [vmem:[%s2990 + $0x90] sm:$0xff]
    %v3010 = vld [vmem:[%s2990 + $0x98] sm:$0xff]
    %v3011 = vld [vmem:[%s2990 + $0xa0] sm:$0xff]
    %v3012 = vld [vmem:[%s2990 + $0xa8] sm:$0xff]
    %v3013 = vld [vmem:[%s2990 + $0xb0] sm:$0xff]
    %v3014 = vld [vmem:[%s2990 + $0xb8] sm:$0xff]
    %v3015 = vld [vmem:[%s2990 + $0xc0] sm:$0xff]
    %v3016 = vld [vmem:[%s2990 + $0xc8] sm:$0xff]
    %v3017 = vld [vmem:[%s2990 + $0xd0] sm:$0xff]
    %v3018 = vld [vmem:[%s2990 + $0xd8] sm:$0xff]
    %v3019 = vld [vmem:[%s2990 + $0xe0] sm:$0xff]
    %v3020 = vld [vmem:[%s2990 + $0xe8] sm:$0xff]
    %v3021 = vld [vmem:[%s2990 + $0xf0] sm:$0xff]
    %v3022 = vld [vmem:[%s2990 + $0xf8] sm:$0xff]
    %v3023 = vld [vmem:[%s2990 + $0x100] sm:$0xff]
    %v3024 = vld [vmem:[%s2990 + $0x108] sm:$0xff]
    %v3025 = vld [vmem:[%s2990 + $0x110] sm:$0xff]
    %v3026 = vld [vmem:[%s2990 + $0x118] sm:$0xff]
    %v3027 = vld [vmem:[%s2990 + $0x120] sm:$0xff]
    %v3028 = vld [vmem:[%s2990 + $0x128] sm:$0xff]
    %v3029 = vld [vmem:[%s2990 + $0x130] sm:$0xff]
    %v3030 = vld [vmem:[%s2990 + $0x138] sm:$0xff]
    %v3031 = vld [vmem:[%s2990 + $0x140] sm:$0xff]
    %v3032 = vld [vmem:[%s2990 + $0x148] sm:$0xff]
    %v3033 = vld [vmem:[%s2990 + $0x150] sm:$0xff]
    %v3034 = vld [vmem:[%s2990 + $0x158] sm:$0xff]
    %v3035 = vld [vmem:[%s2990 + $0x160] sm:$0xff]
    %v3036 = vld [vmem:[%s2990 + $0x168] sm:$0xff]
    %v3037 = vld [vmem:[%s2990 + $0x170] sm:$0xff]
    %v3038 = vld [vmem:[%s2990 + $0x178] sm:$0xff]
    %v3039 = vld [vmem:[%s2990 + $0x180] sm:$0xff]
    %v3040 = vld [vmem:[%s2990 + $0x188] sm:$0xff]
    %v3041 = vld [vmem:[%s2990 + $0x190] sm:$0xff]
    %v3042 = vld [vmem:[%s2990 + $0x198] sm:$0xff]
    %v3043 = vld [vmem:[%s2990 + $0x1a0] sm:$0xff]
    %v3044 = vld [vmem:[%s2990 + $0x1a8] sm:$0xff]
    %v3045 = vld [vmem:[%s2990 + $0x1b0] sm:$0xff]
    %v3046 = vld [vmem:[%s2990 + $0x1b8] sm:$0xff]
    %v3047 = vld [vmem:[%s2990 + $0x1c0] sm:$0xff]
    %v3048 = vld [vmem:[%s2990 + $0x1c8] sm:$0xff]
    %v3049 = vld [vmem:[%s2990 + $0x1d0] sm:$0xff]
    %v3050 = vld [vmem:[%s2990 + $0x1d8] sm:$0xff]
    %v3051 = vld [vmem:[%s2990 + $0x1e0] sm:$0xff]
    %v3052 = vld [vmem:[%s2990 + $0x1e8] sm:$0xff]
    %v3053 = vld [vmem:[%s2990 + $0x1f0] sm:$0xff]
    %v3054 = vld [vmem:[%s2990 + $0x1f8] sm:$0xff]
    %3055 = vmatprep.subr.bf16.mxu0 %v2992
    %3056 = vmatpush1.bf16.msra.mxu0 %v2991
    %3057 = vmatprep.subr.bf16.mxu0 %v2994
    %3058 = vmatpush1.bf16.msra.mxu0 %v2993
    %3059 = vmatprep.subr.bf16.mxu0 %v2996
    %3060 = vmatpush1.bf16.msra.mxu0 %v2995
    %3061 = vmatprep.subr.bf16.mxu0 %v2998
    %3062 = vmatpush1.bf16.msra.mxu0 %v2997
    %3063 = vmatprep.subr.bf16.mxu0 %v3000
    %3064 = vmatpush1.bf16.msra.mxu0 %v2999
    %3065 = vmatprep.subr.bf16.mxu0 %v3002
    %3066 = vmatpush1.bf16.msra.mxu0 %v3001
    %3067 = vmatprep.subr.bf16.mxu0 %v3004
    %3068 = vmatpush1.bf16.msra.mxu0 %v3003
    %3069 = vmatprep.subr.bf16.mxu0 %v3006
    %3070 = vmatpush1.bf16.msra.mxu0 %v3005
    %3071 = vmatprep.subr.bf16.mxu0 %v3008
    %3072 = vmatpush1.bf16.msra.mxu0 %v3007
    %3073 = vmatprep.subr.bf16.mxu0 %v3010
    %3074 = vmatpush1.bf16.msra.mxu0 %v3009
    %3075 = vmatprep.subr.bf16.mxu0 %v3012
    %3076 = vmatpush1.bf16.msra.mxu0 %v3011
    %3077 = vmatprep.subr.bf16.mxu0 %v3014
    %3078 = vmatpush1.bf16.msra.mxu0 %v3013
    %3079 = vmatprep.subr.bf16.mxu0 %v3016
    %3080 = vmatpush1.bf16.msra.mxu0 %v3015
    %3081 = vmatprep.subr.bf16.mxu0 %v3018
    %3082 = vmatpush1.bf16.msra.mxu0 %v3017
    %3083 = vmatprep.subr.bf16.mxu0 %v3020
    %3084 = vmatpush1.bf16.msra.mxu0 %v3019
    %3085 = vmatprep.subr.bf16.mxu0 %v3022
    %3086 = vmatpush1.bf16.msra.mxu0 %v3021
    %3087 = vmatprep.mubr.bf16.mxu0 %v2818
    %3088 = vmatmul.mubr.bf16.gmra.mrb[0].mxu0 %v2817
    %v3089 = vpop.f32.mrb[0].mxu0
    %v3090 = vadd.f32 0.0, %v3089
    %v3091 = vpop.f32.mrb[0].mxu0
    %v3092 = vadd.f32 0.0, %v3091
    %v3093 = vpop.f32.mrb[0].mxu0
    %v3094 = vadd.f32 0.0, %v3093
    %v3095 = vpop.f32.mrb[0].mxu0
    %v3096 = vadd.f32 0.0, %v3095
    %3097 = vdwg.mxu0
    %3098 = vmatprep.subr.bf16.mxu0 %v3024
    %3099 = vmatpush1.bf16.msra.mxu0 %v3023
    %3100 = vmatprep.subr.bf16.mxu0 %v3026
    %3101 = vmatpush1.bf16.msra.mxu0 %v3025
    %3102 = vmatprep.subr.bf16.mxu0 %v3028
    %3103 = vmatpush1.bf16.msra.mxu0 %v3027
    %3104 = vmatprep.subr.bf16.mxu0 %v3030
    %3105 = vmatpush1.bf16.msra.mxu0 %v3029
    %3106 = vmatprep.subr.bf16.mxu0 %v3032
    %3107 = vmatpush1.bf16.msra.mxu0 %v3031
    %3108 = vmatprep.subr.bf16.mxu0 %v3034
    %3109 = vmatpush1.bf16.msra.mxu0 %v3033
    %3110 = vmatprep.subr.bf16.mxu0 %v3036
    %3111 = vmatpush1.bf16.msra.mxu0 %v3035
    %3112 = vmatprep.subr.bf16.mxu0 %v3038
    %3113 = vmatpush1.bf16.msra.mxu0 %v3037
    %3114 = vmatprep.subr.bf16.mxu0 %v3040
    %3115 = vmatpush1.bf16.msra.mxu0 %v3039
    %3116 = vmatprep.subr.bf16.mxu0 %v3042
    %3117 = vmatpush1.bf16.msra.mxu0 %v3041
    %3118 = vmatprep.subr.bf16.mxu0 %v3044
    %3119 = vmatpush1.bf16.msra.mxu0 %v3043
    %3120 = vmatprep.subr.bf16.mxu0 %v3046
    %3121 = vmatpush1.bf16.msra.mxu0 %v3045
    %3122 = vmatprep.subr.bf16.mxu0 %v3048
    %3123 = vmatpush1.bf16.msra.mxu0 %v3047
    %3124 = vmatprep.subr.bf16.mxu0 %v3050
    %3125 = vmatpush1.bf16.msra.mxu0 %v3049
    %3126 = vmatprep.subr.bf16.mxu0 %v3052
    %3127 = vmatpush1.bf16.msra.mxu0 %v3051
    %3128 = vmatprep.subr.bf16.mxu0 %v3054
    %3129 = vmatpush1.bf16.msra.mxu0 %v3053
    %3130 = vmatprep.mubr.bf16.mxu0 %v2820
    %3131 = vmatmul.mubr.bf16.gmra.mrb[0].mxu0 %v2819
    %v3132 = vpop.f32.mrb[0].mxu0
    %v3133 = vadd.f32 %v3090, %v3132
    %v3134 = vpop.f32.mrb[0].mxu0
    %v3135 = vadd.f32 %v3092, %v3134
    %v3136 = vpop.f32.mrb[0].mxu0
    %v3137 = vadd.f32 %v3094, %v3136
    %v3138 = vpop.f32.mrb[0].mxu0
    %v3139 = vadd.f32 %v3096, %v3138
    %3140 = vdwg.mxu0
    %v3141 = vadd.f32 %v2986, %v3133
    %v3142 = vadd.f32 %v2987, %v3135
    %v3143 = vadd.f32 %v2988, %v3137
    %v3144 = vadd.f32 %v2989, %v3139
    %s3145 = scalar_lea.vmem [#allocation7], 1024
    %v3146 = vld [vmem:[%s3145] sm:$0xff]
    %v3147 = vld [vmem:[%s3145 + $0x8] sm:$0xff]
    %v3148 = vld [vmem:[%s3145 + $0x10] sm:$0xff]
    %v3149 = vld [vmem:[%s3145 + $0x18] sm:$0xff]
    %v3150 = vld [vmem:[%s3145 + $0x20] sm:$0xff]
    %v3151 = vld [vmem:[%s3145 + $0x28] sm:$0xff]
    %v3152 = vld [vmem:[%s3145 + $0x30] sm:$0xff]
    %v3153 = vld [vmem:[%s3145 + $0x38] sm:$0xff]
    %v3154 = vld [vmem:[%s3145 + $0x40] sm:$0xff]
    %v3155 = vld [vmem:[%s3145 + $0x48] sm:$0xff]
    %v3156 = vld [vmem:[%s3145 + $0x50] sm:$0xff]
    %v3157 = vld [vmem:[%s3145 + $0x58] sm:$0xff]
    %v3158 = vld [vmem:[%s3145 + $0x60] sm:$0xff]
    %v3159 = vld [vmem:[%s3145 + $0x68] sm:$0xff]
    %v3160 = vld [vmem:[%s3145 + $0x70] sm:$0xff]
    %v3161 = vld [vmem:[%s3145 + $0x78] sm:$0xff]
    %v3162 = vld [vmem:[%s3145 + $0x80] sm:$0xff]
    %v3163 = vld [vmem:[%s3145 + $0x88] sm:$0xff]
    %v3164 = vld [vmem:[%s3145 + $0x90] sm:$0xff]
    %v3165 = vld [vmem:[%s3145 + $0x98] sm:$0xff]
    %v3166 = vld [vmem:[%s3145 + $0xa0] sm:$0xff]
    %v3167 = vld [vmem:[%s3145 + $0xa8] sm:$0xff]
    %v3168 = vld [vmem:[%s3145 + $0xb0] sm:$0xff]
    %v3169 = vld [vmem:[%s3145 + $0xb8] sm:$0xff]
    %v3170 = vld [vmem:[%s3145 + $0xc0] sm:$0xff]
    %v3171 = vld [vmem:[%s3145 + $0xc8] sm:$0xff]
    %v3172 = vld [vmem:[%s3145 + $0xd0] sm:$0xff]
    %v3173 = vld [vmem:[%s3145 + $0xd8] sm:$0xff]
    %v3174 = vld [vmem:[%s3145 + $0xe0] sm:$0xff]
    %v3175 = vld [vmem:[%s3145 + $0xe8] sm:$0xff]
    %v3176 = vld [vmem:[%s3145 + $0xf0] sm:$0xff]
    %v3177 = vld [vmem:[%s3145 + $0xf8] sm:$0xff]
    %v3178 = vld [vmem:[%s3145 + $0x100] sm:$0xff]
    %v3179 = vld [vmem:[%s3145 + $0x108] sm:$0xff]
    %v3180 = vld [vmem:[%s3145 + $0x110] sm:$0xff]
    %v3181 = vld [vmem:[%s3145 + $0x118] sm:$0xff]
    %v3182 = vld [vmem:[%s3145 + $0x120] sm:$0xff]
    %v3183 = vld [vmem:[%s3145 + $0x128] sm:$0xff]
    %v3184 = vld [vmem:[%s3145 + $0x130] sm:$0xff]
    %v3185 = vld [vmem:[%s3145 + $0x138] sm:$0xff]
    %v3186 = vld [vmem:[%s3145 + $0x140] sm:$0xff]
    %v3187 = vld [vmem:[%s3145 + $0x148] sm:$0xff]
    %v3188 = vld [vmem:[%s3145 + $0x150] sm:$0xff]
    %v3189 = vld [vmem:[%s3145 + $0x158] sm:$0xff]
    %v3190 = vld [vmem:[%s3145 + $0x160] sm:$0xff]
    %v3191 = vld [vmem:[%s3145 + $0x168] sm:$0xff]
    %v3192 = vld [vmem:[%s3145 + $0x170] sm:$0xff]
    %v3193 = vld [vmem:[%s3145 + $0x178] sm:$0xff]
    %v3194 = vld [vmem:[%s3145 + $0x180] sm:$0xff]
    %v3195 = vld [vmem:[%s3145 + $0x188] sm:$0xff]
    %v3196 = vld [vmem:[%s3145 + $0x190] sm:$0xff]
    %v3197 = vld [vmem:[%s3145 + $0x198] sm:$0xff]
    %v3198 = vld [vmem:[%s3145 + $0x1a0] sm:$0xff]
    %v3199 = vld [vmem:[%s3145 + $0x1a8] sm:$0xff]
    %v3200 = vld [vmem:[%s3145 + $0x1b0] sm:$0xff]
    %v3201 = vld [vmem:[%s3145 + $0x1b8] sm:$0xff]
    %v3202 = vld [vmem:[%s3145 + $0x1c0] sm:$0xff]
    %v3203 = vld [vmem:[%s3145 + $0x1c8] sm:$0xff]
    %v3204 = vld [vmem:[%s3145 + $0x1d0] sm:$0xff]
    %v3205 = vld [vmem:[%s3145 + $0x1d8] sm:$0xff]
    %v3206 = vld [vmem:[%s3145 + $0x1e0] sm:$0xff]
    %v3207 = vld [vmem:[%s3145 + $0x1e8] sm:$0xff]
    %v3208 = vld [vmem:[%s3145 + $0x1f0] sm:$0xff]
    %v3209 = vld [vmem:[%s3145 + $0x1f8] sm:$0xff]
    %3210 = vmatprep.subr.bf16.mxu0 %v3147
    %3211 = vmatpush1.bf16.msra.mxu0 %v3146
    %3212 = vmatprep.subr.bf16.mxu0 %v3149
    %3213 = vmatpush1.bf16.msra.mxu0 %v3148
    %3214 = vmatprep.subr.bf16.mxu0 %v3151
    %3215 = vmatpush1.bf16.msra.mxu0 %v3150
    %3216 = vmatprep.subr.bf16.mxu0 %v3153
    %3217 = vmatpush1.bf16.msra.mxu0 %v3152
    %3218 = vmatprep.subr.bf16.mxu0 %v3155
    %3219 = vmatpush1.bf16.msra.mxu0 %v3154
    %3220 = vmatprep.subr.bf16.mxu0 %v3157
    %3221 = vmatpush1.bf16.msra.mxu0 %v3156
    %3222 = vmatprep.subr.bf16.mxu0 %v3159
    %3223 = vmatpush1.bf16.msra.mxu0 %v3158
    %3224 = vmatprep.subr.bf16.mxu0 %v3161
    %3225 = vmatpush1.bf16.msra.mxu0 %v3160
    %3226 = vmatprep.subr.bf16.mxu0 %v3163
    %3227 = vmatpush1.bf16.msra.mxu0 %v3162
    %3228 = vmatprep.subr.bf16.mxu0 %v3165
    %3229 = vmatpush1.bf16.msra.mxu0 %v3164
    %3230 = vmatprep.subr.bf16.mxu0 %v3167
    %3231 = vmatpush1.bf16.msra.mxu0 %v3166
    %3232 = vmatprep.subr.bf16.mxu0 %v3169
    %3233 = vmatpush1.bf16.msra.mxu0 %v3168
    %3234 = vmatprep.subr.bf16.mxu0 %v3171
    %3235 = vmatpush1.bf16.msra.mxu0 %v3170
    %3236 = vmatprep.subr.bf16.mxu0 %v3173
    %3237 = vmatpush1.bf16.msra.mxu0 %v3172
    %3238 = vmatprep.subr.bf16.mxu0 %v3175
    %3239 = vmatpush1.bf16.msra.mxu0 %v3174
    %3240 = vmatprep.subr.bf16.mxu0 %v3177
    %3241 = vmatpush1.bf16.msra.mxu0 %v3176
    %3242 = vmatprep.mubr.bf16.mxu0 %v2822
    %3243 = vmatmul.mubr.bf16.gmra.mrb[0].mxu0 %v2821
    %v3244 = vpop.f32.mrb[0].mxu0
    %v3245 = vadd.f32 0.0, %v3244
    %v3246 = vpop.f32.mrb[0].mxu0
    %v3247 = vadd.f32 0.0, %v3246
    %v3248 = vpop.f32.mrb[0].mxu0
    %v3249 = vadd.f32 0.0, %v3248
    %v3250 = vpop.f32.mrb[0].mxu0
    %v3251 = vadd.f32 0.0, %v3250
    %3252 = vdwg.mxu0
    %3253 = vmatprep.subr.bf16.mxu0 %v3179
    %3254 = vmatpush1.bf16.msra.mxu0 %v3178
    %3255 = vmatprep.subr.bf16.mxu0 %v3181
    %3256 = vmatpush1.bf16.msra.mxu0 %v3180
    %3257 = vmatprep.subr.bf16.mxu0 %v3183
    %3258 = vmatpush1.bf16.msra.mxu0 %v3182
    %3259 = vmatprep.subr.bf16.mxu0 %v3185
    %3260 = vmatpush1.bf16.msra.mxu0 %v3184
    %3261 = vmatprep.subr.bf16.mxu0 %v3187
    %3262 = vmatpush1.bf16.msra.mxu0 %v3186
    %3263 = vmatprep.subr.bf16.mxu0 %v3189
    %3264 = vmatpush1.bf16.msra.mxu0 %v3188
    %3265 = vmatprep.subr.bf16.mxu0 %v3191
    %3266 = vmatpush1.bf16.msra.mxu0 %v3190
    %3267 = vmatprep.subr.bf16.mxu0 %v3193
    %3268 = vmatpush1.bf16.msra.mxu0 %v3192
    %3269 = vmatprep.subr.bf16.mxu0 %v3195
    %3270 = vmatpush1.bf16.msra.mxu0 %v3194
    %3271 = vmatprep.subr.bf16.mxu0 %v3197
    %3272 = vmatpush1.bf16.msra.mxu0 %v3196
    %3273 = vmatprep.subr.bf16.mxu0 %v3199
    %3274 = vmatpush1.bf16.msra.mxu0 %v3198
    %3275 = vmatprep.subr.bf16.mxu0 %v3201
    %3276 = vmatpush1.bf16.msra.mxu0 %v3200
    %3277 = vmatprep.subr.bf16.mxu0 %v3203
    %3278 = vmatpush1.bf16.msra.mxu0 %v3202
    %3279 = vmatprep.subr.bf16.mxu0 %v3205
    %3280 = vmatpush1.bf16.msra.mxu0 %v3204
    %3281 = vmatprep.subr.bf16.mxu0 %v3207
    %3282 = vmatpush1.bf16.msra.mxu0 %v3206
    %3283 = vmatprep.subr.bf16.mxu0 %v3209
    %3284 = vmatpush1.bf16.msra.mxu0 %v3208
    %3285 = vmatprep.mubr.bf16.mxu0 %v2824
    %3286 = vmatmul.mubr.bf16.gmra.mrb[0].mxu0 %v2823
    %v3287 = vpop.f32.mrb[0].mxu0
    %v3288 = vadd.f32 %v3245, %v3287
    %v3289 = vpop.f32.mrb[0].mxu0
    %v3290 = vadd.f32 %v3247, %v3289
    %v3291 = vpop.f32.mrb[0].mxu0
    %v3292 = vadd.f32 %v3249, %v3291
    %v3293 = vpop.f32.mrb[0].mxu0
    %v3294 = vadd.f32 %v3251, %v3293
    %3295 = vdwg.mxu0
    %v3296 = vadd.f32 %v3141, %v3288
    %v3297 = vadd.f32 %v3142, %v3290
    %v3298 = vadd.f32 %v3143, %v3292
    %v3299 = vadd.f32 %v3144, %v3294
    %v3300 = vmax.f32 %v3296, 0.0
    %v3301 = vmax.f32 %v3297, 0.0
    %v3302 = vmax.f32 %v3298, 0.0
    %v3303 = vmax.f32 %v3299, 0.0
    %s3304 = sshll.u32 %s2579, 4
    %3305 = dma.done %s234, %s3304
    %s3306 = smul.u32 %s1118, 32
    %s3307 = smul.u32 %s3306, 2
    %s3308 = sshll.u32 %s3307, 4
    %3309 = dma.done %s287, %s3308
    %s3310 = scalar_lea.vmem [#allocation2], 3
    %v3311 = vld [vmem:[%s3310] ss:$8 sm:$0x3]
    %v3312 = vld [vmem:[#allocation8] sm:$0xff]
    %v3313 = vld [vmem:[#allocation8 + $0x8] sm:$0xff]
    %v3314 = vld [vmem:[#allocation8 + $0x10] sm:$0xff]
    %v3315 = vld [vmem:[#allocation8 + $0x18] sm:$0xff]
    %v3316 = vld [vmem:[#allocation8 + $0x20] sm:$0xff]
    %v3317 = vld [vmem:[#allocation8 + $0x28] sm:$0xff]
    %vm3318 = vcmask 130048
    %v3320 = vsel %vm3318, %v3312, 0
    %v3323 = vsel %vm3318, %v3313, 0
    %v3326 = vsel %vm3318, %v3314, 0
    %v3329 = vsel %vm3318, %v3315, 0
    %v3332 = vsel %vm3318, %v3316, 0
    %v3335 = vsel %vm3318, %v3317, 0
    %3337 = vmatprep.subr.mxu0 %v3301
    %3338 = vmatpush1.msra.mxu0 %v3300
    %3339 = vmatprep.subr.mxu0 %v3303
    %3340 = vmatpush1.msra.mxu0 %v3302
    %3341 = vmatprep.subr.mxu0 0.0
    %3342 = vmatpush1.msra.mxu0 0.0
    %3343 = vmatprep.subr.mxu0 0.0
    %3344 = vmatpush1.msra.mxu0 0.0
    %3345 = vmatprep.subr.mxu0 0.0
    %3346 = vmatpush1.msra.mxu0 0.0
    %3347 = vmatprep.subr.mxu0 0.0
    %3348 = vmatpush1.msra.mxu0 0.0
    %3349 = vmatprep.subr.mxu0 0.0
    %3350 = vmatpush1.msra.mxu0 0.0
    %3351 = vmatprep.subr.mxu0 0.0
    %3352 = vmatpush1.msra.mxu0 0.0
    %3353 = vmatprep.subr.mxu0 0.0
    %3354 = vmatpush1.msra.mxu0 0.0
    %3355 = vmatprep.subr.mxu0 0.0
    %3356 = vmatpush1.msra.mxu0 0.0
    %3357 = vmatprep.subr.mxu0 0.0
    %3358 = vmatpush1.msra.mxu0 0.0
    %3359 = vmatprep.subr.mxu0 0.0
    %3360 = vmatpush1.msra.mxu0 0.0
    %3361 = vmatprep.subr.mxu0 0.0
    %3362 = vmatpush1.msra.mxu0 0.0
    %3363 = vmatprep.subr.mxu0 0.0
    %3364 = vmatpush1.msra.mxu0 0.0
    %3365 = vmatprep.subr.mxu0 0.0
    %3366 = vmatpush1.msra.mxu0 0.0
    %3367 = vmatprep.subr.mxu0 0.0
    %3368 = vmatpush1.msra.mxu0 0.0
    %3369 = vmatprep.subr.mxu0 0.0
    %3370 = vmatpush1.msra.mxu0 0.0
    %3371 = vmatprep.subr.mxu0 0.0
    %3372 = vmatpush1.msra.mxu0 0.0
    %3373 = vmatprep.subr.mxu0 0.0
    %3374 = vmatpush1.msra.mxu0 0.0
    %3375 = vmatprep.subr.mxu0 0.0
    %3376 = vmatpush1.msra.mxu0 0.0
    %3377 = vmatprep.subr.mxu0 0.0
    %3378 = vmatpush1.msra.mxu0 0.0
    %3379 = vmatprep.subr.mxu0 0.0
    %3380 = vmatpush1.msra.mxu0 0.0
    %3381 = vmatprep.subr.mxu0 0.0
    %3382 = vmatpush1.msra.mxu0 0.0
    %3383 = vmatprep.subr.mxu0 0.0
    %3384 = vmatpush1.msra.mxu0 0.0
    %3385 = vmatprep.subr.mxu0 0.0
    %3386 = vmatpush1.msra.mxu0 0.0
    %3387 = vmatprep.subr.mxu0 0.0
    %3388 = vmatpush1.msra.mxu0 0.0
    %3389 = vmatprep.subr.mxu0 0.0
    %3390 = vmatpush1.msra.mxu0 0.0
    %3391 = vmatprep.subr.mxu0 0.0
    %3392 = vmatpush1.msra.mxu0 0.0
    %3393 = vmatprep.subr.mxu0 0.0
    %3394 = vmatpush1.msra.mxu0 0.0
    %3395 = vmatprep.subr.mxu0 0.0
    %3396 = vmatpush1.msra.mxu0 0.0
    %3397 = vmatprep.subr.mxu0 0.0
    %3398 = vmatpush1.msra.mxu0 0.0
    %3399 = vmatprep.subr.mxu0 0.0
    %3400 = vmatpush1.msra.mxu0 0.0
    %3401 = vmatprep.mubr.f32.mxu0 0.0
    %3402 = vmatmul.mubr.f32.gmra.mrb[0].mxu0 %v3320
    %v3403 = vpop.f32.mrb[0].mxu0
    %v3404 = vadd.f32 0.0, %v3403
    %v3405 = vpop.f32.mrb[0].mxu0
    %v3406 = vadd.f32 0.0, %v3405
    %3407 = vmatprep.mubr.f32.mxu0 0.0
    %3408 = vmatmul.mubr.f32.gmra.mrb[0].mxu0 %v3323
    %v3409 = vpop.f32.mrb[0].mxu0
    %v3410 = vadd.f32 0.0, %v3409
    %v3411 = vpop.f32.mrb[0].mxu0
    %v3412 = vadd.f32 0.0, %v3411
    %3413 = vmatprep.mubr.f32.mxu0 0.0
    %3414 = vmatmul.mubr.f32.gmra.mrb[0].mxu0 %v3326
    %v3415 = vpop.f32.mrb[0].mxu0
    %v3416 = vadd.f32 0.0, %v3415
    %v3417 = vpop.f32.mrb[0].mxu0
    %v3418 = vadd.f32 0.0, %v3417
    %3419 = vmatprep.mubr.f32.mxu0 0.0
    %3420 = vmatmul.mubr.f32.gmra.mrb[0].mxu0 %v3329
    %v3421 = vpop.f32.mrb[0].mxu0
    %v3422 = vadd.f32 0.0, %v3421
    %v3423 = vpop.f32.mrb[0].mxu0
    %v3424 = vadd.f32 0.0, %v3423
    %3425 = vmatprep.mubr.f32.mxu0 0.0
    %3426 = vmatmul.mubr.f32.gmra.mrb[0].mxu0 %v3332
    %v3427 = vpop.f32.mrb[0].mxu0
    %v3428 = vadd.f32 0.0, %v3427
    %v3429 = vpop.f32.mrb[0].mxu0
    %v3430 = vadd.f32 0.0, %v3429
    %3431 = vmatprep.mubr.f32.mxu0 0.0
    %3432 = vmatmul.mubr.f32.gmra.mrb[0].mxu0 %v3335
    %v3433 = vpop.f32.mrb[0].mxu0
    %v3434 = vadd.f32 0.0, %v3433
    %v3435 = vpop.f32.mrb[0].mxu0
    %v3436 = vadd.f32 0.0, %v3435
    %3437 = vdwg.mxu0
    %v3438 = vpack.c.bf16 %v3410, %v3404
    %v3439 = vpack.c.bf16 %v3412, %v3406
    %v3440 = vpack.c.bf16 %v3422, %v3416
    %v3441 = vpack.c.bf16 %v3424, %v3418
    %v3442 = vpack.c.bf16 %v3434, %v3428
    %v3443 = vpack.c.bf16 %v3436, %v3430
    %v3444 = vld [vmem:[#allocation9] sm:$0xff]
    %v3445 = vld [vmem:[#allocation9 + $0x8] sm:$0xff]
    %v3446 = vld [vmem:[#allocation9 + $0x10] sm:$0xff]
    %v3447 = vld [vmem:[#allocation9 + $0x18] sm:$0xff]
    %v3448 = vld [vmem:[#allocation9 + $0x20] sm:$0xff]
    %v3449 = vld [vmem:[#allocation9 + $0x28] sm:$0xff]
    %v3450 = vld [vmem:[#allocation9 + $0x30] sm:$0xff]
    %v3451 = vld [vmem:[#allocation9 + $0x38] sm:$0xff]
    %v3452 = vld [vmem:[#allocation9 + $0x40] sm:$0xff]
    %v3453 = vld [vmem:[#allocation9 + $0x48] sm:$0xff]
    %v3454 = vld [vmem:[#allocation9 + $0x50] sm:$0xff]
    %v3455 = vld [vmem:[#allocation9 + $0x58] sm:$0xff]
    %v3456 = vld [vmem:[#allocation9 + $0x60] sm:$0xff]
    %v3457 = vld [vmem:[#allocation9 + $0x68] sm:$0xff]
    %v3458 = vld [vmem:[#allocation9 + $0x70] sm:$0xff]
    %v3459 = vld [vmem:[#allocation9 + $0x78] sm:$0xff]
    %v3460 = vld [vmem:[#allocation9 + $0x80] sm:$0xff]
    %v3461 = vld [vmem:[#allocation9 + $0x88] sm:$0xff]
    %v3462 = vld [vmem:[#allocation9 + $0x90] sm:$0xff]
    %v3463 = vld [vmem:[#allocation9 + $0x98] sm:$0xff]
    %v3464 = vld [vmem:[#allocation9 + $0xa0] sm:$0xff]
    %v3465 = vld [vmem:[#allocation9 + $0xa8] sm:$0xff]
    %v3466 = vld [vmem:[#allocation9 + $0xb0] sm:$0xff]
    %v3467 = vld [vmem:[#allocation9 + $0xb8] sm:$0xff]
    %v3468 = vld [vmem:[#allocation9 + $0xc0] sm:$0xff]
    %v3469 = vld [vmem:[#allocation9 + $0xc8] sm:$0xff]
    %v3470 = vld [vmem:[#allocation9 + $0xd0] sm:$0xff]
    %v3471 = vld [vmem:[#allocation9 + $0xd8] sm:$0xff]
    %v3472 = vld [vmem:[#allocation9 + $0xe0] sm:$0xff]
    %v3473 = vld [vmem:[#allocation9 + $0xe8] sm:$0xff]
    %v3474 = vld [vmem:[#allocation9 + $0xf0] sm:$0xff]
    %v3475 = vld [vmem:[#allocation9 + $0xf8] sm:$0xff]
    %3476 = vmatprep.subr.bf16.mxu0 %v3445
    %3477 = vmatpush1.bf16.msra.mxu0 %v3444
    %3478 = vmatprep.subr.bf16.mxu0 %v3447
    %3479 = vmatpush1.bf16.msra.mxu0 %v3446
    %3480 = vmatprep.subr.bf16.mxu0 %v3449
    %3481 = vmatpush1.bf16.msra.mxu0 %v3448
    %3482 = vmatprep.subr.bf16.mxu0 %v3451
    %3483 = vmatpush1.bf16.msra.mxu0 %v3450
    %3484 = vmatprep.subr.bf16.mxu0 %v3453
    %3485 = vmatpush1.bf16.msra.mxu0 %v3452
    %3486 = vmatprep.subr.bf16.mxu0 %v3455
    %3487 = vmatpush1.bf16.msra.mxu0 %v3454
    %3488 = vmatprep.subr.bf16.mxu0 %v3457
    %3489 = vmatpush1.bf16.msra.mxu0 %v3456
    %3490 = vmatprep.subr.bf16.mxu0 %v3459
    %3491 = vmatpush1.bf16.msra.mxu0 %v3458
    %3492 = vmatprep.subr.bf16.mxu0 %v3461
    %3493 = vmatpush1.bf16.msra.mxu0 %v3460
    %3494 = vmatprep.subr.bf16.mxu0 %v3463
    %3495 = vmatpush1.bf16.msra.mxu0 %v3462
    %3496 = vmatprep.subr.bf16.mxu0 %v3465
    %3497 = vmatpush1.bf16.msra.mxu0 %v3464
    %3498 = vmatprep.subr.bf16.mxu0 %v3467
    %3499 = vmatpush1.bf16.msra.mxu0 %v3466
    %3500 = vmatprep.subr.bf16.mxu0 %v3469
    %3501 = vmatpush1.bf16.msra.mxu0 %v3468
    %3502 = vmatprep.subr.bf16.mxu0 %v3471
    %3503 = vmatpush1.bf16.msra.mxu0 %v3470
    %3504 = vmatprep.subr.bf16.mxu0 %v3473
    %3505 = vmatpush1.bf16.msra.mxu0 %v3472
    %3506 = vmatprep.subr.bf16.mxu0 %v3475
    %3507 = vmatpush1.bf16.msra.mxu0 %v3474
    %3508 = vmatprep.mubr.bf16.mxu0 %v3439
    %3509 = vmatmul.mubr.bf16.gmra.mrb[0].mxu0 %v3438
    %v3510 = vpop.f32.mrb[0].mxu0
    %v3511 = vadd.f32 0.0, %v3510
    %v3512 = vpop.f32.mrb[0].mxu0
    %v3513 = vadd.f32 0.0, %v3512
    %v3514 = vpop.f32.mrb[0].mxu0
    %v3515 = vadd.f32 0.0, %v3514
    %v3516 = vpop.f32.mrb[0].mxu0
    %v3517 = vadd.f32 0.0, %v3516
    %3518 = vdwg.mxu0
    %v3520 = vlaneseq
    %v3521 = vshrl.u32 %v3520, 7
    %v3522 = vsub.s32 0, %v3521
    %v3523 = vrot.slane %v3311, %v3522
    %v3524 = vlaneseq
    %v3525 = vshrl.u32 %v3524, 7
    %v3526 = vsub.s32 1, %v3525
    %v3527 = vrot.slane %v3311, %v3526
    %v3530 = vadd.f32 %v3523, %v3511
    %v3531 = vadd.f32 %v3527, %v3513
    %v3532 = vadd.f32 %v3523, %v3515
    %v3533 = vadd.f32 %v3527, %v3517
    %s3534 = scalar_lea.vmem [#allocation9], 256
    %v3535 = vld [vmem:[%s3534] sm:$0xff]
    %v3536 = vld [vmem:[%s3534 + $0x8] sm:$0xff]
    %v3537 = vld [vmem:[%s3534 + $0x10] sm:$0xff]
    %v3538 = vld [vmem:[%s3534 + $0x18] sm:$0xff]
    %v3539 = vld [vmem:[%s3534 + $0x20] sm:$0xff]
    %v3540 = vld [vmem:[%s3534 + $0x28] sm:$0xff]
    %v3541 = vld [vmem:[%s3534 + $0x30] sm:$0xff]
    %v3542 = vld [vmem:[%s3534 + $0x38] sm:$0xff]
    %v3543 = vld [vmem:[%s3534 + $0x40] sm:$0xff]
    %v3544 = vld [vmem:[%s3534 + $0x48] sm:$0xff]
    %v3545 = vld [vmem:[%s3534 + $0x50] sm:$0xff]
    %v3546 = vld [vmem:[%s3534 + $0x58] sm:$0xff]
    %v3547 = vld [vmem:[%s3534 + $0x60] sm:$0xff]
    %v3548 = vld [vmem:[%s3534 + $0x68] sm:$0xff]
    %v3549 = vld [vmem:[%s3534 + $0x70] sm:$0xff]
    %v3550 = vld [vmem:[%s3534 + $0x78] sm:$0xff]
    %v3551 = vld [vmem:[%s3534 + $0x80] sm:$0xff]
    %v3552 = vld [vmem:[%s3534 + $0x88] sm:$0xff]
    %v3553 = vld [vmem:[%s3534 + $0x90] sm:$0xff]
    %v3554 = vld [vmem:[%s3534 + $0x98] sm:$0xff]
    %v3555 = vld [vmem:[%s3534 + $0xa0] sm:$0xff]
    %v3556 = vld [vmem:[%s3534 + $0xa8] sm:$0xff]
    %v3557 = vld [vmem:[%s3534 + $0xb0] sm:$0xff]
    %v3558 = vld [vmem:[%s3534 + $0xb8] sm:$0xff]
    %v3559 = vld [vmem:[%s3534 + $0xc0] sm:$0xff]
    %v3560 = vld [vmem:[%s3534 + $0xc8] sm:$0xff]
    %v3561 = vld [vmem:[%s3534 + $0xd0] sm:$0xff]
    %v3562 = vld [vmem:[%s3534 + $0xd8] sm:$0xff]
    %v3563 = vld [vmem:[%s3534 + $0xe0] sm:$0xff]
    %v3564 = vld [vmem:[%s3534 + $0xe8] sm:$0xff]
    %v3565 = vld [vmem:[%s3534 + $0xf0] sm:$0xff]
    %v3566 = vld [vmem:[%s3534 + $0xf8] sm:$0xff]
    %3567 = vmatprep.subr.bf16.mxu0 %v3536
    %3568 = vmatpush1.bf16.msra.mxu0 %v3535
    %3569 = vmatprep.subr.bf16.mxu0 %v3538
    %3570 = vmatpush1.bf16.msra.mxu0 %v3537
    %3571 = vmatprep.subr.bf16.mxu0 %v3540
    %3572 = vmatpush1.bf16.msra.mxu0 %v3539
    %3573 = vmatprep.subr.bf16.mxu0 %v3542
    %3574 = vmatpush1.bf16.msra.mxu0 %v3541
    %3575 = vmatprep.subr.bf16.mxu0 %v3544
    %3576 = vmatpush1.bf16.msra.mxu0 %v3543
    %3577 = vmatprep.subr.bf16.mxu0 %v3546
    %3578 = vmatpush1.bf16.msra.mxu0 %v3545
    %3579 = vmatprep.subr.bf16.mxu0 %v3548
    %3580 = vmatpush1.bf16.msra.mxu0 %v3547
    %3581 = vmatprep.subr.bf16.mxu0 %v3550
    %3582 = vmatpush1.bf16.msra.mxu0 %v3549
    %3583 = vmatprep.subr.bf16.mxu0 %v3552
    %3584 = vmatpush1.bf16.msra.mxu0 %v3551
    %3585 = vmatprep.subr.bf16.mxu0 %v3554
    %3586 = vmatpush1.bf16.msra.mxu0 %v3553
    %3587 = vmatprep.subr.bf16.mxu0 %v3556
    %3588 = vmatpush1.bf16.msra.mxu0 %v3555
    %3589 = vmatprep.subr.bf16.mxu0 %v3558
    %3590 = vmatpush1.bf16.msra.mxu0 %v3557
    %3591 = vmatprep.subr.bf16.mxu0 %v3560
    %3592 = vmatpush1.bf16.msra.mxu0 %v3559
    %3593 = vmatprep.subr.bf16.mxu0 %v3562
    %3594 = vmatpush1.bf16.msra.mxu0 %v3561
    %3595 = vmatprep.subr.bf16.mxu0 %v3564
    %3596 = vmatpush1.bf16.msra.mxu0 %v3563
    %3597 = vmatprep.subr.bf16.mxu0 %v3566
    %3598 = vmatpush1.bf16.msra.mxu0 %v3565
    %3599 = vmatprep.mubr.bf16.mxu0 %v3441
    %3600 = vmatmul.mubr.bf16.gmra.mrb[0].mxu0 %v3440
    %v3601 = vpop.f32.mrb[0].mxu0
    %v3602 = vadd.f32 0.0, %v3601
    %v3603 = vpop.f32.mrb[0].mxu0
    %v3604 = vadd.f32 0.0, %v3603
    %v3605 = vpop.f32.mrb[0].mxu0
    %v3606 = vadd.f32 0.0, %v3605
    %v3607 = vpop.f32.mrb[0].mxu0
    %v3608 = vadd.f32 0.0, %v3607
    %3609 = vdwg.mxu0
    %v3610 = vadd.f32 %v3530, %v3602
    %v3611 = vadd.f32 %v3531, %v3604
    %v3612 = vadd.f32 %v3532, %v3606
    %v3613 = vadd.f32 %v3533, %v3608
    %s3614 = scalar_lea.vmem [#allocation9], 512
    %v3615 = vld [vmem:[%s3614] sm:$0xff]
    %v3616 = vld [vmem:[%s3614 + $0x8] sm:$0xff]
    %v3617 = vld [vmem:[%s3614 + $0x10] sm:$0xff]
    %v3618 = vld [vmem:[%s3614 + $0x18] sm:$0xff]
    %v3619 = vld [vmem:[%s3614 + $0x20] sm:$0xff]
    %v3620 = vld [vmem:[%s3614 + $0x28] sm:$0xff]
    %v3621 = vld [vmem:[%s3614 + $0x30] sm:$0xff]
    %v3622 = vld [vmem:[%s3614 + $0x38] sm:$0xff]
    %v3623 = vld [vmem:[%s3614 + $0x40] sm:$0xff]
    %v3624 = vld [vmem:[%s3614 + $0x48] sm:$0xff]
    %v3625 = vld [vmem:[%s3614 + $0x50] sm:$0xff]
    %v3626 = vld [vmem:[%s3614 + $0x58] sm:$0xff]
    %v3627 = vld [vmem:[%s3614 + $0x60] sm:$0xff]
    %v3628 = vld [vmem:[%s3614 + $0x68] sm:$0xff]
    %v3629 = vld [vmem:[%s3614 + $0x70] sm:$0xff]
    %v3630 = vld [vmem:[%s3614 + $0x78] sm:$0xff]
    %v3631 = vld [vmem:[%s3614 + $0x80] sm:$0xff]
    %v3632 = vld [vmem:[%s3614 + $0x88] sm:$0xff]
    %v3633 = vld [vmem:[%s3614 + $0x90] sm:$0xff]
    %v3634 = vld [vmem:[%s3614 + $0x98] sm:$0xff]
    %v3635 = vld [vmem:[%s3614 + $0xa0] sm:$0xff]
    %v3636 = vld [vmem:[%s3614 + $0xa8] sm:$0xff]
    %v3637 = vld [vmem:[%s3614 + $0xb0] sm:$0xff]
    %v3638 = vld [vmem:[%s3614 + $0xb8] sm:$0xff]
    %v3639 = vld [vmem:[%s3614 + $0xc0] sm:$0xff]
    %v3640 = vld [vmem:[%s3614 + $0xc8] sm:$0xff]
    %v3641 = vld [vmem:[%s3614 + $0xd0] sm:$0xff]
    %v3642 = vld [vmem:[%s3614 + $0xd8] sm:$0xff]
    %v3643 = vld [vmem:[%s3614 + $0xe0] sm:$0xff]
    %v3644 = vld [vmem:[%s3614 + $0xe8] sm:$0xff]
    %v3645 = vld [vmem:[%s3614 + $0xf0] sm:$0xff]
    %v3646 = vld [vmem:[%s3614 + $0xf8] sm:$0xff]
    %3647 = vmatprep.subr.bf16.mxu0 %v3616
    %3648 = vmatpush1.bf16.msra.mxu0 %v3615
    %3649 = vmatprep.subr.bf16.mxu0 %v3618
    %3650 = vmatpush1.bf16.msra.mxu0 %v3617
    %3651 = vmatprep.subr.bf16.mxu0 %v3620
    %3652 = vmatpush1.bf16.msra.mxu0 %v3619
    %3653 = vmatprep.subr.bf16.mxu0 %v3622
    %3654 = vmatpush1.bf16.msra.mxu0 %v3621
    %3655 = vmatprep.subr.bf16.mxu0 %v3624
    %3656 = vmatpush1.bf16.msra.mxu0 %v3623
    %3657 = vmatprep.subr.bf16.mxu0 %v3626
    %3658 = vmatpush1.bf16.msra.mxu0 %v3625
    %3659 = vmatprep.subr.bf16.mxu0 %v3628
    %3660 = vmatpush1.bf16.msra.mxu0 %v3627
    %3661 = vmatprep.subr.bf16.mxu0 %v3630
    %3662 = vmatpush1.bf16.msra.mxu0 %v3629
    %3663 = vmatprep.subr.bf16.mxu0 %v3632
    %3664 = vmatpush1.bf16.msra.mxu0 %v3631
    %3665 = vmatprep.subr.bf16.mxu0 %v3634
    %3666 = vmatpush1.bf16.msra.mxu0 %v3633
    %3667 = vmatprep.subr.bf16.mxu0 %v3636
    %3668 = vmatpush1.bf16.msra.mxu0 %v3635
    %3669 = vmatprep.subr.bf16.mxu0 %v3638
    %3670 = vmatpush1.bf16.msra.mxu0 %v3637
    %3671 = vmatprep.subr.bf16.mxu0 %v3640
    %3672 = vmatpush1.bf16.msra.mxu0 %v3639
    %3673 = vmatprep.subr.bf16.mxu0 %v3642
    %3674 = vmatpush1.bf16.msra.mxu0 %v3641
    %3675 = vmatprep.subr.bf16.mxu0 %v3644
    %3676 = vmatpush1.bf16.msra.mxu0 %v3643
    %3677 = vmatprep.subr.bf16.mxu0 %v3646
    %3678 = vmatpush1.bf16.msra.mxu0 %v3645
    %3679 = vmatprep.mubr.bf16.mxu0 %v3443
    %3680 = vmatmul.mubr.bf16.gmra.mrb[0].mxu0 %v3442
    %v3681 = vpop.f32.mrb[0].mxu0
    %v3682 = vadd.f32 0.0, %v3681
    %v3683 = vpop.f32.mrb[0].mxu0
    %v3684 = vadd.f32 0.0, %v3683
    %v3685 = vpop.f32.mrb[0].mxu0
    %v3686 = vadd.f32 0.0, %v3685
    %v3687 = vpop.f32.mrb[0].mxu0
    %v3688 = vadd.f32 0.0, %v3687
    %3689 = vdwg.mxu0
    %v3690 = vadd.f32 %v3610, %v3682
    %v3691 = vadd.f32 %v3611, %v3684
    %v3692 = vadd.f32 %v3612, %v3686
    %v3693 = vadd.f32 %v3613, %v3688
    %v3694 = vmax.f32 %v3690, 0.0
    %v3695 = vmax.f32 %v3691, 0.0
    %v3696 = vmax.f32 %v3692, 0.0
    %v3697 = vmax.f32 %v3693, 0.0
    %s3698 = smul.u32 24, 1
    %s3699 = sshll.u32 %s3698, 4
    %3700 = dma.done %s322, %s3699
    %s3701 = sshll.u32 %s3307, 4
    %3702 = dma.done %s369, %s3701
    %s3703 = scalar_lea.vmem [#allocation2], 4
    %v3704 = vld [vmem:[%s3703] ss:$8 sm:$0x3]
    %v3705 = vld [vmem:[#allocation10] sm:$0xff]
    %v3706 = vld [vmem:[#allocation10 + $0x8] sm:$0xff]
    %v3707 = vld [vmem:[#allocation10 + $0x10] sm:$0xff]
    %v3709 = vsel %vm3318, %v3705, 0
    %v3712 = vsel %vm3318, %v3706, 0
    %v3715 = vsel %vm3318, %v3707, 0
    %3717 = vmatprep.subr.mxu0 %v3695
    %3718 = vmatpush1.msra.mxu0 %v3694
    %3719 = vmatprep.subr.mxu0 %v3697
    %3720 = vmatpush1.msra.mxu0 %v3696
    %3721 = vmatprep.subr.mxu0 0.0
    %3722 = vmatpush1.msra.mxu0 0.0
    %3723 = vmatprep.subr.mxu0 0.0
    %3724 = vmatpush1.msra.mxu0 0.0
    %3725 = vmatprep.subr.mxu0 0.0
    %3726 = vmatpush1.msra.mxu0 0.0
    %3727 = vmatprep.subr.mxu0 0.0
    %3728 = vmatpush1.msra.mxu0 0.0
    %3729 = vmatprep.subr.mxu0 0.0
    %3730 = vmatpush1.msra.mxu0 0.0
    %3731 = vmatprep.subr.mxu0 0.0
    %3732 = vmatpush1.msra.mxu0 0.0
    %3733 = vmatprep.subr.mxu0 0.0
    %3734 = vmatpush1.msra.mxu0 0.0
    %3735 = vmatprep.subr.mxu0 0.0
    %3736 = vmatpush1.msra.mxu0 0.0
    %3737 = vmatprep.subr.mxu0 0.0
    %3738 = vmatpush1.msra.mxu0 0.0
    %3739 = vmatprep.subr.mxu0 0.0
    %3740 = vmatpush1.msra.mxu0 0.0
    %3741 = vmatprep.subr.mxu0 0.0
    %3742 = vmatpush1.msra.mxu0 0.0
    %3743 = vmatprep.subr.mxu0 0.0
    %3744 = vmatpush1.msra.mxu0 0.0
    %3745 = vmatprep.subr.mxu0 0.0
    %3746 = vmatpush1.msra.mxu0 0.0
    %3747 = vmatprep.subr.mxu0 0.0
    %3748 = vmatpush1.msra.mxu0 0.0
    %3749 = vmatprep.subr.mxu0 0.0
    %3750 = vmatpush1.msra.mxu0 0.0
    %3751 = vmatprep.subr.mxu0 0.0
    %3752 = vmatpush1.msra.mxu0 0.0
    %3753 = vmatprep.subr.mxu0 0.0
    %3754 = vmatpush1.msra.mxu0 0.0
    %3755 = vmatprep.subr.mxu0 0.0
    %3756 = vmatpush1.msra.mxu0 0.0
    %3757 = vmatprep.subr.mxu0 0.0
    %3758 = vmatpush1.msra.mxu0 0.0
    %3759 = vmatprep.subr.mxu0 0.0
    %3760 = vmatpush1.msra.mxu0 0.0
    %3761 = vmatprep.subr.mxu0 0.0
    %3762 = vmatpush1.msra.mxu0 0.0
    %3763 = vmatprep.subr.mxu0 0.0
    %3764 = vmatpush1.msra.mxu0 0.0
    %3765 = vmatprep.subr.mxu0 0.0
    %3766 = vmatpush1.msra.mxu0 0.0
    %3767 = vmatprep.subr.mxu0 0.0
    %3768 = vmatpush1.msra.mxu0 0.0
    %3769 = vmatprep.subr.mxu0 0.0
    %3770 = vmatpush1.msra.mxu0 0.0
    %3771 = vmatprep.subr.mxu0 0.0
    %3772 = vmatpush1.msra.mxu0 0.0
    %3773 = vmatprep.subr.mxu0 0.0
    %3774 = vmatpush1.msra.mxu0 0.0
    %3775 = vmatprep.subr.mxu0 0.0
    %3776 = vmatpush1.msra.mxu0 0.0
    %3777 = vmatprep.subr.mxu0 0.0
    %3778 = vmatpush1.msra.mxu0 0.0
    %3779 = vmatprep.subr.mxu0 0.0
    %3780 = vmatpush1.msra.mxu0 0.0
    %3781 = vmatprep.mubr.f32.mxu0 0.0
    %3782 = vmatmul.mubr.f32.gmra.mrb[0].mxu0 %v3709
    %v3783 = vpop.f32.mrb[0].mxu0
    %v3784 = vadd.f32 0.0, %v3783
    %v3785 = vpop.f32.mrb[0].mxu0
    %v3786 = vadd.f32 0.0, %v3785
    %3787 = vmatprep.mubr.f32.mxu0 0.0
    %3788 = vmatmul.mubr.f32.gmra.mrb[0].mxu0 %v3712
    %v3789 = vpop.f32.mrb[0].mxu0
    %v3790 = vadd.f32 0.0, %v3789
    %v3791 = vpop.f32.mrb[0].mxu0
    %v3792 = vadd.f32 0.0, %v3791
    %3793 = vmatprep.mubr.f32.mxu0 0.0
    %3794 = vmatmul.mubr.f32.gmra.mrb[0].mxu0 %v3715
    %v3795 = vpop.f32.mrb[0].mxu0
    %v3796 = vadd.f32 0.0, %v3795
    %v3797 = vpop.f32.mrb[0].mxu0
    %v3798 = vadd.f32 0.0, %v3797
    %3799 = vdwg.mxu0
    %v3800 = vpack.c.bf16 %v3790, %v3784
    %v3801 = vpack.c.bf16 %v3792, %v3786
    %v3802 = vpack.c.bf16 %v3796, %v3796
    %v3803 = vpack.c.bf16 %v3798, %v3798
    %v3804 = vld [vmem:[#allocation11] sm:$0xff]
    %v3805 = vld [vmem:[#allocation11 + $0x8] sm:$0xff]
    %v3806 = vld [vmem:[#allocation11 + $0x10] sm:$0xff]
    %v3807 = vld [vmem:[#allocation11 + $0x18] sm:$0xff]
    %v3808 = vld [vmem:[#allocation11 + $0x20] sm:$0xff]
    %v3809 = vld [vmem:[#allocation11 + $0x28] sm:$0xff]
    %v3810 = vld [vmem:[#allocation11 + $0x30] sm:$0xff]
    %v3811 = vld [vmem:[#allocation11 + $0x38] sm:$0xff]
    %v3812 = vld [vmem:[#allocation11 + $0x40] sm:$0xff]
    %v3813 = vld [vmem:[#allocation11 + $0x48] sm:$0xff]
    %v3814 = vld [vmem:[#allocation11 + $0x50] sm:$0xff]
    %v3815 = vld [vmem:[#allocation11 + $0x58] sm:$0xff]
    %v3816 = vld [vmem:[#allocation11 + $0x60] sm:$0xff]
    %v3817 = vld [vmem:[#allocation11 + $0x68] sm:$0xff]
    %v3818 = vld [vmem:[#allocation11 + $0x70] sm:$0xff]
    %v3819 = vld [vmem:[#allocation11 + $0x78] sm:$0xff]
    %v3820 = vld [vmem:[#allocation11 + $0x80] sm:$0xff]
    %v3821 = vld [vmem:[#allocation11 + $0x88] sm:$0xff]
    %v3822 = vld [vmem:[#allocation11 + $0x90] sm:$0xff]
    %v3823 = vld [vmem:[#allocation11 + $0x98] sm:$0xff]
    %v3824 = vld [vmem:[#allocation11 + $0xa0] sm:$0xff]
    %v3825 = vld [vmem:[#allocation11 + $0xa8] sm:$0xff]
    %v3826 = vld [vmem:[#allocation11 + $0xb0] sm:$0xff]
    %v3827 = vld [vmem:[#allocation11 + $0xb8] sm:$0xff]
    %v3828 = vld [vmem:[#allocation11 + $0xc0] sm:$0xff]
    %v3829 = vld [vmem:[#allocation11 + $0xc8] sm:$0xff]
    %v3830 = vld [vmem:[#allocation11 + $0xd0] sm:$0xff]
    %v3831 = vld [vmem:[#allocation11 + $0xd8] sm:$0xff]
    %v3832 = vld [vmem:[#allocation11 + $0xe0] sm:$0xff]
    %v3833 = vld [vmem:[#allocation11 + $0xe8] sm:$0xff]
    %v3834 = vld [vmem:[#allocation11 + $0xf0] sm:$0xff]
    %v3835 = vld [vmem:[#allocation11 + $0xf8] sm:$0xff]
    %3836 = vmatprep.subr.bf16.mxu0 %v3805
    %3837 = vmatpush1.bf16.msra.mxu0 %v3804
    %3838 = vmatprep.subr.bf16.mxu0 %v3807
    %3839 = vmatpush1.bf16.msra.mxu0 %v3806
    %3840 = vmatprep.subr.bf16.mxu0 %v3809
    %3841 = vmatpush1.bf16.msra.mxu0 %v3808
    %3842 = vmatprep.subr.bf16.mxu0 %v3811
    %3843 = vmatpush1.bf16.msra.mxu0 %v3810
    %3844 = vmatprep.subr.bf16.mxu0 %v3813
    %3845 = vmatpush1.bf16.msra.mxu0 %v3812
    %3846 = vmatprep.subr.bf16.mxu0 %v3815
    %3847 = vmatpush1.bf16.msra.mxu0 %v3814
    %3848 = vmatprep.subr.bf16.mxu0 %v3817
    %3849 = vmatpush1.bf16.msra.mxu0 %v3816
    %3850 = vmatprep.subr.bf16.mxu0 %v3819
    %3851 = vmatpush1.bf16.msra.mxu0 %v3818
    %3852 = vmatprep.subr.bf16.mxu0 %v3821
    %3853 = vmatpush1.bf16.msra.mxu0 %v3820
    %3854 = vmatprep.subr.bf16.mxu0 %v3823
    %3855 = vmatpush1.bf16.msra.mxu0 %v3822
    %3856 = vmatprep.subr.bf16.mxu0 %v3825
    %3857 = vmatpush1.bf16.msra.mxu0 %v3824
    %3858 = vmatprep.subr.bf16.mxu0 %v3827
    %3859 = vmatpush1.bf16.msra.mxu0 %v3826
    %3860 = vmatprep.subr.bf16.mxu0 %v3829
    %3861 = vmatpush1.bf16.msra.mxu0 %v3828
    %3862 = vmatprep.subr.bf16.mxu0 %v3831
    %3863 = vmatpush1.bf16.msra.mxu0 %v3830
    %3864 = vmatprep.subr.bf16.mxu0 %v3833
    %3865 = vmatpush1.bf16.msra.mxu0 %v3832
    %3866 = vmatprep.subr.bf16.mxu0 %v3835
    %3867 = vmatpush1.bf16.msra.mxu0 %v3834
    %3868 = vmatprep.mubr.bf16.mxu0 %v3801
    %3869 = vmatmul.mubr.bf16.gmra.mrb[0].mxu0 %v3800
    %v3870 = vpop.f32.mrb[0].mxu0
    %v3871 = vadd.f32 0.0, %v3870
    %v3872 = vpop.f32.mrb[0].mxu0
    %v3873 = vadd.f32 0.0, %v3872
    %v3874 = vpop.f32.mrb[0].mxu0
    %v3875 = vpop.f32.mrb[0].mxu0
    %3876 = vdwg.mxu0
    %v3878 = vlaneseq
    %v3879 = vshrl.u32 %v3878, 7
    %v3880 = vsub.s32 0, %v3879
    %v3881 = vrot.slane %v3704, %v3880
    %v3882 = vlaneseq
    %v3883 = vshrl.u32 %v3882, 7
    %v3884 = vsub.s32 1, %v3883
    %v3885 = vrot.slane %v3704, %v3884
    %v3888 = vadd.f32 %v3881, %v3871
    %v3889 = vadd.f32 %v3885, %v3873
    %s3890 = scalar_lea.vmem [#allocation11], 256
    %v3891 = vld [vmem:[%s3890] sm:$0xff]
    %v3892 = vld [vmem:[%s3890 + $0x8] sm:$0xff]
    %v3893 = vld [vmem:[%s3890 + $0x10] sm:$0xff]
    %v3894 = vld [vmem:[%s3890 + $0x18] sm:$0xff]
    %v3895 = vld [vmem:[%s3890 + $0x20] sm:$0xff]
    %v3896 = vld [vmem:[%s3890 + $0x28] sm:$0xff]
    %v3897 = vld [vmem:[%s3890 + $0x30] sm:$0xff]
    %v3898 = vld [vmem:[%s3890 + $0x38] sm:$0xff]
    %v3899 = vld [vmem:[%s3890 + $0x40] sm:$0xff]
    %v3900 = vld [vmem:[%s3890 + $0x48] sm:$0xff]
    %v3901 = vld [vmem:[%s3890 + $0x50] sm:$0xff]
    %v3902 = vld [vmem:[%s3890 + $0x58] sm:$0xff]
    %v3903 = vld [vmem:[%s3890 + $0x60] sm:$0xff]
    %v3904 = vld [vmem:[%s3890 + $0x68] sm:$0xff]
    %v3905 = vld [vmem:[%s3890 + $0x70] sm:$0xff]
    %v3906 = vld [vmem:[%s3890 + $0x78] sm:$0xff]
    %v3907 = vld [vmem:[%s3890 + $0x80] sm:$0xff]
    %v3908 = vld [vmem:[%s3890 + $0x88] sm:$0xff]
    %v3909 = vld [vmem:[%s3890 + $0x90] sm:$0xff]
    %v3910 = vld [vmem:[%s3890 + $0x98] sm:$0xff]
    %v3911 = vld [vmem:[%s3890 + $0xa0] sm:$0xff]
    %v3912 = vld [vmem:[%s3890 + $0xa8] sm:$0xff]
    %v3913 = vld [vmem:[%s3890 + $0xb0] sm:$0xff]
    %v3914 = vld [vmem:[%s3890 + $0xb8] sm:$0xff]
    %v3915 = vld [vmem:[%s3890 + $0xc0] sm:$0xff]
    %v3916 = vld [vmem:[%s3890 + $0xc8] sm:$0xff]
    %v3917 = vld [vmem:[%s3890 + $0xd0] sm:$0xff]
    %v3918 = vld [vmem:[%s3890 + $0xd8] sm:$0xff]
    %v3919 = vld [vmem:[%s3890 + $0xe0] sm:$0xff]
    %v3920 = vld [vmem:[%s3890 + $0xe8] sm:$0xff]
    %v3921 = vld [vmem:[%s3890 + $0xf0] sm:$0xff]
    %v3922 = vld [vmem:[%s3890 + $0xf8] sm:$0xff]
    %v3925 = vrot.slane %v3800, 4
    %v3926 = vrot.slane %v3801, 4
    %3929 = vmatprep.subr.bf16.mxu0 %v3892
    %3930 = vmatpush1.bf16.msra.mxu0 %v3891
    %3931 = vmatprep.subr.bf16.mxu0 %v3894
    %3932 = vmatpush1.bf16.msra.mxu0 %v3893
    %3933 = vmatprep.subr.bf16.mxu0 %v3896
    %3934 = vmatpush1.bf16.msra.mxu0 %v3895
    %3935 = vmatprep.subr.bf16.mxu0 %v3898
    %3936 = vmatpush1.bf16.msra.mxu0 %v3897
    %3937 = vmatprep.subr.bf16.mxu0 %v3900
    %3938 = vmatpush1.bf16.msra.mxu0 %v3899
    %3939 = vmatprep.subr.bf16.mxu0 %v3902
    %3940 = vmatpush1.bf16.msra.mxu0 %v3901
    %3941 = vmatprep.subr.bf16.mxu0 %v3904
    %3942 = vmatpush1.bf16.msra.mxu0 %v3903
    %3943 = vmatprep.subr.bf16.mxu0 %v3906
    %3944 = vmatpush1.bf16.msra.mxu0 %v3905
    %3945 = vmatprep.subr.bf16.mxu0 %v3908
    %3946 = vmatpush1.bf16.msra.mxu0 %v3907
    %3947 = vmatprep.subr.bf16.mxu0 %v3910
    %3948 = vmatpush1.bf16.msra.mxu0 %v3909
    %3949 = vmatprep.subr.bf16.mxu0 %v3912
    %3950 = vmatpush1.bf16.msra.mxu0 %v3911
    %3951 = vmatprep.subr.bf16.mxu0 %v3914
    %3952 = vmatpush1.bf16.msra.mxu0 %v3913
    %3953 = vmatprep.subr.bf16.mxu0 %v3916
    %3954 = vmatpush1.bf16.msra.mxu0 %v3915
    %3955 = vmatprep.subr.bf16.mxu0 %v3918
    %3956 = vmatpush1.bf16.msra.mxu0 %v3917
    %3957 = vmatprep.subr.bf16.mxu0 %v3920
    %3958 = vmatpush1.bf16.msra.mxu0 %v3919
    %3959 = vmatprep.subr.bf16.mxu0 %v3922
    %3960 = vmatpush1.bf16.msra.mxu0 %v3921
    %3961 = vmatprep.mubr.bf16.mxu0 %v3926
    %3962 = vmatmul.mubr.bf16.gmra.mrb[0].mxu0 %v3925
    %v3963 = vpop.f32.mrb[0].mxu0
    %v3964 = vadd.f32 0.0, %v3963
    %v3965 = vpop.f32.mrb[0].mxu0
    %v3966 = vadd.f32 0.0, %v3965
    %v3967 = vpop.f32.mrb[0].mxu0
    %v3968 = vpop.f32.mrb[0].mxu0
    %3969 = vdwg.mxu0
    %v3970 = vadd.f32 %v3888, %v3964
    %v3971 = vadd.f32 %v3889, %v3966
    %s3972 = scalar_lea.vmem [#allocation11], 512
    %v3973 = vld [vmem:[%s3972] sm:$0xff]
    %v3974 = vld [vmem:[%s3972 + $0x8] sm:$0xff]
    %v3975 = vld [vmem:[%s3972 + $0x10] sm:$0xff]
    %v3976 = vld [vmem:[%s3972 + $0x18] sm:$0xff]
    %v3977 = vld [vmem:[%s3972 + $0x20] sm:$0xff]
    %v3978 = vld [vmem:[%s3972 + $0x28] sm:$0xff]
    %v3979 = vld [vmem:[%s3972 + $0x30] sm:$0xff]
    %v3980 = vld [vmem:[%s3972 + $0x38] sm:$0xff]
    %v3981 = vld [vmem:[%s3972 + $0x40] sm:$0xff]
    %v3982 = vld [vmem:[%s3972 + $0x48] sm:$0xff]
    %v3983 = vld [vmem:[%s3972 + $0x50] sm:$0xff]
    %v3984 = vld [vmem:[%s3972 + $0x58] sm:$0xff]
    %v3985 = vld [vmem:[%s3972 + $0x60] sm:$0xff]
    %v3986 = vld [vmem:[%s3972 + $0x68] sm:$0xff]
    %v3987 = vld [vmem:[%s3972 + $0x70] sm:$0xff]
    %v3988 = vld [vmem:[%s3972 + $0x78] sm:$0xff]
    %v3989 = vld [vmem:[%s3972 + $0x80] sm:$0xff]
    %v3990 = vld [vmem:[%s3972 + $0x88] sm:$0xff]
    %v3991 = vld [vmem:[%s3972 + $0x90] sm:$0xff]
    %v3992 = vld [vmem:[%s3972 + $0x98] sm:$0xff]
    %v3993 = vld [vmem:[%s3972 + $0xa0] sm:$0xff]
    %v3994 = vld [vmem:[%s3972 + $0xa8] sm:$0xff]
    %v3995 = vld [vmem:[%s3972 + $0xb0] sm:$0xff]
    %v3996 = vld [vmem:[%s3972 + $0xb8] sm:$0xff]
    %v3997 = vld [vmem:[%s3972 + $0xc0] sm:$0xff]
    %v3998 = vld [vmem:[%s3972 + $0xc8] sm:$0xff]
    %v3999 = vld [vmem:[%s3972 + $0xd0] sm:$0xff]
    %v4000 = vld [vmem:[%s3972 + $0xd8] sm:$0xff]
    %v4001 = vld [vmem:[%s3972 + $0xe0] sm:$0xff]
    %v4002 = vld [vmem:[%s3972 + $0xe8] sm:$0xff]
    %v4003 = vld [vmem:[%s3972 + $0xf0] sm:$0xff]
    %v4004 = vld [vmem:[%s3972 + $0xf8] sm:$0xff]
    %4005 = vmatprep.subr.bf16.mxu0 %v3974
    %4006 = vmatpush1.bf16.msra.mxu0 %v3973
    %4007 = vmatprep.subr.bf16.mxu0 %v3976
    %4008 = vmatpush1.bf16.msra.mxu0 %v3975
    %4009 = vmatprep.subr.bf16.mxu0 %v3978
    %4010 = vmatpush1.bf16.msra.mxu0 %v3977
    %4011 = vmatprep.subr.bf16.mxu0 %v3980
    %4012 = vmatpush1.bf16.msra.mxu0 %v3979
    %4013 = vmatprep.subr.bf16.mxu0 %v3982
    %4014 = vmatpush1.bf16.msra.mxu0 %v3981
    %4015 = vmatprep.subr.bf16.mxu0 %v3984
    %4016 = vmatpush1.bf16.msra.mxu0 %v3983
    %4017 = vmatprep.subr.bf16.mxu0 %v3986
    %4018 = vmatpush1.bf16.msra.mxu0 %v3985
    %4019 = vmatprep.subr.bf16.mxu0 %v3988
    %4020 = vmatpush1.bf16.msra.mxu0 %v3987
    %4021 = vmatprep.subr.bf16.mxu0 %v3990
    %4022 = vmatpush1.bf16.msra.mxu0 %v3989
    %4023 = vmatprep.subr.bf16.mxu0 %v3992
    %4024 = vmatpush1.bf16.msra.mxu0 %v3991
    %4025 = vmatprep.subr.bf16.mxu0 %v3994
    %4026 = vmatpush1.bf16.msra.mxu0 %v3993
    %4027 = vmatprep.subr.bf16.mxu0 %v3996
    %4028 = vmatpush1.bf16.msra.mxu0 %v3995
    %4029 = vmatprep.subr.bf16.mxu0 %v3998
    %4030 = vmatpush1.bf16.msra.mxu0 %v3997
    %4031 = vmatprep.subr.bf16.mxu0 %v4000
    %4032 = vmatpush1.bf16.msra.mxu0 %v3999
    %4033 = vmatprep.subr.bf16.mxu0 %v4002
    %4034 = vmatpush1.bf16.msra.mxu0 %v4001
    %4035 = vmatprep.subr.bf16.mxu0 %v4004
    %4036 = vmatpush1.bf16.msra.mxu0 %v4003
    %4037 = vmatprep.mubr.bf16.mxu0 %v3803
    %4038 = vmatmul.mubr.bf16.gmra.mrb[0].mxu0 %v3802
    %v4039 = vpop.f32.mrb[0].mxu0
    %v4040 = vadd.f32 0.0, %v4039
    %v4041 = vpop.f32.mrb[0].mxu0
    %v4042 = vadd.f32 0.0, %v4041
    %v4043 = vpop.f32.mrb[0].mxu0
    %v4044 = vpop.f32.mrb[0].mxu0
    %4045 = vdwg.mxu0
    %v4046 = vadd.f32 %v3970, %v4040
    %v4047 = vadd.f32 %v3971, %v4042
    %v4048 = vmax.f32 %v4046, 0.0
    %v4049 = vmax.f32 %v4047, 0.0
    %s4050 = sshll.u32 %s3698, 4
    %4051 = dma.done %s404, %s4050
    %s4052 = sshll.u32 %s3307, 4
    %4053 = dma.done %s451, %s4052
    %s4054 = scalar_lea.vmem [#allocation2], 5
    %v4055 = vld [vmem:[%s4054] ss:$8 sm:$0x3]
    %v4056 = vld [vmem:[#allocation12] sm:$0xff]
    %v4057 = vld [vmem:[#allocation12 + $0x8] sm:$0xff]
    %v4058 = vld [vmem:[#allocation12 + $0x10] sm:$0xff]
    %vm4059 = vcmask 64512
    %v4061 = vsel %vm4059, %v4056, 0
    %v4064 = vsel %vm4059, %v4057, 0
    %v4067 = vsel %vm4059, %v4058, 0
    %4069 = vmatprep.subr.mxu0 %v4049
    %4070 = vmatpush1.msra.mxu0 %v4048
    %4071 = vmatprep.subr.mxu0 0.0
    %4072 = vmatpush1.msra.mxu0 0.0
    %4073 = vmatprep.subr.mxu0 0.0
    %4074 = vmatpush1.msra.mxu0 0.0
    %4075 = vmatprep.subr.mxu0 0.0
    %4076 = vmatpush1.msra.mxu0 0.0
    %4077 = vmatprep.subr.mxu0 0.0
    %4078 = vmatpush1.msra.mxu0 0.0
    %4079 = vmatprep.subr.mxu0 0.0
    %4080 = vmatpush1.msra.mxu0 0.0
    %4081 = vmatprep.subr.mxu0 0.0
    %4082 = vmatpush1.msra.mxu0 0.0
    %4083 = vmatprep.subr.mxu0 0.0
    %4084 = vmatpush1.msra.mxu0 0.0
    %4085 = vmatprep.subr.mxu0 0.0
    %4086 = vmatpush1.msra.mxu0 0.0
    %4087 = vmatprep.subr.mxu0 0.0
    %4088 = vmatpush1.msra.mxu0 0.0
    %4089 = vmatprep.subr.mxu0 0.0
    %4090 = vmatpush1.msra.mxu0 0.0
    %4091 = vmatprep.subr.mxu0 0.0
    %4092 = vmatpush1.msra.mxu0 0.0
    %4093 = vmatprep.subr.mxu0 0.0
    %4094 = vmatpush1.msra.mxu0 0.0
    %4095 = vmatprep.subr.mxu0 0.0
    %4096 = vmatpush1.msra.mxu0 0.0
    %4097 = vmatprep.subr.mxu0 0.0
    %4098 = vmatpush1.msra.mxu0 0.0
    %4099 = vmatprep.subr.mxu0 0.0
    %4100 = vmatpush1.msra.mxu0 0.0
    %4101 = vmatprep.subr.mxu0 0.0
    %4102 = vmatpush1.msra.mxu0 0.0
    %4103 = vmatprep.subr.mxu0 0.0
    %4104 = vmatpush1.msra.mxu0 0.0
    %4105 = vmatprep.subr.mxu0 0.0
    %4106 = vmatpush1.msra.mxu0 0.0
    %4107 = vmatprep.subr.mxu0 0.0
    %4108 = vmatpush1.msra.mxu0 0.0
    %4109 = vmatprep.subr.mxu0 0.0
    %4110 = vmatpush1.msra.mxu0 0.0
    %4111 = vmatprep.subr.mxu0 0.0
    %4112 = vmatpush1.msra.mxu0 0.0
    %4113 = vmatprep.subr.mxu0 0.0
    %4114 = vmatpush1.msra.mxu0 0.0
    %4115 = vmatprep.subr.mxu0 0.0
    %4116 = vmatpush1.msra.mxu0 0.0
    %4117 = vmatprep.subr.mxu0 0.0
    %4118 = vmatpush1.msra.mxu0 0.0
    %4119 = vmatprep.subr.mxu0 0.0
    %4120 = vmatpush1.msra.mxu0 0.0
    %4121 = vmatprep.subr.mxu0 0.0
    %4122 = vmatpush1.msra.mxu0 0.0
    %4123 = vmatprep.subr.mxu0 0.0
    %4124 = vmatpush1.msra.mxu0 0.0
    %4125 = vmatprep.subr.mxu0 0.0
    %4126 = vmatpush1.msra.mxu0 0.0
    %4127 = vmatprep.subr.mxu0 0.0
    %4128 = vmatpush1.msra.mxu0 0.0
    %4129 = vmatprep.subr.mxu0 0.0
    %4130 = vmatpush1.msra.mxu0 0.0
    %4131 = vmatprep.subr.mxu0 0.0
    %4132 = vmatpush1.msra.mxu0 0.0
    %4133 = vmatprep.mubr.f32.mxu0 0.0
    %4134 = vmatmul.mubr.f32.gmra.mrb[0].mxu0 %v4061
    %v4135 = vpop.f32.mrb[0].mxu0
    %v4136 = vadd.f32 0.0, %v4135
    %v4137 = vpop.f32.mrb[0].mxu0
    %v4138 = vadd.f32 0.0, %v4137
    %4139 = vmatprep.mubr.f32.mxu0 0.0
    %4140 = vmatmul.mubr.f32.gmra.mrb[0].mxu0 %v4064
    %v4141 = vpop.f32.mrb[0].mxu0
    %v4142 = vadd.f32 0.0, %v4141
    %v4143 = vpop.f32.mrb[0].mxu0
    %v4144 = vadd.f32 0.0, %v4143
    %4145 = vmatprep.mubr.f32.mxu0 0.0
    %4146 = vmatmul.mubr.f32.gmra.mrb[0].mxu0 %v4067
    %v4147 = vpop.f32.mrb[0].mxu0
    %v4148 = vadd.f32 0.0, %v4147
    %v4149 = vpop.f32.mrb[0].mxu0
    %v4150 = vadd.f32 0.0, %v4149
    %4151 = vdwg.mxu0
    %v4152 = vpack.c.bf16 %v4142, %v4136
    %v4153 = vpack.c.bf16 %v4144, %v4138
    %v4154 = vpack.c.bf16 %v4148, %v4148
    %v4155 = vpack.c.bf16 %v4150, %v4150
    %v4156 = vld [vmem:[#allocation13] sm:$0xff]
    %v4157 = vld [vmem:[#allocation13 + $0x8] sm:$0xff]
    %v4158 = vld [vmem:[#allocation13 + $0x10] sm:$0xff]
    %v4159 = vld [vmem:[#allocation13 + $0x18] sm:$0xff]
    %v4160 = vld [vmem:[#allocation13 + $0x20] sm:$0xff]
    %v4161 = vld [vmem:[#allocation13 + $0x28] sm:$0xff]
    %v4162 = vld [vmem:[#allocation13 + $0x30] sm:$0xff]
    %v4163 = vld [vmem:[#allocation13 + $0x38] sm:$0xff]
    %v4164 = vld [vmem:[#allocation13 + $0x40] sm:$0xff]
    %v4165 = vld [vmem:[#allocation13 + $0x48] sm:$0xff]
    %v4166 = vld [vmem:[#allocation13 + $0x50] sm:$0xff]
    %v4167 = vld [vmem:[#allocation13 + $0x58] sm:$0xff]
    %v4168 = vld [vmem:[#allocation13 + $0x60] sm:$0xff]
    %v4169 = vld [vmem:[#allocation13 + $0x68] sm:$0xff]
    %v4170 = vld [vmem:[#allocation13 + $0x70] sm:$0xff]
    %v4171 = vld [vmem:[#allocation13 + $0x78] sm:$0xff]
    %v4172 = vld [vmem:[#allocation13 + $0x80] sm:$0xff]
    %v4173 = vld [vmem:[#allocation13 + $0x88] sm:$0xff]
    %v4174 = vld [vmem:[#allocation13 + $0x90] sm:$0xff]
    %v4175 = vld [vmem:[#allocation13 + $0x98] sm:$0xff]
    %v4176 = vld [vmem:[#allocation13 + $0xa0] sm:$0xff]
    %v4177 = vld [vmem:[#allocation13 + $0xa8] sm:$0xff]
    %v4178 = vld [vmem:[#allocation13 + $0xb0] sm:$0xff]
    %v4179 = vld [vmem:[#allocation13 + $0xb8] sm:$0xff]
    %v4180 = vld [vmem:[#allocation13 + $0xc0] sm:$0xff]
    %v4181 = vld [vmem:[#allocation13 + $0xc8] sm:$0xff]
    %v4182 = vld [vmem:[#allocation13 + $0xd0] sm:$0xff]
    %v4183 = vld [vmem:[#allocation13 + $0xd8] sm:$0xff]
    %v4184 = vld [vmem:[#allocation13 + $0xe0] sm:$0xff]
    %v4185 = vld [vmem:[#allocation13 + $0xe8] sm:$0xff]
    %v4186 = vld [vmem:[#allocation13 + $0xf0] sm:$0xff]
    %v4187 = vld [vmem:[#allocation13 + $0xf8] sm:$0xff]
    %4188 = vmatprep.subr.bf16.mxu0 %v4157
    %4189 = vmatpush1.bf16.msra.mxu0 %v4156
    %4190 = vmatprep.subr.bf16.mxu0 %v4159
    %4191 = vmatpush1.bf16.msra.mxu0 %v4158
    %4192 = vmatprep.subr.bf16.mxu0 %v4161
    %4193 = vmatpush1.bf16.msra.mxu0 %v4160
    %4194 = vmatprep.subr.bf16.mxu0 %v4163
    %4195 = vmatpush1.bf16.msra.mxu0 %v4162
    %4196 = vmatprep.subr.bf16.mxu0 %v4165
    %4197 = vmatpush1.bf16.msra.mxu0 %v4164
    %4198 = vmatprep.subr.bf16.mxu0 %v4167
    %4199 = vmatpush1.bf16.msra.mxu0 %v4166
    %4200 = vmatprep.subr.bf16.mxu0 %v4169
    %4201 = vmatpush1.bf16.msra.mxu0 %v4168
    %4202 = vmatprep.subr.bf16.mxu0 %v4171
    %4203 = vmatpush1.bf16.msra.mxu0 %v4170
    %4204 = vmatprep.subr.bf16.mxu0 %v4173
    %4205 = vmatpush1.bf16.msra.mxu0 %v4172
    %4206 = vmatprep.subr.bf16.mxu0 %v4175
    %4207 = vmatpush1.bf16.msra.mxu0 %v4174
    %4208 = vmatprep.subr.bf16.mxu0 %v4177
    %4209 = vmatpush1.bf16.msra.mxu0 %v4176
    %4210 = vmatprep.subr.bf16.mxu0 %v4179
    %4211 = vmatpush1.bf16.msra.mxu0 %v4178
    %4212 = vmatprep.subr.bf16.mxu0 %v4181
    %4213 = vmatpush1.bf16.msra.mxu0 %v4180
    %4214 = vmatprep.subr.bf16.mxu0 %v4183
    %4215 = vmatpush1.bf16.msra.mxu0 %v4182
    %4216 = vmatprep.subr.bf16.mxu0 %v4185
    %4217 = vmatpush1.bf16.msra.mxu0 %v4184
    %4218 = vmatprep.subr.bf16.mxu0 %v4187
    %4219 = vmatpush1.bf16.msra.mxu0 %v4186
    %4220 = vmatprep.mubr.bf16.mxu0 %v4153
    %4221 = vmatmul.mubr.bf16.gmra.mrb[0].mxu0 %v4152
    %v4222 = vpop.f32.mrb[0].mxu0
    %v4223 = vadd.f32 0.0, %v4222
    %v4224 = vpop.f32.mrb[0].mxu0
    %v4225 = vadd.f32 0.0, %v4224
    %v4226 = vpop.f32.mrb[0].mxu0
    %v4227 = vpop.f32.mrb[0].mxu0
    %4228 = vdwg.mxu0
    %v4230 = vlaneseq
    %v4231 = vshrl.u32 %v4230, 7
    %v4232 = vsub.s32 0, %v4231
    %v4233 = vrot.slane %v4055, %v4232
    %v4234 = vlaneseq
    %v4235 = vshrl.u32 %v4234, 7
    %v4236 = vsub.s32 1, %v4235
    %v4237 = vrot.slane %v4055, %v4236
    %v4240 = vadd.f32 %v4233, %v4223
    %v4241 = vadd.f32 %v4237, %v4225
    %s4242 = scalar_lea.vmem [#allocation13], 256
    %v4243 = vld [vmem:[%s4242] sm:$0xff]
    %v4244 = vld [vmem:[%s4242 + $0x8] sm:$0xff]
    %v4245 = vld [vmem:[%s4242 + $0x10] sm:$0xff]
    %v4246 = vld [vmem:[%s4242 + $0x18] sm:$0xff]
    %v4247 = vld [vmem:[%s4242 + $0x20] sm:$0xff]
    %v4248 = vld [vmem:[%s4242 + $0x28] sm:$0xff]
    %v4249 = vld [vmem:[%s4242 + $0x30] sm:$0xff]
    %v4250 = vld [vmem:[%s4242 + $0x38] sm:$0xff]
    %v4251 = vld [vmem:[%s4242 + $0x40] sm:$0xff]
    %v4252 = vld [vmem:[%s4242 + $0x48] sm:$0xff]
    %v4253 = vld [vmem:[%s4242 + $0x50] sm:$0xff]
    %v4254 = vld [vmem:[%s4242 + $0x58] sm:$0xff]
    %v4255 = vld [vmem:[%s4242 + $0x60] sm:$0xff]
    %v4256 = vld [vmem:[%s4242 + $0x68] sm:$0xff]
    %v4257 = vld [vmem:[%s4242 + $0x70] sm:$0xff]
    %v4258 = vld [vmem:[%s4242 + $0x78] sm:$0xff]
    %v4259 = vld [vmem:[%s4242 + $0x80] sm:$0xff]
    %v4260 = vld [vmem:[%s4242 + $0x88] sm:$0xff]
    %v4261 = vld [vmem:[%s4242 + $0x90] sm:$0xff]
    %v4262 = vld [vmem:[%s4242 + $0x98] sm:$0xff]
    %v4263 = vld [vmem:[%s4242 + $0xa0] sm:$0xff]
    %v4264 = vld [vmem:[%s4242 + $0xa8] sm:$0xff]
    %v4265 = vld [vmem:[%s4242 + $0xb0] sm:$0xff]
    %v4266 = vld [vmem:[%s4242 + $0xb8] sm:$0xff]
    %v4267 = vld [vmem:[%s4242 + $0xc0] sm:$0xff]
    %v4268 = vld [vmem:[%s4242 + $0xc8] sm:$0xff]
    %v4269 = vld [vmem:[%s4242 + $0xd0] sm:$0xff]
    %v4270 = vld [vmem:[%s4242 + $0xd8] sm:$0xff]
    %v4271 = vld [vmem:[%s4242 + $0xe0] sm:$0xff]
    %v4272 = vld [vmem:[%s4242 + $0xe8] sm:$0xff]
    %v4273 = vld [vmem:[%s4242 + $0xf0] sm:$0xff]
    %v4274 = vld [vmem:[%s4242 + $0xf8] sm:$0xff]
    %v4277 = vrot.slane %v4152, 4
    %v4278 = vrot.slane %v4153, 4
    %4281 = vmatprep.subr.bf16.mxu0 %v4244
    %4282 = vmatpush1.bf16.msra.mxu0 %v4243
    %4283 = vmatprep.subr.bf16.mxu0 %v4246
    %4284 = vmatpush1.bf16.msra.mxu0 %v4245
    %4285 = vmatprep.subr.bf16.mxu0 %v4248
    %4286 = vmatpush1.bf16.msra.mxu0 %v4247
    %4287 = vmatprep.subr.bf16.mxu0 %v4250
    %4288 = vmatpush1.bf16.msra.mxu0 %v4249
    %4289 = vmatprep.subr.bf16.mxu0 %v4252
    %4290 = vmatpush1.bf16.msra.mxu0 %v4251
    %4291 = vmatprep.subr.bf16.mxu0 %v4254
    %4292 = vmatpush1.bf16.msra.mxu0 %v4253
    %4293 = vmatprep.subr.bf16.mxu0 %v4256
    %4294 = vmatpush1.bf16.msra.mxu0 %v4255
    %4295 = vmatprep.subr.bf16.mxu0 %v4258
    %4296 = vmatpush1.bf16.msra.mxu0 %v4257
    %4297 = vmatprep.subr.bf16.mxu0 %v4260
    %4298 = vmatpush1.bf16.msra.mxu0 %v4259
    %4299 = vmatprep.subr.bf16.mxu0 %v4262
    %4300 = vmatpush1.bf16.msra.mxu0 %v4261
    %4301 = vmatprep.subr.bf16.mxu0 %v4264
    %4302 = vmatpush1.bf16.msra.mxu0 %v4263
    %4303 = vmatprep.subr.bf16.mxu0 %v4266
    %4304 = vmatpush1.bf16.msra.mxu0 %v4265
    %4305 = vmatprep.subr.bf16.mxu0 %v4268
    %4306 = vmatpush1.bf16.msra.mxu0 %v4267
    %4307 = vmatprep.subr.bf16.mxu0 %v4270
    %4308 = vmatpush1.bf16.msra.mxu0 %v4269
    %4309 = vmatprep.subr.bf16.mxu0 %v4272
    %4310 = vmatpush1.bf16.msra.mxu0 %v4271
    %4311 = vmatprep.subr.bf16.mxu0 %v4274
    %4312 = vmatpush1.bf16.msra.mxu0 %v4273
    %4313 = vmatprep.mubr.bf16.mxu0 %v4278
    %4314 = vmatmul.mubr.bf16.gmra.mrb[0].mxu0 %v4277
    %v4315 = vpop.f32.mrb[0].mxu0
    %v4316 = vadd.f32 0.0, %v4315
    %v4317 = vpop.f32.mrb[0].mxu0
    %v4318 = vadd.f32 0.0, %v4317
    %v4319 = vpop.f32.mrb[0].mxu0
    %v4320 = vpop.f32.mrb[0].mxu0
    %4321 = vdwg.mxu0
    %v4322 = vadd.f32 %v4240, %v4316
    %v4323 = vadd.f32 %v4241, %v4318
    %s4324 = scalar_lea.vmem [#allocation13], 512
    %v4325 = vld [vmem:[%s4324] sm:$0xff]
    %v4326 = vld [vmem:[%s4324 + $0x8] sm:$0xff]
    %v4327 = vld [vmem:[%s4324 + $0x10] sm:$0xff]
    %v4328 = vld [vmem:[%s4324 + $0x18] sm:$0xff]
    %v4329 = vld [vmem:[%s4324 + $0x20] sm:$0xff]
    %v4330 = vld [vmem:[%s4324 + $0x28] sm:$0xff]
    %v4331 = vld [vmem:[%s4324 + $0x30] sm:$0xff]
    %v4332 = vld [vmem:[%s4324 + $0x38] sm:$0xff]
    %v4333 = vld [vmem:[%s4324 + $0x40] sm:$0xff]
    %v4334 = vld [vmem:[%s4324 + $0x48] sm:$0xff]
    %v4335 = vld [vmem:[%s4324 + $0x50] sm:$0xff]
    %v4336 = vld [vmem:[%s4324 + $0x58] sm:$0xff]
    %v4337 = vld [vmem:[%s4324 + $0x60] sm:$0xff]
    %v4338 = vld [vmem:[%s4324 + $0x68] sm:$0xff]
    %v4339 = vld [vmem:[%s4324 + $0x70] sm:$0xff]
    %v4340 = vld [vmem:[%s4324 + $0x78] sm:$0xff]
    %v4341 = vld [vmem:[%s4324 + $0x80] sm:$0xff]
    %v4342 = vld [vmem:[%s4324 + $0x88] sm:$0xff]
    %v4343 = vld [vmem:[%s4324 + $0x90] sm:$0xff]
    %v4344 = vld [vmem:[%s4324 + $0x98] sm:$0xff]
    %v4345 = vld [vmem:[%s4324 + $0xa0] sm:$0xff]
    %v4346 = vld [vmem:[%s4324 + $0xa8] sm:$0xff]
    %v4347 = vld [vmem:[%s4324 + $0xb0] sm:$0xff]
    %v4348 = vld [vmem:[%s4324 + $0xb8] sm:$0xff]
    %v4349 = vld [vmem:[%s4324 + $0xc0] sm:$0xff]
    %v4350 = vld [vmem:[%s4324 + $0xc8] sm:$0xff]
    %v4351 = vld [vmem:[%s4324 + $0xd0] sm:$0xff]
    %v4352 = vld [vmem:[%s4324 + $0xd8] sm:$0xff]
    %v4353 = vld [vmem:[%s4324 + $0xe0] sm:$0xff]
    %v4354 = vld [vmem:[%s4324 + $0xe8] sm:$0xff]
    %v4355 = vld [vmem:[%s4324 + $0xf0] sm:$0xff]
    %v4356 = vld [vmem:[%s4324 + $0xf8] sm:$0xff]
    %4357 = vmatprep.subr.bf16.mxu0 %v4326
    %4358 = vmatpush1.bf16.msra.mxu0 %v4325
    %4359 = vmatprep.subr.bf16.mxu0 %v4328
    %4360 = vmatpush1.bf16.msra.mxu0 %v4327
    %4361 = vmatprep.subr.bf16.mxu0 %v4330
    %4362 = vmatpush1.bf16.msra.mxu0 %v4329
    %4363 = vmatprep.subr.bf16.mxu0 %v4332
    %4364 = vmatpush1.bf16.msra.mxu0 %v4331
    %4365 = vmatprep.subr.bf16.mxu0 %v4334
    %4366 = vmatpush1.bf16.msra.mxu0 %v4333
    %4367 = vmatprep.subr.bf16.mxu0 %v4336
    %4368 = vmatpush1.bf16.msra.mxu0 %v4335
    %4369 = vmatprep.subr.bf16.mxu0 %v4338
    %4370 = vmatpush1.bf16.msra.mxu0 %v4337
    %4371 = vmatprep.subr.bf16.mxu0 %v4340
    %4372 = vmatpush1.bf16.msra.mxu0 %v4339
    %4373 = vmatprep.subr.bf16.mxu0 %v4342
    %4374 = vmatpush1.bf16.msra.mxu0 %v4341
    %4375 = vmatprep.subr.bf16.mxu0 %v4344
    %4376 = vmatpush1.bf16.msra.mxu0 %v4343
    %4377 = vmatprep.subr.bf16.mxu0 %v4346
    %4378 = vmatpush1.bf16.msra.mxu0 %v4345
    %4379 = vmatprep.subr.bf16.mxu0 %v4348
    %4380 = vmatpush1.bf16.msra.mxu0 %v4347
    %4381 = vmatprep.subr.bf16.mxu0 %v4350
    %4382 = vmatpush1.bf16.msra.mxu0 %v4349
    %4383 = vmatprep.subr.bf16.mxu0 %v4352
    %4384 = vmatpush1.bf16.msra.mxu0 %v4351
    %4385 = vmatprep.subr.bf16.mxu0 %v4354
    %4386 = vmatpush1.bf16.msra.mxu0 %v4353
    %4387 = vmatprep.subr.bf16.mxu0 %v4356
    %4388 = vmatpush1.bf16.msra.mxu0 %v4355
    %4389 = vmatprep.mubr.bf16.mxu0 %v4155
    %4390 = vmatmul.mubr.bf16.gmra.mrb[0].mxu0 %v4154
    %v4391 = vpop.f32.mrb[0].mxu0
    %v4392 = vadd.f32 0.0, %v4391
    %v4393 = vpop.f32.mrb[0].mxu0
    %v4394 = vadd.f32 0.0, %v4393
    %v4395 = vpop.f32.mrb[0].mxu0
    %v4396 = vpop.f32.mrb[0].mxu0
    %4397 = vdwg.mxu0
    %v4398 = vadd.f32 %v4322, %v4392
    %v4399 = vadd.f32 %v4323, %v4394
    %v4400 = vmax.f32 %v4398, 0.0
    %v4401 = vmax.f32 %v4399, 0.0
    %s4402 = sshll.u32 %s3307, 4
    %4403 = dma.done %s488, %s4402
    %s4404 = scalar_lea.vmem [#allocation2], 6
    %v4405 = vld [vmem:[%s4404] ss:$8 sm:$0x3]
    %v4406 = vld [vmem:[#allocation12] sm:$0xff]
    %v4407 = vld [vmem:[#allocation12 + $0x8] sm:$0xff]
    %v4408 = vld [vmem:[#allocation12 + $0x10] sm:$0xff]
    %v4410 = vsel %vm4059, %v4406, 0
    %v4413 = vsel %vm4059, %v4407, 0
    %v4416 = vsel %vm4059, %v4408, 0
    %4418 = vmatprep.subr.mxu0 %v4401
    %4419 = vmatpush1.msra.mxu0 %v4400
    %4420 = vmatprep.subr.mxu0 0.0
    %4421 = vmatpush1.msra.mxu0 0.0
    %4422 = vmatprep.subr.mxu0 0.0
    %4423 = vmatpush1.msra.mxu0 0.0
    %4424 = vmatprep.subr.mxu0 0.0
    %4425 = vmatpush1.msra.mxu0 0.0
    %4426 = vmatprep.subr.mxu0 0.0
    %4427 = vmatpush1.msra.mxu0 0.0
    %4428 = vmatprep.subr.mxu0 0.0
    %4429 = vmatpush1.msra.mxu0 0.0
    %4430 = vmatprep.subr.mxu0 0.0
    %4431 = vmatpush1.msra.mxu0 0.0
    %4432 = vmatprep.subr.mxu0 0.0
    %4433 = vmatpush1.msra.mxu0 0.0
    %4434 = vmatprep.subr.mxu0 0.0
    %4435 = vmatpush1.msra.mxu0 0.0
    %4436 = vmatprep.subr.mxu0 0.0
    %4437 = vmatpush1.msra.mxu0 0.0
    %4438 = vmatprep.subr.mxu0 0.0
    %4439 = vmatpush1.msra.mxu0 0.0
    %4440 = vmatprep.subr.mxu0 0.0
    %4441 = vmatpush1.msra.mxu0 0.0
    %4442 = vmatprep.subr.mxu0 0.0
    %4443 = vmatpush1.msra.mxu0 0.0
    %4444 = vmatprep.subr.mxu0 0.0
    %4445 = vmatpush1.msra.mxu0 0.0
    %4446 = vmatprep.subr.mxu0 0.0
    %4447 = vmatpush1.msra.mxu0 0.0
    %4448 = vmatprep.subr.mxu0 0.0
    %4449 = vmatpush1.msra.mxu0 0.0
    %4450 = vmatprep.subr.mxu0 0.0
    %4451 = vmatpush1.msra.mxu0 0.0
    %4452 = vmatprep.subr.mxu0 0.0
    %4453 = vmatpush1.msra.mxu0 0.0
    %4454 = vmatprep.subr.mxu0 0.0
    %4455 = vmatpush1.msra.mxu0 0.0
    %4456 = vmatprep.subr.mxu0 0.0
    %4457 = vmatpush1.msra.mxu0 0.0
    %4458 = vmatprep.subr.mxu0 0.0
    %4459 = vmatpush1.msra.mxu0 0.0
    %4460 = vmatprep.subr.mxu0 0.0
    %4461 = vmatpush1.msra.mxu0 0.0
    %4462 = vmatprep.subr.mxu0 0.0
    %4463 = vmatpush1.msra.mxu0 0.0
    %4464 = vmatprep.subr.mxu0 0.0
    %4465 = vmatpush1.msra.mxu0 0.0
    %4466 = vmatprep.subr.mxu0 0.0
    %4467 = vmatpush1.msra.mxu0 0.0
    %4468 = vmatprep.subr.mxu0 0.0
    %4469 = vmatpush1.msra.mxu0 0.0
    %4470 = vmatprep.subr.mxu0 0.0
    %4471 = vmatpush1.msra.mxu0 0.0
    %4472 = vmatprep.subr.mxu0 0.0
    %4473 = vmatpush1.msra.mxu0 0.0
    %4474 = vmatprep.subr.mxu0 0.0
    %4475 = vmatpush1.msra.mxu0 0.0
    %4476 = vmatprep.subr.mxu0 0.0
    %4477 = vmatpush1.msra.mxu0 0.0
    %4478 = vmatprep.subr.mxu0 0.0
    %4479 = vmatpush1.msra.mxu0 0.0
    %4480 = vmatprep.subr.mxu0 0.0
    %4481 = vmatpush1.msra.mxu0 0.0
    %4482 = vmatprep.mubr.f32.mxu0 0.0
    %4483 = vmatmul.mubr.f32.gmra.mrb[0].mxu0 %v4410
    %v4484 = vpop.f32.mrb[0].mxu0
    %v4485 = vadd.f32 0.0, %v4484
    %v4486 = vpop.f32.mrb[0].mxu0
    %v4487 = vadd.f32 0.0, %v4486
    %4488 = vmatprep.mubr.f32.mxu0 0.0
    %4489 = vmatmul.mubr.f32.gmra.mrb[0].mxu0 %v4413
    %v4490 = vpop.f32.mrb[0].mxu0
    %v4491 = vadd.f32 0.0, %v4490
    %v4492 = vpop.f32.mrb[0].mxu0
    %v4493 = vadd.f32 0.0, %v4492
    %4494 = vmatprep.mubr.f32.mxu0 0.0
    %4495 = vmatmul.mubr.f32.gmra.mrb[0].mxu0 %v4416
    %v4496 = vpop.f32.mrb[0].mxu0
    %v4497 = vadd.f32 0.0, %v4496
    %v4498 = vpop.f32.mrb[0].mxu0
    %v4499 = vadd.f32 0.0, %v4498
    %4500 = vdwg.mxu0
    %v4501 = vpack.c.bf16 %v4491, %v4485
    %v4502 = vpack.c.bf16 %v4493, %v4487
    %v4503 = vpack.c.bf16 %v4497, %v4497
    %v4504 = vpack.c.bf16 %v4499, %v4499
    %v4505 = vld [vmem:[%s487] sm:$0xff]
    %v4506 = vld [vmem:[%s487 + $0x8] sm:$0xff]
    %v4507 = vld [vmem:[%s487 + $0x10] sm:$0xff]
    %v4508 = vld [vmem:[%s487 + $0x18] sm:$0xff]
    %v4509 = vld [vmem:[%s487 + $0x20] sm:$0xff]
    %v4510 = vld [vmem:[%s487 + $0x28] sm:$0xff]
    %v4511 = vld [vmem:[%s487 + $0x30] sm:$0xff]
    %v4512 = vld [vmem:[%s487 + $0x38] sm:$0xff]
    %v4513 = vld [vmem:[%s487 + $0x40] sm:$0xff]
    %v4514 = vld [vmem:[%s487 + $0x48] sm:$0xff]
    %v4515 = vld [vmem:[%s487 + $0x50] sm:$0xff]
    %v4516 = vld [vmem:[%s487 + $0x58] sm:$0xff]
    %v4517 = vld [vmem:[%s487 + $0x60] sm:$0xff]
    %v4518 = vld [vmem:[%s487 + $0x68] sm:$0xff]
    %v4519 = vld [vmem:[%s487 + $0x70] sm:$0xff]
    %v4520 = vld [vmem:[%s487 + $0x78] sm:$0xff]
    %v4521 = vld [vmem:[%s487 + $0x80] sm:$0xff]
    %v4522 = vld [vmem:[%s487 + $0x88] sm:$0xff]
    %v4523 = vld [vmem:[%s487 + $0x90] sm:$0xff]
    %v4524 = vld [vmem:[%s487 + $0x98] sm:$0xff]
    %v4525 = vld [vmem:[%s487 + $0xa0] sm:$0xff]
    %v4526 = vld [vmem:[%s487 + $0xa8] sm:$0xff]
    %v4527 = vld [vmem:[%s487 + $0xb0] sm:$0xff]
    %v4528 = vld [vmem:[%s487 + $0xb8] sm:$0xff]
    %v4529 = vld [vmem:[%s487 + $0xc0] sm:$0xff]
    %v4530 = vld [vmem:[%s487 + $0xc8] sm:$0xff]
    %v4531 = vld [vmem:[%s487 + $0xd0] sm:$0xff]
    %v4532 = vld [vmem:[%s487 + $0xd8] sm:$0xff]
    %v4533 = vld [vmem:[%s487 + $0xe0] sm:$0xff]
    %v4534 = vld [vmem:[%s487 + $0xe8] sm:$0xff]
    %v4535 = vld [vmem:[%s487 + $0xf0] sm:$0xff]
    %v4536 = vld [vmem:[%s487 + $0xf8] sm:$0xff]
    %4537 = vmatprep.subr.bf16.mxu0 %v4506
    %4538 = vmatpush1.bf16.msra.mxu0 %v4505
    %4539 = vmatprep.subr.bf16.mxu0 %v4508
    %4540 = vmatpush1.bf16.msra.mxu0 %v4507
    %4541 = vmatprep.subr.bf16.mxu0 %v4510
    %4542 = vmatpush1.bf16.msra.mxu0 %v4509
    %4543 = vmatprep.subr.bf16.mxu0 %v4512
    %4544 = vmatpush1.bf16.msra.mxu0 %v4511
    %4545 = vmatprep.subr.bf16.mxu0 %v4514
    %4546 = vmatpush1.bf16.msra.mxu0 %v4513
    %4547 = vmatprep.subr.bf16.mxu0 %v4516
    %4548 = vmatpush1.bf16.msra.mxu0 %v4515
    %4549 = vmatprep.subr.bf16.mxu0 %v4518
    %4550 = vmatpush1.bf16.msra.mxu0 %v4517
    %4551 = vmatprep.subr.bf16.mxu0 %v4520
    %4552 = vmatpush1.bf16.msra.mxu0 %v4519
    %4553 = vmatprep.subr.bf16.mxu0 %v4522
    %4554 = vmatpush1.bf16.msra.mxu0 %v4521
    %4555 = vmatprep.subr.bf16.mxu0 %v4524
    %4556 = vmatpush1.bf16.msra.mxu0 %v4523
    %4557 = vmatprep.subr.bf16.mxu0 %v4526
    %4558 = vmatpush1.bf16.msra.mxu0 %v4525
    %4559 = vmatprep.subr.bf16.mxu0 %v4528
    %4560 = vmatpush1.bf16.msra.mxu0 %v4527
    %4561 = vmatprep.subr.bf16.mxu0 %v4530
    %4562 = vmatpush1.bf16.msra.mxu0 %v4529
    %4563 = vmatprep.subr.bf16.mxu0 %v4532
    %4564 = vmatpush1.bf16.msra.mxu0 %v4531
    %4565 = vmatprep.subr.bf16.mxu0 %v4534
    %4566 = vmatpush1.bf16.msra.mxu0 %v4533
    %4567 = vmatprep.subr.bf16.mxu0 %v4536
    %4568 = vmatpush1.bf16.msra.mxu0 %v4535
    %4569 = vmatprep.mubr.bf16.mxu0 %v4502
    %4570 = vmatmul.mubr.bf16.gmra.mrb[0].mxu0 %v4501
    %v4571 = vpop.f32.mrb[0].mxu0
    %v4572 = vadd.f32 0.0, %v4571
    %v4573 = vpop.f32.mrb[0].mxu0
    %v4574 = vadd.f32 0.0, %v4573
    %v4575 = vpop.f32.mrb[0].mxu0
    %v4576 = vpop.f32.mrb[0].mxu0
    %4577 = vdwg.mxu0
    %v4579 = vlaneseq
    %v4580 = vshrl.u32 %v4579, 7
    %v4581 = vsub.s32 0, %v4580
    %v4582 = vrot.slane %v4405, %v4581
    %v4583 = vlaneseq
    %v4584 = vshrl.u32 %v4583, 7
    %v4585 = vsub.s32 1, %v4584
    %v4586 = vrot.slane %v4405, %v4585
    %v4589 = vadd.f32 %v4582, %v4572
    %v4590 = vadd.f32 %v4586, %v4574
    %s4591 = scalar_lea.vmem [#allocation13], 1024
    %v4592 = vld [vmem:[%s4591] sm:$0xff]
    %v4593 = vld [vmem:[%s4591 + $0x8] sm:$0xff]
    %v4594 = vld [vmem:[%s4591 + $0x10] sm:$0xff]
    %v4595 = vld [vmem:[%s4591 + $0x18] sm:$0xff]
    %v4596 = vld [vmem:[%s4591 + $0x20] sm:$0xff]
    %v4597 = vld [vmem:[%s4591 + $0x28] sm:$0xff]
    %v4598 = vld [vmem:[%s4591 + $0x30] sm:$0xff]
    %v4599 = vld [vmem:[%s4591 + $0x38] sm:$0xff]
    %v4600 = vld [vmem:[%s4591 + $0x40] sm:$0xff]
    %v4601 = vld [vmem:[%s4591 + $0x48] sm:$0xff]
    %v4602 = vld [vmem:[%s4591 + $0x50] sm:$0xff]
    %v4603 = vld [vmem:[%s4591 + $0x58] sm:$0xff]
    %v4604 = vld [vmem:[%s4591 + $0x60] sm:$0xff]
    %v4605 = vld [vmem:[%s4591 + $0x68] sm:$0xff]
    %v4606 = vld [vmem:[%s4591 + $0x70] sm:$0xff]
    %v4607 = vld [vmem:[%s4591 + $0x78] sm:$0xff]
    %v4608 = vld [vmem:[%s4591 + $0x80] sm:$0xff]
    %v4609 = vld [vmem:[%s4591 + $0x88] sm:$0xff]
    %v4610 = vld [vmem:[%s4591 + $0x90] sm:$0xff]
    %v4611 = vld [vmem:[%s4591 + $0x98] sm:$0xff]
    %v4612 = vld [vmem:[%s4591 + $0xa0] sm:$0xff]
    %v4613 = vld [vmem:[%s4591 + $0xa8] sm:$0xff]
    %v4614 = vld [vmem:[%s4591 + $0xb0] sm:$0xff]
    %v4615 = vld [vmem:[%s4591 + $0xb8] sm:$0xff]
    %v4616 = vld [vmem:[%s4591 + $0xc0] sm:$0xff]
    %v4617 = vld [vmem:[%s4591 + $0xc8] sm:$0xff]
    %v4618 = vld [vmem:[%s4591 + $0xd0] sm:$0xff]
    %v4619 = vld [vmem:[%s4591 + $0xd8] sm:$0xff]
    %v4620 = vld [vmem:[%s4591 + $0xe0] sm:$0xff]
    %v4621 = vld [vmem:[%s4591 + $0xe8] sm:$0xff]
    %v4622 = vld [vmem:[%s4591 + $0xf0] sm:$0xff]
    %v4623 = vld [vmem:[%s4591 + $0xf8] sm:$0xff]
    %v4626 = vrot.slane %v4501, 4
    %v4627 = vrot.slane %v4502, 4
    %4630 = vmatprep.subr.bf16.mxu0 %v4593
    %4631 = vmatpush1.bf16.msra.mxu0 %v4592
    %4632 = vmatprep.subr.bf16.mxu0 %v4595
    %4633 = vmatpush1.bf16.msra.mxu0 %v4594
    %4634 = vmatprep.subr.bf16.mxu0 %v4597
    %4635 = vmatpush1.bf16.msra.mxu0 %v4596
    %4636 = vmatprep.subr.bf16.mxu0 %v4599
    %4637 = vmatpush1.bf16.msra.mxu0 %v4598
    %4638 = vmatprep.subr.bf16.mxu0 %v4601
    %4639 = vmatpush1.bf16.msra.mxu0 %v4600
    %4640 = vmatprep.subr.bf16.mxu0 %v4603
    %4641 = vmatpush1.bf16.msra.mxu0 %v4602
    %4642 = vmatprep.subr.bf16.mxu0 %v4605
    %4643 = vmatpush1.bf16.msra.mxu0 %v4604
    %4644 = vmatprep.subr.bf16.mxu0 %v4607
    %4645 = vmatpush1.bf16.msra.mxu0 %v4606
    %4646 = vmatprep.subr.bf16.mxu0 %v4609
    %4647 = vmatpush1.bf16.msra.mxu0 %v4608
    %4648 = vmatprep.subr.bf16.mxu0 %v4611
    %4649 = vmatpush1.bf16.msra.mxu0 %v4610
    %4650 = vmatprep.subr.bf16.mxu0 %v4613
    %4651 = vmatpush1.bf16.msra.mxu0 %v4612
    %4652 = vmatprep.subr.bf16.mxu0 %v4615
    %4653 = vmatpush1.bf16.msra.mxu0 %v4614
    %4654 = vmatprep.subr.bf16.mxu0 %v4617
    %4655 = vmatpush1.bf16.msra.mxu0 %v4616
    %4656 = vmatprep.subr.bf16.mxu0 %v4619
    %4657 = vmatpush1.bf16.msra.mxu0 %v4618
    %4658 = vmatprep.subr.bf16.mxu0 %v4621
    %4659 = vmatpush1.bf16.msra.mxu0 %v4620
    %4660 = vmatprep.subr.bf16.mxu0 %v4623
    %4661 = vmatpush1.bf16.msra.mxu0 %v4622
    %4662 = vmatprep.mubr.bf16.mxu0 %v4627
    %4663 = vmatmul.mubr.bf16.gmra.mrb[0].mxu0 %v4626
    %v4664 = vpop.f32.mrb[0].mxu0
    %v4665 = vadd.f32 0.0, %v4664
    %v4666 = vpop.f32.mrb[0].mxu0
    %v4667 = vadd.f32 0.0, %v4666
    %v4668 = vpop.f32.mrb[0].mxu0
    %v4669 = vpop.f32.mrb[0].mxu0
    %4670 = vdwg.mxu0
    %v4671 = vadd.f32 %v4589, %v4665
    %v4672 = vadd.f32 %v4590, %v4667
    %s4673 = scalar_lea.vmem [#allocation13], 1280
    %v4674 = vld [vmem:[%s4673] sm:$0xff]
    %v4675 = vld [vmem:[%s4673 + $0x8] sm:$0xff]
    %v4676 = vld [vmem:[%s4673 + $0x10] sm:$0xff]
    %v4677 = vld [vmem:[%s4673 + $0x18] sm:$0xff]
    %v4678 = vld [vmem:[%s4673 + $0x20] sm:$0xff]
    %v4679 = vld [vmem:[%s4673 + $0x28] sm:$0xff]
    %v4680 = vld [vmem:[%s4673 + $0x30] sm:$0xff]
    %v4681 = vld [vmem:[%s4673 + $0x38] sm:$0xff]
    %v4682 = vld [vmem:[%s4673 + $0x40] sm:$0xff]
    %v4683 = vld [vmem:[%s4673 + $0x48] sm:$0xff]
    %v4684 = vld [vmem:[%s4673 + $0x50] sm:$0xff]
    %v4685 = vld [vmem:[%s4673 + $0x58] sm:$0xff]
    %v4686 = vld [vmem:[%s4673 + $0x60] sm:$0xff]
    %v4687 = vld [vmem:[%s4673 + $0x68] sm:$0xff]
    %v4688 = vld [vmem:[%s4673 + $0x70] sm:$0xff]
    %v4689 = vld [vmem:[%s4673 + $0x78] sm:$0xff]
    %v4690 = vld [vmem:[%s4673 + $0x80] sm:$0xff]
    %v4691 = vld [vmem:[%s4673 + $0x88] sm:$0xff]
    %v4692 = vld [vmem:[%s4673 + $0x90] sm:$0xff]
    %v4693 = vld [vmem:[%s4673 + $0x98] sm:$0xff]
    %v4694 = vld [vmem:[%s4673 + $0xa0] sm:$0xff]
    %v4695 = vld [vmem:[%s4673 + $0xa8] sm:$0xff]
    %v4696 = vld [vmem:[%s4673 + $0xb0] sm:$0xff]
    %v4697 = vld [vmem:[%s4673 + $0xb8] sm:$0xff]
    %v4698 = vld [vmem:[%s4673 + $0xc0] sm:$0xff]
    %v4699 = vld [vmem:[%s4673 + $0xc8] sm:$0xff]
    %v4700 = vld [vmem:[%s4673 + $0xd0] sm:$0xff]
    %v4701 = vld [vmem:[%s4673 + $0xd8] sm:$0xff]
    %v4702 = vld [vmem:[%s4673 + $0xe0] sm:$0xff]
    %v4703 = vld [vmem:[%s4673 + $0xe8] sm:$0xff]
    %v4704 = vld [vmem:[%s4673 + $0xf0] sm:$0xff]
    %v4705 = vld [vmem:[%s4673 + $0xf8] sm:$0xff]
    %4706 = vmatprep.subr.bf16.mxu0 %v4675
    %4707 = vmatpush1.bf16.msra.mxu0 %v4674
    %4708 = vmatprep.subr.bf16.mxu0 %v4677
    %4709 = vmatpush1.bf16.msra.mxu0 %v4676
    %4710 = vmatprep.subr.bf16.mxu0 %v4679
    %4711 = vmatpush1.bf16.msra.mxu0 %v4678
    %4712 = vmatprep.subr.bf16.mxu0 %v4681
    %4713 = vmatpush1.bf16.msra.mxu0 %v4680
    %4714 = vmatprep.subr.bf16.mxu0 %v4683
    %4715 = vmatpush1.bf16.msra.mxu0 %v4682
    %4716 = vmatprep.subr.bf16.mxu0 %v4685
    %4717 = vmatpush1.bf16.msra.mxu0 %v4684
    %4718 = vmatprep.subr.bf16.mxu0 %v4687
    %4719 = vmatpush1.bf16.msra.mxu0 %v4686
    %4720 = vmatprep.subr.bf16.mxu0 %v4689
    %4721 = vmatpush1.bf16.msra.mxu0 %v4688
    %4722 = vmatprep.subr.bf16.mxu0 %v4691
    %4723 = vmatpush1.bf16.msra.mxu0 %v4690
    %4724 = vmatprep.subr.bf16.mxu0 %v4693
    %4725 = vmatpush1.bf16.msra.mxu0 %v4692
    %4726 = vmatprep.subr.bf16.mxu0 %v4695
    %4727 = vmatpush1.bf16.msra.mxu0 %v4694
    %4728 = vmatprep.subr.bf16.mxu0 %v4697
    %4729 = vmatpush1.bf16.msra.mxu0 %v4696
    %4730 = vmatprep.subr.bf16.mxu0 %v4699
    %4731 = vmatpush1.bf16.msra.mxu0 %v4698
    %4732 = vmatprep.subr.bf16.mxu0 %v4701
    %4733 = vmatpush1.bf16.msra.mxu0 %v4700
    %4734 = vmatprep.subr.bf16.mxu0 %v4703
    %4735 = vmatpush1.bf16.msra.mxu0 %v4702
    %4736 = vmatprep.subr.bf16.mxu0 %v4705
    %4737 = vmatpush1.bf16.msra.mxu0 %v4704
    %4738 = vmatprep.mubr.bf16.mxu0 %v4504
    %4739 = vmatmul.mubr.bf16.gmra.mrb[0].mxu0 %v4503
    %v4740 = vpop.f32.mrb[0].mxu0
    %v4741 = vadd.f32 0.0, %v4740
    %v4742 = vpop.f32.mrb[0].mxu0
    %v4743 = vadd.f32 0.0, %v4742
    %v4744 = vpop.f32.mrb[0].mxu0
    %v4745 = vpop.f32.mrb[0].mxu0
    %4746 = vdwg.mxu0
    %v4747 = vadd.f32 %v4671, %v4741
    %v4748 = vadd.f32 %v4672, %v4743
    %v4749 = vmax.f32 %v4747, 0.0
    %v4750 = vmax.f32 %v4748, 0.0
    %s4751 = sshll.u32 %s3307, 4
    %4752 = dma.done %s525, %s4751
    %s4753 = scalar_lea.vmem [#allocation2], 7
    %v4754 = vld [vmem:[%s4753] ss:$8 sm:$0x3]
    %v4755 = vld [vmem:[#allocation12] sm:$0xff]
    %v4756 = vld [vmem:[#allocation12 + $0x8] sm:$0xff]
    %v4757 = vld [vmem:[#allocation12 + $0x10] sm:$0xff]
    %v4759 = vsel %vm4059, %v4755, 0
    %v4762 = vsel %vm4059, %v4756, 0
    %v4765 = vsel %vm4059, %v4757, 0
    %4767 = vmatprep.subr.mxu0 %v4750
    %4768 = vmatpush1.msra.mxu0 %v4749
    %4769 = vmatprep.subr.mxu0 0.0
    %4770 = vmatpush1.msra.mxu0 0.0
    %4771 = vmatprep.subr.mxu0 0.0
    %4772 = vmatpush1.msra.mxu0 0.0
    %4773 = vmatprep.subr.mxu0 0.0
    %4774 = vmatpush1.msra.mxu0 0.0
    %4775 = vmatprep.subr.mxu0 0.0
    %4776 = vmatpush1.msra.mxu0 0.0
    %4777 = vmatprep.subr.mxu0 0.0
    %4778 = vmatpush1.msra.mxu0 0.0
    %4779 = vmatprep.subr.mxu0 0.0
    %4780 = vmatpush1.msra.mxu0 0.0
    %4781 = vmatprep.subr.mxu0 0.0
    %4782 = vmatpush1.msra.mxu0 0.0
    %4783 = vmatprep.subr.mxu0 0.0
    %4784 = vmatpush1.msra.mxu0 0.0
    %4785 = vmatprep.subr.mxu0 0.0
    %4786 = vmatpush1.msra.mxu0 0.0
    %4787 = vmatprep.subr.mxu0 0.0
    %4788 = vmatpush1.msra.mxu0 0.0
    %4789 = vmatprep.subr.mxu0 0.0
    %4790 = vmatpush1.msra.mxu0 0.0
    %4791 = vmatprep.subr.mxu0 0.0
    %4792 = vmatpush1.msra.mxu0 0.0
    %4793 = vmatprep.subr.mxu0 0.0
    %4794 = vmatpush1.msra.mxu0 0.0
    %4795 = vmatprep.subr.mxu0 0.0
    %4796 = vmatpush1.msra.mxu0 0.0
    %4797 = vmatprep.subr.mxu0 0.0
    %4798 = vmatpush1.msra.mxu0 0.0
    %4799 = vmatprep.subr.mxu0 0.0
    %4800 = vmatpush1.msra.mxu0 0.0
    %4801 = vmatprep.subr.mxu0 0.0
    %4802 = vmatpush1.msra.mxu0 0.0
    %4803 = vmatprep.subr.mxu0 0.0
    %4804 = vmatpush1.msra.mxu0 0.0
    %4805 = vmatprep.subr.mxu0 0.0
    %4806 = vmatpush1.msra.mxu0 0.0
    %4807 = vmatprep.subr.mxu0 0.0
    %4808 = vmatpush1.msra.mxu0 0.0
    %4809 = vmatprep.subr.mxu0 0.0
    %4810 = vmatpush1.msra.mxu0 0.0
    %4811 = vmatprep.subr.mxu0 0.0
    %4812 = vmatpush1.msra.mxu0 0.0
    %4813 = vmatprep.subr.mxu0 0.0
    %4814 = vmatpush1.msra.mxu0 0.0
    %4815 = vmatprep.subr.mxu0 0.0
    %4816 = vmatpush1.msra.mxu0 0.0
    %4817 = vmatprep.subr.mxu0 0.0
    %4818 = vmatpush1.msra.mxu0 0.0
    %4819 = vmatprep.subr.mxu0 0.0
    %4820 = vmatpush1.msra.mxu0 0.0
    %4821 = vmatprep.subr.mxu0 0.0
    %4822 = vmatpush1.msra.mxu0 0.0
    %4823 = vmatprep.subr.mxu0 0.0
    %4824 = vmatpush1.msra.mxu0 0.0
    %4825 = vmatprep.subr.mxu0 0.0
    %4826 = vmatpush1.msra.mxu0 0.0
    %4827 = vmatprep.subr.mxu0 0.0
    %4828 = vmatpush1.msra.mxu0 0.0
    %4829 = vmatprep.subr.mxu0 0.0
    %4830 = vmatpush1.msra.mxu0 0.0
    %4831 = vmatprep.mubr.f32.mxu0 0.0
    %4832 = vmatmul.mubr.f32.gmra.mrb[0].mxu0 %v4759
    %v4833 = vpop.f32.mrb[0].mxu0
    %v4834 = vadd.f32 0.0, %v4833
    %v4835 = vpop.f32.mrb[0].mxu0
    %v4836 = vadd.f32 0.0, %v4835
    %4837 = vmatprep.mubr.f32.mxu0 0.0
    %4838 = vmatmul.mubr.f32.gmra.mrb[0].mxu0 %v4762
    %v4839 = vpop.f32.mrb[0].mxu0
    %v4840 = vadd.f32 0.0, %v4839
    %v4841 = vpop.f32.mrb[0].mxu0
    %v4842 = vadd.f32 0.0, %v4841
    %4843 = vmatprep.mubr.f32.mxu0 0.0
    %4844 = vmatmul.mubr.f32.gmra.mrb[0].mxu0 %v4765
    %v4845 = vpop.f32.mrb[0].mxu0
    %v4846 = vadd.f32 0.0, %v4845
    %v4847 = vpop.f32.mrb[0].mxu0
    %v4848 = vadd.f32 0.0, %v4847
    %4849 = vdwg.mxu0
    %v4850 = vpack.c.bf16 %v4840, %v4834
    %v4851 = vpack.c.bf16 %v4842, %v4836
    %v4852 = vpack.c.bf16 %v4846, %v4846
    %v4853 = vpack.c.bf16 %v4848, %v4848
    %v4854 = vld [vmem:[%s524] sm:$0xff]
    %v4855 = vld [vmem:[%s524 + $0x8] sm:$0xff]
    %v4856 = vld [vmem:[%s524 + $0x10] sm:$0xff]
    %v4857 = vld [vmem:[%s524 + $0x18] sm:$0xff]
    %v4858 = vld [vmem:[%s524 + $0x20] sm:$0xff]
    %v4859 = vld [vmem:[%s524 + $0x28] sm:$0xff]
    %v4860 = vld [vmem:[%s524 + $0x30] sm:$0xff]
    %v4861 = vld [vmem:[%s524 + $0x38] sm:$0xff]
    %v4862 = vld [vmem:[%s524 + $0x40] sm:$0xff]
    %v4863 = vld [vmem:[%s524 + $0x48] sm:$0xff]
    %v4864 = vld [vmem:[%s524 + $0x50] sm:$0xff]
    %v4865 = vld [vmem:[%s524 + $0x58] sm:$0xff]
    %v4866 = vld [vmem:[%s524 + $0x60] sm:$0xff]
    %v4867 = vld [vmem:[%s524 + $0x68] sm:$0xff]
    %v4868 = vld [vmem:[%s524 + $0x70] sm:$0xff]
    %v4869 = vld [vmem:[%s524 + $0x78] sm:$0xff]
    %v4870 = vld [vmem:[%s524 + $0x80] sm:$0xff]
    %v4871 = vld [vmem:[%s524 + $0x88] sm:$0xff]
    %v4872 = vld [vmem:[%s524 + $0x90] sm:$0xff]
    %v4873 = vld [vmem:[%s524 + $0x98] sm:$0xff]
    %v4874 = vld [vmem:[%s524 + $0xa0] sm:$0xff]
    %v4875 = vld [vmem:[%s524 + $0xa8] sm:$0xff]
    %v4876 = vld [vmem:[%s524 + $0xb0] sm:$0xff]
    %v4877 = vld [vmem:[%s524 + $0xb8] sm:$0xff]
    %v4878 = vld [vmem:[%s524 + $0xc0] sm:$0xff]
    %v4879 = vld [vmem:[%s524 + $0xc8] sm:$0xff]
    %v4880 = vld [vmem:[%s524 + $0xd0] sm:$0xff]
    %v4881 = vld [vmem:[%s524 + $0xd8] sm:$0xff]
    %v4882 = vld [vmem:[%s524 + $0xe0] sm:$0xff]
    %v4883 = vld [vmem:[%s524 + $0xe8] sm:$0xff]
    %v4884 = vld [vmem:[%s524 + $0xf0] sm:$0xff]
    %v4885 = vld [vmem:[%s524 + $0xf8] sm:$0xff]
    %4886 = vmatprep.subr.bf16.mxu0 %v4855
    %4887 = vmatpush1.bf16.msra.mxu0 %v4854
    %4888 = vmatprep.subr.bf16.mxu0 %v4857
    %4889 = vmatpush1.bf16.msra.mxu0 %v4856
    %4890 = vmatprep.subr.bf16.mxu0 %v4859
    %4891 = vmatpush1.bf16.msra.mxu0 %v4858
    %4892 = vmatprep.subr.bf16.mxu0 %v4861
    %4893 = vmatpush1.bf16.msra.mxu0 %v4860
    %4894 = vmatprep.subr.bf16.mxu0 %v4863
    %4895 = vmatpush1.bf16.msra.mxu0 %v4862
    %4896 = vmatprep.subr.bf16.mxu0 %v4865
    %4897 = vmatpush1.bf16.msra.mxu0 %v4864
    %4898 = vmatprep.subr.bf16.mxu0 %v4867
    %4899 = vmatpush1.bf16.msra.mxu0 %v4866
    %4900 = vmatprep.subr.bf16.mxu0 %v4869
    %4901 = vmatpush1.bf16.msra.mxu0 %v4868
    %4902 = vmatprep.subr.bf16.mxu0 %v4871
    %4903 = vmatpush1.bf16.msra.mxu0 %v4870
    %4904 = vmatprep.subr.bf16.mxu0 %v4873
    %4905 = vmatpush1.bf16.msra.mxu0 %v4872
    %4906 = vmatprep.subr.bf16.mxu0 %v4875
    %4907 = vmatpush1.bf16.msra.mxu0 %v4874
    %4908 = vmatprep.subr.bf16.mxu0 %v4877
    %4909 = vmatpush1.bf16.msra.mxu0 %v4876
    %4910 = vmatprep.subr.bf16.mxu0 %v4879
    %4911 = vmatpush1.bf16.msra.mxu0 %v4878
    %4912 = vmatprep.subr.bf16.mxu0 %v4881
    %4913 = vmatpush1.bf16.msra.mxu0 %v4880
    %4914 = vmatprep.subr.bf16.mxu0 %v4883
    %4915 = vmatpush1.bf16.msra.mxu0 %v4882
    %4916 = vmatprep.subr.bf16.mxu0 %v4885
    %4917 = vmatpush1.bf16.msra.mxu0 %v4884
    %4918 = vmatprep.mubr.bf16.mxu0 %v4851
    %4919 = vmatmul.mubr.bf16.gmra.mrb[0].mxu0 %v4850
    %v4920 = vpop.f32.mrb[0].mxu0
    %v4921 = vadd.f32 0.0, %v4920
    %v4922 = vpop.f32.mrb[0].mxu0
    %v4923 = vadd.f32 0.0, %v4922
    %v4924 = vpop.f32.mrb[0].mxu0
    %v4925 = vpop.f32.mrb[0].mxu0
    %4926 = vdwg.mxu0
    %v4928 = vlaneseq
    %v4929 = vshrl.u32 %v4928, 7
    %v4930 = vsub.s32 0, %v4929
    %v4931 = vrot.slane %v4754, %v4930
    %v4932 = vlaneseq
    %v4933 = vshrl.u32 %v4932, 7
    %v4934 = vsub.s32 1, %v4933
    %v4935 = vrot.slane %v4754, %v4934
    %v4938 = vadd.f32 %v4931, %v4921
    %v4939 = vadd.f32 %v4935, %v4923
    %s4940 = scalar_lea.vmem [#allocation13], 1792
    %v4941 = vld [vmem:[%s4940] sm:$0xff]
    %v4942 = vld [vmem:[%s4940 + $0x8] sm:$0xff]
    %v4943 = vld [vmem:[%s4940 + $0x10] sm:$0xff]
    %v4944 = vld [vmem:[%s4940 + $0x18] sm:$0xff]
    %v4945 = vld [vmem:[%s4940 + $0x20] sm:$0xff]
    %v4946 = vld [vmem:[%s4940 + $0x28] sm:$0xff]
    %v4947 = vld [vmem:[%s4940 + $0x30] sm:$0xff]
    %v4948 = vld [vmem:[%s4940 + $0x38] sm:$0xff]
    %v4949 = vld [vmem:[%s4940 + $0x40] sm:$0xff]
    %v4950 = vld [vmem:[%s4940 + $0x48] sm:$0xff]
    %v4951 = vld [vmem:[%s4940 + $0x50] sm:$0xff]
    %v4952 = vld [vmem:[%s4940 + $0x58] sm:$0xff]
    %v4953 = vld [vmem:[%s4940 + $0x60] sm:$0xff]
    %v4954 = vld [vmem:[%s4940 + $0x68] sm:$0xff]
    %v4955 = vld [vmem:[%s4940 + $0x70] sm:$0xff]
    %v4956 = vld [vmem:[%s4940 + $0x78] sm:$0xff]
    %v4957 = vld [vmem:[%s4940 + $0x80] sm:$0xff]
    %v4958 = vld [vmem:[%s4940 + $0x88] sm:$0xff]
    %v4959 = vld [vmem:[%s4940 + $0x90] sm:$0xff]
    %v4960 = vld [vmem:[%s4940 + $0x98] sm:$0xff]
    %v4961 = vld [vmem:[%s4940 + $0xa0] sm:$0xff]
    %v4962 = vld [vmem:[%s4940 + $0xa8] sm:$0xff]
    %v4963 = vld [vmem:[%s4940 + $0xb0] sm:$0xff]
    %v4964 = vld [vmem:[%s4940 + $0xb8] sm:$0xff]
    %v4965 = vld [vmem:[%s4940 + $0xc0] sm:$0xff]
    %v4966 = vld [vmem:[%s4940 + $0xc8] sm:$0xff]
    %v4967 = vld [vmem:[%s4940 + $0xd0] sm:$0xff]
    %v4968 = vld [vmem:[%s4940 + $0xd8] sm:$0xff]
    %v4969 = vld [vmem:[%s4940 + $0xe0] sm:$0xff]
    %v4970 = vld [vmem:[%s4940 + $0xe8] sm:$0xff]
    %v4971 = vld [vmem:[%s4940 + $0xf0] sm:$0xff]
    %v4972 = vld [vmem:[%s4940 + $0xf8] sm:$0xff]
    %v4975 = vrot.slane %v4850, 4
    %v4976 = vrot.slane %v4851, 4
    %4979 = vmatprep.subr.bf16.mxu0 %v4942
    %4980 = vmatpush1.bf16.msra.mxu0 %v4941
    %4981 = vmatprep.subr.bf16.mxu0 %v4944
    %4982 = vmatpush1.bf16.msra.mxu0 %v4943
    %4983 = vmatprep.subr.bf16.mxu0 %v4946
    %4984 = vmatpush1.bf16.msra.mxu0 %v4945
    %4985 = vmatprep.subr.bf16.mxu0 %v4948
    %4986 = vmatpush1.bf16.msra.mxu0 %v4947
    %4987 = vmatprep.subr.bf16.mxu0 %v4950
    %4988 = vmatpush1.bf16.msra.mxu0 %v4949
    %4989 = vmatprep.subr.bf16.mxu0 %v4952
    %4990 = vmatpush1.bf16.msra.mxu0 %v4951
    %4991 = vmatprep.subr.bf16.mxu0 %v4954
    %4992 = vmatpush1.bf16.msra.mxu0 %v4953
    %4993 = vmatprep.subr.bf16.mxu0 %v4956
    %4994 = vmatpush1.bf16.msra.mxu0 %v4955
    %4995 = vmatprep.subr.bf16.mxu0 %v4958
    %4996 = vmatpush1.bf16.msra.mxu0 %v4957
    %4997 = vmatprep.subr.bf16.mxu0 %v4960
    %4998 = vmatpush1.bf16.msra.mxu0 %v4959
    %4999 = vmatprep.subr.bf16.mxu0 %v4962
    %5000 = vmatpush1.bf16.msra.mxu0 %v4961
    %5001 = vmatprep.subr.bf16.mxu0 %v4964
    %5002 = vmatpush1.bf16.msra.mxu0 %v4963
    %5003 = vmatprep.subr.bf16.mxu0 %v4966
    %5004 = vmatpush1.bf16.msra.mxu0 %v4965
    %5005 = vmatprep.subr.bf16.mxu0 %v4968
    %5006 = vmatpush1.bf16.msra.mxu0 %v4967
    %5007 = vmatprep.subr.bf16.mxu0 %v4970
    %5008 = vmatpush1.bf16.msra.mxu0 %v4969
    %5009 = vmatprep.subr.bf16.mxu0 %v4972
    %5010 = vmatpush1.bf16.msra.mxu0 %v4971
    %5011 = vmatprep.mubr.bf16.mxu0 %v4976
    %5012 = vmatmul.mubr.bf16.gmra.mrb[0].mxu0 %v4975
    %v5013 = vpop.f32.mrb[0].mxu0
    %v5014 = vadd.f32 0.0, %v5013
    %v5015 = vpop.f32.mrb[0].mxu0
    %v5016 = vadd.f32 0.0, %v5015
    %v5017 = vpop.f32.mrb[0].mxu0
    %v5018 = vpop.f32.mrb[0].mxu0
    %5019 = vdwg.mxu0
    %v5020 = vadd.f32 %v4938, %v5014
    %v5021 = vadd.f32 %v4939, %v5016
    %s5022 = scalar_lea.vmem [#allocation13], 2048
    %v5023 = vld [vmem:[%s5022] sm:$0xff]
    %v5024 = vld [vmem:[%s5022 + $0x8] sm:$0xff]
    %v5025 = vld [vmem:[%s5022 + $0x10] sm:$0xff]
    %v5026 = vld [vmem:[%s5022 + $0x18] sm:$0xff]
    %v5027 = vld [vmem:[%s5022 + $0x20] sm:$0xff]
    %v5028 = vld [vmem:[%s5022 + $0x28] sm:$0xff]
    %v5029 = vld [vmem:[%s5022 + $0x30] sm:$0xff]
    %v5030 = vld [vmem:[%s5022 + $0x38] sm:$0xff]
    %v5031 = vld [vmem:[%s5022 + $0x40] sm:$0xff]
    %v5032 = vld [vmem:[%s5022 + $0x48] sm:$0xff]
    %v5033 = vld [vmem:[%s5022 + $0x50] sm:$0xff]
    %v5034 = vld [vmem:[%s5022 + $0x58] sm:$0xff]
    %v5035 = vld [vmem:[%s5022 + $0x60] sm:$0xff]
    %v5036 = vld [vmem:[%s5022 + $0x68] sm:$0xff]
    %v5037 = vld [vmem:[%s5022 + $0x70] sm:$0xff]
    %v5038 = vld [vmem:[%s5022 + $0x78] sm:$0xff]
    %v5039 = vld [vmem:[%s5022 + $0x80] sm:$0xff]
    %v5040 = vld [vmem:[%s5022 + $0x88] sm:$0xff]
    %v5041 = vld [vmem:[%s5022 + $0x90] sm:$0xff]
    %v5042 = vld [vmem:[%s5022 + $0x98] sm:$0xff]
    %v5043 = vld [vmem:[%s5022 + $0xa0] sm:$0xff]
    %v5044 = vld [vmem:[%s5022 + $0xa8] sm:$0xff]
    %v5045 = vld [vmem:[%s5022 + $0xb0] sm:$0xff]
    %v5046 = vld [vmem:[%s5022 + $0xb8] sm:$0xff]
    %v5047 = vld [vmem:[%s5022 + $0xc0] sm:$0xff]
    %v5048 = vld [vmem:[%s5022 + $0xc8] sm:$0xff]
    %v5049 = vld [vmem:[%s5022 + $0xd0] sm:$0xff]
    %v5050 = vld [vmem:[%s5022 + $0xd8] sm:$0xff]
    %v5051 = vld [vmem:[%s5022 + $0xe0] sm:$0xff]
    %v5052 = vld [vmem:[%s5022 + $0xe8] sm:$0xff]
    %v5053 = vld [vmem:[%s5022 + $0xf0] sm:$0xff]
    %v5054 = vld [vmem:[%s5022 + $0xf8] sm:$0xff]
    %5055 = vmatprep.subr.bf16.mxu0 %v5024
    %5056 = vmatpush1.bf16.msra.mxu0 %v5023
    %5057 = vmatprep.subr.bf16.mxu0 %v5026
    %5058 = vmatpush1.bf16.msra.mxu0 %v5025
    %5059 = vmatprep.subr.bf16.mxu0 %v5028
    %5060 = vmatpush1.bf16.msra.mxu0 %v5027
    %5061 = vmatprep.subr.bf16.mxu0 %v5030
    %5062 = vmatpush1.bf16.msra.mxu0 %v5029
    %5063 = vmatprep.subr.bf16.mxu0 %v5032
    %5064 = vmatpush1.bf16.msra.mxu0 %v5031
    %5065 = vmatprep.subr.bf16.mxu0 %v5034
    %5066 = vmatpush1.bf16.msra.mxu0 %v5033
    %5067 = vmatprep.subr.bf16.mxu0 %v5036
    %5068 = vmatpush1.bf16.msra.mxu0 %v5035
    %5069 = vmatprep.subr.bf16.mxu0 %v5038
    %5070 = vmatpush1.bf16.msra.mxu0 %v5037
    %5071 = vmatprep.subr.bf16.mxu0 %v5040
    %5072 = vmatpush1.bf16.msra.mxu0 %v5039
    %5073 = vmatprep.subr.bf16.mxu0 %v5042
    %5074 = vmatpush1.bf16.msra.mxu0 %v5041
    %5075 = vmatprep.subr.bf16.mxu0 %v5044
    %5076 = vmatpush1.bf16.msra.mxu0 %v5043
    %5077 = vmatprep.subr.bf16.mxu0 %v5046
    %5078 = vmatpush1.bf16.msra.mxu0 %v5045
    %5079 = vmatprep.subr.bf16.mxu0 %v5048
    %5080 = vmatpush1.bf16.msra.mxu0 %v5047
    %5081 = vmatprep.subr.bf16.mxu0 %v5050
    %5082 = vmatpush1.bf16.msra.mxu0 %v5049
    %5083 = vmatprep.subr.bf16.mxu0 %v5052
    %5084 = vmatpush1.bf16.msra.mxu0 %v5051
    %5085 = vmatprep.subr.bf16.mxu0 %v5054
    %5086 = vmatpush1.bf16.msra.mxu0 %v5053
    %5087 = vmatprep.mubr.bf16.mxu0 %v4853
    %5088 = vmatmul.mubr.bf16.gmra.mrb[0].mxu0 %v4852
    %v5089 = vpop.f32.mrb[0].mxu0
    %v5090 = vadd.f32 0.0, %v5089
    %v5091 = vpop.f32.mrb[0].mxu0
    %v5092 = vadd.f32 0.0, %v5091
    %v5093 = vpop.f32.mrb[0].mxu0
    %v5094 = vpop.f32.mrb[0].mxu0
    %5095 = vdwg.mxu0
    %v5096 = vadd.f32 %v5020, %v5090
    %v5097 = vadd.f32 %v5021, %v5092
    %v5098 = vmax.f32 %v5096, 0.0
    %v5099 = vmax.f32 %v5097, 0.0
    %s5100 = sshll.u32 %s3307, 4
    %5101 = dma.done %s562, %s5100
    %s5102 = scalar_lea.vmem [#allocation2], 32
    %v5103 = vld [vmem:[%s5102] ss:$8 sm:$0x3]
    %v5104 = vld [vmem:[#allocation12] sm:$0xff]
    %v5105 = vld [vmem:[#allocation12 + $0x8] sm:$0xff]
    %v5106 = vld [vmem:[#allocation12 + $0x10] sm:$0xff]
    %v5108 = vsel %vm4059, %v5104, 0
    %v5111 = vsel %vm4059, %v5105, 0
    %v5114 = vsel %vm4059, %v5106, 0
    %5116 = vmatprep.subr.mxu0 %v5099
    %5117 = vmatpush1.msra.mxu0 %v5098
    %5118 = vmatprep.subr.mxu0 0.0
    %5119 = vmatpush1.msra.mxu0 0.0
    %5120 = vmatprep.subr.mxu0 0.0
    %5121 = vmatpush1.msra.mxu0 0.0
    %5122 = vmatprep.subr.mxu0 0.0
    %5123 = vmatpush1.msra.mxu0 0.0
    %5124 = vmatprep.subr.mxu0 0.0
    %5125 = vmatpush1.msra.mxu0 0.0
    %5126 = vmatprep.subr.mxu0 0.0
    %5127 = vmatpush1.msra.mxu0 0.0
    %5128 = vmatprep.subr.mxu0 0.0
    %5129 = vmatpush1.msra.mxu0 0.0
    %5130 = vmatprep.subr.mxu0 0.0
    %5131 = vmatpush1.msra.mxu0 0.0
    %5132 = vmatprep.subr.mxu0 0.0
    %5133 = vmatpush1.msra.mxu0 0.0
    %5134 = vmatprep.subr.mxu0 0.0
    %5135 = vmatpush1.msra.mxu0 0.0
    %5136 = vmatprep.subr.mxu0 0.0
    %5137 = vmatpush1.msra.mxu0 0.0
    %5138 = vmatprep.subr.mxu0 0.0
    %5139 = vmatpush1.msra.mxu0 0.0
    %5140 = vmatprep.subr.mxu0 0.0
    %5141 = vmatpush1.msra.mxu0 0.0
    %5142 = vmatprep.subr.mxu0 0.0
    %5143 = vmatpush1.msra.mxu0 0.0
    %5144 = vmatprep.subr.mxu0 0.0
    %5145 = vmatpush1.msra.mxu0 0.0
    %5146 = vmatprep.subr.mxu0 0.0
    %5147 = vmatpush1.msra.mxu0 0.0
    %5148 = vmatprep.subr.mxu0 0.0
    %5149 = vmatpush1.msra.mxu0 0.0
    %5150 = vmatprep.subr.mxu0 0.0
    %5151 = vmatpush1.msra.mxu0 0.0
    %5152 = vmatprep.subr.mxu0 0.0
    %5153 = vmatpush1.msra.mxu0 0.0
    %5154 = vmatprep.subr.mxu0 0.0
    %5155 = vmatpush1.msra.mxu0 0.0
    %5156 = vmatprep.subr.mxu0 0.0
    %5157 = vmatpush1.msra.mxu0 0.0
    %5158 = vmatprep.subr.mxu0 0.0
    %5159 = vmatpush1.msra.mxu0 0.0
    %5160 = vmatprep.subr.mxu0 0.0
    %5161 = vmatpush1.msra.mxu0 0.0
    %5162 = vmatprep.subr.mxu0 0.0
    %5163 = vmatpush1.msra.mxu0 0.0
    %5164 = vmatprep.subr.mxu0 0.0
    %5165 = vmatpush1.msra.mxu0 0.0
    %5166 = vmatprep.subr.mxu0 0.0
    %5167 = vmatpush1.msra.mxu0 0.0
    %5168 = vmatprep.subr.mxu0 0.0
    %5169 = vmatpush1.msra.mxu0 0.0
    %5170 = vmatprep.subr.mxu0 0.0
    %5171 = vmatpush1.msra.mxu0 0.0
    %5172 = vmatprep.subr.mxu0 0.0
    %5173 = vmatpush1.msra.mxu0 0.0
    %5174 = vmatprep.subr.mxu0 0.0
    %5175 = vmatpush1.msra.mxu0 0.0
    %5176 = vmatprep.subr.mxu0 0.0
    %5177 = vmatpush1.msra.mxu0 0.0
    %5178 = vmatprep.subr.mxu0 0.0
    %5179 = vmatpush1.msra.mxu0 0.0
    %5180 = vmatprep.mubr.f32.mxu0 0.0
    %5181 = vmatmul.mubr.f32.gmra.mrb[0].mxu0 %v5108
    %v5182 = vpop.f32.mrb[0].mxu0
    %v5183 = vadd.f32 0.0, %v5182
    %v5184 = vpop.f32.mrb[0].mxu0
    %v5185 = vadd.f32 0.0, %v5184
    %5186 = vmatprep.mubr.f32.mxu0 0.0
    %5187 = vmatmul.mubr.f32.gmra.mrb[0].mxu0 %v5111
    %v5188 = vpop.f32.mrb[0].mxu0
    %v5189 = vadd.f32 0.0, %v5188
    %v5190 = vpop.f32.mrb[0].mxu0
    %v5191 = vadd.f32 0.0, %v5190
    %5192 = vmatprep.mubr.f32.mxu0 0.0
    %5193 = vmatmul.mubr.f32.gmra.mrb[0].mxu0 %v5114
    %v5194 = vpop.f32.mrb[0].mxu0
    %v5195 = vadd.f32 0.0, %v5194
    %v5196 = vpop.f32.mrb[0].mxu0
    %v5197 = vadd.f32 0.0, %v5196
    %5198 = vdwg.mxu0
    %v5199 = vpack.c.bf16 %v5189, %v5183
    %v5200 = vpack.c.bf16 %v5191, %v5185
    %v5201 = vpack.c.bf16 %v5195, %v5195
    %v5202 = vpack.c.bf16 %v5197, %v5197
    %v5203 = vld [vmem:[%s561] sm:$0xff]
    %v5204 = vld [vmem:[%s561 + $0x8] sm:$0xff]
    %v5205 = vld [vmem:[%s561 + $0x10] sm:$0xff]
    %v5206 = vld [vmem:[%s561 + $0x18] sm:$0xff]
    %v5207 = vld [vmem:[%s561 + $0x20] sm:$0xff]
    %v5208 = vld [vmem:[%s561 + $0x28] sm:$0xff]
    %v5209 = vld [vmem:[%s561 + $0x30] sm:$0xff]
    %v5210 = vld [vmem:[%s561 + $0x38] sm:$0xff]
    %v5211 = vld [vmem:[%s561 + $0x40] sm:$0xff]
    %v5212 = vld [vmem:[%s561 + $0x48] sm:$0xff]
    %v5213 = vld [vmem:[%s561 + $0x50] sm:$0xff]
    %v5214 = vld [vmem:[%s561 + $0x58] sm:$0xff]
    %v5215 = vld [vmem:[%s561 + $0x60] sm:$0xff]
    %v5216 = vld [vmem:[%s561 + $0x68] sm:$0xff]
    %v5217 = vld [vmem:[%s561 + $0x70] sm:$0xff]
    %v5218 = vld [vmem:[%s561 + $0x78] sm:$0xff]
    %v5219 = vld [vmem:[%s561 + $0x80] sm:$0xff]
    %v5220 = vld [vmem:[%s561 + $0x88] sm:$0xff]
    %v5221 = vld [vmem:[%s561 + $0x90] sm:$0xff]
    %v5222 = vld [vmem:[%s561 + $0x98] sm:$0xff]
    %v5223 = vld [vmem:[%s561 + $0xa0] sm:$0xff]
    %v5224 = vld [vmem:[%s561 + $0xa8] sm:$0xff]
    %v5225 = vld [vmem:[%s561 + $0xb0] sm:$0xff]
    %v5226 = vld [vmem:[%s561 + $0xb8] sm:$0xff]
    %v5227 = vld [vmem:[%s561 + $0xc0] sm:$0xff]
    %v5228 = vld [vmem:[%s561 + $0xc8] sm:$0xff]
    %v5229 = vld [vmem:[%s561 + $0xd0] sm:$0xff]
    %v5230 = vld [vmem:[%s561 + $0xd8] sm:$0xff]
    %v5231 = vld [vmem:[%s561 + $0xe0] sm:$0xff]
    %v5232 = vld [vmem:[%s561 + $0xe8] sm:$0xff]
    %v5233 = vld [vmem:[%s561 + $0xf0] sm:$0xff]
    %v5234 = vld [vmem:[%s561 + $0xf8] sm:$0xff]
    %5235 = vmatprep.subr.bf16.mxu0 %v5204
    %5236 = vmatpush1.bf16.msra.mxu0 %v5203
    %5237 = vmatprep.subr.bf16.mxu0 %v5206
    %5238 = vmatpush1.bf16.msra.mxu0 %v5205
    %5239 = vmatprep.subr.bf16.mxu0 %v5208
    %5240 = vmatpush1.bf16.msra.mxu0 %v5207
    %5241 = vmatprep.subr.bf16.mxu0 %v5210
    %5242 = vmatpush1.bf16.msra.mxu0 %v5209
    %5243 = vmatprep.subr.bf16.mxu0 %v5212
    %5244 = vmatpush1.bf16.msra.mxu0 %v5211
    %5245 = vmatprep.subr.bf16.mxu0 %v5214
    %5246 = vmatpush1.bf16.msra.mxu0 %v5213
    %5247 = vmatprep.subr.bf16.mxu0 %v5216
    %5248 = vmatpush1.bf16.msra.mxu0 %v5215
    %5249 = vmatprep.subr.bf16.mxu0 %v5218
    %5250 = vmatpush1.bf16.msra.mxu0 %v5217
    %5251 = vmatprep.subr.bf16.mxu0 %v5220
    %5252 = vmatpush1.bf16.msra.mxu0 %v5219
    %5253 = vmatprep.subr.bf16.mxu0 %v5222
    %5254 = vmatpush1.bf16.msra.mxu0 %v5221
    %5255 = vmatprep.subr.bf16.mxu0 %v5224
    %5256 = vmatpush1.bf16.msra.mxu0 %v5223
    %5257 = vmatprep.subr.bf16.mxu0 %v5226
    %5258 = vmatpush1.bf16.msra.mxu0 %v5225
    %5259 = vmatprep.subr.bf16.mxu0 %v5228
    %5260 = vmatpush1.bf16.msra.mxu0 %v5227
    %5261 = vmatprep.subr.bf16.mxu0 %v5230
    %5262 = vmatpush1.bf16.msra.mxu0 %v5229
    %5263 = vmatprep.subr.bf16.mxu0 %v5232
    %5264 = vmatpush1.bf16.msra.mxu0 %v5231
    %5265 = vmatprep.subr.bf16.mxu0 %v5234
    %5266 = vmatpush1.bf16.msra.mxu0 %v5233
    %5267 = vmatprep.mubr.bf16.mxu0 %v5200
    %5268 = vmatmul.mubr.bf16.gmra.mrb[0].mxu0 %v5199
    %v5269 = vpop.f32.mrb[0].mxu0
    %v5270 = vadd.f32 0.0, %v5269
    %v5271 = vpop.f32.mrb[0].mxu0
    %v5272 = vadd.f32 0.0, %v5271
    %v5273 = vpop.f32.mrb[0].mxu0
    %v5274 = vpop.f32.mrb[0].mxu0
    %5275 = vdwg.mxu0
    %v5277 = vlaneseq
    %v5278 = vshrl.u32 %v5277, 7
    %v5279 = vsub.s32 0, %v5278
    %v5280 = vrot.slane %v5103, %v5279
    %v5281 = vlaneseq
    %v5282 = vshrl.u32 %v5281, 7
    %v5283 = vsub.s32 1, %v5282
    %v5284 = vrot.slane %v5103, %v5283
    %v5287 = vadd.f32 %v5280, %v5270
    %v5288 = vadd.f32 %v5284, %v5272
    %s5289 = scalar_lea.vmem [#allocation13], 2560
    %v5290 = vld [vmem:[%s5289] sm:$0xff]
    %v5291 = vld [vmem:[%s5289 + $0x8] sm:$0xff]
    %v5292 = vld [vmem:[%s5289 + $0x10] sm:$0xff]
    %v5293 = vld [vmem:[%s5289 + $0x18] sm:$0xff]
    %v5294 = vld [vmem:[%s5289 + $0x20] sm:$0xff]
    %v5295 = vld [vmem:[%s5289 + $0x28] sm:$0xff]
    %v5296 = vld [vmem:[%s5289 + $0x30] sm:$0xff]
    %v5297 = vld [vmem:[%s5289 + $0x38] sm:$0xff]
    %v5298 = vld [vmem:[%s5289 + $0x40] sm:$0xff]
    %v5299 = vld [vmem:[%s5289 + $0x48] sm:$0xff]
    %v5300 = vld [vmem:[%s5289 + $0x50] sm:$0xff]
    %v5301 = vld [vmem:[%s5289 + $0x58] sm:$0xff]
    %v5302 = vld [vmem:[%s5289 + $0x60] sm:$0xff]
    %v5303 = vld [vmem:[%s5289 + $0x68] sm:$0xff]
    %v5304 = vld [vmem:[%s5289 + $0x70] sm:$0xff]
    %v5305 = vld [vmem:[%s5289 + $0x78] sm:$0xff]
    %v5306 = vld [vmem:[%s5289 + $0x80] sm:$0xff]
    %v5307 = vld [vmem:[%s5289 + $0x88] sm:$0xff]
    %v5308 = vld [vmem:[%s5289 + $0x90] sm:$0xff]
    %v5309 = vld [vmem:[%s5289 + $0x98] sm:$0xff]
    %v5310 = vld [vmem:[%s5289 + $0xa0] sm:$0xff]
    %v5311 = vld [vmem:[%s5289 + $0xa8] sm:$0xff]
    %v5312 = vld [vmem:[%s5289 + $0xb0] sm:$0xff]
    %v5313 = vld [vmem:[%s5289 + $0xb8] sm:$0xff]
    %v5314 = vld [vmem:[%s5289 + $0xc0] sm:$0xff]
    %v5315 = vld [vmem:[%s5289 + $0xc8] sm:$0xff]
    %v5316 = vld [vmem:[%s5289 + $0xd0] sm:$0xff]
    %v5317 = vld [vmem:[%s5289 + $0xd8] sm:$0xff]
    %v5318 = vld [vmem:[%s5289 + $0xe0] sm:$0xff]
    %v5319 = vld [vmem:[%s5289 + $0xe8] sm:$0xff]
    %v5320 = vld [vmem:[%s5289 + $0xf0] sm:$0xff]
    %v5321 = vld [vmem:[%s5289 + $0xf8] sm:$0xff]
    %v5324 = vrot.slane %v5199, 4
    %v5325 = vrot.slane %v5200, 4
    %5328 = vmatprep.subr.bf16.mxu0 %v5291
    %5329 = vmatpush1.bf16.msra.mxu0 %v5290
    %5330 = vmatprep.subr.bf16.mxu0 %v5293
    %5331 = vmatpush1.bf16.msra.mxu0 %v5292
    %5332 = vmatprep.subr.bf16.mxu0 %v5295
    %5333 = vmatpush1.bf16.msra.mxu0 %v5294
    %5334 = vmatprep.subr.bf16.mxu0 %v5297
    %5335 = vmatpush1.bf16.msra.mxu0 %v5296
    %5336 = vmatprep.subr.bf16.mxu0 %v5299
    %5337 = vmatpush1.bf16.msra.mxu0 %v5298
    %5338 = vmatprep.subr.bf16.mxu0 %v5301
    %5339 = vmatpush1.bf16.msra.mxu0 %v5300
    %5340 = vmatprep.subr.bf16.mxu0 %v5303
    %5341 = vmatpush1.bf16.msra.mxu0 %v5302
    %5342 = vmatprep.subr.bf16.mxu0 %v5305
    %5343 = vmatpush1.bf16.msra.mxu0 %v5304
    %5344 = vmatprep.subr.bf16.mxu0 %v5307
    %5345 = vmatpush1.bf16.msra.mxu0 %v5306
    %5346 = vmatprep.subr.bf16.mxu0 %v5309
    %5347 = vmatpush1.bf16.msra.mxu0 %v5308
    %5348 = vmatprep.subr.bf16.mxu0 %v5311
    %5349 = vmatpush1.bf16.msra.mxu0 %v5310
    %5350 = vmatprep.subr.bf16.mxu0 %v5313
    %5351 = vmatpush1.bf16.msra.mxu0 %v5312
    %5352 = vmatprep.subr.bf16.mxu0 %v5315
    %5353 = vmatpush1.bf16.msra.mxu0 %v5314
    %5354 = vmatprep.subr.bf16.mxu0 %v5317
    %5355 = vmatpush1.bf16.msra.mxu0 %v5316
    %5356 = vmatprep.subr.bf16.mxu0 %v5319
    %5357 = vmatpush1.bf16.msra.mxu0 %v5318
    %5358 = vmatprep.subr.bf16.mxu0 %v5321
    %5359 = vmatpush1.bf16.msra.mxu0 %v5320
    %5360 = vmatprep.mubr.bf16.mxu0 %v5325
    %5361 = vmatmul.mubr.bf16.gmra.mrb[0].mxu0 %v5324
    %v5362 = vpop.f32.mrb[0].mxu0
    %v5363 = vadd.f32 0.0, %v5362
    %v5364 = vpop.f32.mrb[0].mxu0
    %v5365 = vadd.f32 0.0, %v5364
    %v5366 = vpop.f32.mrb[0].mxu0
    %v5367 = vpop.f32.mrb[0].mxu0
    %5368 = vdwg.mxu0
    %v5369 = vadd.f32 %v5287, %v5363
    %v5370 = vadd.f32 %v5288, %v5365
    %s5371 = scalar_lea.vmem [#allocation13], 2816
    %v5372 = vld [vmem:[%s5371] sm:$0xff]
    %v5373 = vld [vmem:[%s5371 + $0x8] sm:$0xff]
    %v5374 = vld [vmem:[%s5371 + $0x10] sm:$0xff]
    %v5375 = vld [vmem:[%s5371 + $0x18] sm:$0xff]
    %v5376 = vld [vmem:[%s5371 + $0x20] sm:$0xff]
    %v5377 = vld [vmem:[%s5371 + $0x28] sm:$0xff]
    %v5378 = vld [vmem:[%s5371 + $0x30] sm:$0xff]
    %v5379 = vld [vmem:[%s5371 + $0x38] sm:$0xff]
    %v5380 = vld [vmem:[%s5371 + $0x40] sm:$0xff]
    %v5381 = vld [vmem:[%s5371 + $0x48] sm:$0xff]
    %v5382 = vld [vmem:[%s5371 + $0x50] sm:$0xff]
    %v5383 = vld [vmem:[%s5371 + $0x58] sm:$0xff]
    %v5384 = vld [vmem:[%s5371 + $0x60] sm:$0xff]
    %v5385 = vld [vmem:[%s5371 + $0x68] sm:$0xff]
    %v5386 = vld [vmem:[%s5371 + $0x70] sm:$0xff]
    %v5387 = vld [vmem:[%s5371 + $0x78] sm:$0xff]
    %v5388 = vld [vmem:[%s5371 + $0x80] sm:$0xff]
    %v5389 = vld [vmem:[%s5371 + $0x88] sm:$0xff]
    %v5390 = vld [vmem:[%s5371 + $0x90] sm:$0xff]
    %v5391 = vld [vmem:[%s5371 + $0x98] sm:$0xff]
    %v5392 = vld [vmem:[%s5371 + $0xa0] sm:$0xff]
    %v5393 = vld [vmem:[%s5371 + $0xa8] sm:$0xff]
    %v5394 = vld [vmem:[%s5371 + $0xb0] sm:$0xff]
    %v5395 = vld [vmem:[%s5371 + $0xb8] sm:$0xff]
    %v5396 = vld [vmem:[%s5371 + $0xc0] sm:$0xff]
    %v5397 = vld [vmem:[%s5371 + $0xc8] sm:$0xff]
    %v5398 = vld [vmem:[%s5371 + $0xd0] sm:$0xff]
    %v5399 = vld [vmem:[%s5371 + $0xd8] sm:$0xff]
    %v5400 = vld [vmem:[%s5371 + $0xe0] sm:$0xff]
    %v5401 = vld [vmem:[%s5371 + $0xe8] sm:$0xff]
    %v5402 = vld [vmem:[%s5371 + $0xf0] sm:$0xff]
    %v5403 = vld [vmem:[%s5371 + $0xf8] sm:$0xff]
    %5404 = vmatprep.subr.bf16.mxu0 %v5373
    %5405 = vmatpush1.bf16.msra.mxu0 %v5372
    %5406 = vmatprep.subr.bf16.mxu0 %v5375
    %5407 = vmatpush1.bf16.msra.mxu0 %v5374
    %5408 = vmatprep.subr.bf16.mxu0 %v5377
    %5409 = vmatpush1.bf16.msra.mxu0 %v5376
    %5410 = vmatprep.subr.bf16.mxu0 %v5379
    %5411 = vmatpush1.bf16.msra.mxu0 %v5378
    %5412 = vmatprep.subr.bf16.mxu0 %v5381
    %5413 = vmatpush1.bf16.msra.mxu0 %v5380
    %5414 = vmatprep.subr.bf16.mxu0 %v5383
    %5415 = vmatpush1.bf16.msra.mxu0 %v5382
    %5416 = vmatprep.subr.bf16.mxu0 %v5385
    %5417 = vmatpush1.bf16.msra.mxu0 %v5384
    %5418 = vmatprep.subr.bf16.mxu0 %v5387
    %5419 = vmatpush1.bf16.msra.mxu0 %v5386
    %5420 = vmatprep.subr.bf16.mxu0 %v5389
    %5421 = vmatpush1.bf16.msra.mxu0 %v5388
    %5422 = vmatprep.subr.bf16.mxu0 %v5391
    %5423 = vmatpush1.bf16.msra.mxu0 %v5390
    %5424 = vmatprep.subr.bf16.mxu0 %v5393
    %5425 = vmatpush1.bf16.msra.mxu0 %v5392
    %5426 = vmatprep.subr.bf16.mxu0 %v5395
    %5427 = vmatpush1.bf16.msra.mxu0 %v5394
    %5428 = vmatprep.subr.bf16.mxu0 %v5397
    %5429 = vmatpush1.bf16.msra.mxu0 %v5396
    %5430 = vmatprep.subr.bf16.mxu0 %v5399
    %5431 = vmatpush1.bf16.msra.mxu0 %v5398
    %5432 = vmatprep.subr.bf16.mxu0 %v5401
    %5433 = vmatpush1.bf16.msra.mxu0 %v5400
    %5434 = vmatprep.subr.bf16.mxu0 %v5403
    %5435 = vmatpush1.bf16.msra.mxu0 %v5402
    %5436 = vmatprep.mubr.bf16.mxu0 %v5202
    %5437 = vmatmul.mubr.bf16.gmra.mrb[0].mxu0 %v5201
    %v5438 = vpop.f32.mrb[0].mxu0
    %v5439 = vadd.f32 0.0, %v5438
    %v5440 = vpop.f32.mrb[0].mxu0
    %v5441 = vadd.f32 0.0, %v5440
    %v5442 = vpop.f32.mrb[0].mxu0
    %v5443 = vpop.f32.mrb[0].mxu0
    %5444 = vdwg.mxu0
    %v5445 = vadd.f32 %v5369, %v5439
    %v5446 = vadd.f32 %v5370, %v5441
    %v5447 = vmax.f32 %v5445, 0.0
    %v5448 = vmax.f32 %v5446, 0.0
    %s5449 = sshll.u32 %s3307, 4
    %5450 = dma.done %s599, %s5449
    %s5451 = scalar_lea.vmem [#allocation2], 33
    %v5452 = vld [vmem:[%s5451] ss:$8 sm:$0x3]
    %v5453 = vld [vmem:[#allocation12] sm:$0xff]
    %v5454 = vld [vmem:[#allocation12 + $0x8] sm:$0xff]
    %v5455 = vld [vmem:[#allocation12 + $0x10] sm:$0xff]
    %v5457 = vsel %vm4059, %v5453, 0
    %v5460 = vsel %vm4059, %v5454, 0
    %v5463 = vsel %vm4059, %v5455, 0
    %5465 = vmatprep.subr.mxu0 %v5448
    %5466 = vmatpush1.msra.mxu0 %v5447
    %5467 = vmatprep.subr.mxu0 0.0
    %5468 = vmatpush1.msra.mxu0 0.0
    %5469 = vmatprep.subr.mxu0 0.0
    %5470 = vmatpush1.msra.mxu0 0.0
    %5471 = vmatprep.subr.mxu0 0.0
    %5472 = vmatpush1.msra.mxu0 0.0
    %5473 = vmatprep.subr.mxu0 0.0
    %5474 = vmatpush1.msra.mxu0 0.0
    %5475 = vmatprep.subr.mxu0 0.0
    %5476 = vmatpush1.msra.mxu0 0.0
    %5477 = vmatprep.subr.mxu0 0.0
    %5478 = vmatpush1.msra.mxu0 0.0
    %5479 = vmatprep.subr.mxu0 0.0
    %5480 = vmatpush1.msra.mxu0 0.0
    %5481 = vmatprep.subr.mxu0 0.0
    %5482 = vmatpush1.msra.mxu0 0.0
    %5483 = vmatprep.subr.mxu0 0.0
    %5484 = vmatpush1.msra.mxu0 0.0
    %5485 = vmatprep.subr.mxu0 0.0
    %5486 = vmatpush1.msra.mxu0 0.0
    %5487 = vmatprep.subr.mxu0 0.0
    %5488 = vmatpush1.msra.mxu0 0.0
    %5489 = vmatprep.subr.mxu0 0.0
    %5490 = vmatpush1.msra.mxu0 0.0
    %5491 = vmatprep.subr.mxu0 0.0
    %5492 = vmatpush1.msra.mxu0 0.0
    %5493 = vmatprep.subr.mxu0 0.0
    %5494 = vmatpush1.msra.mxu0 0.0
    %5495 = vmatprep.subr.mxu0 0.0
    %5496 = vmatpush1.msra.mxu0 0.0
    %5497 = vmatprep.subr.mxu0 0.0
    %5498 = vmatpush1.msra.mxu0 0.0
    %5499 = vmatprep.subr.mxu0 0.0
    %5500 = vmatpush1.msra.mxu0 0.0
    %5501 = vmatprep.subr.mxu0 0.0
    %5502 = vmatpush1.msra.mxu0 0.0
    %5503 = vmatprep.subr.mxu0 0.0
    %5504 = vmatpush1.msra.mxu0 0.0
    %5505 = vmatprep.subr.mxu0 0.0
    %5506 = vmatpush1.msra.mxu0 0.0
    %5507 = vmatprep.subr.mxu0 0.0
    %5508 = vmatpush1.msra.mxu0 0.0
    %5509 = vmatprep.subr.mxu0 0.0
    %5510 = vmatpush1.msra.mxu0 0.0
    %5511 = vmatprep.subr.mxu0 0.0
    %5512 = vmatpush1.msra.mxu0 0.0
    %5513 = vmatprep.subr.mxu0 0.0
    %5514 = vmatpush1.msra.mxu0 0.0
    %5515 = vmatprep.subr.mxu0 0.0
    %5516 = vmatpush1.msra.mxu0 0.0
    %5517 = vmatprep.subr.mxu0 0.0
    %5518 = vmatpush1.msra.mxu0 0.0
    %5519 = vmatprep.subr.mxu0 0.0
    %5520 = vmatpush1.msra.mxu0 0.0
    %5521 = vmatprep.subr.mxu0 0.0
    %5522 = vmatpush1.msra.mxu0 0.0
    %5523 = vmatprep.subr.mxu0 0.0
    %5524 = vmatpush1.msra.mxu0 0.0
    %5525 = vmatprep.subr.mxu0 0.0
    %5526 = vmatpush1.msra.mxu0 0.0
    %5527 = vmatprep.subr.mxu0 0.0
    %5528 = vmatpush1.msra.mxu0 0.0
    %5529 = vmatprep.mubr.f32.mxu0 0.0
    %5530 = vmatmul.mubr.f32.gmra.mrb[0].mxu0 %v5457
    %v5531 = vpop.f32.mrb[0].mxu0
    %v5532 = vadd.f32 0.0, %v5531
    %v5533 = vpop.f32.mrb[0].mxu0
    %v5534 = vadd.f32 0.0, %v5533
    %5535 = vmatprep.mubr.f32.mxu0 0.0
    %5536 = vmatmul.mubr.f32.gmra.mrb[0].mxu0 %v5460
    %v5537 = vpop.f32.mrb[0].mxu0
    %v5538 = vadd.f32 0.0, %v5537
    %v5539 = vpop.f32.mrb[0].mxu0
    %v5540 = vadd.f32 0.0, %v5539
    %5541 = vmatprep.mubr.f32.mxu0 0.0
    %5542 = vmatmul.mubr.f32.gmra.mrb[0].mxu0 %v5463
    %v5543 = vpop.f32.mrb[0].mxu0
    %v5544 = vadd.f32 0.0, %v5543
    %v5545 = vpop.f32.mrb[0].mxu0
    %v5546 = vadd.f32 0.0, %v5545
    %5547 = vdwg.mxu0
    %v5548 = vpack.c.bf16 %v5538, %v5532
    %v5549 = vpack.c.bf16 %v5540, %v5534
    %v5550 = vpack.c.bf16 %v5544, %v5544
    %v5551 = vpack.c.bf16 %v5546, %v5546
    %v5552 = vld [vmem:[%s598] sm:$0xff]
    %v5553 = vld [vmem:[%s598 + $0x8] sm:$0xff]
    %v5554 = vld [vmem:[%s598 + $0x10] sm:$0xff]
    %v5555 = vld [vmem:[%s598 + $0x18] sm:$0xff]
    %v5556 = vld [vmem:[%s598 + $0x20] sm:$0xff]
    %v5557 = vld [vmem:[%s598 + $0x28] sm:$0xff]
    %v5558 = vld [vmem:[%s598 + $0x30] sm:$0xff]
    %v5559 = vld [vmem:[%s598 + $0x38] sm:$0xff]
    %v5560 = vld [vmem:[%s598 + $0x40] sm:$0xff]
    %v5561 = vld [vmem:[%s598 + $0x48] sm:$0xff]
    %v5562 = vld [vmem:[%s598 + $0x50] sm:$0xff]
    %v5563 = vld [vmem:[%s598 + $0x58] sm:$0xff]
    %v5564 = vld [vmem:[%s598 + $0x60] sm:$0xff]
    %v5565 = vld [vmem:[%s598 + $0x68] sm:$0xff]
    %v5566 = vld [vmem:[%s598 + $0x70] sm:$0xff]
    %v5567 = vld [vmem:[%s598 + $0x78] sm:$0xff]
    %v5568 = vld [vmem:[%s598 + $0x80] sm:$0xff]
    %v5569 = vld [vmem:[%s598 + $0x88] sm:$0xff]
    %v5570 = vld [vmem:[%s598 + $0x90] sm:$0xff]
    %v5571 = vld [vmem:[%s598 + $0x98] sm:$0xff]
    %v5572 = vld [vmem:[%s598 + $0xa0] sm:$0xff]
    %v5573 = vld [vmem:[%s598 + $0xa8] sm:$0xff]
    %v5574 = vld [vmem:[%s598 + $0xb0] sm:$0xff]
    %v5575 = vld [vmem:[%s598 + $0xb8] sm:$0xff]
    %v5576 = vld [vmem:[%s598 + $0xc0] sm:$0xff]
    %v5577 = vld [vmem:[%s598 + $0xc8] sm:$0xff]
    %v5578 = vld [vmem:[%s598 + $0xd0] sm:$0xff]
    %v5579 = vld [vmem:[%s598 + $0xd8] sm:$0xff]
    %v5580 = vld [vmem:[%s598 + $0xe0] sm:$0xff]
    %v5581 = vld [vmem:[%s598 + $0xe8] sm:$0xff]
    %v5582 = vld [vmem:[%s598 + $0xf0] sm:$0xff]
    %v5583 = vld [vmem:[%s598 + $0xf8] sm:$0xff]
    %5584 = vmatprep.subr.bf16.mxu0 %v5553
    %5585 = vmatpush1.bf16.msra.mxu0 %v5552
    %5586 = vmatprep.subr.bf16.mxu0 %v5555
    %5587 = vmatpush1.bf16.msra.mxu0 %v5554
    %5588 = vmatprep.subr.bf16.mxu0 %v5557
    %5589 = vmatpush1.bf16.msra.mxu0 %v5556
    %5590 = vmatprep.subr.bf16.mxu0 %v5559
    %5591 = vmatpush1.bf16.msra.mxu0 %v5558
    %5592 = vmatprep.subr.bf16.mxu0 %v5561
    %5593 = vmatpush1.bf16.msra.mxu0 %v5560
    %5594 = vmatprep.subr.bf16.mxu0 %v5563
    %5595 = vmatpush1.bf16.msra.mxu0 %v5562
    %5596 = vmatprep.subr.bf16.mxu0 %v5565
    %5597 = vmatpush1.bf16.msra.mxu0 %v5564
    %5598 = vmatprep.subr.bf16.mxu0 %v5567
    %5599 = vmatpush1.bf16.msra.mxu0 %v5566
    %5600 = vmatprep.subr.bf16.mxu0 %v5569
    %5601 = vmatpush1.bf16.msra.mxu0 %v5568
    %5602 = vmatprep.subr.bf16.mxu0 %v5571
    %5603 = vmatpush1.bf16.msra.mxu0 %v5570
    %5604 = vmatprep.subr.bf16.mxu0 %v5573
    %5605 = vmatpush1.bf16.msra.mxu0 %v5572
    %5606 = vmatprep.subr.bf16.mxu0 %v5575
    %5607 = vmatpush1.bf16.msra.mxu0 %v5574
    %5608 = vmatprep.subr.bf16.mxu0 %v5577
    %5609 = vmatpush1.bf16.msra.mxu0 %v5576
    %5610 = vmatprep.subr.bf16.mxu0 %v5579
    %5611 = vmatpush1.bf16.msra.mxu0 %v5578
    %5612 = vmatprep.subr.bf16.mxu0 %v5581
    %5613 = vmatpush1.bf16.msra.mxu0 %v5580
    %5614 = vmatprep.subr.bf16.mxu0 %v5583
    %5615 = vmatpush1.bf16.msra.mxu0 %v5582
    %5616 = vmatprep.mubr.bf16.mxu0 %v5549
    %5617 = vmatmul.mubr.bf16.gmra.mrb[0].mxu0 %v5548
    %v5618 = vpop.f32.mrb[0].mxu0
    %v5619 = vadd.f32 0.0, %v5618
    %v5620 = vpop.f32.mrb[0].mxu0
    %v5621 = vadd.f32 0.0, %v5620
    %v5622 = vpop.f32.mrb[0].mxu0
    %v5623 = vpop.f32.mrb[0].mxu0
    %5624 = vdwg.mxu0
    %v5626 = vlaneseq
    %v5627 = vshrl.u32 %v5626, 7
    %v5628 = vsub.s32 0, %v5627
    %v5629 = vrot.slane %v5452, %v5628
    %v5630 = vlaneseq
    %v5631 = vshrl.u32 %v5630, 7
    %v5632 = vsub.s32 1, %v5631
    %v5633 = vrot.slane %v5452, %v5632
    %v5636 = vadd.f32 %v5629, %v5619
    %v5637 = vadd.f32 %v5633, %v5621
    %s5638 = scalar_lea.vmem [#allocation13], 3328
    %v5639 = vld [vmem:[%s5638] sm:$0xff]
    %v5640 = vld [vmem:[%s5638 + $0x8] sm:$0xff]
    %v5641 = vld [vmem:[%s5638 + $0x10] sm:$0xff]
    %v5642 = vld [vmem:[%s5638 + $0x18] sm:$0xff]
    %v5643 = vld [vmem:[%s5638 + $0x20] sm:$0xff]
    %v5644 = vld [vmem:[%s5638 + $0x28] sm:$0xff]
    %v5645 = vld [vmem:[%s5638 + $0x30] sm:$0xff]
    %v5646 = vld [vmem:[%s5638 + $0x38] sm:$0xff]
    %v5647 = vld [vmem:[%s5638 + $0x40] sm:$0xff]
    %v5648 = vld [vmem:[%s5638 + $0x48] sm:$0xff]
    %v5649 = vld [vmem:[%s5638 + $0x50] sm:$0xff]
    %v5650 = vld [vmem:[%s5638 + $0x58] sm:$0xff]
    %v5651 = vld [vmem:[%s5638 + $0x60] sm:$0xff]
    %v5652 = vld [vmem:[%s5638 + $0x68] sm:$0xff]
    %v5653 = vld [vmem:[%s5638 + $0x70] sm:$0xff]
    %v5654 = vld [vmem:[%s5638 + $0x78] sm:$0xff]
    %v5655 = vld [vmem:[%s5638 + $0x80] sm:$0xff]
    %v5656 = vld [vmem:[%s5638 + $0x88] sm:$0xff]
    %v5657 = vld [vmem:[%s5638 + $0x90] sm:$0xff]
    %v5658 = vld [vmem:[%s5638 + $0x98] sm:$0xff]
    %v5659 = vld [vmem:[%s5638 + $0xa0] sm:$0xff]
    %v5660 = vld [vmem:[%s5638 + $0xa8] sm:$0xff]
    %v5661 = vld [vmem:[%s5638 + $0xb0] sm:$0xff]
    %v5662 = vld [vmem:[%s5638 + $0xb8] sm:$0xff]
    %v5663 = vld [vmem:[%s5638 + $0xc0] sm:$0xff]
    %v5664 = vld [vmem:[%s5638 + $0xc8] sm:$0xff]
    %v5665 = vld [vmem:[%s5638 + $0xd0] sm:$0xff]
    %v5666 = vld [vmem:[%s5638 + $0xd8] sm:$0xff]
    %v5667 = vld [vmem:[%s5638 + $0xe0] sm:$0xff]
    %v5668 = vld [vmem:[%s5638 + $0xe8] sm:$0xff]
    %v5669 = vld [vmem:[%s5638 + $0xf0] sm:$0xff]
    %v5670 = vld [vmem:[%s5638 + $0xf8] sm:$0xff]
    %v5673 = vrot.slane %v5548, 4
    %v5674 = vrot.slane %v5549, 4
    %5677 = vmatprep.subr.bf16.mxu0 %v5640
    %5678 = vmatpush1.bf16.msra.mxu0 %v5639
    %5679 = vmatprep.subr.bf16.mxu0 %v5642
    %5680 = vmatpush1.bf16.msra.mxu0 %v5641
    %5681 = vmatprep.subr.bf16.mxu0 %v5644
    %5682 = vmatpush1.bf16.msra.mxu0 %v5643
    %5683 = vmatprep.subr.bf16.mxu0 %v5646
    %5684 = vmatpush1.bf16.msra.mxu0 %v5645
    %5685 = vmatprep.subr.bf16.mxu0 %v5648
    %5686 = vmatpush1.bf16.msra.mxu0 %v5647
    %5687 = vmatprep.subr.bf16.mxu0 %v5650
    %5688 = vmatpush1.bf16.msra.mxu0 %v5649
    %5689 = vmatprep.subr.bf16.mxu0 %v5652
    %5690 = vmatpush1.bf16.msra.mxu0 %v5651
    %5691 = vmatprep.subr.bf16.mxu0 %v5654
    %5692 = vmatpush1.bf16.msra.mxu0 %v5653
    %5693 = vmatprep.subr.bf16.mxu0 %v5656
    %5694 = vmatpush1.bf16.msra.mxu0 %v5655
    %5695 = vmatprep.subr.bf16.mxu0 %v5658
    %5696 = vmatpush1.bf16.msra.mxu0 %v5657
    %5697 = vmatprep.subr.bf16.mxu0 %v5660
    %5698 = vmatpush1.bf16.msra.mxu0 %v5659
    %5699 = vmatprep.subr.bf16.mxu0 %v5662
    %5700 = vmatpush1.bf16.msra.mxu0 %v5661
    %5701 = vmatprep.subr.bf16.mxu0 %v5664
    %5702 = vmatpush1.bf16.msra.mxu0 %v5663
    %5703 = vmatprep.subr.bf16.mxu0 %v5666
    %5704 = vmatpush1.bf16.msra.mxu0 %v5665
    %5705 = vmatprep.subr.bf16.mxu0 %v5668
    %5706 = vmatpush1.bf16.msra.mxu0 %v5667
    %5707 = vmatprep.subr.bf16.mxu0 %v5670
    %5708 = vmatpush1.bf16.msra.mxu0 %v5669
    %5709 = vmatprep.mubr.bf16.mxu0 %v5674
    %5710 = vmatmul.mubr.bf16.gmra.mrb[0].mxu0 %v5673
    %v5711 = vpop.f32.mrb[0].mxu0
    %v5712 = vadd.f32 0.0, %v5711
    %v5713 = vpop.f32.mrb[0].mxu0
    %v5714 = vadd.f32 0.0, %v5713
    %v5715 = vpop.f32.mrb[0].mxu0
    %v5716 = vpop.f32.mrb[0].mxu0
    %5717 = vdwg.mxu0
    %v5718 = vadd.f32 %v5636, %v5712
    %v5719 = vadd.f32 %v5637, %v5714
    %s5720 = scalar_lea.vmem [#allocation13], 3584
    %v5721 = vld [vmem:[%s5720] sm:$0xff]
    %v5722 = vld [vmem:[%s5720 + $0x8] sm:$0xff]
    %v5723 = vld [vmem:[%s5720 + $0x10] sm:$0xff]
    %v5724 = vld [vmem:[%s5720 + $0x18] sm:$0xff]
    %v5725 = vld [vmem:[%s5720 + $0x20] sm:$0xff]
    %v5726 = vld [vmem:[%s5720 + $0x28] sm:$0xff]
    %v5727 = vld [vmem:[%s5720 + $0x30] sm:$0xff]
    %v5728 = vld [vmem:[%s5720 + $0x38] sm:$0xff]
    %v5729 = vld [vmem:[%s5720 + $0x40] sm:$0xff]
    %v5730 = vld [vmem:[%s5720 + $0x48] sm:$0xff]
    %v5731 = vld [vmem:[%s5720 + $0x50] sm:$0xff]
    %v5732 = vld [vmem:[%s5720 + $0x58] sm:$0xff]
    %v5733 = vld [vmem:[%s5720 + $0x60] sm:$0xff]
    %v5734 = vld [vmem:[%s5720 + $0x68] sm:$0xff]
    %v5735 = vld [vmem:[%s5720 + $0x70] sm:$0xff]
    %v5736 = vld [vmem:[%s5720 + $0x78] sm:$0xff]
    %v5737 = vld [vmem:[%s5720 + $0x80] sm:$0xff]
    %v5738 = vld [vmem:[%s5720 + $0x88] sm:$0xff]
    %v5739 = vld [vmem:[%s5720 + $0x90] sm:$0xff]
    %v5740 = vld [vmem:[%s5720 + $0x98] sm:$0xff]
    %v5741 = vld [vmem:[%s5720 + $0xa0] sm:$0xff]
    %v5742 = vld [vmem:[%s5720 + $0xa8] sm:$0xff]
    %v5743 = vld [vmem:[%s5720 + $0xb0] sm:$0xff]
    %v5744 = vld [vmem:[%s5720 + $0xb8] sm:$0xff]
    %v5745 = vld [vmem:[%s5720 + $0xc0] sm:$0xff]
    %v5746 = vld [vmem:[%s5720 + $0xc8] sm:$0xff]
    %v5747 = vld [vmem:[%s5720 + $0xd0] sm:$0xff]
    %v5748 = vld [vmem:[%s5720 + $0xd8] sm:$0xff]
    %v5749 = vld [vmem:[%s5720 + $0xe0] sm:$0xff]
    %v5750 = vld [vmem:[%s5720 + $0xe8] sm:$0xff]
    %v5751 = vld [vmem:[%s5720 + $0xf0] sm:$0xff]
    %v5752 = vld [vmem:[%s5720 + $0xf8] sm:$0xff]
    %5753 = vmatprep.subr.bf16.mxu0 %v5722
    %5754 = vmatpush1.bf16.msra.mxu0 %v5721
    %5755 = vmatprep.subr.bf16.mxu0 %v5724
    %5756 = vmatpush1.bf16.msra.mxu0 %v5723
    %5757 = vmatprep.subr.bf16.mxu0 %v5726
    %5758 = vmatpush1.bf16.msra.mxu0 %v5725
    %5759 = vmatprep.subr.bf16.mxu0 %v5728
    %5760 = vmatpush1.bf16.msra.mxu0 %v5727
    %5761 = vmatprep.subr.bf16.mxu0 %v5730
    %5762 = vmatpush1.bf16.msra.mxu0 %v5729
    %5763 = vmatprep.subr.bf16.mxu0 %v5732
    %5764 = vmatpush1.bf16.msra.mxu0 %v5731
    %5765 = vmatprep.subr.bf16.mxu0 %v5734
    %5766 = vmatpush1.bf16.msra.mxu0 %v5733
    %5767 = vmatprep.subr.bf16.mxu0 %v5736
    %5768 = vmatpush1.bf16.msra.mxu0 %v5735
    %5769 = vmatprep.subr.bf16.mxu0 %v5738
    %5770 = vmatpush1.bf16.msra.mxu0 %v5737
    %5771 = vmatprep.subr.bf16.mxu0 %v5740
    %5772 = vmatpush1.bf16.msra.mxu0 %v5739
    %5773 = vmatprep.subr.bf16.mxu0 %v5742
    %5774 = vmatpush1.bf16.msra.mxu0 %v5741
    %5775 = vmatprep.subr.bf16.mxu0 %v5744
    %5776 = vmatpush1.bf16.msra.mxu0 %v5743
    %5777 = vmatprep.subr.bf16.mxu0 %v5746
    %5778 = vmatpush1.bf16.msra.mxu0 %v5745
    %5779 = vmatprep.subr.bf16.mxu0 %v5748
    %5780 = vmatpush1.bf16.msra.mxu0 %v5747
    %5781 = vmatprep.subr.bf16.mxu0 %v5750
    %5782 = vmatpush1.bf16.msra.mxu0 %v5749
    %5783 = vmatprep.subr.bf16.mxu0 %v5752
    %5784 = vmatpush1.bf16.msra.mxu0 %v5751
    %5785 = vmatprep.mubr.bf16.mxu0 %v5551
    %5786 = vmatmul.mubr.bf16.gmra.mrb[0].mxu0 %v5550
    %v5787 = vpop.f32.mrb[0].mxu0
    %v5788 = vadd.f32 0.0, %v5787
    %v5789 = vpop.f32.mrb[0].mxu0
    %v5790 = vadd.f32 0.0, %v5789
    %v5791 = vpop.f32.mrb[0].mxu0
    %v5792 = vpop.f32.mrb[0].mxu0
    %5793 = vdwg.mxu0
    %v5794 = vadd.f32 %v5718, %v5788
    %v5795 = vadd.f32 %v5719, %v5790
    %v5796 = vmax.f32 %v5794, 0.0
    %v5797 = vmax.f32 %v5795, 0.0
    %s5798 = sshll.u32 %s3307, 4
    %5799 = dma.done %s636, %s5798
    %s5800 = scalar_lea.vmem [#allocation2], 34
    %v5801 = vld [vmem:[%s5800] ss:$8 sm:$0x3]
    %v5802 = vld [vmem:[#allocation12] sm:$0xff]
    %v5803 = vld [vmem:[#allocation12 + $0x8] sm:$0xff]
    %v5804 = vld [vmem:[#allocation12 + $0x10] sm:$0xff]
    %v5806 = vsel %vm4059, %v5802, 0
    %v5809 = vsel %vm4059, %v5803, 0
    %v5812 = vsel %vm4059, %v5804, 0
    %5814 = vmatprep.subr.mxu0 %v5797
    %5815 = vmatpush1.msra.mxu0 %v5796
    %5816 = vmatprep.subr.mxu0 0.0
    %5817 = vmatpush1.msra.mxu0 0.0
    %5818 = vmatprep.subr.mxu0 0.0
    %5819 = vmatpush1.msra.mxu0 0.0
    %5820 = vmatprep.subr.mxu0 0.0
    %5821 = vmatpush1.msra.mxu0 0.0
    %5822 = vmatprep.subr.mxu0 0.0
    %5823 = vmatpush1.msra.mxu0 0.0
    %5824 = vmatprep.subr.mxu0 0.0
    %5825 = vmatpush1.msra.mxu0 0.0
    %5826 = vmatprep.subr.mxu0 0.0
    %5827 = vmatpush1.msra.mxu0 0.0
    %5828 = vmatprep.subr.mxu0 0.0
    %5829 = vmatpush1.msra.mxu0 0.0
    %5830 = vmatprep.subr.mxu0 0.0
    %5831 = vmatpush1.msra.mxu0 0.0
    %5832 = vmatprep.subr.mxu0 0.0
    %5833 = vmatpush1.msra.mxu0 0.0
    %5834 = vmatprep.subr.mxu0 0.0
    %5835 = vmatpush1.msra.mxu0 0.0
    %5836 = vmatprep.subr.mxu0 0.0
    %5837 = vmatpush1.msra.mxu0 0.0
    %5838 = vmatprep.subr.mxu0 0.0
    %5839 = vmatpush1.msra.mxu0 0.0
    %5840 = vmatprep.subr.mxu0 0.0
    %5841 = vmatpush1.msra.mxu0 0.0
    %5842 = vmatprep.subr.mxu0 0.0
    %5843 = vmatpush1.msra.mxu0 0.0
    %5844 = vmatprep.subr.mxu0 0.0
    %5845 = vmatpush1.msra.mxu0 0.0
    %5846 = vmatprep.subr.mxu0 0.0
    %5847 = vmatpush1.msra.mxu0 0.0
    %5848 = vmatprep.subr.mxu0 0.0
    %5849 = vmatpush1.msra.mxu0 0.0
    %5850 = vmatprep.subr.mxu0 0.0
    %5851 = vmatpush1.msra.mxu0 0.0
    %5852 = vmatprep.subr.mxu0 0.0
    %5853 = vmatpush1.msra.mxu0 0.0
    %5854 = vmatprep.subr.mxu0 0.0
    %5855 = vmatpush1.msra.mxu0 0.0
    %5856 = vmatprep.subr.mxu0 0.0
    %5857 = vmatpush1.msra.mxu0 0.0
    %5858 = vmatprep.subr.mxu0 0.0
    %5859 = vmatpush1.msra.mxu0 0.0
    %5860 = vmatprep.subr.mxu0 0.0
    %5861 = vmatpush1.msra.mxu0 0.0
    %5862 = vmatprep.subr.mxu0 0.0
    %5863 = vmatpush1.msra.mxu0 0.0
    %5864 = vmatprep.subr.mxu0 0.0
    %5865 = vmatpush1.msra.mxu0 0.0
    %5866 = vmatprep.subr.mxu0 0.0
    %5867 = vmatpush1.msra.mxu0 0.0
    %5868 = vmatprep.subr.mxu0 0.0
    %5869 = vmatpush1.msra.mxu0 0.0
    %5870 = vmatprep.subr.mxu0 0.0
    %5871 = vmatpush1.msra.mxu0 0.0
    %5872 = vmatprep.subr.mxu0 0.0
    %5873 = vmatpush1.msra.mxu0 0.0
    %5874 = vmatprep.subr.mxu0 0.0
    %5875 = vmatpush1.msra.mxu0 0.0
    %5876 = vmatprep.subr.mxu0 0.0
    %5877 = vmatpush1.msra.mxu0 0.0
    %5878 = vmatprep.mubr.f32.mxu0 0.0
    %5879 = vmatmul.mubr.f32.gmra.mrb[0].mxu0 %v5806
    %v5880 = vpop.f32.mrb[0].mxu0
    %v5881 = vadd.f32 0.0, %v5880
    %v5882 = vpop.f32.mrb[0].mxu0
    %v5883 = vadd.f32 0.0, %v5882
    %5884 = vmatprep.mubr.f32.mxu0 0.0
    %5885 = vmatmul.mubr.f32.gmra.mrb[0].mxu0 %v5809
    %v5886 = vpop.f32.mrb[0].mxu0
    %v5887 = vadd.f32 0.0, %v5886
    %v5888 = vpop.f32.mrb[0].mxu0
    %v5889 = vadd.f32 0.0, %v5888
    %5890 = vmatprep.mubr.f32.mxu0 0.0
    %5891 = vmatmul.mubr.f32.gmra.mrb[0].mxu0 %v5812
    %v5892 = vpop.f32.mrb[0].mxu0
    %v5893 = vadd.f32 0.0, %v5892
    %v5894 = vpop.f32.mrb[0].mxu0
    %v5895 = vadd.f32 0.0, %v5894
    %5896 = vdwg.mxu0
    %v5897 = vpack.c.bf16 %v5887, %v5881
    %v5898 = vpack.c.bf16 %v5889, %v5883
    %v5899 = vpack.c.bf16 %v5893, %v5893
    %v5900 = vpack.c.bf16 %v5895, %v5895
    %v5901 = vld [vmem:[%s635] sm:$0xff]
    %v5902 = vld [vmem:[%s635 + $0x8] sm:$0xff]
    %v5903 = vld [vmem:[%s635 + $0x10] sm:$0xff]
    %v5904 = vld [vmem:[%s635 + $0x18] sm:$0xff]
    %v5905 = vld [vmem:[%s635 + $0x20] sm:$0xff]
    %v5906 = vld [vmem:[%s635 + $0x28] sm:$0xff]
    %v5907 = vld [vmem:[%s635 + $0x30] sm:$0xff]
    %v5908 = vld [vmem:[%s635 + $0x38] sm:$0xff]
    %v5909 = vld [vmem:[%s635 + $0x40] sm:$0xff]
    %v5910 = vld [vmem:[%s635 + $0x48] sm:$0xff]
    %v5911 = vld [vmem:[%s635 + $0x50] sm:$0xff]
    %v5912 = vld [vmem:[%s635 + $0x58] sm:$0xff]
    %v5913 = vld [vmem:[%s635 + $0x60] sm:$0xff]
    %v5914 = vld [vmem:[%s635 + $0x68] sm:$0xff]
    %v5915 = vld [vmem:[%s635 + $0x70] sm:$0xff]
    %v5916 = vld [vmem:[%s635 + $0x78] sm:$0xff]
    %v5917 = vld [vmem:[%s635 + $0x80] sm:$0xff]
    %v5918 = vld [vmem:[%s635 + $0x88] sm:$0xff]
    %v5919 = vld [vmem:[%s635 + $0x90] sm:$0xff]
    %v5920 = vld [vmem:[%s635 + $0x98] sm:$0xff]
    %v5921 = vld [vmem:[%s635 + $0xa0] sm:$0xff]
    %v5922 = vld [vmem:[%s635 + $0xa8] sm:$0xff]
    %v5923 = vld [vmem:[%s635 + $0xb0] sm:$0xff]
    %v5924 = vld [vmem:[%s635 + $0xb8] sm:$0xff]
    %v5925 = vld [vmem:[%s635 + $0xc0] sm:$0xff]
    %v5926 = vld [vmem:[%s635 + $0xc8] sm:$0xff]
    %v5927 = vld [vmem:[%s635 + $0xd0] sm:$0xff]
    %v5928 = vld [vmem:[%s635 + $0xd8] sm:$0xff]
    %v5929 = vld [vmem:[%s635 + $0xe0] sm:$0xff]
    %v5930 = vld [vmem:[%s635 + $0xe8] sm:$0xff]
    %v5931 = vld [vmem:[%s635 + $0xf0] sm:$0xff]
    %v5932 = vld [vmem:[%s635 + $0xf8] sm:$0xff]
    %5933 = vmatprep.subr.bf16.mxu0 %v5902
    %5934 = vmatpush1.bf16.msra.mxu0 %v5901
    %5935 = vmatprep.subr.bf16.mxu0 %v5904
    %5936 = vmatpush1.bf16.msra.mxu0 %v5903
    %5937 = vmatprep.subr.bf16.mxu0 %v5906
    %5938 = vmatpush1.bf16.msra.mxu0 %v5905
    %5939 = vmatprep.subr.bf16.mxu0 %v5908
    %5940 = vmatpush1.bf16.msra.mxu0 %v5907
    %5941 = vmatprep.subr.bf16.mxu0 %v5910
    %5942 = vmatpush1.bf16.msra.mxu0 %v5909
    %5943 = vmatprep.subr.bf16.mxu0 %v5912
    %5944 = vmatpush1.bf16.msra.mxu0 %v5911
    %5945 = vmatprep.subr.bf16.mxu0 %v5914
    %5946 = vmatpush1.bf16.msra.mxu0 %v5913
    %5947 = vmatprep.subr.bf16.mxu0 %v5916
    %5948 = vmatpush1.bf16.msra.mxu0 %v5915
    %5949 = vmatprep.subr.bf16.mxu0 %v5918
    %5950 = vmatpush1.bf16.msra.mxu0 %v5917
    %5951 = vmatprep.subr.bf16.mxu0 %v5920
    %5952 = vmatpush1.bf16.msra.mxu0 %v5919
    %5953 = vmatprep.subr.bf16.mxu0 %v5922
    %5954 = vmatpush1.bf16.msra.mxu0 %v5921
    %5955 = vmatprep.subr.bf16.mxu0 %v5924
    %5956 = vmatpush1.bf16.msra.mxu0 %v5923
    %5957 = vmatprep.subr.bf16.mxu0 %v5926
    %5958 = vmatpush1.bf16.msra.mxu0 %v5925
    %5959 = vmatprep.subr.bf16.mxu0 %v5928
    %5960 = vmatpush1.bf16.msra.mxu0 %v5927
    %5961 = vmatprep.subr.bf16.mxu0 %v5930
    %5962 = vmatpush1.bf16.msra.mxu0 %v5929
    %5963 = vmatprep.subr.bf16.mxu0 %v5932
    %5964 = vmatpush1.bf16.msra.mxu0 %v5931
    %5965 = vmatprep.mubr.bf16.mxu0 %v5898
    %5966 = vmatmul.mubr.bf16.gmra.mrb[0].mxu0 %v5897
    %v5967 = vpop.f32.mrb[0].mxu0
    %v5968 = vadd.f32 0.0, %v5967
    %v5969 = vpop.f32.mrb[0].mxu0
    %v5970 = vadd.f32 0.0, %v5969
    %v5971 = vpop.f32.mrb[0].mxu0
    %v5972 = vpop.f32.mrb[0].mxu0
    %5973 = vdwg.mxu0
    %v5975 = vlaneseq
    %v5976 = vshrl.u32 %v5975, 7
    %v5977 = vsub.s32 0, %v5976
    %v5978 = vrot.slane %v5801, %v5977
    %v5979 = vlaneseq
    %v5980 = vshrl.u32 %v5979, 7
    %v5981 = vsub.s32 1, %v5980
    %v5982 = vrot.slane %v5801, %v5981
    %v5985 = vadd.f32 %v5978, %v5968
    %v5986 = vadd.f32 %v5982, %v5970
    %s5987 = scalar_lea.vmem [#allocation13], 4096
    %v5988 = vld [vmem:[%s5987] sm:$0xff]
    %v5989 = vld [vmem:[%s5987 + $0x8] sm:$0xff]
    %v5990 = vld [vmem:[%s5987 + $0x10] sm:$0xff]
    %v5991 = vld [vmem:[%s5987 + $0x18] sm:$0xff]
    %v5992 = vld [vmem:[%s5987 + $0x20] sm:$0xff]
    %v5993 = vld [vmem:[%s5987 + $0x28] sm:$0xff]
    %v5994 = vld [vmem:[%s5987 + $0x30] sm:$0xff]
    %v5995 = vld [vmem:[%s5987 + $0x38] sm:$0xff]
    %v5996 = vld [vmem:[%s5987 + $0x40] sm:$0xff]
    %v5997 = vld [vmem:[%s5987 + $0x48] sm:$0xff]
    %v5998 = vld [vmem:[%s5987 + $0x50] sm:$0xff]
    %v5999 = vld [vmem:[%s5987 + $0x58] sm:$0xff]
    %v6000 = vld [vmem:[%s5987 + $0x60] sm:$0xff]
    %v6001 = vld [vmem:[%s5987 + $0x68] sm:$0xff]
    %v6002 = vld [vmem:[%s5987 + $0x70] sm:$0xff]
    %v6003 = vld [vmem:[%s5987 + $0x78] sm:$0xff]
    %v6004 = vld [vmem:[%s5987 + $0x80] sm:$0xff]
    %v6005 = vld [vmem:[%s5987 + $0x88] sm:$0xff]
    %v6006 = vld [vmem:[%s5987 + $0x90] sm:$0xff]
    %v6007 = vld [vmem:[%s5987 + $0x98] sm:$0xff]
    %v6008 = vld [vmem:[%s5987 + $0xa0] sm:$0xff]
    %v6009 = vld [vmem:[%s5987 + $0xa8] sm:$0xff]
    %v6010 = vld [vmem:[%s5987 + $0xb0] sm:$0xff]
    %v6011 = vld [vmem:[%s5987 + $0xb8] sm:$0xff]
    %v6012 = vld [vmem:[%s5987 + $0xc0] sm:$0xff]
    %v6013 = vld [vmem:[%s5987 + $0xc8] sm:$0xff]
    %v6014 = vld [vmem:[%s5987 + $0xd0] sm:$0xff]
    %v6015 = vld [vmem:[%s5987 + $0xd8] sm:$0xff]
    %v6016 = vld [vmem:[%s5987 + $0xe0] sm:$0xff]
    %v6017 = vld [vmem:[%s5987 + $0xe8] sm:$0xff]
    %v6018 = vld [vmem:[%s5987 + $0xf0] sm:$0xff]
    %v6019 = vld [vmem:[%s5987 + $0xf8] sm:$0xff]
    %v6022 = vrot.slane %v5897, 4
    %v6023 = vrot.slane %v5898, 4
    %6026 = vmatprep.subr.bf16.mxu0 %v5989
    %6027 = vmatpush1.bf16.msra.mxu0 %v5988
    %6028 = vmatprep.subr.bf16.mxu0 %v5991
    %6029 = vmatpush1.bf16.msra.mxu0 %v5990
    %6030 = vmatprep.subr.bf16.mxu0 %v5993
    %6031 = vmatpush1.bf16.msra.mxu0 %v5992
    %6032 = vmatprep.subr.bf16.mxu0 %v5995
    %6033 = vmatpush1.bf16.msra.mxu0 %v5994
    %6034 = vmatprep.subr.bf16.mxu0 %v5997
    %6035 = vmatpush1.bf16.msra.mxu0 %v5996
    %6036 = vmatprep.subr.bf16.mxu0 %v5999
    %6037 = vmatpush1.bf16.msra.mxu0 %v5998
    %6038 = vmatprep.subr.bf16.mxu0 %v6001
    %6039 = vmatpush1.bf16.msra.mxu0 %v6000
    %6040 = vmatprep.subr.bf16.mxu0 %v6003
    %6041 = vmatpush1.bf16.msra.mxu0 %v6002
    %6042 = vmatprep.subr.bf16.mxu0 %v6005
    %6043 = vmatpush1.bf16.msra.mxu0 %v6004
    %6044 = vmatprep.subr.bf16.mxu0 %v6007
    %6045 = vmatpush1.bf16.msra.mxu0 %v6006
    %6046 = vmatprep.subr.bf16.mxu0 %v6009
    %6047 = vmatpush1.bf16.msra.mxu0 %v6008
    %6048 = vmatprep.subr.bf16.mxu0 %v6011
    %6049 = vmatpush1.bf16.msra.mxu0 %v6010
    %6050 = vmatprep.subr.bf16.mxu0 %v6013
    %6051 = vmatpush1.bf16.msra.mxu0 %v6012
    %6052 = vmatprep.subr.bf16.mxu0 %v6015
    %6053 = vmatpush1.bf16.msra.mxu0 %v6014
    %6054 = vmatprep.subr.bf16.mxu0 %v6017
    %6055 = vmatpush1.bf16.msra.mxu0 %v6016
    %6056 = vmatprep.subr.bf16.mxu0 %v6019
    %6057 = vmatpush1.bf16.msra.mxu0 %v6018
    %6058 = vmatprep.mubr.bf16.mxu0 %v6023
    %6059 = vmatmul.mubr.bf16.gmra.mrb[0].mxu0 %v6022
    %v6060 = vpop.f32.mrb[0].mxu0
    %v6061 = vadd.f32 0.0, %v6060
    %v6062 = vpop.f32.mrb[0].mxu0
    %v6063 = vadd.f32 0.0, %v6062
    %v6064 = vpop.f32.mrb[0].mxu0
    %v6065 = vpop.f32.mrb[0].mxu0
    %6066 = vdwg.mxu0
    %v6067 = vadd.f32 %v5985, %v6061
    %v6068 = vadd.f32 %v5986, %v6063
    %s6069 = scalar_lea.vmem [#allocation13], 4352
    %v6070 = vld [vmem:[%s6069] sm:$0xff]
    %v6071 = vld [vmem:[%s6069 + $0x8] sm:$0xff]
    %v6072 = vld [vmem:[%s6069 + $0x10] sm:$0xff]
    %v6073 = vld [vmem:[%s6069 + $0x18] sm:$0xff]
    %v6074 = vld [vmem:[%s6069 + $0x20] sm:$0xff]
    %v6075 = vld [vmem:[%s6069 + $0x28] sm:$0xff]
    %v6076 = vld [vmem:[%s6069 + $0x30] sm:$0xff]
    %v6077 = vld [vmem:[%s6069 + $0x38] sm:$0xff]
    %v6078 = vld [vmem:[%s6069 + $0x40] sm:$0xff]
    %v6079 = vld [vmem:[%s6069 + $0x48] sm:$0xff]
    %v6080 = vld [vmem:[%s6069 + $0x50] sm:$0xff]
    %v6081 = vld [vmem:[%s6069 + $0x58] sm:$0xff]
    %v6082 = vld [vmem:[%s6069 + $0x60] sm:$0xff]
    %v6083 = vld [vmem:[%s6069 + $0x68] sm:$0xff]
    %v6084 = vld [vmem:[%s6069 + $0x70] sm:$0xff]
    %v6085 = vld [vmem:[%s6069 + $0x78] sm:$0xff]
    %v6086 = vld [vmem:[%s6069 + $0x80] sm:$0xff]
    %v6087 = vld [vmem:[%s6069 + $0x88] sm:$0xff]
    %v6088 = vld [vmem:[%s6069 + $0x90] sm:$0xff]
    %v6089 = vld [vmem:[%s6069 + $0x98] sm:$0xff]
    %v6090 = vld [vmem:[%s6069 + $0xa0] sm:$0xff]
    %v6091 = vld [vmem:[%s6069 + $0xa8] sm:$0xff]
    %v6092 = vld [vmem:[%s6069 + $0xb0] sm:$0xff]
    %v6093 = vld [vmem:[%s6069 + $0xb8] sm:$0xff]
    %v6094 = vld [vmem:[%s6069 + $0xc0] sm:$0xff]
    %v6095 = vld [vmem:[%s6069 + $0xc8] sm:$0xff]
    %v6096 = vld [vmem:[%s6069 + $0xd0] sm:$0xff]
    %v6097 = vld [vmem:[%s6069 + $0xd8] sm:$0xff]
    %v6098 = vld [vmem:[%s6069 + $0xe0] sm:$0xff]
    %v6099 = vld [vmem:[%s6069 + $0xe8] sm:$0xff]
    %v6100 = vld [vmem:[%s6069 + $0xf0] sm:$0xff]
    %v6101 = vld [vmem:[%s6069 + $0xf8] sm:$0xff]
    %6102 = vmatprep.subr.bf16.mxu0 %v6071
    %6103 = vmatpush1.bf16.msra.mxu0 %v6070
    %6104 = vmatprep.subr.bf16.mxu0 %v6073
    %6105 = vmatpush1.bf16.msra.mxu0 %v6072
    %6106 = vmatprep.subr.bf16.mxu0 %v6075
    %6107 = vmatpush1.bf16.msra.mxu0 %v6074
    %6108 = vmatprep.subr.bf16.mxu0 %v6077
    %6109 = vmatpush1.bf16.msra.mxu0 %v6076
    %6110 = vmatprep.subr.bf16.mxu0 %v6079
    %6111 = vmatpush1.bf16.msra.mxu0 %v6078
    %6112 = vmatprep.subr.bf16.mxu0 %v6081
    %6113 = vmatpush1.bf16.msra.mxu0 %v6080
    %6114 = vmatprep.subr.bf16.mxu0 %v6083
    %6115 = vmatpush1.bf16.msra.mxu0 %v6082
    %6116 = vmatprep.subr.bf16.mxu0 %v6085
    %6117 = vmatpush1.bf16.msra.mxu0 %v6084
    %6118 = vmatprep.subr.bf16.mxu0 %v6087
    %6119 = vmatpush1.bf16.msra.mxu0 %v6086
    %6120 = vmatprep.subr.bf16.mxu0 %v6089
    %6121 = vmatpush1.bf16.msra.mxu0 %v6088
    %6122 = vmatprep.subr.bf16.mxu0 %v6091
    %6123 = vmatpush1.bf16.msra.mxu0 %v6090
    %6124 = vmatprep.subr.bf16.mxu0 %v6093
    %6125 = vmatpush1.bf16.msra.mxu0 %v6092
    %6126 = vmatprep.subr.bf16.mxu0 %v6095
    %6127 = vmatpush1.bf16.msra.mxu0 %v6094
    %6128 = vmatprep.subr.bf16.mxu0 %v6097
    %6129 = vmatpush1.bf16.msra.mxu0 %v6096
    %6130 = vmatprep.subr.bf16.mxu0 %v6099
    %6131 = vmatpush1.bf16.msra.mxu0 %v6098
    %6132 = vmatprep.subr.bf16.mxu0 %v6101
    %6133 = vmatpush1.bf16.msra.mxu0 %v6100
    %6134 = vmatprep.mubr.bf16.mxu0 %v5900
    %6135 = vmatmul.mubr.bf16.gmra.mrb[0].mxu0 %v5899
    %v6136 = vpop.f32.mrb[0].mxu0
    %v6137 = vadd.f32 0.0, %v6136
    %v6138 = vpop.f32.mrb[0].mxu0
    %v6139 = vadd.f32 0.0, %v6138
    %v6140 = vpop.f32.mrb[0].mxu0
    %v6141 = vpop.f32.mrb[0].mxu0
    %6142 = vdwg.mxu0
    %v6143 = vadd.f32 %v6067, %v6137
    %v6144 = vadd.f32 %v6068, %v6139
    %v6145 = vmax.f32 %v6143, 0.0
    %v6146 = vmax.f32 %v6144, 0.0
    %s6147 = sshll.u32 %s3307, 4
    %6148 = dma.done %s673, %s6147
    %s6149 = scalar_lea.vmem [#allocation2], 35
    %v6150 = vld [vmem:[%s6149] ss:$8 sm:$0x3]
    %v6151 = vld [vmem:[#allocation12] sm:$0xff]
    %v6152 = vld [vmem:[#allocation12 + $0x8] sm:$0xff]
    %v6153 = vld [vmem:[#allocation12 + $0x10] sm:$0xff]
    %v6155 = vsel %vm4059, %v6151, 0
    %v6158 = vsel %vm4059, %v6152, 0
    %v6161 = vsel %vm4059, %v6153, 0
    %6163 = vmatprep.subr.mxu0 %v6146
    %6164 = vmatpush1.msra.mxu0 %v6145
    %6165 = vmatprep.subr.mxu0 0.0
    %6166 = vmatpush1.msra.mxu0 0.0
    %6167 = vmatprep.subr.mxu0 0.0
    %6168 = vmatpush1.msra.mxu0 0.0
    %6169 = vmatprep.subr.mxu0 0.0
    %6170 = vmatpush1.msra.mxu0 0.0
    %6171 = vmatprep.subr.mxu0 0.0
    %6172 = vmatpush1.msra.mxu0 0.0
    %6173 = vmatprep.subr.mxu0 0.0
    %6174 = vmatpush1.msra.mxu0 0.0
    %6175 = vmatprep.subr.mxu0 0.0
    %6176 = vmatpush1.msra.mxu0 0.0
    %6177 = vmatprep.subr.mxu0 0.0
    %6178 = vmatpush1.msra.mxu0 0.0
    %6179 = vmatprep.subr.mxu0 0.0
    %6180 = vmatpush1.msra.mxu0 0.0
    %6181 = vmatprep.subr.mxu0 0.0
    %6182 = vmatpush1.msra.mxu0 0.0
    %6183 = vmatprep.subr.mxu0 0.0
    %6184 = vmatpush1.msra.mxu0 0.0
    %6185 = vmatprep.subr.mxu0 0.0
    %6186 = vmatpush1.msra.mxu0 0.0
    %6187 = vmatprep.subr.mxu0 0.0
    %6188 = vmatpush1.msra.mxu0 0.0
    %6189 = vmatprep.subr.mxu0 0.0
    %6190 = vmatpush1.msra.mxu0 0.0
    %6191 = vmatprep.subr.mxu0 0.0
    %6192 = vmatpush1.msra.mxu0 0.0
    %6193 = vmatprep.subr.mxu0 0.0
    %6194 = vmatpush1.msra.mxu0 0.0
    %6195 = vmatprep.subr.mxu0 0.0
    %6196 = vmatpush1.msra.mxu0 0.0
    %6197 = vmatprep.subr.mxu0 0.0
    %6198 = vmatpush1.msra.mxu0 0.0
    %6199 = vmatprep.subr.mxu0 0.0
    %6200 = vmatpush1.msra.mxu0 0.0
    %6201 = vmatprep.subr.mxu0 0.0
    %6202 = vmatpush1.msra.mxu0 0.0
    %6203 = vmatprep.subr.mxu0 0.0
    %6204 = vmatpush1.msra.mxu0 0.0
    %6205 = vmatprep.subr.mxu0 0.0
    %6206 = vmatpush1.msra.mxu0 0.0
    %6207 = vmatprep.subr.mxu0 0.0
    %6208 = vmatpush1.msra.mxu0 0.0
    %6209 = vmatprep.subr.mxu0 0.0
    %6210 = vmatpush1.msra.mxu0 0.0
    %6211 = vmatprep.subr.mxu0 0.0
    %6212 = vmatpush1.msra.mxu0 0.0
    %6213 = vmatprep.subr.mxu0 0.0
    %6214 = vmatpush1.msra.mxu0 0.0
    %6215 = vmatprep.subr.mxu0 0.0
    %6216 = vmatpush1.msra.mxu0 0.0
    %6217 = vmatprep.subr.mxu0 0.0
    %6218 = vmatpush1.msra.mxu0 0.0
    %6219 = vmatprep.subr.mxu0 0.0
    %6220 = vmatpush1.msra.mxu0 0.0
    %6221 = vmatprep.subr.mxu0 0.0
    %6222 = vmatpush1.msra.mxu0 0.0
    %6223 = vmatprep.subr.mxu0 0.0
    %6224 = vmatpush1.msra.mxu0 0.0
    %6225 = vmatprep.subr.mxu0 0.0
    %6226 = vmatpush1.msra.mxu0 0.0
    %6227 = vmatprep.mubr.f32.mxu0 0.0
    %6228 = vmatmul.mubr.f32.gmra.mrb[0].mxu0 %v6155
    %v6229 = vpop.f32.mrb[0].mxu0
    %v6230 = vadd.f32 0.0, %v6229
    %v6231 = vpop.f32.mrb[0].mxu0
    %v6232 = vadd.f32 0.0, %v6231
    %6233 = vmatprep.mubr.f32.mxu0 0.0
    %6234 = vmatmul.mubr.f32.gmra.mrb[0].mxu0 %v6158
    %v6235 = vpop.f32.mrb[0].mxu0
    %v6236 = vadd.f32 0.0, %v6235
    %v6237 = vpop.f32.mrb[0].mxu0
    %v6238 = vadd.f32 0.0, %v6237
    %6239 = vmatprep.mubr.f32.mxu0 0.0
    %6240 = vmatmul.mubr.f32.gmra.mrb[0].mxu0 %v6161
    %v6241 = vpop.f32.mrb[0].mxu0
    %v6242 = vadd.f32 0.0, %v6241
    %v6243 = vpop.f32.mrb[0].mxu0
    %v6244 = vadd.f32 0.0, %v6243
    %6245 = vdwg.mxu0
    %v6246 = vpack.c.bf16 %v6236, %v6230
    %v6247 = vpack.c.bf16 %v6238, %v6232
    %v6248 = vpack.c.bf16 %v6242, %v6242
    %v6249 = vpack.c.bf16 %v6244, %v6244
    %v6250 = vld [vmem:[%s672] sm:$0xff]
    %v6251 = vld [vmem:[%s672 + $0x8] sm:$0xff]
    %v6252 = vld [vmem:[%s672 + $0x10] sm:$0xff]
    %v6253 = vld [vmem:[%s672 + $0x18] sm:$0xff]
    %v6254 = vld [vmem:[%s672 + $0x20] sm:$0xff]
    %v6255 = vld [vmem:[%s672 + $0x28] sm:$0xff]
    %v6256 = vld [vmem:[%s672 + $0x30] sm:$0xff]
    %v6257 = vld [vmem:[%s672 + $0x38] sm:$0xff]
    %v6258 = vld [vmem:[%s672 + $0x40] sm:$0xff]
    %v6259 = vld [vmem:[%s672 + $0x48] sm:$0xff]
    %v6260 = vld [vmem:[%s672 + $0x50] sm:$0xff]
    %v6261 = vld [vmem:[%s672 + $0x58] sm:$0xff]
    %v6262 = vld [vmem:[%s672 + $0x60] sm:$0xff]
    %v6263 = vld [vmem:[%s672 + $0x68] sm:$0xff]
    %v6264 = vld [vmem:[%s672 + $0x70] sm:$0xff]
    %v6265 = vld [vmem:[%s672 + $0x78] sm:$0xff]
    %v6266 = vld [vmem:[%s672 + $0x80] sm:$0xff]
    %v6267 = vld [vmem:[%s672 + $0x88] sm:$0xff]
    %v6268 = vld [vmem:[%s672 + $0x90] sm:$0xff]
    %v6269 = vld [vmem:[%s672 + $0x98] sm:$0xff]
    %v6270 = vld [vmem:[%s672 + $0xa0] sm:$0xff]
    %v6271 = vld [vmem:[%s672 + $0xa8] sm:$0xff]
    %v6272 = vld [vmem:[%s672 + $0xb0] sm:$0xff]
    %v6273 = vld [vmem:[%s672 + $0xb8] sm:$0xff]
    %v6274 = vld [vmem:[%s672 + $0xc0] sm:$0xff]
    %v6275 = vld [vmem:[%s672 + $0xc8] sm:$0xff]
    %v6276 = vld [vmem:[%s672 + $0xd0] sm:$0xff]
    %v6277 = vld [vmem:[%s672 + $0xd8] sm:$0xff]
    %v6278 = vld [vmem:[%s672 + $0xe0] sm:$0xff]
    %v6279 = vld [vmem:[%s672 + $0xe8] sm:$0xff]
    %v6280 = vld [vmem:[%s672 + $0xf0] sm:$0xff]
    %v6281 = vld [vmem:[%s672 + $0xf8] sm:$0xff]
    %6282 = vmatprep.subr.bf16.mxu0 %v6251
    %6283 = vmatpush1.bf16.msra.mxu0 %v6250
    %6284 = vmatprep.subr.bf16.mxu0 %v6253
    %6285 = vmatpush1.bf16.msra.mxu0 %v6252
    %6286 = vmatprep.subr.bf16.mxu0 %v6255
    %6287 = vmatpush1.bf16.msra.mxu0 %v6254
    %6288 = vmatprep.subr.bf16.mxu0 %v6257
    %6289 = vmatpush1.bf16.msra.mxu0 %v6256
    %6290 = vmatprep.subr.bf16.mxu0 %v6259
    %6291 = vmatpush1.bf16.msra.mxu0 %v6258
    %6292 = vmatprep.subr.bf16.mxu0 %v6261
    %6293 = vmatpush1.bf16.msra.mxu0 %v6260
    %6294 = vmatprep.subr.bf16.mxu0 %v6263
    %6295 = vmatpush1.bf16.msra.mxu0 %v6262
    %6296 = vmatprep.subr.bf16.mxu0 %v6265
    %6297 = vmatpush1.bf16.msra.mxu0 %v6264
    %6298 = vmatprep.subr.bf16.mxu0 %v6267
    %6299 = vmatpush1.bf16.msra.mxu0 %v6266
    %6300 = vmatprep.subr.bf16.mxu0 %v6269
    %6301 = vmatpush1.bf16.msra.mxu0 %v6268
    %6302 = vmatprep.subr.bf16.mxu0 %v6271
    %6303 = vmatpush1.bf16.msra.mxu0 %v6270
    %6304 = vmatprep.subr.bf16.mxu0 %v6273
    %6305 = vmatpush1.bf16.msra.mxu0 %v6272
    %6306 = vmatprep.subr.bf16.mxu0 %v6275
    %6307 = vmatpush1.bf16.msra.mxu0 %v6274
    %6308 = vmatprep.subr.bf16.mxu0 %v6277
    %6309 = vmatpush1.bf16.msra.mxu0 %v6276
    %6310 = vmatprep.subr.bf16.mxu0 %v6279
    %6311 = vmatpush1.bf16.msra.mxu0 %v6278
    %6312 = vmatprep.subr.bf16.mxu0 %v6281
    %6313 = vmatpush1.bf16.msra.mxu0 %v6280
    %6314 = vmatprep.mubr.bf16.mxu0 %v6247
    %6315 = vmatmul.mubr.bf16.gmra.mrb[0].mxu0 %v6246
    %v6316 = vpop.f32.mrb[0].mxu0
    %v6317 = vadd.f32 0.0, %v6316
    %v6318 = vpop.f32.mrb[0].mxu0
    %v6319 = vadd.f32 0.0, %v6318
    %v6320 = vpop.f32.mrb[0].mxu0
    %v6321 = vpop.f32.mrb[0].mxu0
    %6322 = vdwg.mxu0
    %v6324 = vlaneseq
    %v6325 = vshrl.u32 %v6324, 7
    %v6326 = vsub.s32 0, %v6325
    %v6327 = vrot.slane %v6150, %v6326
    %v6328 = vlaneseq
    %v6329 = vshrl.u32 %v6328, 7
    %v6330 = vsub.s32 1, %v6329
    %v6331 = vrot.slane %v6150, %v6330
    %v6334 = vadd.f32 %v6327, %v6317
    %v6335 = vadd.f32 %v6331, %v6319
    %s6336 = scalar_lea.vmem [#allocation13], 4864
    %v6337 = vld [vmem:[%s6336] sm:$0xff]
    %v6338 = vld [vmem:[%s6336 + $0x8] sm:$0xff]
    %v6339 = vld [vmem:[%s6336 + $0x10] sm:$0xff]
    %v6340 = vld [vmem:[%s6336 + $0x18] sm:$0xff]
    %v6341 = vld [vmem:[%s6336 + $0x20] sm:$0xff]
    %v6342 = vld [vmem:[%s6336 + $0x28] sm:$0xff]
    %v6343 = vld [vmem:[%s6336 + $0x30] sm:$0xff]
    %v6344 = vld [vmem:[%s6336 + $0x38] sm:$0xff]
    %v6345 = vld [vmem:[%s6336 + $0x40] sm:$0xff]
    %v6346 = vld [vmem:[%s6336 + $0x48] sm:$0xff]
    %v6347 = vld [vmem:[%s6336 + $0x50] sm:$0xff]
    %v6348 = vld [vmem:[%s6336 + $0x58] sm:$0xff]
    %v6349 = vld [vmem:[%s6336 + $0x60] sm:$0xff]
    %v6350 = vld [vmem:[%s6336 + $0x68] sm:$0xff]
    %v6351 = vld [vmem:[%s6336 + $0x70] sm:$0xff]
    %v6352 = vld [vmem:[%s6336 + $0x78] sm:$0xff]
    %v6353 = vld [vmem:[%s6336 + $0x80] sm:$0xff]
    %v6354 = vld [vmem:[%s6336 + $0x88] sm:$0xff]
    %v6355 = vld [vmem:[%s6336 + $0x90] sm:$0xff]
    %v6356 = vld [vmem:[%s6336 + $0x98] sm:$0xff]
    %v6357 = vld [vmem:[%s6336 + $0xa0] sm:$0xff]
    %v6358 = vld [vmem:[%s6336 + $0xa8] sm:$0xff]
    %v6359 = vld [vmem:[%s6336 + $0xb0] sm:$0xff]
    %v6360 = vld [vmem:[%s6336 + $0xb8] sm:$0xff]
    %v6361 = vld [vmem:[%s6336 + $0xc0] sm:$0xff]
    %v6362 = vld [vmem:[%s6336 + $0xc8] sm:$0xff]
    %v6363 = vld [vmem:[%s6336 + $0xd0] sm:$0xff]
    %v6364 = vld [vmem:[%s6336 + $0xd8] sm:$0xff]
    %v6365 = vld [vmem:[%s6336 + $0xe0] sm:$0xff]
    %v6366 = vld [vmem:[%s6336 + $0xe8] sm:$0xff]
    %v6367 = vld [vmem:[%s6336 + $0xf0] sm:$0xff]
    %v6368 = vld [vmem:[%s6336 + $0xf8] sm:$0xff]
    %v6371 = vrot.slane %v6246, 4
    %v6372 = vrot.slane %v6247, 4
    %6375 = vmatprep.subr.bf16.mxu0 %v6338
    %6376 = vmatpush1.bf16.msra.mxu0 %v6337
    %6377 = vmatprep.subr.bf16.mxu0 %v6340
    %6378 = vmatpush1.bf16.msra.mxu0 %v6339
    %6379 = vmatprep.subr.bf16.mxu0 %v6342
    %6380 = vmatpush1.bf16.msra.mxu0 %v6341
    %6381 = vmatprep.subr.bf16.mxu0 %v6344
    %6382 = vmatpush1.bf16.msra.mxu0 %v6343
    %6383 = vmatprep.subr.bf16.mxu0 %v6346
    %6384 = vmatpush1.bf16.msra.mxu0 %v6345
    %6385 = vmatprep.subr.bf16.mxu0 %v6348
    %6386 = vmatpush1.bf16.msra.mxu0 %v6347
    %6387 = vmatprep.subr.bf16.mxu0 %v6350
    %6388 = vmatpush1.bf16.msra.mxu0 %v6349
    %6389 = vmatprep.subr.bf16.mxu0 %v6352
    %6390 = vmatpush1.bf16.msra.mxu0 %v6351
    %6391 = vmatprep.subr.bf16.mxu0 %v6354
    %6392 = vmatpush1.bf16.msra.mxu0 %v6353
    %6393 = vmatprep.subr.bf16.mxu0 %v6356
    %6394 = vmatpush1.bf16.msra.mxu0 %v6355
    %6395 = vmatprep.subr.bf16.mxu0 %v6358
    %6396 = vmatpush1.bf16.msra.mxu0 %v6357
    %6397 = vmatprep.subr.bf16.mxu0 %v6360
    %6398 = vmatpush1.bf16.msra.mxu0 %v6359
    %6399 = vmatprep.subr.bf16.mxu0 %v6362
    %6400 = vmatpush1.bf16.msra.mxu0 %v6361
    %6401 = vmatprep.subr.bf16.mxu0 %v6364
    %6402 = vmatpush1.bf16.msra.mxu0 %v6363
    %6403 = vmatprep.subr.bf16.mxu0 %v6366
    %6404 = vmatpush1.bf16.msra.mxu0 %v6365
    %6405 = vmatprep.subr.bf16.mxu0 %v6368
    %6406 = vmatpush1.bf16.msra.mxu0 %v6367
    %6407 = vmatprep.mubr.bf16.mxu0 %v6372
    %6408 = vmatmul.mubr.bf16.gmra.mrb[0].mxu0 %v6371
    %v6409 = vpop.f32.mrb[0].mxu0
    %v6410 = vadd.f32 0.0, %v6409
    %v6411 = vpop.f32.mrb[0].mxu0
    %v6412 = vadd.f32 0.0, %v6411
    %v6413 = vpop.f32.mrb[0].mxu0
    %v6414 = vpop.f32.mrb[0].mxu0
    %6415 = vdwg.mxu0
    %v6416 = vadd.f32 %v6334, %v6410
    %v6417 = vadd.f32 %v6335, %v6412
    %s6418 = scalar_lea.vmem [#allocation13], 5120
    %v6419 = vld [vmem:[%s6418] sm:$0xff]
    %v6420 = vld [vmem:[%s6418 + $0x8] sm:$0xff]
    %v6421 = vld [vmem:[%s6418 + $0x10] sm:$0xff]
    %v6422 = vld [vmem:[%s6418 + $0x18] sm:$0xff]
    %v6423 = vld [vmem:[%s6418 + $0x20] sm:$0xff]
    %v6424 = vld [vmem:[%s6418 + $0x28] sm:$0xff]
    %v6425 = vld [vmem:[%s6418 + $0x30] sm:$0xff]
    %v6426 = vld [vmem:[%s6418 + $0x38] sm:$0xff]
    %v6427 = vld [vmem:[%s6418 + $0x40] sm:$0xff]
    %v6428 = vld [vmem:[%s6418 + $0x48] sm:$0xff]
    %v6429 = vld [vmem:[%s6418 + $0x50] sm:$0xff]
    %v6430 = vld [vmem:[%s6418 + $0x58] sm:$0xff]
    %v6431 = vld [vmem:[%s6418 + $0x60] sm:$0xff]
    %v6432 = vld [vmem:[%s6418 + $0x68] sm:$0xff]
    %v6433 = vld [vmem:[%s6418 + $0x70] sm:$0xff]
    %v6434 = vld [vmem:[%s6418 + $0x78] sm:$0xff]
    %v6435 = vld [vmem:[%s6418 + $0x80] sm:$0xff]
    %v6436 = vld [vmem:[%s6418 + $0x88] sm:$0xff]
    %v6437 = vld [vmem:[%s6418 + $0x90] sm:$0xff]
    %v6438 = vld [vmem:[%s6418 + $0x98] sm:$0xff]
    %v6439 = vld [vmem:[%s6418 + $0xa0] sm:$0xff]
    %v6440 = vld [vmem:[%s6418 + $0xa8] sm:$0xff]
    %v6441 = vld [vmem:[%s6418 + $0xb0] sm:$0xff]
    %v6442 = vld [vmem:[%s6418 + $0xb8] sm:$0xff]
    %v6443 = vld [vmem:[%s6418 + $0xc0] sm:$0xff]
    %v6444 = vld [vmem:[%s6418 + $0xc8] sm:$0xff]
    %v6445 = vld [vmem:[%s6418 + $0xd0] sm:$0xff]
    %v6446 = vld [vmem:[%s6418 + $0xd8] sm:$0xff]
    %v6447 = vld [vmem:[%s6418 + $0xe0] sm:$0xff]
    %v6448 = vld [vmem:[%s6418 + $0xe8] sm:$0xff]
    %v6449 = vld [vmem:[%s6418 + $0xf0] sm:$0xff]
    %v6450 = vld [vmem:[%s6418 + $0xf8] sm:$0xff]
    %6451 = vmatprep.subr.bf16.mxu0 %v6420
    %6452 = vmatpush1.bf16.msra.mxu0 %v6419
    %6453 = vmatprep.subr.bf16.mxu0 %v6422
    %6454 = vmatpush1.bf16.msra.mxu0 %v6421
    %6455 = vmatprep.subr.bf16.mxu0 %v6424
    %6456 = vmatpush1.bf16.msra.mxu0 %v6423
    %6457 = vmatprep.subr.bf16.mxu0 %v6426
    %6458 = vmatpush1.bf16.msra.mxu0 %v6425
    %6459 = vmatprep.subr.bf16.mxu0 %v6428
    %6460 = vmatpush1.bf16.msra.mxu0 %v6427
    %6461 = vmatprep.subr.bf16.mxu0 %v6430
    %6462 = vmatpush1.bf16.msra.mxu0 %v6429
    %6463 = vmatprep.subr.bf16.mxu0 %v6432
    %6464 = vmatpush1.bf16.msra.mxu0 %v6431
    %6465 = vmatprep.subr.bf16.mxu0 %v6434
    %6466 = vmatpush1.bf16.msra.mxu0 %v6433
    %6467 = vmatprep.subr.bf16.mxu0 %v6436
    %6468 = vmatpush1.bf16.msra.mxu0 %v6435
    %6469 = vmatprep.subr.bf16.mxu0 %v6438
    %6470 = vmatpush1.bf16.msra.mxu0 %v6437
    %6471 = vmatprep.subr.bf16.mxu0 %v6440
    %6472 = vmatpush1.bf16.msra.mxu0 %v6439
    %6473 = vmatprep.subr.bf16.mxu0 %v6442
    %6474 = vmatpush1.bf16.msra.mxu0 %v6441
    %6475 = vmatprep.subr.bf16.mxu0 %v6444
    %6476 = vmatpush1.bf16.msra.mxu0 %v6443
    %6477 = vmatprep.subr.bf16.mxu0 %v6446
    %6478 = vmatpush1.bf16.msra.mxu0 %v6445
    %6479 = vmatprep.subr.bf16.mxu0 %v6448
    %6480 = vmatpush1.bf16.msra.mxu0 %v6447
    %6481 = vmatprep.subr.bf16.mxu0 %v6450
    %6482 = vmatpush1.bf16.msra.mxu0 %v6449
    %6483 = vmatprep.mubr.bf16.mxu0 %v6249
    %6484 = vmatmul.mubr.bf16.gmra.mrb[0].mxu0 %v6248
    %v6485 = vpop.f32.mrb[0].mxu0
    %v6486 = vadd.f32 0.0, %v6485
    %v6487 = vpop.f32.mrb[0].mxu0
    %v6488 = vadd.f32 0.0, %v6487
    %v6489 = vpop.f32.mrb[0].mxu0
    %v6490 = vpop.f32.mrb[0].mxu0
    %6491 = vdwg.mxu0
    %v6492 = vadd.f32 %v6416, %v6486
    %v6493 = vadd.f32 %v6417, %v6488
    %v6494 = vmax.f32 %v6492, 0.0
    %v6495 = vmax.f32 %v6493, 0.0
    %s6496 = sshll.u32 %s3307, 4
    %6497 = dma.done %s710, %s6496
    %s6498 = scalar_lea.vmem [#allocation2], 36
    %v6499 = vld [vmem:[%s6498] ss:$8 sm:$0x3]
    %v6500 = vld [vmem:[#allocation12] sm:$0xff]
    %v6501 = vld [vmem:[#allocation12 + $0x8] sm:$0xff]
    %v6502 = vld [vmem:[#allocation12 + $0x10] sm:$0xff]
    %v6504 = vsel %vm4059, %v6500, 0
    %v6507 = vsel %vm4059, %v6501, 0
    %v6510 = vsel %vm4059, %v6502, 0
    %6512 = vmatprep.subr.mxu0 %v6495
    %6513 = vmatpush1.msra.mxu0 %v6494
    %6514 = vmatprep.subr.mxu0 0.0
    %6515 = vmatpush1.msra.mxu0 0.0
    %6516 = vmatprep.subr.mxu0 0.0
    %6517 = vmatpush1.msra.mxu0 0.0
    %6518 = vmatprep.subr.mxu0 0.0
    %6519 = vmatpush1.msra.mxu0 0.0
    %6520 = vmatprep.subr.mxu0 0.0
    %6521 = vmatpush1.msra.mxu0 0.0
    %6522 = vmatprep.subr.mxu0 0.0
    %6523 = vmatpush1.msra.mxu0 0.0
    %6524 = vmatprep.subr.mxu0 0.0
    %6525 = vmatpush1.msra.mxu0 0.0
    %6526 = vmatprep.subr.mxu0 0.0
    %6527 = vmatpush1.msra.mxu0 0.0
    %6528 = vmatprep.subr.mxu0 0.0
    %6529 = vmatpush1.msra.mxu0 0.0
    %6530 = vmatprep.subr.mxu0 0.0
    %6531 = vmatpush1.msra.mxu0 0.0
    %6532 = vmatprep.subr.mxu0 0.0
    %6533 = vmatpush1.msra.mxu0 0.0
    %6534 = vmatprep.subr.mxu0 0.0
    %6535 = vmatpush1.msra.mxu0 0.0
    %6536 = vmatprep.subr.mxu0 0.0
    %6537 = vmatpush1.msra.mxu0 0.0
    %6538 = vmatprep.subr.mxu0 0.0
    %6539 = vmatpush1.msra.mxu0 0.0
    %6540 = vmatprep.subr.mxu0 0.0
    %6541 = vmatpush1.msra.mxu0 0.0
    %6542 = vmatprep.subr.mxu0 0.0
    %6543 = vmatpush1.msra.mxu0 0.0
    %6544 = vmatprep.subr.mxu0 0.0
    %6545 = vmatpush1.msra.mxu0 0.0
    %6546 = vmatprep.subr.mxu0 0.0
    %6547 = vmatpush1.msra.mxu0 0.0
    %6548 = vmatprep.subr.mxu0 0.0
    %6549 = vmatpush1.msra.mxu0 0.0
    %6550 = vmatprep.subr.mxu0 0.0
    %6551 = vmatpush1.msra.mxu0 0.0
    %6552 = vmatprep.subr.mxu0 0.0
    %6553 = vmatpush1.msra.mxu0 0.0
    %6554 = vmatprep.subr.mxu0 0.0
    %6555 = vmatpush1.msra.mxu0 0.0
    %6556 = vmatprep.subr.mxu0 0.0
    %6557 = vmatpush1.msra.mxu0 0.0
    %6558 = vmatprep.subr.mxu0 0.0
    %6559 = vmatpush1.msra.mxu0 0.0
    %6560 = vmatprep.subr.mxu0 0.0
    %6561 = vmatpush1.msra.mxu0 0.0
    %6562 = vmatprep.subr.mxu0 0.0
    %6563 = vmatpush1.msra.mxu0 0.0
    %6564 = vmatprep.subr.mxu0 0.0
    %6565 = vmatpush1.msra.mxu0 0.0
    %6566 = vmatprep.subr.mxu0 0.0
    %6567 = vmatpush1.msra.mxu0 0.0
    %6568 = vmatprep.subr.mxu0 0.0
    %6569 = vmatpush1.msra.mxu0 0.0
    %6570 = vmatprep.subr.mxu0 0.0
    %6571 = vmatpush1.msra.mxu0 0.0
    %6572 = vmatprep.subr.mxu0 0.0
    %6573 = vmatpush1.msra.mxu0 0.0
    %6574 = vmatprep.subr.mxu0 0.0
    %6575 = vmatpush1.msra.mxu0 0.0
    %6576 = vmatprep.mubr.f32.mxu0 0.0
    %6577 = vmatmul.mubr.f32.gmra.mrb[0].mxu0 %v6504
    %v6578 = vpop.f32.mrb[0].mxu0
    %v6579 = vadd.f32 0.0, %v6578
    %v6580 = vpop.f32.mrb[0].mxu0
    %v6581 = vadd.f32 0.0, %v6580
    %6582 = vmatprep.mubr.f32.mxu0 0.0
    %6583 = vmatmul.mubr.f32.gmra.mrb[0].mxu0 %v6507
    %v6584 = vpop.f32.mrb[0].mxu0
    %v6585 = vadd.f32 0.0, %v6584
    %v6586 = vpop.f32.mrb[0].mxu0
    %v6587 = vadd.f32 0.0, %v6586
    %6588 = vmatprep.mubr.f32.mxu0 0.0
    %6589 = vmatmul.mubr.f32.gmra.mrb[0].mxu0 %v6510
    %v6590 = vpop.f32.mrb[0].mxu0
    %v6591 = vadd.f32 0.0, %v6590
    %v6592 = vpop.f32.mrb[0].mxu0
    %v6593 = vadd.f32 0.0, %v6592
    %6594 = vdwg.mxu0
    %v6595 = vpack.c.bf16 %v6585, %v6579
    %v6596 = vpack.c.bf16 %v6587, %v6581
    %v6597 = vpack.c.bf16 %v6591, %v6591
    %v6598 = vpack.c.bf16 %v6593, %v6593
    %v6599 = vld [vmem:[%s709] sm:$0xff]
    %v6600 = vld [vmem:[%s709 + $0x8] sm:$0xff]
    %v6601 = vld [vmem:[%s709 + $0x10] sm:$0xff]
    %v6602 = vld [vmem:[%s709 + $0x18] sm:$0xff]
    %v6603 = vld [vmem:[%s709 + $0x20] sm:$0xff]
    %v6604 = vld [vmem:[%s709 + $0x28] sm:$0xff]
    %v6605 = vld [vmem:[%s709 + $0x30] sm:$0xff]
    %v6606 = vld [vmem:[%s709 + $0x38] sm:$0xff]
    %v6607 = vld [vmem:[%s709 + $0x40] sm:$0xff]
    %v6608 = vld [vmem:[%s709 + $0x48] sm:$0xff]
    %v6609 = vld [vmem:[%s709 + $0x50] sm:$0xff]
    %v6610 = vld [vmem:[%s709 + $0x58] sm:$0xff]
    %v6611 = vld [vmem:[%s709 + $0x60] sm:$0xff]
    %v6612 = vld [vmem:[%s709 + $0x68] sm:$0xff]
    %v6613 = vld [vmem:[%s709 + $0x70] sm:$0xff]
    %v6614 = vld [vmem:[%s709 + $0x78] sm:$0xff]
    %v6615 = vld [vmem:[%s709 + $0x80] sm:$0xff]
    %v6616 = vld [vmem:[%s709 + $0x88] sm:$0xff]
    %v6617 = vld [vmem:[%s709 + $0x90] sm:$0xff]
    %v6618 = vld [vmem:[%s709 + $0x98] sm:$0xff]
    %v6619 = vld [vmem:[%s709 + $0xa0] sm:$0xff]
    %v6620 = vld [vmem:[%s709 + $0xa8] sm:$0xff]
    %v6621 = vld [vmem:[%s709 + $0xb0] sm:$0xff]
    %v6622 = vld [vmem:[%s709 + $0xb8] sm:$0xff]
    %v6623 = vld [vmem:[%s709 + $0xc0] sm:$0xff]
    %v6624 = vld [vmem:[%s709 + $0xc8] sm:$0xff]
    %v6625 = vld [vmem:[%s709 + $0xd0] sm:$0xff]
    %v6626 = vld [vmem:[%s709 + $0xd8] sm:$0xff]
    %v6627 = vld [vmem:[%s709 + $0xe0] sm:$0xff]
    %v6628 = vld [vmem:[%s709 + $0xe8] sm:$0xff]
    %v6629 = vld [vmem:[%s709 + $0xf0] sm:$0xff]
    %v6630 = vld [vmem:[%s709 + $0xf8] sm:$0xff]
    %6631 = vmatprep.subr.bf16.mxu0 %v6600
    %6632 = vmatpush1.bf16.msra.mxu0 %v6599
    %6633 = vmatprep.subr.bf16.mxu0 %v6602
    %6634 = vmatpush1.bf16.msra.mxu0 %v6601
    %6635 = vmatprep.subr.bf16.mxu0 %v6604
    %6636 = vmatpush1.bf16.msra.mxu0 %v6603
    %6637 = vmatprep.subr.bf16.mxu0 %v6606
    %6638 = vmatpush1.bf16.msra.mxu0 %v6605
    %6639 = vmatprep.subr.bf16.mxu0 %v6608
    %6640 = vmatpush1.bf16.msra.mxu0 %v6607
    %6641 = vmatprep.subr.bf16.mxu0 %v6610
    %6642 = vmatpush1.bf16.msra.mxu0 %v6609
    %6643 = vmatprep.subr.bf16.mxu0 %v6612
    %6644 = vmatpush1.bf16.msra.mxu0 %v6611
    %6645 = vmatprep.subr.bf16.mxu0 %v6614
    %6646 = vmatpush1.bf16.msra.mxu0 %v6613
    %6647 = vmatprep.subr.bf16.mxu0 %v6616
    %6648 = vmatpush1.bf16.msra.mxu0 %v6615
    %6649 = vmatprep.subr.bf16.mxu0 %v6618
    %6650 = vmatpush1.bf16.msra.mxu0 %v6617
    %6651 = vmatprep.subr.bf16.mxu0 %v6620
    %6652 = vmatpush1.bf16.msra.mxu0 %v6619
    %6653 = vmatprep.subr.bf16.mxu0 %v6622
    %6654 = vmatpush1.bf16.msra.mxu0 %v6621
    %6655 = vmatprep.subr.bf16.mxu0 %v6624
    %6656 = vmatpush1.bf16.msra.mxu0 %v6623
    %6657 = vmatprep.subr.bf16.mxu0 %v6626
    %6658 = vmatpush1.bf16.msra.mxu0 %v6625
    %6659 = vmatprep.subr.bf16.mxu0 %v6628
    %6660 = vmatpush1.bf16.msra.mxu0 %v6627
    %6661 = vmatprep.subr.bf16.mxu0 %v6630
    %6662 = vmatpush1.bf16.msra.mxu0 %v6629
    %6663 = vmatprep.mubr.bf16.mxu0 %v6596
    %6664 = vmatmul.mubr.bf16.gmra.mrb[0].mxu0 %v6595
    %v6665 = vpop.f32.mrb[0].mxu0
    %v6666 = vadd.f32 0.0, %v6665
    %v6667 = vpop.f32.mrb[0].mxu0
    %v6668 = vadd.f32 0.0, %v6667
    %v6669 = vpop.f32.mrb[0].mxu0
    %v6670 = vpop.f32.mrb[0].mxu0
    %6671 = vdwg.mxu0
    %v6673 = vlaneseq
    %v6674 = vshrl.u32 %v6673, 7
    %v6675 = vsub.s32 0, %v6674
    %v6676 = vrot.slane %v6499, %v6675
    %v6677 = vlaneseq
    %v6678 = vshrl.u32 %v6677, 7
    %v6679 = vsub.s32 1, %v6678
    %v6680 = vrot.slane %v6499, %v6679
    %v6683 = vadd.f32 %v6676, %v6666
    %v6684 = vadd.f32 %v6680, %v6668
    %s6685 = scalar_lea.vmem [#allocation13], 5632
    %v6686 = vld [vmem:[%s6685] sm:$0xff]
    %v6687 = vld [vmem:[%s6685 + $0x8] sm:$0xff]
    %v6688 = vld [vmem:[%s6685 + $0x10] sm:$0xff]
    %v6689 = vld [vmem:[%s6685 + $0x18] sm:$0xff]
    %v6690 = vld [vmem:[%s6685 + $0x20] sm:$0xff]
    %v6691 = vld [vmem:[%s6685 + $0x28] sm:$0xff]
    %v6692 = vld [vmem:[%s6685 + $0x30] sm:$0xff]
    %v6693 = vld [vmem:[%s6685 + $0x38] sm:$0xff]
    %v6694 = vld [vmem:[%s6685 + $0x40] sm:$0xff]
    %v6695 = vld [vmem:[%s6685 + $0x48] sm:$0xff]
    %v6696 = vld [vmem:[%s6685 + $0x50] sm:$0xff]
    %v6697 = vld [vmem:[%s6685 + $0x58] sm:$0xff]
    %v6698 = vld [vmem:[%s6685 + $0x60] sm:$0xff]
    %v6699 = vld [vmem:[%s6685 + $0x68] sm:$0xff]
    %v6700 = vld [vmem:[%s6685 + $0x70] sm:$0xff]
    %v6701 = vld [vmem:[%s6685 + $0x78] sm:$0xff]
    %v6702 = vld [vmem:[%s6685 + $0x80] sm:$0xff]
    %v6703 = vld [vmem:[%s6685 + $0x88] sm:$0xff]
    %v6704 = vld [vmem:[%s6685 + $0x90] sm:$0xff]
    %v6705 = vld [vmem:[%s6685 + $0x98] sm:$0xff]
    %v6706 = vld [vmem:[%s6685 + $0xa0] sm:$0xff]
    %v6707 = vld [vmem:[%s6685 + $0xa8] sm:$0xff]
    %v6708 = vld [vmem:[%s6685 + $0xb0] sm:$0xff]
    %v6709 = vld [vmem:[%s6685 + $0xb8] sm:$0xff]
    %v6710 = vld [vmem:[%s6685 + $0xc0] sm:$0xff]
    %v6711 = vld [vmem:[%s6685 + $0xc8] sm:$0xff]
    %v6712 = vld [vmem:[%s6685 + $0xd0] sm:$0xff]
    %v6713 = vld [vmem:[%s6685 + $0xd8] sm:$0xff]
    %v6714 = vld [vmem:[%s6685 + $0xe0] sm:$0xff]
    %v6715 = vld [vmem:[%s6685 + $0xe8] sm:$0xff]
    %v6716 = vld [vmem:[%s6685 + $0xf0] sm:$0xff]
    %v6717 = vld [vmem:[%s6685 + $0xf8] sm:$0xff]
    %v6720 = vrot.slane %v6595, 4
    %v6721 = vrot.slane %v6596, 4
    %6724 = vmatprep.subr.bf16.mxu0 %v6687
    %6725 = vmatpush1.bf16.msra.mxu0 %v6686
    %6726 = vmatprep.subr.bf16.mxu0 %v6689
    %6727 = vmatpush1.bf16.msra.mxu0 %v6688
    %6728 = vmatprep.subr.bf16.mxu0 %v6691
    %6729 = vmatpush1.bf16.msra.mxu0 %v6690
    %6730 = vmatprep.subr.bf16.mxu0 %v6693
    %6731 = vmatpush1.bf16.msra.mxu0 %v6692
    %6732 = vmatprep.subr.bf16.mxu0 %v6695
    %6733 = vmatpush1.bf16.msra.mxu0 %v6694
    %6734 = vmatprep.subr.bf16.mxu0 %v6697
    %6735 = vmatpush1.bf16.msra.mxu0 %v6696
    %6736 = vmatprep.subr.bf16.mxu0 %v6699
    %6737 = vmatpush1.bf16.msra.mxu0 %v6698
    %6738 = vmatprep.subr.bf16.mxu0 %v6701
    %6739 = vmatpush1.bf16.msra.mxu0 %v6700
    %6740 = vmatprep.subr.bf16.mxu0 %v6703
    %6741 = vmatpush1.bf16.msra.mxu0 %v6702
    %6742 = vmatprep.subr.bf16.mxu0 %v6705
    %6743 = vmatpush1.bf16.msra.mxu0 %v6704
    %6744 = vmatprep.subr.bf16.mxu0 %v6707
    %6745 = vmatpush1.bf16.msra.mxu0 %v6706
    %6746 = vmatprep.subr.bf16.mxu0 %v6709
    %6747 = vmatpush1.bf16.msra.mxu0 %v6708
    %6748 = vmatprep.subr.bf16.mxu0 %v6711
    %6749 = vmatpush1.bf16.msra.mxu0 %v6710
    %6750 = vmatprep.subr.bf16.mxu0 %v6713
    %6751 = vmatpush1.bf16.msra.mxu0 %v6712
    %6752 = vmatprep.subr.bf16.mxu0 %v6715
    %6753 = vmatpush1.bf16.msra.mxu0 %v6714
    %6754 = vmatprep.subr.bf16.mxu0 %v6717
    %6755 = vmatpush1.bf16.msra.mxu0 %v6716
    %6756 = vmatprep.mubr.bf16.mxu0 %v6721
    %6757 = vmatmul.mubr.bf16.gmra.mrb[0].mxu0 %v6720
    %v6758 = vpop.f32.mrb[0].mxu0
    %v6759 = vadd.f32 0.0, %v6758
    %v6760 = vpop.f32.mrb[0].mxu0
    %v6761 = vadd.f32 0.0, %v6760
    %v6762 = vpop.f32.mrb[0].mxu0
    %v6763 = vpop.f32.mrb[0].mxu0
    %6764 = vdwg.mxu0
    %v6765 = vadd.f32 %v6683, %v6759
    %v6766 = vadd.f32 %v6684, %v6761
    %s6767 = scalar_lea.vmem [#allocation13], 5888
    %v6768 = vld [vmem:[%s6767] sm:$0xff]
    %v6769 = vld [vmem:[%s6767 + $0x8] sm:$0xff]
    %v6770 = vld [vmem:[%s6767 + $0x10] sm:$0xff]
    %v6771 = vld [vmem:[%s6767 + $0x18] sm:$0xff]
    %v6772 = vld [vmem:[%s6767 + $0x20] sm:$0xff]
    %v6773 = vld [vmem:[%s6767 + $0x28] sm:$0xff]
    %v6774 = vld [vmem:[%s6767 + $0x30] sm:$0xff]
    %v6775 = vld [vmem:[%s6767 + $0x38] sm:$0xff]
    %v6776 = vld [vmem:[%s6767 + $0x40] sm:$0xff]
    %v6777 = vld [vmem:[%s6767 + $0x48] sm:$0xff]
    %v6778 = vld [vmem:[%s6767 + $0x50] sm:$0xff]
    %v6779 = vld [vmem:[%s6767 + $0x58] sm:$0xff]
    %v6780 = vld [vmem:[%s6767 + $0x60] sm:$0xff]
    %v6781 = vld [vmem:[%s6767 + $0x68] sm:$0xff]
    %v6782 = vld [vmem:[%s6767 + $0x70] sm:$0xff]
    %v6783 = vld [vmem:[%s6767 + $0x78] sm:$0xff]
    %v6784 = vld [vmem:[%s6767 + $0x80] sm:$0xff]
    %v6785 = vld [vmem:[%s6767 + $0x88] sm:$0xff]
    %v6786 = vld [vmem:[%s6767 + $0x90] sm:$0xff]
    %v6787 = vld [vmem:[%s6767 + $0x98] sm:$0xff]
    %v6788 = vld [vmem:[%s6767 + $0xa0] sm:$0xff]
    %v6789 = vld [vmem:[%s6767 + $0xa8] sm:$0xff]
    %v6790 = vld [vmem:[%s6767 + $0xb0] sm:$0xff]
    %v6791 = vld [vmem:[%s6767 + $0xb8] sm:$0xff]
    %v6792 = vld [vmem:[%s6767 + $0xc0] sm:$0xff]
    %v6793 = vld [vmem:[%s6767 + $0xc8] sm:$0xff]
    %v6794 = vld [vmem:[%s6767 + $0xd0] sm:$0xff]
    %v6795 = vld [vmem:[%s6767 + $0xd8] sm:$0xff]
    %v6796 = vld [vmem:[%s6767 + $0xe0] sm:$0xff]
    %v6797 = vld [vmem:[%s6767 + $0xe8] sm:$0xff]
    %v6798 = vld [vmem:[%s6767 + $0xf0] sm:$0xff]
    %v6799 = vld [vmem:[%s6767 + $0xf8] sm:$0xff]
    %6800 = vmatprep.subr.bf16.mxu0 %v6769
    %6801 = vmatpush1.bf16.msra.mxu0 %v6768
    %6802 = vmatprep.subr.bf16.mxu0 %v6771
    %6803 = vmatpush1.bf16.msra.mxu0 %v6770
    %6804 = vmatprep.subr.bf16.mxu0 %v6773
    %6805 = vmatpush1.bf16.msra.mxu0 %v6772
    %6806 = vmatprep.subr.bf16.mxu0 %v6775
    %6807 = vmatpush1.bf16.msra.mxu0 %v6774
    %6808 = vmatprep.subr.bf16.mxu0 %v6777
    %6809 = vmatpush1.bf16.msra.mxu0 %v6776
    %6810 = vmatprep.subr.bf16.mxu0 %v6779
    %6811 = vmatpush1.bf16.msra.mxu0 %v6778
    %6812 = vmatprep.subr.bf16.mxu0 %v6781
    %6813 = vmatpush1.bf16.msra.mxu0 %v6780
    %6814 = vmatprep.subr.bf16.mxu0 %v6783
    %6815 = vmatpush1.bf16.msra.mxu0 %v6782
    %6816 = vmatprep.subr.bf16.mxu0 %v6785
    %6817 = vmatpush1.bf16.msra.mxu0 %v6784
    %6818 = vmatprep.subr.bf16.mxu0 %v6787
    %6819 = vmatpush1.bf16.msra.mxu0 %v6786
    %6820 = vmatprep.subr.bf16.mxu0 %v6789
    %6821 = vmatpush1.bf16.msra.mxu0 %v6788
    %6822 = vmatprep.subr.bf16.mxu0 %v6791
    %6823 = vmatpush1.bf16.msra.mxu0 %v6790
    %6824 = vmatprep.subr.bf16.mxu0 %v6793
    %6825 = vmatpush1.bf16.msra.mxu0 %v6792
    %6826 = vmatprep.subr.bf16.mxu0 %v6795
    %6827 = vmatpush1.bf16.msra.mxu0 %v6794
    %6828 = vmatprep.subr.bf16.mxu0 %v6797
    %6829 = vmatpush1.bf16.msra.mxu0 %v6796
    %6830 = vmatprep.subr.bf16.mxu0 %v6799
    %6831 = vmatpush1.bf16.msra.mxu0 %v6798
    %6832 = vmatprep.mubr.bf16.mxu0 %v6598
    %6833 = vmatmul.mubr.bf16.gmra.mrb[0].mxu0 %v6597
    %v6834 = vpop.f32.mrb[0].mxu0
    %v6835 = vadd.f32 0.0, %v6834
    %v6836 = vpop.f32.mrb[0].mxu0
    %v6837 = vadd.f32 0.0, %v6836
    %v6838 = vpop.f32.mrb[0].mxu0
    %v6839 = vpop.f32.mrb[0].mxu0
    %6840 = vdwg.mxu0
    %v6841 = vadd.f32 %v6765, %v6835
    %v6842 = vadd.f32 %v6766, %v6837
    %v6843 = vmax.f32 %v6841, 0.0
    %v6844 = vmax.f32 %v6842, 0.0
    %s6845 = smul.u32 256, 1
    %s6846 = sshll.u32 %s6845, 4
    %6847 = dma.done %s745, %s6846
    %v6848 = vld [vmem:[#allocation2 + $0x25] ss:$0 sm:$0xff]
    %v6849 = vld [vmem:[#allocation14] sm:$0xff]
    %v6850 = vld [vmem:[#allocation14 + $0x8] sm:$0xff]
    %v6851 = vld [vmem:[#allocation14 + $0x10] sm:$0xff]
    %v6852 = vld [vmem:[#allocation14 + $0x18] sm:$0xff]
    %v6853 = vld [vmem:[#allocation14 + $0x20] sm:$0xff]
    %v6854 = vld [vmem:[#allocation14 + $0x28] sm:$0xff]
    %v6855 = vld [vmem:[#allocation14 + $0x30] sm:$0xff]
    %v6856 = vld [vmem:[#allocation14 + $0x38] sm:$0xff]
    %v6857 = vld [vmem:[#allocation14 + $0x40] sm:$0xff]
    %v6858 = vld [vmem:[#allocation14 + $0x48] sm:$0xff]
    %v6859 = vld [vmem:[#allocation14 + $0x50] sm:$0xff]
    %v6860 = vld [vmem:[#allocation14 + $0x58] sm:$0xff]
    %v6861 = vld [vmem:[#allocation14 + $0x60] sm:$0xff]
    %v6862 = vld [vmem:[#allocation14 + $0x68] sm:$0xff]
    %v6863 = vld [vmem:[#allocation14 + $0x70] sm:$0xff]
    %v6864 = vld [vmem:[#allocation14 + $0x78] sm:$0xff]
    %v6865 = vld [vmem:[#allocation14 + $0x80] sm:$0xff]
    %v6866 = vld [vmem:[#allocation14 + $0x88] sm:$0xff]
    %v6867 = vld [vmem:[#allocation14 + $0x90] sm:$0xff]
    %v6868 = vld [vmem:[#allocation14 + $0x98] sm:$0xff]
    %v6869 = vld [vmem:[#allocation14 + $0xa0] sm:$0xff]
    %v6870 = vld [vmem:[#allocation14 + $0xa8] sm:$0xff]
    %v6871 = vld [vmem:[#allocation14 + $0xb0] sm:$0xff]
    %v6872 = vld [vmem:[#allocation14 + $0xb8] sm:$0xff]
    %v6873 = vld [vmem:[#allocation14 + $0xc0] sm:$0xff]
    %v6874 = vld [vmem:[#allocation14 + $0xc8] sm:$0xff]
    %v6875 = vld [vmem:[#allocation14 + $0xd0] sm:$0xff]
    %v6876 = vld [vmem:[#allocation14 + $0xd8] sm:$0xff]
    %v6877 = vld [vmem:[#allocation14 + $0xe0] sm:$0xff]
    %v6878 = vld [vmem:[#allocation14 + $0xe8] sm:$0xff]
    %v6879 = vld [vmem:[#allocation14 + $0xf0] sm:$0xff]
    %v6880 = vld [vmem:[#allocation14 + $0xf8] sm:$0xff]
    %6881 = vmatprep.subr.mxu0 0.0
    %6882 = vmatpush1.msra.mxu0 %v6849
    %6883 = vmatprep.subr.mxu0 0.0
    %6884 = vmatpush1.msra.mxu0 %v6850
    %6885 = vmatprep.subr.mxu0 0.0
    %6886 = vmatpush1.msra.mxu0 %v6851
    %6887 = vmatprep.subr.mxu0 0.0
    %6888 = vmatpush1.msra.mxu0 %v6852
    %6889 = vmatprep.subr.mxu0 0.0
    %6890 = vmatpush1.msra.mxu0 %v6853
    %6891 = vmatprep.subr.mxu0 0.0
    %6892 = vmatpush1.msra.mxu0 %v6854
    %6893 = vmatprep.subr.mxu0 0.0
    %6894 = vmatpush1.msra.mxu0 %v6855
    %6895 = vmatprep.subr.mxu0 0.0
    %6896 = vmatpush1.msra.mxu0 %v6856
    %6897 = vmatprep.subr.mxu0 0.0
    %6898 = vmatpush1.msra.mxu0 %v6857
    %6899 = vmatprep.subr.mxu0 0.0
    %6900 = vmatpush1.msra.mxu0 %v6858
    %6901 = vmatprep.subr.mxu0 0.0
    %6902 = vmatpush1.msra.mxu0 %v6859
    %6903 = vmatprep.subr.mxu0 0.0
    %6904 = vmatpush1.msra.mxu0 %v6860
    %6905 = vmatprep.subr.mxu0 0.0
    %6906 = vmatpush1.msra.mxu0 %v6861
    %6907 = vmatprep.subr.mxu0 0.0
    %6908 = vmatpush1.msra.mxu0 %v6862
    %6909 = vmatprep.subr.mxu0 0.0
    %6910 = vmatpush1.msra.mxu0 %v6863
    %6911 = vmatprep.subr.mxu0 0.0
    %6912 = vmatpush1.msra.mxu0 %v6864
    %6913 = vmatprep.subr.mxu0 0.0
    %6914 = vmatpush1.msra.mxu0 %v6865
    %6915 = vmatprep.subr.mxu0 0.0
    %6916 = vmatpush1.msra.mxu0 %v6866
    %6917 = vmatprep.subr.mxu0 0.0
    %6918 = vmatpush1.msra.mxu0 %v6867
    %6919 = vmatprep.subr.mxu0 0.0
    %6920 = vmatpush1.msra.mxu0 %v6868
    %6921 = vmatprep.subr.mxu0 0.0
    %6922 = vmatpush1.msra.mxu0 %v6869
    %6923 = vmatprep.subr.mxu0 0.0
    %6924 = vmatpush1.msra.mxu0 %v6870
    %6925 = vmatprep.subr.mxu0 0.0
    %6926 = vmatpush1.msra.mxu0 %v6871
    %6927 = vmatprep.subr.mxu0 0.0
    %6928 = vmatpush1.msra.mxu0 %v6872
    %6929 = vmatprep.subr.mxu0 0.0
    %6930 = vmatpush1.msra.mxu0 %v6873
    %6931 = vmatprep.subr.mxu0 0.0
    %6932 = vmatpush1.msra.mxu0 %v6874
    %6933 = vmatprep.subr.mxu0 0.0
    %6934 = vmatpush1.msra.mxu0 %v6875
    %6935 = vmatprep.subr.mxu0 0.0
    %6936 = vmatpush1.msra.mxu0 %v6876
    %6937 = vmatprep.subr.mxu0 0.0
    %6938 = vmatpush1.msra.mxu0 %v6877
    %6939 = vmatprep.subr.mxu0 0.0
    %6940 = vmatpush1.msra.mxu0 %v6878
    %6941 = vmatprep.subr.mxu0 0.0
    %6942 = vmatpush1.msra.mxu0 %v6879
    %6943 = vmatprep.subr.mxu0 0.0
    %6944 = vmatpush1.msra.mxu0 %v6880
    %6945 = vmatprep.mubr.f32.mxu0 %v6844
    %6946 = vmatmul.mubr.f32.gmra.mrb[0].mxu0 %v6843
    %v6947 = vpop.f32.mrb[0].mxu0
    %v6948 = vadd.f32 %v6848, %v6947
    %v6949 = vpop.f32.mrb[0].mxu0
    %6950 = vdwg.mxu0
    %vm6951 = vcmask 31744
    %6952 = vst.msk [vmem:[#allocation16] sm:$0xff] %vm6951, %v6948
    // Predicated region
    $region218: #{_lambda_.1} parent=1 // pred_check
      _
    $region219: #{_lambda_.1} parent=1 // pred_check_branch
      %6954 = sbr.rel (0) target = $region221
    $region220: #{_lambda_.1} parent=1 // pred_region
      %s6956 = ssub.s32 128, 128
      %6957 = vsyncadd [#allocation17], %s6956
      %s6959 = sshll.u32 [#allocation16], 4
      %s6960 = int_to_ptr.vmem [resolvable:$true] %s6959
      %6962 = dma.vmem_to_hbm [thread:$0]  %s6960, 128, %s14, [#allocation17]
    $region221: #{_lambda_.1} parent=1 // pred_fallthru
      _
    // Predicated region
    $region222: #{_lambda_.1} parent=1 // pred_check
      _
    $region223: #{_lambda_.1} parent=1 // pred_check_branch
      %6964 = sbr.rel (0) target = $region225
    $region224: #{_lambda_.1} parent=1 // pred_region
      %6965 = dma.done [#allocation17], 128
    $region225: #{_lambda_.1} parent=1 // pred_fallthru
      _
    %6966 = vsyncpa [#allocation17], 1
  %6967 = vsyncmov [#allocation15]
  %s6968 = vpop.sfrf %6967
  %p6969 = scmp.eq.s32.totalorder %s6968, 0
  %p6970 = pneg %p6969
  %6972 = shalt.err (%p6970)
  %s6973 = scalar_lea.sflag [#allocation15], 1
  %6974 = vsyncmov %s6973
  %s6975 = vpop.sfrf %6974
  %p6976 = scmp.eq.s32.totalorder %s6975, 0
  %p6977 = pneg %p6976
  %6979 = shalt.err (%p6977)
  %s6980 = scalar_lea.sflag [#allocation15], 2
  %6981 = vsyncmov %s6980
  %s6982 = vpop.sfrf %6981
  %p6983 = scmp.eq.s32.totalorder %s6982, 0
  %p6984 = pneg %p6983
  %6986 = shalt.err (%p6984)
  %s6987 = scalar_lea.sflag [#allocation15], 3
  %6988 = vsyncmov %s6987
  %s6989 = vpop.sfrf %6988
  %p6990 = scmp.eq.s32.totalorder %s6989, 0
  %p6991 = pneg %p6990
  %6993 = shalt.err (%p6991)
  %s6994 = scalar_lea.sflag [#allocation15], 4
  %6995 = vsyncmov %s6994
  %s6996 = vpop.sfrf %6995
  %p6997 = scmp.eq.s32.totalorder %s6996, 0
  %p6998 = pneg %p6997
  %7000 = shalt.err (%p6998)
  %s7001 = scalar_lea.sflag [#allocation15], 5
  %7002 = vsyncmov %s7001
  %s7003 = vpop.sfrf %7002
  %p7004 = scmp.eq.s32.totalorder %s7003, 0
  %p7005 = pneg %p7004
  %7007 = shalt.err (%p7005)
  %s7008 = scalar_lea.sflag [#allocation15], 6
  %7009 = vsyncmov %s7008
  %s7010 = vpop.sfrf %7009
  %p7011 = scmp.eq.s32.totalorder %s7010, 0
  %p7012 = pneg %p7011
  %7014 = shalt.err (%p7012)
  %s7015 = scalar_lea.sflag [#allocation15], 7
  %7016 = vsyncmov %s7015
  %s7017 = vpop.sfrf %7016
  %p7018 = scmp.eq.s32.totalorder %s7017, 0
  %p7019 = pneg %p7018
  %7021 = shalt.err (%p7019)
  %s7022 = scalar_lea.sflag [#allocation15], 8
  %7023 = vsyncmov %s7022
  %s7024 = vpop.sfrf %7023
  %p7025 = scmp.eq.s32.totalorder %s7024, 0
  %p7026 = pneg %p7025
  %7028 = shalt.err (%p7026)
  %s7029 = scalar_lea.sflag [#allocation15], 9
  %7030 = vsyncmov %s7029
  %s7031 = vpop.sfrf %7030
  %p7032 = scmp.eq.s32.totalorder %s7031, 0
  %p7033 = pneg %p7032
  %7035 = shalt.err (%p7033)
  %s7036 = scalar_lea.sflag [#allocation15], 10
  %7037 = vsyncmov %s7036
  %s7038 = vpop.sfrf %7037
  %p7039 = scmp.eq.s32.totalorder %s7038, 0
  %p7040 = pneg %p7039
  %7042 = shalt.err (%p7040)
  %s7043 = scalar_lea.sflag [#allocation15], 11
  %7044 = vsyncmov %s7043
  %s7045 = vpop.sfrf %7044
  %p7046 = scmp.eq.s32.totalorder %s7045, 0
  %p7047 = pneg %p7046
  %7049 = shalt.err (%p7047)
  %s7050 = scalar_lea.sflag [#allocation15], 12
  %7051 = vsyncmov %s7050
  %s7052 = vpop.sfrf %7051
  %p7053 = scmp.eq.s32.totalorder %s7052, 0
  %p7054 = pneg %p7053
  %7056 = shalt.err (%p7054)
  %s7057 = scalar_lea.sflag [#allocation15], 13
  %7058 = vsyncmov %s7057
  %s7059 = vpop.sfrf %7058
  %p7060 = scmp.eq.s32.totalorder %s7059, 0
  %p7061 = pneg %p7060
  %7063 = shalt.err (%p7061)
  %s7064 = scalar_lea.sflag [#allocation15], 14
  %7065 = vsyncmov %s7064
  %s7066 = vpop.sfrf %7065
  %p7067 = scmp.eq.s32.totalorder %s7066, 0
  %p7068 = pneg %p7067
  %7070 = shalt.err (%p7068)
  %s7071 = scalar_lea.sflag [#allocation15], 15
  %7072 = vsyncmov %s7071
  %s7073 = vpop.sfrf %7072
  %p7074 = scmp.eq.s32.totalorder %s7073, 0
  %p7075 = pneg %p7074
  %7077 = shalt.err (%p7075)
  %s7078 = scalar_lea.sflag [#allocation15], 16
  %7079 = vsyncmov %s7078
  %s7080 = vpop.sfrf %7079
  %p7081 = scmp.eq.s32.totalorder %s7080, 0
  %p7082 = pneg %p7081
  %7084 = shalt.err (%p7082)
  %s7085 = scalar_lea.sflag [#allocation15], 17
  %7086 = vsyncmov %s7085
  %s7087 = vpop.sfrf %7086
  %p7088 = scmp.eq.s32.totalorder %s7087, 0
  %p7089 = pneg %p7088
  %7091 = shalt.err (%p7089)
  %s7092 = scalar_lea.sflag [#allocation15], 18
  %7093 = vsyncmov %s7092
  %s7094 = vpop.sfrf %7093
  %p7095 = scmp.eq.s32.totalorder %s7094, 0
  %p7096 = pneg %p7095
  %7098 = shalt.err (%p7096)
  %s7099 = scalar_lea.sflag [#allocation15], 19
  %7100 = vsyncmov %s7099
  %s7101 = vpop.sfrf %7100
  %p7102 = scmp.eq.s32.totalorder %s7101, 0
  %p7103 = pneg %p7102
  %7105 = shalt.err (%p7103)

</llo_original>
